<compile_context>
chip_gen: v7x
topology: tpu7x:2x2x1
jax: 0.10.0
libtpu: 0.0.40
codegen_flags: <defaults>
</compile_context>

<pallas_src>
import functools

import jax
import jax.numpy as jnp
from jax import lax
from jax.experimental import pallas as pl
from jax.experimental.pallas import tpu as pltpu


# ----------------------------------------------------------------------------
# Kernel 1: fused SE branch + patch embedding + cls/pos -> padded tokens
# ----------------------------------------------------------------------------
def _embed_kernel(pat_se_ref, pat_pe_ref, add_ref,
                  w1_ref, b1_ref, w2_ref, b2_ref, w3_ref, b3_ref,
                  expand_ref, pew_ref, o_ref):
    f32 = jnp.float32
    # SE: Conv2d(3,12,3x3,pad=(0,1)) as im2col matmul + bias.
    conv = jnp.dot(pat_se_ref[0], w1_ref[...], preferred_element_type=f32) + b1_ref[...]
    # AdaptiveAvgPool2d((1,1)): mean over all spatial positions.
    pooled = jnp.mean(conv, axis=0, keepdims=True)                       # (1, 12)
    h = jnp.dot(pooled, w2_ref[...], preferred_element_type=f32) + b2_ref[...]
    h = jnp.maximum(h, 0.0)                                              # ReLU
    s = jax.nn.sigmoid(jnp.dot(h, w3_ref[...], preferred_element_type=f32)
                       + b3_ref[...])                                    # (1, C)
    # x_out = se(x)*x + x  ==  scale every patch column of channel c by (s_c+1).
    col_scale = jnp.dot(s, expand_ref[...], preferred_element_type=f32) + 1.0   # (1, C*p*p)
    pat = pat_pe_ref[0] * col_scale                                      # (Npad, C*p*p)
    # Patch embedding matmul + (pos_embed, cls token, conv bias) additive term.
    tok = jnp.dot(pat, pew_ref[...], preferred_element_type=f32) + add_ref[0]   # (Npad, D)
    o_ref[0] = tok.astype(o_ref.dtype)


def embed_tokens(pat_se, pat_pe, add_term, params, expand):
    B, HoWo, Kse = pat_se.shape
    _, Npad, Kpe = pat_pe.shape
    D = params["pe_w"].shape[1]
    C = expand.shape[0]
    c1 = params["se_conv1_w"].shape[1]          # 12
    c2 = params["se_fc1_w"].shape[1]            # 6
    return pl.pallas_call(
        _embed_kernel,
        out_shape=jax.ShapeDtypeStruct((B, Npad, D), jnp.float32),
        grid=(B,),
        in_specs=[
            pl.BlockSpec((1, HoWo, Kse), lambda b: (b, 0, 0)),
            pl.BlockSpec((1, Npad, Kpe), lambda b: (b, 0, 0)),
            pl.BlockSpec((1, Npad, D), lambda b: (0, 0, 0)),
            pl.BlockSpec((Kse, c1), lambda b: (0, 0)),
            pl.BlockSpec((1, c1), lambda b: (0, 0)),
            pl.BlockSpec((c1, c2), lambda b: (0, 0)),
            pl.BlockSpec((1, c2), lambda b: (0, 0)),
            pl.BlockSpec((c2, C), lambda b: (0, 0)),
            pl.BlockSpec((1, C), lambda b: (0, 0)),
            pl.BlockSpec((C, Kpe), lambda b: (0, 0)),
            pl.BlockSpec((Kpe, D), lambda b: (0, 0)),
        ],
        out_specs=pl.BlockSpec((1, Npad, D), lambda b: (b, 0, 0)),
        compiler_params=pltpu.CompilerParams(
            dimension_semantics=("parallel",),
            vmem_limit_bytes=32 * 1024 * 1024),
    )(pat_se, pat_pe, add_term,
      params["se_conv1_w"], params["se_conv1_b"],
      params["se_fc1_w"], params["se_fc1_b"],
      params["se_fc2_w"], params["se_fc2_b"],
      expand, params["pe_w"])


# ----------------------------------------------------------------------------
# Kernel 2: all transformer blocks + final LayerNorm, grid = (B, depth)
# ----------------------------------------------------------------------------
def _vit_stack_kernel(x_ref, ln1g, ln1b, qkvw, qkvb, projw, projb,
                      ln2g, ln2b, fc1w, fc1b, fc2w, fc2b, nrmg, nrmb,
                      o_ref, tok_ref, *, num_heads, n_valid, eps):
    layer = pl.program_id(1)

    @pl.when(layer == 0)
    def _():
        tok_ref[...] = x_ref[0].astype(jnp.float32)

    x = tok_ref[...]                              # (Npad, D), carried across layers
    Npad, D = x.shape
    hd = D // num_heads
    scale = hd ** -0.5

    def ln(t, g, b):
        mu = jnp.mean(t, axis=-1, keepdims=True)
        var = jnp.mean((t - mu) ** 2, axis=-1, keepdims=True)
        return (t - mu) * lax.rsqrt(var + eps) * g + b

    # ---- multi-head self-attention (heads batched, transposed-feature layout) ----
    h = ln(x, ln1g[0], ln1b[0])
    qkv = jnp.dot(h, qkvw[0], preferred_element_type=jnp.float32) + qkvb[0]   # (Npad, 3D)
    qkv_t = qkv.T                                                             # (3D, Npad)
    q_t = qkv_t[0:D].reshape(num_heads, hd, Npad)                             # (h, d, q)
    k_t = qkv_t[D:2 * D].reshape(num_heads, hd, Npad)                         # (h, d, k)
    v_t = qkv_t[2 * D:3 * D].reshape(num_heads, hd, Npad)                     # (h, d, k)

    s = lax.dot_general(q_t, k_t, (((1,), (1,)), ((0,), (0,))),
                        preferred_element_type=jnp.float32) * scale           # (h, q, k)
    # Mask padded key positions (tokens >= n_valid are padding).
    key_id = lax.broadcasted_iota(jnp.int32, s.shape, 2)
    s = jnp.where(key_id < n_valid, s, -1e30)
    s = s - jnp.max(s, axis=-1, keepdims=True)
    p = jnp.exp(s)
    p = p * pl.reciprocal(jnp.sum(p, axis=-1, keepdims=True), approx=True)
    o_t = lax.dot_general(v_t, p, (((2,), (2,)), ((0,), (0,))),
                          preferred_element_type=jnp.float32)                 # (h, d, q)
    attn_t = o_t.reshape(D, Npad)                                             # feature-major
    proj = lax.dot_general(attn_t, projw[0], (((0,), (0,)), ((), ())),
                           preferred_element_type=jnp.float32) + projb[0]     # (Npad, D)
    x = x + proj

    # ---- MLP ----
    h = ln(x, ln2g[0], ln2b[0])
    h = jnp.dot(h, fc1w[0], preferred_element_type=jnp.float32) + fc1b[0]
    # TODO(synk): PyTorch nn.GELU() is exact erf-GELU; using the tanh approximation
    # for robust Mosaic lowering (max abs deviation ~1e-3).
    h = jax.nn.gelu(h, approximate=True)
    h = jnp.dot(h, fc2w[0], preferred_element_type=jnp.float32) + fc2b[0]
    x = x + h

    tok_ref[...] = x

    @pl.when(layer == pl.num_programs(1) - 1)
    def _():
        o_ref[0] = ln(x, nrmg[...], nrmb[...]).astype(o_ref.dtype)


def vit_stack(tokens, params, *, num_heads, n_valid, eps=1e-6):
    B, Npad, D = tokens.shape
    depth = params["qkv_w"].shape[0]
    H = params["fc1_w"].shape[2]
    D3 = 3 * D
    lspec = lambda shape: pl.BlockSpec((1,) + shape, lambda b, l: (l, 0, 0))
    cspec = lambda shape: pl.BlockSpec(shape, lambda b, l: (0, 0))
    return pl.pallas_call(
        functools.partial(_vit_stack_kernel, num_heads=num_heads,
                          n_valid=n_valid, eps=eps),
        out_shape=jax.ShapeDtypeStruct((B, Npad, D), jnp.float32),
        grid=(B, depth),
        in_specs=[
            pl.BlockSpec((1, Npad, D), lambda b, l: (b, 0, 0)),   # tokens (resident over depth)
            lspec((1, D)), lspec((1, D)),                         # ln1 g/b
            lspec((D, D3)), lspec((1, D3)),                       # qkv w/b
            lspec((D, D)), lspec((1, D)),                         # proj w/b
            lspec((1, D)), lspec((1, D)),                         # ln2 g/b
            lspec((D, H)), lspec((1, H)),                         # fc1 w/b
            lspec((H, D)), lspec((1, D)),                         # fc2 w/b
            cspec((1, D)), cspec((1, D)),                         # final norm g/b
        ],
        out_specs=pl.BlockSpec((1, Npad, D), lambda b, l: (b, 0, 0)),
        scratch_shapes=[pltpu.VMEM((Npad, D), jnp.float32)],
        compiler_params=pltpu.CompilerParams(
            dimension_semantics=("parallel", "arbitrary"),
            vmem_limit_bytes=32 * 1024 * 1024),
    )(tokens,
      params["ln1_g"], params["ln1_b"],
      params["qkv_w"], params["qkv_b"],
      params["proj_w"], params["proj_b"],
      params["ln2_g"], params["ln2_b"],
      params["fc1_w"], params["fc1_b"],
      params["fc2_w"], params["fc2_b"],
      params["norm_g"], params["norm_b"])


# ----------------------------------------------------------------------------
# Plain-JAX layout plumbing (pure reshapes / strided slices, no compute)
# ----------------------------------------------------------------------------
def _se_im2col(x):
    """x: (B,C,H,W) -> 3x3 / stride 1 / pad (0,1) patches, (B, Ho*Wo, C*9)."""
    B, C, H, W = x.shape
    xp = jnp.pad(x, ((0, 0), (0, 0), (0, 0), (1, 1)))    # pad width only
    Ho, Wo = H - 2, W
    cols = []
    for i in range(3):
        for j in range(3):
            cols.append(xp[:, :, i:i + Ho, j:j + Wo])
    pat = jnp.stack(cols, axis=2)                        # (B, C, 9, Ho, Wo)
    pat = pat.transpose(0, 3, 4, 1, 2)                   # (B, Ho, Wo, C, 9)
    return pat.reshape(B, Ho * Wo, C * 9)


def _patchify(x, p):
    """kernel==stride patch extraction as a pure reshape/transpose.
    x: (B,C,H,W) -> (B, (H//p)*(W//p), C*p*p), column order (c, i, j)."""
    B, C, H, W = x.shape
    x = x.reshape(B, C, H // p, p, W // p, p)
    x = x.transpose(0, 2, 4, 1, 3, 5)                    # (B, H//p, W//p, C, p, p)
    return x.reshape(B, (H // p) * (W // p), C * p * p)


# ----------------------------------------------------------------------------
# Parameter init (deterministic, synthetic); per-layer weights stacked on axis 0
# ----------------------------------------------------------------------------
def init_params(key, cfg):
    D = cfg["embed_dim"]
    p = cfg["patch_size"]
    C = cfg["in_c"]
    Np = (cfg["img_size"] // p) ** 2
    Hm = int(D * cfg["mlp_ratio"])
    depth = cfg["depth"]
    keys = iter(jax.random.split(key, 64))

    def nrm(shape, std):
        return (std * jax.random.normal(next(keys), shape)).astype(jnp.float32)

    f32 = jnp.float32
    return dict(
        # SE branch: Conv2d(3,12,3x3,pad=(0,1)) -> pool -> 12->6 (ReLU) -> 6->3 (Sigmoid)
        se_conv1_w=nrm((C * 9, 12), 0.1), se_conv1_b=jnp.zeros((1, 12), f32),
        se_fc1_w=nrm((12, 6), 0.1),       se_fc1_b=jnp.zeros((1, 6), f32),
        se_fc2_w=nrm((6, C), 0.1),        se_fc2_b=jnp.zeros((1, C), f32),
        # patch embedding Conv2d(in_c, D, kernel=stride=patch)
        pe_w=nrm((C * p * p, D), 0.1),    pe_b=jnp.zeros((D,), f32),
        cls_token=nrm((1, 1, D), 0.02),
        pos_embed=nrm((1, Np + 1, D), 0.02),
        norm_g=jnp.ones((1, D), f32),     norm_b=jnp.zeros((1, D), f32),
        # transformer blocks, stacked along a leading layer axis
        ln1_g=jnp.ones((depth, 1, D), f32),  ln1_b=jnp.zeros((depth, 1, D), f32),
        qkv_w=nrm((depth, D, 3 * D), 0.01),  qkv_b=jnp.zeros((depth, 1, 3 * D), f32),
        proj_w=nrm((depth, D, D), 0.01),     proj_b=jnp.zeros((depth, 1, D), f32),
        ln2_g=jnp.ones((depth, 1, D), f32),  ln2_b=jnp.zeros((depth, 1, D), f32),
        fc1_w=nrm((depth, D, Hm), 0.01),     fc1_b=jnp.zeros((depth, 1, Hm), f32),
        fc2_w=nrm((depth, Hm, D), 0.01),     fc2_b=jnp.zeros((depth, 1, D), f32),
    )


# ----------------------------------------------------------------------------
# Full forward pass (mirrors SE_VisionTransformer.forward, eval mode)
# ----------------------------------------------------------------------------
def se_vit_forward(x, params, cfg):
    B, C, H, W = x.shape
    D = cfg["embed_dim"]
    p = cfg["patch_size"]
    Np = (H // p) * (W // p)
    N = Np + 1                                  # cls + patches
    Npad = ((N + 127) // 128) * 128             # lane-dense token count

    # --- layout plumbing in XLA (im2col for SE conv; reshape-only patchify) ---
    pat_se = _se_im2col(x)                                        # (B, Ho*Wo, C*9)
    pat_pe = _patchify(x, p)                                      # (B, Np, C*p*p)
    pat_pe = jnp.pad(pat_pe, ((0, 0), (1, Npad - Np - 1), (0, 0)))  # row 0 = cls slot

    # Additive term: pos_embed everywhere (rows 0..N-1), cls token at row 0,
    # patch-embed conv bias at patch rows; padded rows stay exactly zero.
    add = jnp.zeros((1, Npad, D), jnp.float32)
    add = add.at[:, :N, :].set(params["pos_embed"])
    add = add.at[:, 0, :].add(params["cls_token"][0])
    add = add.at[:, 1:N, :].add(params["pe_b"][None, None, :])

    # Expansion matrix turning the (1,C) SE gate into a per-patch-column scale.
    expand = jnp.repeat(jnp.eye(C, dtype=jnp.float32), p * p, axis=1)   # (C, C*p*p)

    # --- kernel 1: fused SE + gating + patch embed + cls/pos ---
    tokens = embed_tokens(pat_se, pat_pe, add, params, expand)          # (B, Npad, D)

    # --- kernel 2: all transformer blocks + final LayerNorm ---
    out = vit_stack(tokens, params, num_heads=cfg["num_heads"], n_valid=N)

    return out[:, 0]                             # cls-token features (B, D)


if __name__ == "__main__":
    cfg = dict(img_size=16, patch_size=2, in_c=3, embed_dim=128,
               depth=2, num_heads=4, mlp_ratio=4.0)
    key = jax.random.PRNGKey(0)
    kx, kp = jax.random.split(key)
    x = jax.random.normal(kx, (2, cfg["in_c"], cfg["img_size"], cfg["img_size"]),
                          jnp.float32)
    params = init_params(kp, cfg)

    fwd = jax.jit(functools.partial(se_vit_forward, cfg=cfg))
    out = jax.block_until_ready(fwd(x, params))
    assert out.shape == (2, cfg["embed_dim"]) and bool(jnp.all(jnp.isfinite(out)))
    print("KERNEL_OK")
</pallas_src>

<mosaic_0001>
module attributes {stable_mosaic.version = 11 : i64} {
  func.func @_vit_stack_kernel(%arg0: i32, %arg1: i32, %arg2: memref<1x128x128xf32, #tpu.memory_space<vmem>>, %arg3: memref<1x1x128xf32, #tpu.memory_space<vmem>>, %arg4: memref<1x1x128xf32, #tpu.memory_space<vmem>>, %arg5: memref<1x128x384xf32, #tpu.memory_space<vmem>>, %arg6: memref<1x1x384xf32, #tpu.memory_space<vmem>>, %arg7: memref<1x128x128xf32, #tpu.memory_space<vmem>>, %arg8: memref<1x1x128xf32, #tpu.memory_space<vmem>>, %arg9: memref<1x1x128xf32, #tpu.memory_space<vmem>>, %arg10: memref<1x1x128xf32, #tpu.memory_space<vmem>>, %arg11: memref<1x128x512xf32, #tpu.memory_space<vmem>>, %arg12: memref<1x1x512xf32, #tpu.memory_space<vmem>>, %arg13: memref<1x512x128xf32, #tpu.memory_space<vmem>>, %arg14: memref<1x1x128xf32, #tpu.memory_space<vmem>>, %arg15: memref<1x128xf32, #tpu.memory_space<vmem>>, %arg16: memref<1x128xf32, #tpu.memory_space<vmem>>, %arg17: memref<1x128x128xf32, #tpu.memory_space<vmem>>, %arg18: memref<128x128xf32, #tpu.memory_space<vmem>>) attributes {dimension_semantics = [#tpu.dimension_semantics<parallel>, #tpu.dimension_semantics<arbitrary>], iteration_bounds = array<i64: 2, 2>, scalar_prefetch = 0 : i64, scratch_operands = 1 : i64, tpu.core_type = #tpu.core_type<tc>, window_params = [{transform_indices = @transform_0, window_bounds = array<i64: 1, 128, 128>}, {transform_indices = @transform_1, window_bounds = array<i64: 1, 1, 128>}, {transform_indices = @transform_2, window_bounds = array<i64: 1, 1, 128>}, {transform_indices = @transform_3, window_bounds = array<i64: 1, 128, 384>}, {transform_indices = @transform_4, window_bounds = array<i64: 1, 1, 384>}, {transform_indices = @transform_5, window_bounds = array<i64: 1, 128, 128>}, {transform_indices = @transform_6, window_bounds = array<i64: 1, 1, 128>}, {transform_indices = @transform_7, window_bounds = array<i64: 1, 1, 128>}, {transform_indices = @transform_8, window_bounds = array<i64: 1, 1, 128>}, {transform_indices = @transform_9, window_bounds = array<i64: 1, 128, 512>}, {transform_indices = @transform_10, window_bounds = array<i64: 1, 1, 512>}, {transform_indices = @transform_11, window_bounds = array<i64: 1, 512, 128>}, {transform_indices = @transform_12, window_bounds = array<i64: 1, 1, 128>}, {pipeline_mode = #tpu.pipeline_mode<synchronous>, transform_indices = @transform_13, window_bounds = array<i64: 1, 128>}, {pipeline_mode = #tpu.pipeline_mode<synchronous>, transform_indices = @transform_14, window_bounds = array<i64: 1, 128>}, {transform_indices = @transform_15, window_bounds = array<i64: 1, 128, 128>}]} {
    %c0_i32 = arith.constant 0 : i32
    %0 = arith.cmpi eq, %arg1, %c0_i32 : i32
    %1 = arith.extui %0 : i1 to i32
    %c0_i32_0 = arith.constant 0 : i32
    %2 = arith.cmpi ne, %1, %c0_i32_0 : i32
    scf.if %2 {
      %c0_64 = arith.constant 0 : index
      %c0_65 = arith.constant 0 : index
      %c0_66 = arith.constant 0 : index
      %130 = vector.load %arg2[%c0_64, %c0_65, %c0_66] : memref<1x128x128xf32, #tpu.memory_space<vmem>>, vector<1x128x128xf32>
      %131 = vector.shape_cast %130 : vector<1x128x128xf32> to vector<128x128xf32>
      %c0_67 = arith.constant 0 : index
      %c0_68 = arith.constant 0 : index
      %132 = vector.load %arg18[%c0_67, %c0_68] : memref<128x128xf32, #tpu.memory_space<vmem>>, vector<128x128xf32>
      tpu.vector_store %arg18[%c0_67, %c0_68], %131 {strides = array<i32>} : memref<128x128xf32, #tpu.memory_space<vmem>>, vector<128x128xf32>,
    } else {
    }
    %c0 = arith.constant 0 : index
    %c0_1 = arith.constant 0 : index
    %3 = vector.load %arg18[%c0, %c0_1] : memref<128x128xf32, #tpu.memory_space<vmem>>, vector<128x128xf32>
    %c0_2 = arith.constant 0 : index
    %c0_3 = arith.constant 0 : index
    %c0_4 = arith.constant 0 : index
    %4 = vector.load %arg3[%c0_2, %c0_3, %c0_4] : memref<1x1x128xf32, #tpu.memory_space<vmem>>, vector<1x1x128xf32>
    %5 = vector.shape_cast %4 : vector<1x1x128xf32> to vector<1x128xf32>
    %c0_5 = arith.constant 0 : index
    %c0_6 = arith.constant 0 : index
    %c0_7 = arith.constant 0 : index
    %6 = vector.load %arg4[%c0_5, %c0_6, %c0_7] : memref<1x1x128xf32, #tpu.memory_space<vmem>>, vector<1x1x128xf32>
    %7 = vector.shape_cast %6 : vector<1x1x128xf32> to vector<1x128xf32>
    %cst = arith.constant dense<0.000000e+00> : vector<128xf32>
    %8 = vector.multi_reduction <add>, %3, %cst [1] : vector<128x128xf32> to vector<128xf32>
    %9 = vector.shape_cast %8 : vector<128xf32> to vector<128x1xf32>
    %cst_8 = arith.constant 1.280000e+02 : f32
    %10 = vector.broadcast %cst_8 : f32 to vector<128x1xf32>
    %11 = arith.divf %9, %10 : vector<128x1xf32>
    %12 = vector.broadcast %11 : vector<128x1xf32> to vector<128x128xf32>
    %13 = arith.subf %3, %12 : vector<128x128xf32>
    %14 = arith.mulf %13, %13 : vector<128x128xf32>
    %cst_9 = arith.constant dense<0.000000e+00> : vector<128xf32>
    %15 = vector.multi_reduction <add>, %14, %cst_9 [1] : vector<128x128xf32> to vector<128xf32>
    %16 = vector.shape_cast %15 : vector<128xf32> to vector<128x1xf32>
    %cst_10 = arith.constant 1.280000e+02 : f32
    %17 = vector.broadcast %cst_10 : f32 to vector<128x1xf32>
    %18 = arith.divf %16, %17 : vector<128x1xf32>
    %19 = vector.broadcast %11 : vector<128x1xf32> to vector<128x128xf32>
    %20 = arith.subf %3, %19 : vector<128x128xf32>
    %cst_11 = arith.constant 9.99999997E-7 : f32
    %21 = vector.broadcast %cst_11 : f32 to vector<128x1xf32>
    %22 = arith.addf %18, %21 : vector<128x1xf32>
    %23 = math.rsqrt %22 : vector<128x1xf32>
    %24 = vector.broadcast %23 : vector<128x1xf32> to vector<128x128xf32>
    %25 = arith.mulf %20, %24 : vector<128x128xf32>
    %26 = vector.broadcast %5 : vector<1x128xf32> to vector<128x128xf32>
    %27 = arith.mulf %25, %26 : vector<128x128xf32>
    %28 = vector.broadcast %7 : vector<1x128xf32> to vector<128x128xf32>
    %29 = arith.addf %27, %28 : vector<128x128xf32>
    %c0_12 = arith.constant 0 : index
    %c0_13 = arith.constant 0 : index
    %c0_14 = arith.constant 0 : index
    %30 = vector.load %arg5[%c0_12, %c0_13, %c0_14] : memref<1x128x384xf32, #tpu.memory_space<vmem>>, vector<1x128x384xf32>
    %31 = vector.shape_cast %30 : vector<1x128x384xf32> to vector<128x384xf32>
    %cst_15 = arith.constant dense<0.000000e+00> : vector<128x384xf32>
    %32 = tpu.matmul %29, %31, %cst_15 {dimension_numbers = #tpu.dot_dimension_numbers<[1], [0], [0], [1], [0, 0, 1, 1], [], []>} : vector<128x128xf32>, vector<128x384xf32>, vector<128x384xf32> -> vector<128x384xf32>
    %c0_16 = arith.constant 0 : index
    %c0_17 = arith.constant 0 : index
    %c0_18 = arith.constant 0 : index
    %33 = vector.load %arg6[%c0_16, %c0_17, %c0_18] : memref<1x1x384xf32, #tpu.memory_space<vmem>>, vector<1x1x384xf32>
    %34 = vector.shape_cast %33 : vector<1x1x384xf32> to vector<1x384xf32>
    %35 = vector.broadcast %34 : vector<1x384xf32> to vector<128x384xf32>
    %36 = arith.addf %32, %35 : vector<128x384xf32>
    %37 = tpu.transpose %36, [1, 0] : vector<128x384xf32> -> vector<384x128xf32>
    %38 = vector.extract_strided_slice %37 {offsets = [0, 0], sizes = [128, 128], strides = [1, 1]} : vector<384x128xf32> to vector<128x128xf32>
    %39 = vector.shape_cast %38 : vector<128x128xf32> to vector<4x32x128xf32>
    %40 = vector.extract_strided_slice %37 {offsets = [128, 0], sizes = [128, 128], strides = [1, 1]} : vector<384x128xf32> to vector<128x128xf32>
    %41 = vector.shape_cast %40 : vector<128x128xf32> to vector<4x32x128xf32>
    %42 = vector.extract_strided_slice %37 {offsets = [256, 0], sizes = [128, 128], strides = [1, 1]} : vector<384x128xf32> to vector<128x128xf32>
    %43 = vector.shape_cast %42 : vector<128x128xf32> to vector<4x32x128xf32>
    %cst_19 = arith.constant dense<0.000000e+00> : vector<4x128x128xf32>
    %44 = tpu.matmul %39, %41, %cst_19 {dimension_numbers = #tpu.dot_dimension_numbers<[1], [1], [2], [2], [0, 0, 0, 2, 1, 2], [0], [0]>} : vector<4x32x128xf32>, vector<4x32x128xf32>, vector<4x128x128xf32> -> vector<4x128x128xf32>
    %cst_20 = arith.constant 0.176776692 : f32
    %45 = vector.broadcast %cst_20 : f32 to vector<4x128x128xf32>
    %46 = arith.mulf %44, %45 : vector<4x128x128xf32>
    %47 = tpu.iota {dimensions = array<i32: 2>} : vector<4x128x128xi32>
    %c65_i32 = arith.constant 65 : i32
    %48 = vector.broadcast %c65_i32 : i32 to vector<4x128x128xi32>
    %49 = arith.cmpi slt, %47, %48 : vector<4x128x128xi32>
    %cst_21 = arith.constant -1.000000e+30 : f32
    %50 = vector.broadcast %cst_21 : f32 to vector<4x128x128xf32>
    %51 = arith.select %49, %46, %50 : vector<4x128x128xi1>, vector<4x128x128xf32>
    %cst_22 = arith.constant dense<0xFF800000> : vector<4x128xf32>
    %52 = vector.multi_reduction <maximumf>, %51, %cst_22 [2] : vector<4x128x128xf32> to vector<4x128xf32>
    %53 = vector.shape_cast %52 : vector<4x128xf32> to vector<4x128x1xf32>
    %54 = vector.broadcast %53 : vector<4x128x1xf32> to vector<4x128x128xf32>
    %55 = arith.subf %51, %54 : vector<4x128x128xf32>
    %56 = math.exp %55 : vector<4x128x128xf32>
    %cst_23 = arith.constant dense<0.000000e+00> : vector<4x128xf32>
    %57 = vector.multi_reduction <add>, %56, %cst_23 [2] : vector<4x128x128xf32> to vector<4x128xf32>
    %58 = vector.shape_cast %57 : vector<4x128xf32> to vector<4x128x1xf32>
    %59 = tpu.reciprocal %58 {approx = true} : vector<4x128x1xf32> -> vector<4x128x1xf32>
    %60 = vector.broadcast %59 : vector<4x128x1xf32> to vector<4x128x128xf32>
    %61 = arith.mulf %56, %60 : vector<4x128x128xf32>
    %cst_24 = arith.constant dense<0.000000e+00> : vector<4x32x128xf32>
    %62 = tpu.matmul %43, %61, %cst_24 {dimension_numbers = #tpu.dot_dimension_numbers<[2], [2], [1], [1], [0, 0, 0, 1, 1, 1], [0], [0]>} : vector<4x32x128xf32>, vector<4x128x128xf32>, vector<4x32x128xf32> -> vector<4x32x128xf32>
    %63 = vector.shape_cast %62 : vector<4x32x128xf32> to vector<128x128xf32>
    %c0_25 = arith.constant 0 : index
    %c0_26 = arith.constant 0 : index
    %c0_27 = arith.constant 0 : index
    %64 = vector.load %arg7[%c0_25, %c0_26, %c0_27] : memref<1x128x128xf32, #tpu.memory_space<vmem>>, vector<1x128x128xf32>
    %65 = vector.shape_cast %64 : vector<1x128x128xf32> to vector<128x128xf32>
    %cst_28 = arith.constant dense<0.000000e+00> : vector<128x128xf32>
    %66 = tpu.matmul %63, %65, %cst_28 {dimension_numbers = #tpu.dot_dimension_numbers<[0], [0], [1], [1], [0, 1, 1, 1], [], []>} : vector<128x128xf32>, vector<128x128xf32>, vector<128x128xf32> -> vector<128x128xf32>
    %c0_29 = arith.constant 0 : index
    %c0_30 = arith.constant 0 : index
    %c0_31 = arith.constant 0 : index
    %67 = vector.load %arg8[%c0_29, %c0_30, %c0_31] : memref<1x1x128xf32, #tpu.memory_space<vmem>>, vector<1x1x128xf32>
    %68 = vector.shape_cast %67 : vector<1x1x128xf32> to vector<1x128xf32>
    %69 = vector.broadcast %68 : vector<1x128xf32> to vector<128x128xf32>
    %70 = arith.addf %66, %69 : vector<128x128xf32>
    %71 = arith.addf %3, %70 : vector<128x128xf32>
    %c0_32 = arith.constant 0 : index
    %c0_33 = arith.constant 0 : index
    %c0_34 = arith.constant 0 : index
    %72 = vector.load %arg9[%c0_32, %c0_33, %c0_34] : memref<1x1x128xf32, #tpu.memory_space<vmem>>, vector<1x1x128xf32>
    %73 = vector.shape_cast %72 : vector<1x1x128xf32> to vector<1x128xf32>
    %c0_35 = arith.constant 0 : index
    %c0_36 = arith.constant 0 : index
    %c0_37 = arith.constant 0 : index
    %74 = vector.load %arg10[%c0_35, %c0_36, %c0_37] : memref<1x1x128xf32, #tpu.memory_space<vmem>>, vector<1x1x128xf32>
    %75 = vector.shape_cast %74 : vector<1x1x128xf32> to vector<1x128xf32>
    %cst_38 = arith.constant dense<0.000000e+00> : vector<128xf32>
    %76 = vector.multi_reduction <add>, %71, %cst_38 [1] : vector<128x128xf32> to vector<128xf32>
    %77 = vector.shape_cast %76 : vector<128xf32> to vector<128x1xf32>
    %cst_39 = arith.constant 1.280000e+02 : f32
    %78 = vector.broadcast %cst_39 : f32 to vector<128x1xf32>
    %79 = arith.divf %77, %78 : vector<128x1xf32>
    %80 = vector.broadcast %79 : vector<128x1xf32> to vector<128x128xf32>
    %81 = arith.subf %71, %80 : vector<128x128xf32>
    %82 = arith.mulf %81, %81 : vector<128x128xf32>
    %cst_40 = arith.constant dense<0.000000e+00> : vector<128xf32>
    %83 = vector.multi_reduction <add>, %82, %cst_40 [1] : vector<128x128xf32> to vector<128xf32>
    %84 = vector.shape_cast %83 : vector<128xf32> to vector<128x1xf32>
    %cst_41 = arith.constant 1.280000e+02 : f32
    %85 = vector.broadcast %cst_41 : f32 to vector<128x1xf32>
    %86 = arith.divf %84, %85 : vector<128x1xf32>
    %87 = vector.broadcast %79 : vector<128x1xf32> to vector<128x128xf32>
    %88 = arith.subf %71, %87 : vector<128x128xf32>
    %cst_42 = arith.constant 9.99999997E-7 : f32
    %89 = vector.broadcast %cst_42 : f32 to vector<128x1xf32>
    %90 = arith.addf %86, %89 : vector<128x1xf32>
    %91 = math.rsqrt %90 : vector<128x1xf32>
    %92 = vector.broadcast %91 : vector<128x1xf32> to vector<128x128xf32>
    %93 = arith.mulf %88, %92 : vector<128x128xf32>
    %94 = vector.broadcast %73 : vector<1x128xf32> to vector<128x128xf32>
    %95 = arith.mulf %93, %94 : vector<128x128xf32>
    %96 = vector.broadcast %75 : vector<1x128xf32> to vector<128x128xf32>
    %97 = arith.addf %95, %96 : vector<128x128xf32>
    %c0_43 = arith.constant 0 : index
    %c0_44 = arith.constant 0 : index
    %c0_45 = arith.constant 0 : index
    %98 = vector.load %arg11[%c0_43, %c0_44, %c0_45] : memref<1x128x512xf32, #tpu.memory_space<vmem>>, vector<1x128x512xf32>
    %99 = vector.shape_cast %98 : vector<1x128x512xf32> to vector<128x512xf32>
    %cst_46 = arith.constant dense<0.000000e+00> : vector<128x512xf32>
    %100 = tpu.matmul %97, %99, %cst_46 {dimension_numbers = #tpu.dot_dimension_numbers<[1], [0], [0], [1], [0, 0, 1, 1], [], []>} : vector<128x128xf32>, vector<128x512xf32>, vector<128x512xf32> -> vector<128x512xf32>
    %c0_47 = arith.constant 0 : index
    %c0_48 = arith.constant 0 : index
    %c0_49 = arith.constant 0 : index
    %101 = vector.load %arg12[%c0_47, %c0_48, %c0_49] : memref<1x1x512xf32, #tpu.memory_space<vmem>>, vector<1x1x512xf32>
    %102 = vector.shape_cast %101 : vector<1x1x512xf32> to vector<1x512xf32>
    %103 = vector.broadcast %102 : vector<1x512xf32> to vector<128x512xf32>
    %104 = arith.addf %100, %103 : vector<128x512xf32>
    %105 = arith.mulf %104, %104 : vector<128x512xf32>
    %106 = arith.mulf %104, %105 : vector<128x512xf32>
    %cst_50 = arith.constant 4.471500e-02 : f32
    %107 = vector.broadcast %cst_50 : f32 to vector<128x512xf32>
    %108 = arith.mulf %107, %106 : vector<128x512xf32>
    %109 = arith.addf %104, %108 : vector<128x512xf32>
    %cst_51 = arith.constant 0.797884583 : f32
    %110 = vector.broadcast %cst_51 : f32 to vector<128x512xf32>
    %111 = arith.mulf %110, %109 : vector<128x512xf32>
    %112 = math.tanh %111 : vector<128x512xf32>
    %cst_52 = arith.constant 1.000000e+00 : f32
    %113 = vector.broadcast %cst_52 : f32 to vector<128x512xf32>
    %114 = arith.addf %113, %112 : vector<128x512xf32>
    %cst_53 = arith.constant 5.000000e-01 : f32
    %115 = vector.broadcast %cst_53 : f32 to vector<128x512xf32>
    %116 = arith.mulf %115, %114 : vector<128x512xf32>
    %117 = arith.mulf %104, %116 : vector<128x512xf32>
    %c0_54 = arith.constant 0 : index
    %c0_55 = arith.constant 0 : index
    %c0_56 = arith.constant 0 : index
    %118 = vector.load %arg13[%c0_54, %c0_55, %c0_56] : memref<1x512x128xf32, #tpu.memory_space<vmem>>, vector<1x512x128xf32>
    %119 = vector.shape_cast %118 : vector<1x512x128xf32> to vector<512x128xf32>
    %cst_57 = arith.constant dense<0.000000e+00> : vector<128x128xf32>
    %120 = tpu.matmul %117, %119, %cst_57 {dimension_numbers = #tpu.dot_dimension_numbers<[1], [0], [0], [1], [0, 0, 1, 1], [], []>} : vector<128x512xf32>, vector<512x128xf32>, vector<128x128xf32> -> vector<128x128xf32>
    %c0_58 = arith.constant 0 : index
    %c0_59 = arith.constant 0 : index
    %c0_60 = arith.constant 0 : index
    %121 = vector.load %arg14[%c0_58, %c0_59, %c0_60] : memref<1x1x128xf32, #tpu.memory_space<vmem>>, vector<1x1x128xf32>
    %122 = vector.shape_cast %121 : vector<1x1x128xf32> to vector<1x128xf32>
    %123 = vector.broadcast %122 : vector<1x128xf32> to vector<128x128xf32>
    %124 = arith.addf %120, %123 : vector<128x128xf32>
    %125 = arith.addf %71, %124 : vector<128x128xf32>
    %c0_61 = arith.constant 0 : index
    %c0_62 = arith.constant 0 : index
    %126 = vector.load %arg18[%c0_61, %c0_62] : memref<128x128xf32, #tpu.memory_space<vmem>>, vector<128x128xf32>
    tpu.vector_store %arg18[%c0_61, %c0_62], %125 {strides = array<i32>} : memref<128x128xf32, #tpu.memory_space<vmem>>, vector<128x128xf32>,
    %c1_i32 = arith.constant 1 : i32
    %127 = arith.cmpi eq, %arg1, %c1_i32 : i32
    %128 = arith.extui %127 : i1 to i32
    %c0_i32_63 = arith.constant 0 : i32
    %129 = arith.cmpi ne, %128, %c0_i32_63 : i32
    scf.if %129 {
      %c0_64 = arith.constant 0 : index
      %c0_65 = arith.constant 0 : index
      %130 = vector.load %arg15[%c0_64, %c0_65] : memref<1x128xf32, #tpu.memory_space<vmem>>, vector<1x128xf32>
      %c0_66 = arith.constant 0 : index
      %c0_67 = arith.constant 0 : index
      %131 = vector.load %arg16[%c0_66, %c0_67] : memref<1x128xf32, #tpu.memory_space<vmem>>, vector<1x128xf32>
      %cst_68 = arith.constant dense<0.000000e+00> : vector<128xf32>
      %132 = vector.multi_reduction <add>, %125, %cst_68 [1] : vector<128x128xf32> to vector<128xf32>
      %133 = vector.shape_cast %132 : vector<128xf32> to vector<128x1xf32>
      %cst_69 = arith.constant 1.280000e+02 : f32
      %134 = vector.broadcast %cst_69 : f32 to vector<128x1xf32>
      %135 = arith.divf %133, %134 : vector<128x1xf32>
      %136 = vector.broadcast %135 : vector<128x1xf32> to vector<128x128xf32>
      %137 = arith.subf %125, %136 : vector<128x128xf32>
      %138 = arith.mulf %137, %137 : vector<128x128xf32>
      %cst_70 = arith.constant dense<0.000000e+00> : vector<128xf32>
      %139 = vector.multi_reduction <add>, %138, %cst_70 [1] : vector<128x128xf32> to vector<128xf32>
      %140 = vector.shape_cast %139 : vector<128xf32> to vector<128x1xf32>
      %cst_71 = arith.constant 1.280000e+02 : f32
      %141 = vector.broadcast %cst_71 : f32 to vector<128x1xf32>
      %142 = arith.divf %140, %141 : vector<128x1xf32>
      %143 = vector.broadcast %135 : vector<128x1xf32> to vector<128x128xf32>
      %144 = arith.subf %125, %143 : vector<128x128xf32>
      %cst_72 = arith.constant 9.99999997E-7 : f32
      %145 = vector.broadcast %cst_72 : f32 to vector<128x1xf32>
      %146 = arith.addf %142, %145 : vector<128x1xf32>
      %147 = math.rsqrt %146 : vector<128x1xf32>
      %148 = vector.broadcast %147 : vector<128x1xf32> to vector<128x128xf32>
      %149 = arith.mulf %144, %148 : vector<128x128xf32>
      %150 = vector.broadcast %130 : vector<1x128xf32> to vector<128x128xf32>
      %151 = arith.mulf %149, %150 : vector<128x128xf32>
      %152 = vector.broadcast %131 : vector<1x128xf32> to vector<128x128xf32>
      %153 = arith.addf %151, %152 : vector<128x128xf32>
      %c0_73 = arith.constant 0 : index
      %c0_74 = arith.constant 0 : index
      %c0_75 = arith.constant 0 : index
      %154 = vector.load %arg17[%c0_73, %c0_74, %c0_75] : memref<1x128x128xf32, #tpu.memory_space<vmem>>, vector<1x128x128xf32>
      %155 = vector.shape_cast %154 : vector<1x128x128xf32> to vector<128x128xf32>
      %156 = vector.shape_cast %153 : vector<128x128xf32> to vector<1x128x128xf32>
      tpu.vector_store %arg17[%c0_73, %c0_74, %c0_75], %156 {strides = array<i32>} : memref<1x128x128xf32, #tpu.memory_space<vmem>>, vector<1x128x128xf32>,
    } else {
    }
    return
  }
  func.func @transform_0(%arg0: i32, %arg1: i32) -> (i32, i32, i32) {
    %c0_i32 = arith.constant 0 : i32
    %c0_i32_0 = arith.constant 0 : i32
    %c0_i32_1 = arith.constant 0 : i32
    return %arg0, %c0_i32, %c0_i32_0 : i32, i32, i32
  }
  func.func @transform_1(%arg0: i32, %arg1: i32) -> (i32, i32, i32) {
    %c0_i32 = arith.constant 0 : i32
    %c0_i32_0 = arith.constant 0 : i32
    %c0_i32_1 = arith.constant 0 : i32
    return %arg1, %c0_i32, %c0_i32_0 : i32, i32, i32
  }
  func.func @transform_2(%arg0: i32, %arg1: i32) -> (i32, i32, i32) {
    %c0_i32 = arith.constant 0 : i32
    %c0_i32_0 = arith.constant 0 : i32
    %c0_i32_1 = arith.constant 0 : i32
    return %arg1, %c0_i32, %c0_i32_0 : i32, i32, i32
  }
  func.func @transform_3(%arg0: i32, %arg1: i32) -> (i32, i32, i32) {
    %c0_i32 = arith.constant 0 : i32
    %c0_i32_0 = arith.constant 0 : i32
    %c0_i32_1 = arith.constant 0 : i32
    return %arg1, %c0_i32, %c0_i32_0 : i32, i32, i32
  }
  func.func @transform_4(%arg0: i32, %arg1: i32) -> (i32, i32, i32) {
    %c0_i32 = arith.constant 0 : i32
    %c0_i32_0 = arith.constant 0 : i32
    %c0_i32_1 = arith.constant 0 : i32
    return %arg1, %c0_i32, %c0_i32_0 : i32, i32, i32
  }
  func.func @transform_5(%arg0: i32, %arg1: i32) -> (i32, i32, i32) {
    %c0_i32 = arith.constant 0 : i32
    %c0_i32_0 = arith.constant 0 : i32
    %c0_i32_1 = arith.constant 0 : i32
    return %arg1, %c0_i32, %c0_i32_0 : i32, i32, i32
  }
  func.func @transform_6(%arg0: i32, %arg1: i32) -> (i32, i32, i32) {
    %c0_i32 = arith.constant 0 : i32
    %c0_i32_0 = arith.constant 0 : i32
    %c0_i32_1 = arith.constant 0 : i32
    return %arg1, %c0_i32, %c0_i32_0 : i32, i32, i32
  }
  func.func @transform_7(%arg0: i32, %arg1: i32) -> (i32, i32, i32) {
    %c0_i32 = arith.constant 0 : i32
    %c0_i32_0 = arith.constant 0 : i32
    %c0_i32_1 = arith.constant 0 : i32
    return %arg1, %c0_i32, %c0_i32_0 : i32, i32, i32
  }
  func.func @transform_8(%arg0: i32, %arg1: i32) -> (i32, i32, i32) {
    %c0_i32 = arith.constant 0 : i32
    %c0_i32_0 = arith.constant 0 : i32
    %c0_i32_1 = arith.constant 0 : i32
    return %arg1, %c0_i32, %c0_i32_0 : i32, i32, i32
  }
  func.func @transform_9(%arg0: i32, %arg1: i32) -> (i32, i32, i32) {
    %c0_i32 = arith.constant 0 : i32
    %c0_i32_0 = arith.constant 0 : i32
    %c0_i32_1 = arith.constant 0 : i32
    return %arg1, %c0_i32, %c0_i32_0 : i32, i32, i32
  }
  func.func @transform_10(%arg0: i32, %arg1: i32) -> (i32, i32, i32) {
    %c0_i32 = arith.constant 0 : i32
    %c0_i32_0 = arith.constant 0 : i32
    %c0_i32_1 = arith.constant 0 : i32
    return %arg1, %c0_i32, %c0_i32_0 : i32, i32, i32
  }
  func.func @transform_11(%arg0: i32, %arg1: i32) -> (i32, i32, i32) {
    %c0_i32 = arith.constant 0 : i32
    %c0_i32_0 = arith.constant 0 : i32
    %c0_i32_1 = arith.constant 0 : i32
    return %arg1, %c0_i32, %c0_i32_0 : i32, i32, i32
  }
  func.func @transform_12(%arg0: i32, %arg1: i32) -> (i32, i32, i32) {
    %c0_i32 = arith.constant 0 : i32
    %c0_i32_0 = arith.constant 0 : i32
    %c0_i32_1 = arith.constant 0 : i32
    return %arg1, %c0_i32, %c0_i32_0 : i32, i32, i32
  }
  func.func @transform_13(%arg0: i32, %arg1: i32) -> (i32, i32) {
    %c0_i32 = arith.constant 0 : i32
    %c0_i32_0 = arith.constant 0 : i32
    %c0_i32_1 = arith.constant 0 : i32
    return %c0_i32, %c0_i32_0 : i32, i32
  }
  func.func @transform_14(%arg0: i32, %arg1: i32) -> (i32, i32) {
    %c0_i32 = arith.constant 0 : i32
    %c0_i32_0 = arith.constant 0 : i32
    %c0_i32_1 = arith.constant 0 : i32
    return %c0_i32, %c0_i32_0 : i32, i32
  }
  func.func @transform_15(%arg0: i32, %arg1: i32) -> (i32, i32, i32) {
    %c0_i32 = arith.constant 0 : i32
    %c0_i32_0 = arith.constant 0 : i32
    %c0_i32_1 = arith.constant 0 : i32
    return %arg0, %c0_i32, %c0_i32_0 : i32, i32, i32
  }
}

module attributes {stable_mosaic.version = 11 : i64} {
  func.func @_embed_kernel(%arg0: i32, %arg1: memref<1x224x27xf32, #tpu.memory_space<vmem>>, %arg2: memref<1x128x12xf32, #tpu.memory_space<vmem>>, %arg3: memref<1x128x128xf32, #tpu.memory_space<vmem>>, %arg4: memref<27x12xf32, #tpu.memory_space<vmem>>, %arg5: memref<1x12xf32, #tpu.memory_space<vmem>>, %arg6: memref<12x6xf32, #tpu.memory_space<vmem>>, %arg7: memref<1x6xf32, #tpu.memory_space<vmem>>, %arg8: memref<6x3xf32, #tpu.memory_space<vmem>>, %arg9: memref<1x3xf32, #tpu.memory_space<vmem>>, %arg10: memref<3x12xf32, #tpu.memory_space<vmem>>, %arg11: memref<12x128xf32, #tpu.memory_space<vmem>>, %arg12: memref<1x128x128xf32, #tpu.memory_space<vmem>>) attributes {dimension_semantics = [#tpu.dimension_semantics<parallel>], iteration_bounds = array<i64: 2>, scalar_prefetch = 0 : i64, scratch_operands = 0 : i64, tpu.core_type = #tpu.core_type<tc>, window_params = [{transform_indices = @transform_0, window_bounds = array<i64: 1, 224, 27>}, {transform_indices = @transform_1, window_bounds = array<i64: 1, 128, 12>}, {pipeline_mode = #tpu.pipeline_mode<synchronous>, transform_indices = @transform_2, window_bounds = array<i64: 1, 128, 128>}, {pipeline_mode = #tpu.pipeline_mode<synchronous>, transform_indices = @transform_3, window_bounds = array<i64: 27, 12>}, {pipeline_mode = #tpu.pipeline_mode<synchronous>, transform_indices = @transform_4, window_bounds = array<i64: 1, 12>}, {pipeline_mode = #tpu.pipeline_mode<synchronous>, transform_indices = @transform_5, window_bounds = array<i64: 12, 6>}, {pipeline_mode = #tpu.pipeline_mode<synchronous>, transform_indices = @transform_6, window_bounds = array<i64: 1, 6>}, {pipeline_mode = #tpu.pipeline_mode<synchronous>, transform_indices = @transform_7, window_bounds = array<i64: 6, 3>}, {pipeline_mode = #tpu.pipeline_mode<synchronous>, transform_indices = @transform_8, window_bounds = array<i64: 1, 3>}, {pipeline_mode = #tpu.pipeline_mode<synchronous>, transform_indices = @transform_9, window_bounds = array<i64: 3, 12>}, {pipeline_mode = #tpu.pipeline_mode<synchronous>, transform_indices = @transform_10, window_bounds = array<i64: 12, 128>}, {transform_indices = @transform_11, window_bounds = array<i64: 1, 128, 128>}]} {
    %c0 = arith.constant 0 : index
    %c0_0 = arith.constant 0 : index
    %c0_1 = arith.constant 0 : index
    %0 = vector.load %arg1[%c0, %c0_0, %c0_1] : memref<1x224x27xf32, #tpu.memory_space<vmem>>, vector<1x224x27xf32>
    %1 = vector.shape_cast %0 : vector<1x224x27xf32> to vector<224x27xf32>
    %c0_2 = arith.constant 0 : index
    %c0_3 = arith.constant 0 : index
    %2 = vector.load %arg4[%c0_2, %c0_3] : memref<27x12xf32, #tpu.memory_space<vmem>>, vector<27x12xf32>
    %cst = arith.constant dense<0.000000e+00> : vector<224x12xf32>
    %3 = tpu.matmul %1, %2, %cst {dimension_numbers = #tpu.dot_dimension_numbers<[1], [0], [0], [1], [0, 0, 1, 1], [], []>} : vector<224x27xf32>, vector<27x12xf32>, vector<224x12xf32> -> vector<224x12xf32>
    %c0_4 = arith.constant 0 : index
    %c0_5 = arith.constant 0 : index
    %4 = vector.load %arg5[%c0_4, %c0_5] : memref<1x12xf32, #tpu.memory_space<vmem>>, vector<1x12xf32>
    %5 = vector.broadcast %4 : vector<1x12xf32> to vector<224x12xf32>
    %6 = arith.addf %3, %5 : vector<224x12xf32>
    %cst_6 = arith.constant dense<0.000000e+00> : vector<12xf32>
    %7 = vector.multi_reduction <add>, %6, %cst_6 [0] : vector<224x12xf32> to vector<12xf32>
    %8 = vector.shape_cast %7 : vector<12xf32> to vector<1x12xf32>
    %cst_7 = arith.constant 2.240000e+02 : f32
    %9 = vector.broadcast %cst_7 : f32 to vector<1x12xf32>
    %10 = arith.divf %8, %9 : vector<1x12xf32>
    %c0_8 = arith.constant 0 : index
    %c0_9 = arith.constant 0 : index
    %11 = vector.load %arg6[%c0_8, %c0_9] : memref<12x6xf32, #tpu.memory_space<vmem>>, vector<12x6xf32>
    %cst_10 = arith.constant dense<0.000000e+00> : vector<1x6xf32>
    %12 = tpu.matmul %10, %11, %cst_10 {dimension_numbers = #tpu.dot_dimension_numbers<[1], [0], [0], [1], [0, 0, 1, 1], [], []>} : vector<1x12xf32>, vector<12x6xf32>, vector<1x6xf32> -> vector<1x6xf32>
    %c0_11 = arith.constant 0 : index
    %c0_12 = arith.constant 0 : index
    %13 = vector.load %arg7[%c0_11, %c0_12] : memref<1x6xf32, #tpu.memory_space<vmem>>, vector<1x6xf32>
    %14 = arith.addf %12, %13 : vector<1x6xf32>
    %cst_13 = arith.constant 0.000000e+00 : f32
    %15 = vector.broadcast %cst_13 : f32 to vector<1x6xf32>
    %16 = arith.maximumf %14, %15 : vector<1x6xf32>
    %c0_14 = arith.constant 0 : index
    %c0_15 = arith.constant 0 : index
    %17 = vector.load %arg8[%c0_14, %c0_15] : memref<6x3xf32, #tpu.memory_space<vmem>>, vector<6x3xf32>
    %cst_16 = arith.constant dense<0.000000e+00> : vector<1x3xf32>
    %18 = tpu.matmul %16, %17, %cst_16 {dimension_numbers = #tpu.dot_dimension_numbers<[1], [0], [0], [1], [0, 0, 1, 1], [], []>} : vector<1x6xf32>, vector<6x3xf32>, vector<1x3xf32> -> vector<1x3xf32>
    %c0_17 = arith.constant 0 : index
    %c0_18 = arith.constant 0 : index
    %19 = vector.load %arg9[%c0_17, %c0_18] : memref<1x3xf32, #tpu.memory_space<vmem>>, vector<1x3xf32>
    %20 = arith.addf %18, %19 : vector<1x3xf32>
    %21 = arith.negf %20 : vector<1x3xf32>
    %22 = math.exp %21 : vector<1x3xf32>
    %cst_19 = arith.constant 1.000000e+00 : f32
    %23 = vector.broadcast %cst_19 : f32 to vector<1x3xf32>
    %24 = arith.addf %23, %22 : vector<1x3xf32>
    %25 = arith.divf %23, %24 : vector<1x3xf32>
    %c0_20 = arith.constant 0 : index
    %c0_21 = arith.constant 0 : index
    %26 = vector.load %arg10[%c0_20, %c0_21] : memref<3x12xf32, #tpu.memory_space<vmem>>, vector<3x12xf32>
    %cst_22 = arith.constant dense<0.000000e+00> : vector<1x12xf32>
    %27 = tpu.matmul %25, %26, %cst_22 {dimension_numbers = #tpu.dot_dimension_numbers<[1], [0], [0], [1], [0, 0, 1, 1], [], []>} : vector<1x3xf32>, vector<3x12xf32>, vector<1x12xf32> -> vector<1x12xf32>
    %cst_23 = arith.constant 1.000000e+00 : f32
    %28 = vector.broadcast %cst_23 : f32 to vector<1x12xf32>
    %29 = arith.addf %27, %28 : vector<1x12xf32>
    %c0_24 = arith.constant 0 : index
    %c0_25 = arith.constant 0 : index
    %c0_26 = arith.constant 0 : index
    %30 = vector.load %arg2[%c0_24, %c0_25, %c0_26] : memref<1x128x12xf32, #tpu.memory_space<vmem>>, vector<1x128x12xf32>
    %31 = vector.shape_cast %30 : vector<1x128x12xf32> to vector<128x12xf32>
    %32 = vector.broadcast %29 : vector<1x12xf32> to vector<128x12xf32>
    %33 = arith.mulf %31, %32 : vector<128x12xf32>
    %c0_27 = arith.constant 0 : index
    %c0_28 = arith.constant 0 : index
    %34 = vector.load %arg11[%c0_27, %c0_28] : memref<12x128xf32, #tpu.memory_space<vmem>>, vector<12x128xf32>
    %cst_29 = arith.constant dense<0.000000e+00> : vector<128x128xf32>
    %35 = tpu.matmul %33, %34, %cst_29 {dimension_numbers = #tpu.dot_dimension_numbers<[1], [0], [0], [1], [0, 0, 1, 1], [], []>} : vector<128x12xf32>, vector<12x128xf32>, vector<128x128xf32> -> vector<128x128xf32>
    %c0_30 = arith.constant 0 : index
    %c0_31 = arith.constant 0 : index
    %c0_32 = arith.constant 0 : index
    %36 = vector.load %arg3[%c0_30, %c0_31, %c0_32] : memref<1x128x128xf32, #tpu.memory_space<vmem>>, vector<1x128x128xf32>
    %37 = vector.shape_cast %36 : vector<1x128x128xf32> to vector<128x128xf32>
    %38 = arith.addf %35, %37 : vector<128x128xf32>
    %c0_33 = arith.constant 0 : index
    %c0_34 = arith.constant 0 : index
    %c0_35 = arith.constant 0 : index
    %39 = vector.load %arg12[%c0_33, %c0_34, %c0_35] : memref<1x128x128xf32, #tpu.memory_space<vmem>>, vector<1x128x128xf32>
    %40 = vector.shape_cast %39 : vector<1x128x128xf32> to vector<128x128xf32>
    %41 = vector.shape_cast %38 : vector<128x128xf32> to vector<1x128x128xf32>
    tpu.vector_store %arg12[%c0_33, %c0_34, %c0_35], %41 {strides = array<i32>} : memref<1x128x128xf32, #tpu.memory_space<vmem>>, vector<1x128x128xf32>,
    return
  }
  func.func @transform_0(%arg0: i32) -> (i32, i32, i32) {
    %c0_i32 = arith.constant 0 : i32
    %c0_i32_0 = arith.constant 0 : i32
    %c0_i32_1 = arith.constant 0 : i32
    return %arg0, %c0_i32, %c0_i32_0 : i32, i32, i32
  }
  func.func @transform_1(%arg0: i32) -> (i32, i32, i32) {
    %c0_i32 = arith.constant 0 : i32
    %c0_i32_0 = arith.constant 0 : i32
    %c0_i32_1 = arith.constant 0 : i32
    return %arg0, %c0_i32, %c0_i32_0 : i32, i32, i32
  }
  func.func @transform_2(%arg0: i32) -> (i32, i32, i32) {
    %c0_i32 = arith.constant 0 : i32
    %c0_i32_0 = arith.constant 0 : i32
    %c0_i32_1 = arith.constant 0 : i32
    %c0_i32_2 = arith.constant 0 : i32
    return %c0_i32, %c0_i32_0, %c0_i32_1 : i32, i32, i32
  }
  func.func @transform_3(%arg0: i32) -> (i32, i32) {
    %c0_i32 = arith.constant 0 : i32
    %c0_i32_0 = arith.constant 0 : i32
    %c0_i32_1 = arith.constant 0 : i32
    return %c0_i32, %c0_i32_0 : i32, i32
  }
  func.func @transform_4(%arg0: i32) -> (i32, i32) {
    %c0_i32 = arith.constant 0 : i32
    %c0_i32_0 = arith.constant 0 : i32
    %c0_i32_1 = arith.constant 0 : i32
    return %c0_i32, %c0_i32_0 : i32, i32
  }
  func.func @transform_5(%arg0: i32) -> (i32, i32) {
    %c0_i32 = arith.constant 0 : i32
    %c0_i32_0 = arith.constant 0 : i32
    %c0_i32_1 = arith.constant 0 : i32
    return %c0_i32, %c0_i32_0 : i32, i32
  }
  func.func @transform_6(%arg0: i32) -> (i32, i32) {
    %c0_i32 = arith.constant 0 : i32
    %c0_i32_0 = arith.constant 0 : i32
    %c0_i32_1 = arith.constant 0 : i32
    return %c0_i32, %c0_i32_0 : i32, i32
  }
  func.func @transform_7(%arg0: i32) -> (i32, i32) {
    %c0_i32 = arith.constant 0 : i32
    %c0_i32_0 = arith.constant 0 : i32
    %c0_i32_1 = arith.constant 0 : i32
    return %c0_i32, %c0_i32_0 : i32, i32
  }
  func.func @transform_8(%arg0: i32) -> (i32, i32) {
    %c0_i32 = arith.constant 0 : i32
    %c0_i32_0 = arith.constant 0 : i32
    %c0_i32_1 = arith.constant 0 : i32
    return %c0_i32, %c0_i32_0 : i32, i32
  }
  func.func @transform_9(%arg0: i32) -> (i32, i32) {
    %c0_i32 = arith.constant 0 : i32
    %c0_i32_0 = arith.constant 0 : i32
    %c0_i32_1 = arith.constant 0 : i32
    return %c0_i32, %c0_i32_0 : i32, i32
  }
  func.func @transform_10(%arg0: i32) -> (i32, i32) {
    %c0_i32 = arith.constant 0 : i32
    %c0_i32_0 = arith.constant 0 : i32
    %c0_i32_1 = arith.constant 0 : i32
    return %c0_i32, %c0_i32_0 : i32, i32
  }
  func.func @transform_11(%arg0: i32) -> (i32, i32, i32) {
    %c0_i32 = arith.constant 0 : i32
    %c0_i32_0 = arith.constant 0 : i32
    %c0_i32_1 = arith.constant 0 : i32
    return %arg0, %c0_i32, %c0_i32_0 : i32, i32, i32
  }
}

</mosaic_0001>

<llo_original>
// kernel: se_vit_forward.2
$region0: #{se_vit_forward.2}
  #allocation0 [shape = 'u32[]', space=smem, size = 0x4, offset = 0x4, fixed_abs, tag = 'smem constant byte address 0x4 - core index']
  #allocation1 [shape = 'u32[144,128]{1,0:T(1,128)}', space=vmem, size = 0x12000, scoped, tag = 'internal scratch']
  %s0 = inlined_call_operand.vmem [shape: f32[2,224,27], index: 0, kind: input, shape index: {}]
  %s1 = inlined_call_operand.vmem [shape: f32[2,128,12], index: 1, kind: input, shape index: {}]
  %s2 = inlined_call_operand.vmem [shape: f32[1,128,128], index: 2, kind: input, shape index: {}]
  %s3 = inlined_call_operand.vmem [shape: f32[27,12], index: 3, kind: input, shape index: {}]
  %s4 = inlined_call_operand.vmem [shape: f32[1,12], index: 4, kind: input, shape index: {}]
  %s5 = inlined_call_operand.vmem [shape: f32[12,6], index: 5, kind: input, shape index: {}]
  %s6 = inlined_call_operand.vmem [shape: f32[1,6], index: 6, kind: input, shape index: {}]
  %s7 = inlined_call_operand.vmem [shape: f32[6,3], index: 7, kind: input, shape index: {}]
  %s8 = inlined_call_operand.vmem [shape: f32[1,3], index: 8, kind: input, shape index: {}]
  %s9 = inlined_call_operand.vmem [shape: f32[3,12], index: 9, kind: input, shape index: {}]
  %s10 = inlined_call_operand.vmem [shape: f32[12,128], index: 10, kind: input, shape index: {}]
  %s11 = inlined_call_operand.vmem [shape: f32[2,128,128], index: 11, kind: output, shape index: {}]
  %s12 = sld [smem:[#allocation0]]
  $region77: #{se_vit_forward.2} parent=0
    _
  %s14 = ssub.s32 1, %s12
  %s15 = scalar_select 0, %s14, %s12
  loop: start=0, step=1, limit=4
  $region2: #{se_vit_forward.2} parent=0 // loop_pre_header
    _
  $region3: #{se_vit_forward.2} parent=0 // loop_header
    %s17 = sphi 0, %s21
    %p18 = scmp.ge.s32.totalorder %s17, 4
    %s27 = sphi 0, %s29
    %s30 = sphi 0, %s27
    %s31 = sphi 0, %s30
    %s47 = sphi 0, %s31
    %s53 = sphi 0, %s55
    %s56 = sphi 0, %s53
    %s57 = sphi 0, %s56
    %s73 = sphi 0, %s57
    %s77 = sphi 0, %s77
    %s79 = sphi 0, %s77
    %s80 = sphi 0, %s79
    %s94 = sphi 0, %s80
    %s98 = sphi 0, %s98
    %s100 = sphi 0, %s98
    %s101 = sphi 0, %s100
    %s115 = sphi 0, %s101
    %s119 = sphi 0, %s119
    %s121 = sphi 0, %s119
    %s122 = sphi 0, %s121
    %s136 = sphi 0, %s122
    %s140 = sphi 0, %s140
    %s142 = sphi 0, %s140
    %s143 = sphi 0, %s142
    %s157 = sphi 0, %s143
    %s161 = sphi 0, %s161
    %s163 = sphi 0, %s161
    %s164 = sphi 0, %s163
    %s178 = sphi 0, %s164
    %s182 = sphi 0, %s182
    %s184 = sphi 0, %s182
    %s185 = sphi 0, %s184
    %s199 = sphi 0, %s185
    %s203 = sphi 0, %s203
    %s205 = sphi 0, %s203
    %s206 = sphi 0, %s205
    %s220 = sphi 0, %s206
    %s224 = sphi 0, %s224
    %s226 = sphi 0, %s224
    %s227 = sphi 0, %s226
    %s241 = sphi 0, %s227
    %s245 = sphi 0, %s245
    %s247 = sphi 0, %s245
    %s248 = sphi 0, %s247
    %s262 = sphi 0, %s248
    %s268 = sphi 0, %s270
    %s271 = sphi 0, %s268
    %s272 = sphi 0, %s271
    %s288 = sphi 0, %s272
  $region4: #{se_vit_forward.2} parent=0 // loop_header_branch
    %20 = sbr.rel (%p18) target = $region8
  $region5: #{se_vit_forward.2} parent=0 // loop_body
    %s22 = ssub.s32 %s17, 1
    %s23 = ssub.s32 %s17, 2
    %s24 = sadd.s32 %s17, 1
    %s25 = ssub.s32 %s17, %s24
    %p26 = scmp.eq.s32.totalorder %s25, 0
    %s28 = sadd.s32 %s27, 1
    %s29 = scalar_select %p26, %s27, %s28
    %p32 = pneg %p26
    %p33 = scmp.eq.s32.totalorder %s17, 1
    %p34 = por %p32, %p33
    %p35 = scmp.ne.s32.totalorder %s27, %s30
    %p36 = scmp.eq.s32.totalorder %s17, 0
    %p37 = por %p35, %p36
    %p38 = scmp.ne.s32.totalorder %s27, %s30
    %p39 = scmp.eq.s32.totalorder %s22, 1
    %p40 = por %p38, %p39
    %p41 = scmp.ne.s32.totalorder %s30, %s31
    %p42 = scmp.eq.s32.totalorder %s22, 0
    %p43 = por %p41, %p42
    %p44 = scmp.ne.s32.totalorder %s30, %s31
    %p45 = scmp.eq.s32.totalorder %s23, 1
    %p46 = por %p44, %p45
    %p48 = scmp.ne.s32.totalorder %s31, %s47
    %p49 = scmp.eq.s32.totalorder %s23, 0
    %p50 = por %p48, %p49
    %s51 = ssub.s32 %s17, %s24
    %p52 = scmp.eq.s32.totalorder %s51, 0
    %s54 = sadd.s32 %s53, 1
    %s55 = scalar_select %p52, %s53, %s54
    %p58 = pneg %p52
    %p59 = scmp.eq.s32.totalorder %s17, 1
    %p60 = por %p58, %p59
    %p61 = scmp.ne.s32.totalorder %s53, %s56
    %p62 = scmp.eq.s32.totalorder %s17, 0
    %p63 = por %p61, %p62
    %p64 = scmp.ne.s32.totalorder %s53, %s56
    %p65 = scmp.eq.s32.totalorder %s22, 1
    %p66 = por %p64, %p65
    %p67 = scmp.ne.s32.totalorder %s56, %s57
    %p68 = scmp.eq.s32.totalorder %s22, 0
    %p69 = por %p67, %p68
    %p70 = scmp.ne.s32.totalorder %s56, %s57
    %p71 = scmp.eq.s32.totalorder %s23, 1
    %p72 = por %p70, %p71
    %p74 = scmp.ne.s32.totalorder %s57, %s73
    %p75 = scmp.eq.s32.totalorder %s23, 0
    %p76 = por %p74, %p75
    %s78 = sadd.s32 %s77, 1
    %p81 = scmp.eq.s32.totalorder %s17, 1
    %p82 = scmp.ne.s32.totalorder %s77, %s79
    %p83 = scmp.eq.s32.totalorder %s17, 0
    %p84 = por %p82, %p83
    %p85 = scmp.ne.s32.totalorder %s77, %s79
    %p86 = scmp.eq.s32.totalorder %s22, 1
    %p87 = por %p85, %p86
    %p88 = scmp.ne.s32.totalorder %s79, %s80
    %p89 = scmp.eq.s32.totalorder %s22, 0
    %p90 = por %p88, %p89
    %p91 = scmp.ne.s32.totalorder %s79, %s80
    %p92 = scmp.eq.s32.totalorder %s23, 1
    %p93 = por %p91, %p92
    %p95 = scmp.ne.s32.totalorder %s80, %s94
    %p96 = scmp.eq.s32.totalorder %s23, 0
    %p97 = por %p95, %p96
    %s99 = sadd.s32 %s98, 1
    %p102 = scmp.eq.s32.totalorder %s17, 1
    %p103 = scmp.ne.s32.totalorder %s98, %s100
    %p104 = scmp.eq.s32.totalorder %s17, 0
    %p105 = por %p103, %p104
    %p106 = scmp.ne.s32.totalorder %s98, %s100
    %p107 = scmp.eq.s32.totalorder %s22, 1
    %p108 = por %p106, %p107
    %p109 = scmp.ne.s32.totalorder %s100, %s101
    %p110 = scmp.eq.s32.totalorder %s22, 0
    %p111 = por %p109, %p110
    %p112 = scmp.ne.s32.totalorder %s100, %s101
    %p113 = scmp.eq.s32.totalorder %s23, 1
    %p114 = por %p112, %p113
    %p116 = scmp.ne.s32.totalorder %s101, %s115
    %p117 = scmp.eq.s32.totalorder %s23, 0
    %p118 = por %p116, %p117
    %s120 = sadd.s32 %s119, 1
    %p123 = scmp.eq.s32.totalorder %s17, 1
    %p124 = scmp.ne.s32.totalorder %s119, %s121
    %p125 = scmp.eq.s32.totalorder %s17, 0
    %p126 = por %p124, %p125
    %p127 = scmp.ne.s32.totalorder %s119, %s121
    %p128 = scmp.eq.s32.totalorder %s22, 1
    %p129 = por %p127, %p128
    %p130 = scmp.ne.s32.totalorder %s121, %s122
    %p131 = scmp.eq.s32.totalorder %s22, 0
    %p132 = por %p130, %p131
    %p133 = scmp.ne.s32.totalorder %s121, %s122
    %p134 = scmp.eq.s32.totalorder %s23, 1
    %p135 = por %p133, %p134
    %p137 = scmp.ne.s32.totalorder %s122, %s136
    %p138 = scmp.eq.s32.totalorder %s23, 0
    %p139 = por %p137, %p138
    %s141 = sadd.s32 %s140, 1
    %p144 = scmp.eq.s32.totalorder %s17, 1
    %p145 = scmp.ne.s32.totalorder %s140, %s142
    %p146 = scmp.eq.s32.totalorder %s17, 0
    %p147 = por %p145, %p146
    %p148 = scmp.ne.s32.totalorder %s140, %s142
    %p149 = scmp.eq.s32.totalorder %s22, 1
    %p150 = por %p148, %p149
    %p151 = scmp.ne.s32.totalorder %s142, %s143
    %p152 = scmp.eq.s32.totalorder %s22, 0
    %p153 = por %p151, %p152
    %p154 = scmp.ne.s32.totalorder %s142, %s143
    %p155 = scmp.eq.s32.totalorder %s23, 1
    %p156 = por %p154, %p155
    %p158 = scmp.ne.s32.totalorder %s143, %s157
    %p159 = scmp.eq.s32.totalorder %s23, 0
    %p160 = por %p158, %p159
    %s162 = sadd.s32 %s161, 1
    %p165 = scmp.eq.s32.totalorder %s17, 1
    %p166 = scmp.ne.s32.totalorder %s161, %s163
    %p167 = scmp.eq.s32.totalorder %s17, 0
    %p168 = por %p166, %p167
    %p169 = scmp.ne.s32.totalorder %s161, %s163
    %p170 = scmp.eq.s32.totalorder %s22, 1
    %p171 = por %p169, %p170
    %p172 = scmp.ne.s32.totalorder %s163, %s164
    %p173 = scmp.eq.s32.totalorder %s22, 0
    %p174 = por %p172, %p173
    %p175 = scmp.ne.s32.totalorder %s163, %s164
    %p176 = scmp.eq.s32.totalorder %s23, 1
    %p177 = por %p175, %p176
    %p179 = scmp.ne.s32.totalorder %s164, %s178
    %p180 = scmp.eq.s32.totalorder %s23, 0
    %p181 = por %p179, %p180
    %s183 = sadd.s32 %s182, 1
    %p186 = scmp.eq.s32.totalorder %s17, 1
    %p187 = scmp.ne.s32.totalorder %s182, %s184
    %p188 = scmp.eq.s32.totalorder %s17, 0
    %p189 = por %p187, %p188
    %p190 = scmp.ne.s32.totalorder %s182, %s184
    %p191 = scmp.eq.s32.totalorder %s22, 1
    %p192 = por %p190, %p191
    %p193 = scmp.ne.s32.totalorder %s184, %s185
    %p194 = scmp.eq.s32.totalorder %s22, 0
    %p195 = por %p193, %p194
    %p196 = scmp.ne.s32.totalorder %s184, %s185
    %p197 = scmp.eq.s32.totalorder %s23, 1
    %p198 = por %p196, %p197
    %p200 = scmp.ne.s32.totalorder %s185, %s199
    %p201 = scmp.eq.s32.totalorder %s23, 0
    %p202 = por %p200, %p201
    %s204 = sadd.s32 %s203, 1
    %p207 = scmp.eq.s32.totalorder %s17, 1
    %p208 = scmp.ne.s32.totalorder %s203, %s205
    %p209 = scmp.eq.s32.totalorder %s17, 0
    %p210 = por %p208, %p209
    %p211 = scmp.ne.s32.totalorder %s203, %s205
    %p212 = scmp.eq.s32.totalorder %s22, 1
    %p213 = por %p211, %p212
    %p214 = scmp.ne.s32.totalorder %s205, %s206
    %p215 = scmp.eq.s32.totalorder %s22, 0
    %p216 = por %p214, %p215
    %p217 = scmp.ne.s32.totalorder %s205, %s206
    %p218 = scmp.eq.s32.totalorder %s23, 1
    %p219 = por %p217, %p218
    %p221 = scmp.ne.s32.totalorder %s206, %s220
    %p222 = scmp.eq.s32.totalorder %s23, 0
    %p223 = por %p221, %p222
    %s225 = sadd.s32 %s224, 1
    %p228 = scmp.eq.s32.totalorder %s17, 1
    %p229 = scmp.ne.s32.totalorder %s224, %s226
    %p230 = scmp.eq.s32.totalorder %s17, 0
    %p231 = por %p229, %p230
    %p232 = scmp.ne.s32.totalorder %s224, %s226
    %p233 = scmp.eq.s32.totalorder %s22, 1
    %p234 = por %p232, %p233
    %p235 = scmp.ne.s32.totalorder %s226, %s227
    %p236 = scmp.eq.s32.totalorder %s22, 0
    %p237 = por %p235, %p236
    %p238 = scmp.ne.s32.totalorder %s226, %s227
    %p239 = scmp.eq.s32.totalorder %s23, 1
    %p240 = por %p238, %p239
    %p242 = scmp.ne.s32.totalorder %s227, %s241
    %p243 = scmp.eq.s32.totalorder %s23, 0
    %p244 = por %p242, %p243
    %s246 = sadd.s32 %s245, 1
    %p249 = scmp.eq.s32.totalorder %s17, 1
    %p250 = scmp.ne.s32.totalorder %s245, %s247
    %p251 = scmp.eq.s32.totalorder %s17, 0
    %p252 = por %p250, %p251
    %p253 = scmp.ne.s32.totalorder %s245, %s247
    %p254 = scmp.eq.s32.totalorder %s22, 1
    %p255 = por %p253, %p254
    %p256 = scmp.ne.s32.totalorder %s247, %s248
    %p257 = scmp.eq.s32.totalorder %s22, 0
    %p258 = por %p256, %p257
    %p259 = scmp.ne.s32.totalorder %s247, %s248
    %p260 = scmp.eq.s32.totalorder %s23, 1
    %p261 = por %p259, %p260
    %p263 = scmp.ne.s32.totalorder %s248, %s262
    %p264 = scmp.eq.s32.totalorder %s23, 0
    %p265 = por %p263, %p264
    %s266 = ssub.s32 %s17, %s24
    %p267 = scmp.eq.s32.totalorder %s266, 0
    %s269 = sadd.s32 %s268, 1
    %s270 = scalar_select %p267, %s268, %s269
    %p273 = pneg %p267
    %p274 = scmp.eq.s32.totalorder %s17, 1
    %p275 = por %p273, %p274
    %p276 = scmp.ne.s32.totalorder %s268, %s271
    %p277 = scmp.eq.s32.totalorder %s17, 0
    %p278 = por %p276, %p277
    %p279 = scmp.ne.s32.totalorder %s268, %s271
    %p280 = scmp.eq.s32.totalorder %s22, 1
    %p281 = por %p279, %p280
    %p282 = scmp.ne.s32.totalorder %s271, %s272
    %p283 = scmp.eq.s32.totalorder %s22, 0
    %p284 = por %p282, %p283
    %p285 = scmp.ne.s32.totalorder %s271, %s272
    %p286 = scmp.eq.s32.totalorder %s23, 1
    %p287 = por %p285, %p286
    %p289 = scmp.ne.s32.totalorder %s272, %s288
    %p290 = scmp.eq.s32.totalorder %s23, 0
    %p291 = por %p289, %p290
    %p292 = scmp.le.s32.totalorder 1, %s17
    %p293 = scmp.lt.s32.totalorder %s17, 3
    %p294 = pnand %p292, %p293
    %p295 = pneg %p294
    // Predicated region
    $region9: #{se_vit_forward.2} parent=5 // pred_check
      _
    $region10: #{se_vit_forward.2} parent=5 // pred_check_branch
      %297 = sbr.rel (%p294) target = $region12
    $region11: #{se_vit_forward.2} parent=5 // pred_region
      %s298 = ssub.s32 %s17, 1
      // Predicated region
      $region13: #{se_vit_forward.2} parent=11 // pred_check
        %p299 = pneg %p90
      $region14: #{se_vit_forward.2} parent=11 // pred_check_branch
        %301 = sbr.rel (%p299) target = $region16
      $region15: #{se_vit_forward.2} parent=11 // pred_region
        _
      $region16: #{se_vit_forward.2} parent=11 // pred_fallthru
        _
      // Predicated region
      $region17: #{se_vit_forward.2} parent=11 // pred_check
        %p302 = pneg %p111
      $region18: #{se_vit_forward.2} parent=11 // pred_check_branch
        %304 = sbr.rel (%p302) target = $region20
      $region19: #{se_vit_forward.2} parent=11 // pred_region
        _
      $region20: #{se_vit_forward.2} parent=11 // pred_fallthru
        _
      // Predicated region
      $region21: #{se_vit_forward.2} parent=11 // pred_check
        %p305 = pneg %p132
      $region22: #{se_vit_forward.2} parent=11 // pred_check_branch
        %307 = sbr.rel (%p305) target = $region24
      $region23: #{se_vit_forward.2} parent=11 // pred_region
        _
      $region24: #{se_vit_forward.2} parent=11 // pred_fallthru
        _
      // Predicated region
      $region25: #{se_vit_forward.2} parent=11 // pred_check
        %p308 = pneg %p153
      $region26: #{se_vit_forward.2} parent=11 // pred_check_branch
        %310 = sbr.rel (%p308) target = $region28
      $region27: #{se_vit_forward.2} parent=11 // pred_region
        _
      $region28: #{se_vit_forward.2} parent=11 // pred_fallthru
        _
      // Predicated region
      $region29: #{se_vit_forward.2} parent=11 // pred_check
        %p311 = pneg %p174
      $region30: #{se_vit_forward.2} parent=11 // pred_check_branch
        %313 = sbr.rel (%p311) target = $region32
      $region31: #{se_vit_forward.2} parent=11 // pred_region
        _
      $region32: #{se_vit_forward.2} parent=11 // pred_fallthru
        _
      // Predicated region
      $region33: #{se_vit_forward.2} parent=11 // pred_check
        %p314 = pneg %p195
      $region34: #{se_vit_forward.2} parent=11 // pred_check_branch
        %316 = sbr.rel (%p314) target = $region36
      $region35: #{se_vit_forward.2} parent=11 // pred_region
        _
      $region36: #{se_vit_forward.2} parent=11 // pred_fallthru
        _
      // Predicated region
      $region37: #{se_vit_forward.2} parent=11 // pred_check
        %p317 = pneg %p216
      $region38: #{se_vit_forward.2} parent=11 // pred_check_branch
        %319 = sbr.rel (%p317) target = $region40
      $region39: #{se_vit_forward.2} parent=11 // pred_region
        _
      $region40: #{se_vit_forward.2} parent=11 // pred_fallthru
        _
      // Predicated region
      $region41: #{se_vit_forward.2} parent=11 // pred_check
        %p320 = pneg %p237
      $region42: #{se_vit_forward.2} parent=11 // pred_check_branch
        %322 = sbr.rel (%p320) target = $region44
      $region43: #{se_vit_forward.2} parent=11 // pred_region
        _
      $region44: #{se_vit_forward.2} parent=11 // pred_fallthru
        _
      // Predicated region
      $region45: #{se_vit_forward.2} parent=11 // pred_check
        %p323 = pneg %p258
      $region46: #{se_vit_forward.2} parent=11 // pred_check_branch
        %325 = sbr.rel (%p323) target = $region48
      $region47: #{se_vit_forward.2} parent=11 // pred_region
        _
      $region48: #{se_vit_forward.2} parent=11 // pred_fallthru
        _
    $region12: #{se_vit_forward.2} parent=5 // pred_fallthru
      _
    %p326 = scmp.lt.s32.totalorder %s17, 2
    // Predicated region
    $region49: #{se_vit_forward.2} parent=5 // pred_check
      %p327 = pneg %p326
    $region50: #{se_vit_forward.2} parent=5 // pred_check_branch
      %329 = sbr.rel (%p327) target = $region52
    $region51: #{se_vit_forward.2} parent=5 // pred_region
      // Predicated region
      $region53: #{se_vit_forward.2} parent=51 // pred_check
        %p330 = pneg %p37
      $region54: #{se_vit_forward.2} parent=51 // pred_check_branch
        %332 = sbr.rel (%p330) target = $region56
      $region55: #{se_vit_forward.2} parent=51 // pred_region
        %p333 = scmp.lt.s32.totalorder %s17, 1
        %s334 = scalar_select %p333, %s17, 1
        %s335 = smul.addr %s334, 28
        %s336 = smul.addr %s335, 8
        %s337 = scalar_lea.vmem %s0, %s336
      $region56: #{se_vit_forward.2} parent=51 // pred_fallthru
        _
      // Predicated region
      $region57: #{se_vit_forward.2} parent=51 // pred_check
        %p338 = pneg %p63
      $region58: #{se_vit_forward.2} parent=51 // pred_check_branch
        %340 = sbr.rel (%p338) target = $region60
      $region59: #{se_vit_forward.2} parent=51 // pred_region
        %p341 = scmp.lt.s32.totalorder %s17, 1
        %s342 = scalar_select %p341, %s17, 1
        %s343 = smul.addr %s342, 16
        %s344 = smul.addr %s343, 8
        %s345 = scalar_lea.vmem %s1, %s344
      $region60: #{se_vit_forward.2} parent=51 // pred_fallthru
        _
    $region52: #{se_vit_forward.2} parent=5 // pred_fallthru
      _
    %p346 = scmp.le.s32.totalorder 1, %s17
    %p347 = scmp.lt.s32.totalorder %s17, 3
    %p348 = pnand %p346, %p347
    %p349 = pneg %p348
    // Predicated region
    $region61: #{se_vit_forward.2} parent=5 // pred_check
      _
    $region62: #{se_vit_forward.2} parent=5 // pred_check_branch
      %351 = sbr.rel (%p348) target = $region64
    $region63: #{se_vit_forward.2} parent=5 // pred_region
      %s352 = ssub.s32 %s17, 1
      %p353 = scmp.lt.s32.totalorder %s22, 1
      %s354 = scalar_select %p353, %s22, 1
      %s355 = smul.addr %s354, 28
      %s356 = smul.addr %s355, 8
      %s357 = scalar_lea.vmem %s0, %s356
      %p358 = pneg %p43
      %p359 = pneg %p40
      %p360 = scmp.lt.s32.totalorder %s22, 1
      %s361 = scalar_select %p360, %s22, 1
      %s362 = smul.addr %s361, 16
      %s363 = smul.addr %s362, 8
      %s364 = scalar_lea.vmem %s1, %s363
      %p365 = pneg %p69
      %p366 = pneg %p66
      %p367 = pneg %p90
      %p368 = pneg %p87
      %p369 = pneg %p111
      %p370 = pneg %p108
      %p371 = pneg %p132
      %p372 = pneg %p129
      %p373 = pneg %p153
      %p374 = pneg %p150
      %p375 = pneg %p174
      %p376 = pneg %p171
      %p377 = pneg %p195
      %p378 = pneg %p192
      %p379 = pneg %p216
      %p380 = pneg %p213
      %p381 = pneg %p237
      %p382 = pneg %p234
      %p383 = pneg %p258
      %p384 = pneg %p255
      %p385 = pneg %p284
      %p386 = pneg %p281
      %p387 = scmp.lt.s32.totalorder %s22, 1
      %s388 = scalar_select %p387, %s22, 1
      %s389 = smul.addr %s388, 16
      %s390 = smul.addr %s389, 8
      %s391 = scalar_lea.vmem %s11, %s390
      %p392 = scmp.lt.s32.totalorder %s22, 1
      %s393 = scalar_select %p392, %s22, 1
      %s394 = smul.addr %s393, 28
      %s395 = smul.addr %s394, 8
      %s396 = scalar_lea.vmem %s0, %s395
      %p397 = scmp.lt.s32.totalorder %s22, 1
      %s398 = scalar_select %p397, %s22, 1
      %s399 = smul.addr %s398, 16
      %s400 = smul.addr %s399, 8
      %s401 = scalar_lea.vmem %s1, %s400
      %p402 = scmp.lt.s32.totalorder %s22, 1
      %s403 = scalar_select %p402, %s22, 1
      %s404 = smul.addr %s403, 16
      %s405 = smul.addr %s404, 8
      %s406 = scalar_lea.vmem %s11, %s405
      %v407 = vld [vmem:[%s396] sm:$0xff]
      %v408 = vld [vmem:[%s396 + $0x8] sm:$0xff]
      %v409 = vld [vmem:[%s396 + $0x10] sm:$0xff]
      %v410 = vld [vmem:[%s396 + $0x18] sm:$0xff]
      %v411 = vld [vmem:[%s396 + $0x20] sm:$0xff]
      %v412 = vld [vmem:[%s396 + $0x28] sm:$0xff]
      %v413 = vld [vmem:[%s396 + $0x30] sm:$0xff]
      %v414 = vld [vmem:[%s396 + $0x38] sm:$0xff]
      %v415 = vld [vmem:[%s396 + $0x40] sm:$0xff]
      %v416 = vld [vmem:[%s396 + $0x48] sm:$0xff]
      %v417 = vld [vmem:[%s396 + $0x50] sm:$0xff]
      %v418 = vld [vmem:[%s396 + $0x58] sm:$0xff]
      %v419 = vld [vmem:[%s396 + $0x60] sm:$0xff]
      %v420 = vld [vmem:[%s396 + $0x68] sm:$0xff]
      %v421 = vld [vmem:[%s396 + $0x70] sm:$0xff]
      %v422 = vld [vmem:[%s396 + $0x78] sm:$0xff]
      %v423 = vld [vmem:[%s396 + $0x80] sm:$0xff]
      %v424 = vld [vmem:[%s396 + $0x88] sm:$0xff]
      %v425 = vld [vmem:[%s396 + $0x90] sm:$0xff]
      %v426 = vld [vmem:[%s396 + $0x98] sm:$0xff]
      %v427 = vld [vmem:[%s396 + $0xa0] sm:$0xff]
      %v428 = vld [vmem:[%s396 + $0xa8] sm:$0xff]
      %v429 = vld [vmem:[%s396 + $0xb0] sm:$0xff]
      %v430 = vld [vmem:[%s396 + $0xb8] sm:$0xff]
      %v431 = vld [vmem:[%s396 + $0xc0] sm:$0xff]
      %v432 = vld [vmem:[%s396 + $0xc8] sm:$0xff]
      %v433 = vld [vmem:[%s396 + $0xd0] sm:$0xff]
      %v434 = vld [vmem:[%s396 + $0xd8] sm:$0xff]
      %v435 = vld [vmem:[%s3] sm:$0xff]
      %v436 = vld [vmem:[%s3 + $0x8] sm:$0xff]
      %v437 = vld [vmem:[%s3 + $0x10] sm:$0xff]
      %v438 = vld [vmem:[%s3 + $0x18] sm:$0x7]
      %v439 = vld [vmem:[%s4] sm:$0x1]
      %v441 = vlaneseq
      %v442 = vshrl.u32 %v441, 7
      %v443 = vsub.s32 0, %v442
      %v444 = vrot.slane %v439, %v443
      %vm446 = vcmask 220160
      %v448 = vsel %vm446, %v407, 0
      %v451 = vsel %vm446, %v408, 0
      %v454 = vsel %vm446, %v409, 0
      %v457 = vsel %vm446, %v410, 0
      %v460 = vsel %vm446, %v411, 0
      %v463 = vsel %vm446, %v412, 0
      %v466 = vsel %vm446, %v413, 0
      %v469 = vsel %vm446, %v414, 0
      %v472 = vsel %vm446, %v415, 0
      %v475 = vsel %vm446, %v416, 0
      %v478 = vsel %vm446, %v417, 0
      %v481 = vsel %vm446, %v418, 0
      %v484 = vsel %vm446, %v419, 0
      %v487 = vsel %vm446, %v420, 0
      %v490 = vsel %vm446, %v421, 0
      %v493 = vsel %vm446, %v422, 0
      %v496 = vsel %vm446, %v423, 0
      %v499 = vsel %vm446, %v424, 0
      %v502 = vsel %vm446, %v425, 0
      %v505 = vsel %vm446, %v426, 0
      %v508 = vsel %vm446, %v427, 0
      %v511 = vsel %vm446, %v428, 0
      %v514 = vsel %vm446, %v429, 0
      %v517 = vsel %vm446, %v430, 0
      %v520 = vsel %vm446, %v431, 0
      %v523 = vsel %vm446, %v432, 0
      %v526 = vsel %vm446, %v433, 0
      %v529 = vsel %vm446, %v434, 0
      %vm531 = vcmask 1042432
      %v533 = vsel %vm531, %v438, 0
      %535 = vmatprep.subr.mxu0 0.0
      %536 = vmatpush1.msra.mxu0 %v435
      %537 = vmatprep.subr.mxu0 0.0
      %538 = vmatpush1.msra.mxu0 %v436
      %539 = vmatprep.subr.mxu0 0.0
      %540 = vmatpush1.msra.mxu0 %v437
      %541 = vmatprep.subr.mxu0 0.0
      %542 = vmatpush1.msra.mxu0 %v533
      %543 = vmatprep.subr.mxu0 0.0
      %544 = vmatpush1.msra.mxu0 0.0
      %545 = vmatprep.subr.mxu0 0.0
      %546 = vmatpush1.msra.mxu0 0.0
      %547 = vmatprep.subr.mxu0 0.0
      %548 = vmatpush1.msra.mxu0 0.0
      %549 = vmatprep.subr.mxu0 0.0
      %550 = vmatpush1.msra.mxu0 0.0
      %551 = vmatprep.subr.mxu0 0.0
      %552 = vmatpush1.msra.mxu0 0.0
      %553 = vmatprep.subr.mxu0 0.0
      %554 = vmatpush1.msra.mxu0 0.0
      %555 = vmatprep.subr.mxu0 0.0
      %556 = vmatpush1.msra.mxu0 0.0
      %557 = vmatprep.subr.mxu0 0.0
      %558 = vmatpush1.msra.mxu0 0.0
      %559 = vmatprep.subr.mxu0 0.0
      %560 = vmatpush1.msra.mxu0 0.0
      %561 = vmatprep.subr.mxu0 0.0
      %562 = vmatpush1.msra.mxu0 0.0
      %563 = vmatprep.subr.mxu0 0.0
      %564 = vmatpush1.msra.mxu0 0.0
      %565 = vmatprep.subr.mxu0 0.0
      %566 = vmatpush1.msra.mxu0 0.0
      %567 = vmatprep.subr.mxu0 0.0
      %568 = vmatpush1.msra.mxu0 0.0
      %569 = vmatprep.subr.mxu0 0.0
      %570 = vmatpush1.msra.mxu0 0.0
      %571 = vmatprep.subr.mxu0 0.0
      %572 = vmatpush1.msra.mxu0 0.0
      %573 = vmatprep.subr.mxu0 0.0
      %574 = vmatpush1.msra.mxu0 0.0
      %575 = vmatprep.subr.mxu0 0.0
      %576 = vmatpush1.msra.mxu0 0.0
      %577 = vmatprep.subr.mxu0 0.0
      %578 = vmatpush1.msra.mxu0 0.0
      %579 = vmatprep.subr.mxu0 0.0
      %580 = vmatpush1.msra.mxu0 0.0
      %581 = vmatprep.subr.mxu0 0.0
      %582 = vmatpush1.msra.mxu0 0.0
      %583 = vmatprep.subr.mxu0 0.0
      %584 = vmatpush1.msra.mxu0 0.0
      %585 = vmatprep.subr.mxu0 0.0
      %586 = vmatpush1.msra.mxu0 0.0
      %587 = vmatprep.subr.mxu0 0.0
      %588 = vmatpush1.msra.mxu0 0.0
      %589 = vmatprep.subr.mxu0 0.0
      %590 = vmatpush1.msra.mxu0 0.0
      %591 = vmatprep.subr.mxu0 0.0
      %592 = vmatpush1.msra.mxu0 0.0
      %593 = vmatprep.subr.mxu0 0.0
      %594 = vmatpush1.msra.mxu0 0.0
      %595 = vmatprep.subr.mxu0 0.0
      %596 = vmatpush1.msra.mxu0 0.0
      %597 = vmatprep.subr.mxu0 0.0
      %598 = vmatpush1.msra.mxu0 0.0
      %599 = vmatprep.mubr.f32.mxu0 0.0
      %600 = vmatmul.mubr.f32.gmra.mrb[0].mxu0 %v448
      %v601 = vpop.f32.mrb[0].mxu0
      %v602 = vadd.f32 %v444, %v601
      %v603 = vpop.f32.mrb[0].mxu0
      %604 = vmatprep.mubr.f32.mxu0 0.0
      %605 = vmatmul.mubr.f32.gmra.mrb[0].mxu0 %v451
      %v606 = vpop.f32.mrb[0].mxu0
      %v607 = vadd.f32 %v444, %v606
      %v608 = vpop.f32.mrb[0].mxu0
      %609 = vmatprep.mubr.f32.mxu0 0.0
      %610 = vmatmul.mubr.f32.gmra.mrb[0].mxu0 %v454
      %v611 = vpop.f32.mrb[0].mxu0
      %v612 = vadd.f32 %v444, %v611
      %v613 = vpop.f32.mrb[0].mxu0
      %614 = vmatprep.mubr.f32.mxu0 0.0
      %615 = vmatmul.mubr.f32.gmra.mrb[0].mxu0 %v457
      %v616 = vpop.f32.mrb[0].mxu0
      %v617 = vadd.f32 %v444, %v616
      %v618 = vpop.f32.mrb[0].mxu0
      %619 = vmatprep.mubr.f32.mxu0 0.0
      %620 = vmatmul.mubr.f32.gmra.mrb[0].mxu0 %v460
      %v621 = vpop.f32.mrb[0].mxu0
      %v622 = vadd.f32 %v444, %v621
      %v623 = vpop.f32.mrb[0].mxu0
      %624 = vmatprep.mubr.f32.mxu0 0.0
      %625 = vmatmul.mubr.f32.gmra.mrb[0].mxu0 %v463
      %v626 = vpop.f32.mrb[0].mxu0
      %v627 = vadd.f32 %v444, %v626
      %v628 = vpop.f32.mrb[0].mxu0
      %629 = vmatprep.mubr.f32.mxu0 0.0
      %630 = vmatmul.mubr.f32.gmra.mrb[0].mxu0 %v466
      %v631 = vpop.f32.mrb[0].mxu0
      %v632 = vadd.f32 %v444, %v631
      %v633 = vpop.f32.mrb[0].mxu0
      %634 = vmatprep.mubr.f32.mxu0 0.0
      %635 = vmatmul.mubr.f32.gmra.mrb[0].mxu0 %v469
      %v636 = vpop.f32.mrb[0].mxu0
      %v637 = vadd.f32 %v444, %v636
      %v638 = vpop.f32.mrb[0].mxu0
      %639 = vmatprep.mubr.f32.mxu0 0.0
      %640 = vmatmul.mubr.f32.gmra.mrb[0].mxu0 %v472
      %v641 = vpop.f32.mrb[0].mxu0
      %v642 = vadd.f32 %v444, %v641
      %v643 = vpop.f32.mrb[0].mxu0
      %644 = vmatprep.mubr.f32.mxu0 0.0
      %645 = vmatmul.mubr.f32.gmra.mrb[0].mxu0 %v475
      %v646 = vpop.f32.mrb[0].mxu0
      %v647 = vadd.f32 %v444, %v646
      %v648 = vpop.f32.mrb[0].mxu0
      %649 = vmatprep.mubr.f32.mxu0 0.0
      %650 = vmatmul.mubr.f32.gmra.mrb[0].mxu0 %v478
      %v651 = vpop.f32.mrb[0].mxu0
      %v652 = vadd.f32 %v444, %v651
      %v653 = vpop.f32.mrb[0].mxu0
      %654 = vmatprep.mubr.f32.mxu0 0.0
      %655 = vmatmul.mubr.f32.gmra.mrb[0].mxu0 %v481
      %v656 = vpop.f32.mrb[0].mxu0
      %v657 = vadd.f32 %v444, %v656
      %v658 = vpop.f32.mrb[0].mxu0
      %659 = vmatprep.mubr.f32.mxu0 0.0
      %660 = vmatmul.mubr.f32.gmra.mrb[0].mxu0 %v484
      %v661 = vpop.f32.mrb[0].mxu0
      %v662 = vadd.f32 %v444, %v661
      %v663 = vpop.f32.mrb[0].mxu0
      %664 = vmatprep.mubr.f32.mxu0 0.0
      %665 = vmatmul.mubr.f32.gmra.mrb[0].mxu0 %v487
      %v666 = vpop.f32.mrb[0].mxu0
      %v667 = vadd.f32 %v444, %v666
      %v668 = vpop.f32.mrb[0].mxu0
      %669 = vmatprep.mubr.f32.mxu0 0.0
      %670 = vmatmul.mubr.f32.gmra.mrb[0].mxu0 %v490
      %v671 = vpop.f32.mrb[0].mxu0
      %v672 = vadd.f32 %v444, %v671
      %v673 = vpop.f32.mrb[0].mxu0
      %674 = vmatprep.mubr.f32.mxu0 0.0
      %675 = vmatmul.mubr.f32.gmra.mrb[0].mxu0 %v493
      %v676 = vpop.f32.mrb[0].mxu0
      %v677 = vadd.f32 %v444, %v676
      %v678 = vpop.f32.mrb[0].mxu0
      %679 = vmatprep.mubr.f32.mxu0 0.0
      %680 = vmatmul.mubr.f32.gmra.mrb[0].mxu0 %v496
      %v681 = vpop.f32.mrb[0].mxu0
      %v682 = vadd.f32 %v444, %v681
      %v683 = vpop.f32.mrb[0].mxu0
      %684 = vmatprep.mubr.f32.mxu0 0.0
      %685 = vmatmul.mubr.f32.gmra.mrb[0].mxu0 %v499
      %v686 = vpop.f32.mrb[0].mxu0
      %v687 = vadd.f32 %v444, %v686
      %v688 = vpop.f32.mrb[0].mxu0
      %689 = vmatprep.mubr.f32.mxu0 0.0
      %690 = vmatmul.mubr.f32.gmra.mrb[0].mxu0 %v502
      %v691 = vpop.f32.mrb[0].mxu0
      %v692 = vadd.f32 %v444, %v691
      %v693 = vpop.f32.mrb[0].mxu0
      %694 = vmatprep.mubr.f32.mxu0 0.0
      %695 = vmatmul.mubr.f32.gmra.mrb[0].mxu0 %v505
      %v696 = vpop.f32.mrb[0].mxu0
      %v697 = vadd.f32 %v444, %v696
      %v698 = vpop.f32.mrb[0].mxu0
      %699 = vmatprep.mubr.f32.mxu0 0.0
      %700 = vmatmul.mubr.f32.gmra.mrb[0].mxu0 %v508
      %v701 = vpop.f32.mrb[0].mxu0
      %v702 = vadd.f32 %v444, %v701
      %v703 = vpop.f32.mrb[0].mxu0
      %704 = vmatprep.mubr.f32.mxu0 0.0
      %705 = vmatmul.mubr.f32.gmra.mrb[0].mxu0 %v511
      %v706 = vpop.f32.mrb[0].mxu0
      %v707 = vadd.f32 %v444, %v706
      %v708 = vpop.f32.mrb[0].mxu0
      %709 = vmatprep.mubr.f32.mxu0 0.0
      %710 = vmatmul.mubr.f32.gmra.mrb[0].mxu0 %v514
      %v711 = vpop.f32.mrb[0].mxu0
      %v712 = vadd.f32 %v444, %v711
      %v713 = vpop.f32.mrb[0].mxu0
      %714 = vmatprep.mubr.f32.mxu0 0.0
      %715 = vmatmul.mubr.f32.gmra.mrb[0].mxu0 %v517
      %v716 = vpop.f32.mrb[0].mxu0
      %v717 = vadd.f32 %v444, %v716
      %v718 = vpop.f32.mrb[0].mxu0
      %719 = vmatprep.mubr.f32.mxu0 0.0
      %720 = vmatmul.mubr.f32.gmra.mrb[0].mxu0 %v520
      %v721 = vpop.f32.mrb[0].mxu0
      %v722 = vadd.f32 %v444, %v721
      %v723 = vpop.f32.mrb[0].mxu0
      %724 = vmatprep.mubr.f32.mxu0 0.0
      %725 = vmatmul.mubr.f32.gmra.mrb[0].mxu0 %v523
      %v726 = vpop.f32.mrb[0].mxu0
      %v727 = vadd.f32 %v444, %v726
      %v728 = vpop.f32.mrb[0].mxu0
      %729 = vmatprep.mubr.f32.mxu0 0.0
      %730 = vmatmul.mubr.f32.gmra.mrb[0].mxu0 %v526
      %v731 = vpop.f32.mrb[0].mxu0
      %v732 = vadd.f32 %v444, %v731
      %v733 = vpop.f32.mrb[0].mxu0
      %734 = vmatprep.mubr.f32.mxu0 0.0
      %735 = vmatmul.mubr.f32.gmra.mrb[0].mxu0 %v529
      %v736 = vpop.f32.mrb[0].mxu0
      %v737 = vadd.f32 %v444, %v736
      %v738 = vpop.f32.mrb[0].mxu0
      %739 = vdwg.mxu0
      %vm740 = vcmask 97280
      %v741 = vsel %vm740, %v602, 0.0
      %v742 = vsel %vm740, %v607, 0.0
      %v743 = vadd.f32 %v741, %v742
      %v744 = vsel %vm740, %v612, 0.0
      %v745 = vadd.f32 %v743, %v744
      %v746 = vsel %vm740, %v617, 0.0
      %v747 = vadd.f32 %v745, %v746
      %v748 = vsel %vm740, %v622, 0.0
      %v749 = vadd.f32 %v747, %v748
      %v750 = vsel %vm740, %v627, 0.0
      %v751 = vadd.f32 %v749, %v750
      %v752 = vsel %vm740, %v632, 0.0
      %v753 = vadd.f32 %v751, %v752
      %v754 = vsel %vm740, %v637, 0.0
      %v755 = vadd.f32 %v753, %v754
      %v756 = vsel %vm740, %v642, 0.0
      %v757 = vadd.f32 %v755, %v756
      %v758 = vsel %vm740, %v647, 0.0
      %v759 = vadd.f32 %v757, %v758
      %v760 = vsel %vm740, %v652, 0.0
      %v761 = vadd.f32 %v759, %v760
      %v762 = vsel %vm740, %v657, 0.0
      %v763 = vadd.f32 %v761, %v762
      %v764 = vsel %vm740, %v662, 0.0
      %v765 = vadd.f32 %v763, %v764
      %v766 = vsel %vm740, %v667, 0.0
      %v767 = vadd.f32 %v765, %v766
      %v768 = vsel %vm740, %v672, 0.0
      %v769 = vadd.f32 %v767, %v768
      %v770 = vsel %vm740, %v677, 0.0
      %v771 = vadd.f32 %v769, %v770
      %v772 = vsel %vm740, %v682, 0.0
      %v773 = vadd.f32 %v771, %v772
      %v774 = vsel %vm740, %v687, 0.0
      %v775 = vadd.f32 %v773, %v774
      %v776 = vsel %vm740, %v692, 0.0
      %v777 = vadd.f32 %v775, %v776
      %v778 = vsel %vm740, %v697, 0.0
      %v779 = vadd.f32 %v777, %v778
      %v780 = vsel %vm740, %v702, 0.0
      %v781 = vadd.f32 %v779, %v780
      %v782 = vsel %vm740, %v707, 0.0
      %v783 = vadd.f32 %v781, %v782
      %v784 = vsel %vm740, %v712, 0.0
      %v785 = vadd.f32 %v783, %v784
      %v786 = vsel %vm740, %v717, 0.0
      %v787 = vadd.f32 %v785, %v786
      %v788 = vsel %vm740, %v722, 0.0
      %v789 = vadd.f32 %v787, %v788
      %v790 = vsel %vm740, %v727, 0.0
      %v791 = vadd.f32 %v789, %v790
      %v792 = vsel %vm740, %v732, 0.0
      %v793 = vadd.f32 %v791, %v792
      %v794 = vsel %vm740, %v737, 0.0
      %v795 = vadd.f32 %v793, %v794
      %v796 = vrot.slane %v795, 4
      %v797 = vadd.f32 %v795, %v796
      %v798 = vrot.slane %v797, 2
      %v799 = vadd.f32 %v797, %v798
      %v800 = vrot.slane %v799, 1
      %v801 = vadd.f32 %v799, %v800
      %v802 = vrcp.pop 224.0
      %v803 = vmul.f32 %v801, %v802
      %v804 = vld [vmem:[%s5] sm:$0xff]
      %v805 = vld [vmem:[%s5 + $0x8] sm:$0xf]
      %v806 = vld [vmem:[%s6] sm:$0x1]
      %v808 = vsel %vm740, %v803, 0
      %vm810 = vcmask 1043456
      %v812 = vsel %vm810, %v805, 0
      %814 = vmatprep.subr.mxu0 0.0
      %815 = vmatpush1.msra.mxu0 %v804
      %816 = vmatprep.subr.mxu0 0.0
      %817 = vmatpush1.msra.mxu0 %v812
      %818 = vmatprep.subr.mxu0 0.0
      %819 = vmatpush1.msra.mxu0 0.0
      %820 = vmatprep.subr.mxu0 0.0
      %821 = vmatpush1.msra.mxu0 0.0
      %822 = vmatprep.subr.mxu0 0.0
      %823 = vmatpush1.msra.mxu0 0.0
      %824 = vmatprep.subr.mxu0 0.0
      %825 = vmatpush1.msra.mxu0 0.0
      %826 = vmatprep.subr.mxu0 0.0
      %827 = vmatpush1.msra.mxu0 0.0
      %828 = vmatprep.subr.mxu0 0.0
      %829 = vmatpush1.msra.mxu0 0.0
      %830 = vmatprep.subr.mxu0 0.0
      %831 = vmatpush1.msra.mxu0 0.0
      %832 = vmatprep.subr.mxu0 0.0
      %833 = vmatpush1.msra.mxu0 0.0
      %834 = vmatprep.subr.mxu0 0.0
      %835 = vmatpush1.msra.mxu0 0.0
      %836 = vmatprep.subr.mxu0 0.0
      %837 = vmatpush1.msra.mxu0 0.0
      %838 = vmatprep.subr.mxu0 0.0
      %839 = vmatpush1.msra.mxu0 0.0
      %840 = vmatprep.subr.mxu0 0.0
      %841 = vmatpush1.msra.mxu0 0.0
      %842 = vmatprep.subr.mxu0 0.0
      %843 = vmatpush1.msra.mxu0 0.0
      %844 = vmatprep.subr.mxu0 0.0
      %845 = vmatpush1.msra.mxu0 0.0
      %846 = vmatprep.subr.mxu0 0.0
      %847 = vmatpush1.msra.mxu0 0.0
      %848 = vmatprep.subr.mxu0 0.0
      %849 = vmatpush1.msra.mxu0 0.0
      %850 = vmatprep.subr.mxu0 0.0
      %851 = vmatpush1.msra.mxu0 0.0
      %852 = vmatprep.subr.mxu0 0.0
      %853 = vmatpush1.msra.mxu0 0.0
      %854 = vmatprep.subr.mxu0 0.0
      %855 = vmatpush1.msra.mxu0 0.0
      %856 = vmatprep.subr.mxu0 0.0
      %857 = vmatpush1.msra.mxu0 0.0
      %858 = vmatprep.subr.mxu0 0.0
      %859 = vmatpush1.msra.mxu0 0.0
      %860 = vmatprep.subr.mxu0 0.0
      %861 = vmatpush1.msra.mxu0 0.0
      %862 = vmatprep.subr.mxu0 0.0
      %863 = vmatpush1.msra.mxu0 0.0
      %864 = vmatprep.subr.mxu0 0.0
      %865 = vmatpush1.msra.mxu0 0.0
      %866 = vmatprep.subr.mxu0 0.0
      %867 = vmatpush1.msra.mxu0 0.0
      %868 = vmatprep.subr.mxu0 0.0
      %869 = vmatpush1.msra.mxu0 0.0
      %870 = vmatprep.subr.mxu0 0.0
      %871 = vmatpush1.msra.mxu0 0.0
      %872 = vmatprep.subr.mxu0 0.0
      %873 = vmatpush1.msra.mxu0 0.0
      %874 = vmatprep.subr.mxu0 0.0
      %875 = vmatpush1.msra.mxu0 0.0
      %876 = vmatprep.subr.mxu0 0.0
      %877 = vmatpush1.msra.mxu0 0.0
      %878 = vmatprep.mubr.f32.mxu0 0.0
      %879 = vmatmul.mubr.f32.gmra.mrb[0].mxu0 %v808
      %v880 = vpop.f32.mrb[0].mxu0
      %v881 = vadd.f32 %v806, %v880
      %v882 = vpop.f32.mrb[0].mxu0
      %883 = vdwg.mxu0
      %v884 = vmax.f32 %v881, 0.0
      %v885 = vld [vmem:[%s7] sm:$0x3f]
      %v886 = vld [vmem:[%s8] sm:$0x1]
      %vm887 = vcmask 48128
      %v889 = vsel %vm887, %v884, 0
      %vm891 = vcmask 1045504
      %v893 = vsel %vm891, %v885, 0
      %895 = vmatprep.subr.mxu0 0.0
      %896 = vmatpush1.msra.mxu0 %v893
      %897 = vmatprep.subr.mxu0 0.0
      %898 = vmatpush1.msra.mxu0 0.0
      %899 = vmatprep.subr.mxu0 0.0
      %900 = vmatpush1.msra.mxu0 0.0
      %901 = vmatprep.subr.mxu0 0.0
      %902 = vmatpush1.msra.mxu0 0.0
      %903 = vmatprep.subr.mxu0 0.0
      %904 = vmatpush1.msra.mxu0 0.0
      %905 = vmatprep.subr.mxu0 0.0
      %906 = vmatpush1.msra.mxu0 0.0
      %907 = vmatprep.subr.mxu0 0.0
      %908 = vmatpush1.msra.mxu0 0.0
      %909 = vmatprep.subr.mxu0 0.0
      %910 = vmatpush1.msra.mxu0 0.0
      %911 = vmatprep.subr.mxu0 0.0
      %912 = vmatpush1.msra.mxu0 0.0
      %913 = vmatprep.subr.mxu0 0.0
      %914 = vmatpush1.msra.mxu0 0.0
      %915 = vmatprep.subr.mxu0 0.0
      %916 = vmatpush1.msra.mxu0 0.0
      %917 = vmatprep.subr.mxu0 0.0
      %918 = vmatpush1.msra.mxu0 0.0
      %919 = vmatprep.subr.mxu0 0.0
      %920 = vmatpush1.msra.mxu0 0.0
      %921 = vmatprep.subr.mxu0 0.0
      %922 = vmatpush1.msra.mxu0 0.0
      %923 = vmatprep.subr.mxu0 0.0
      %924 = vmatpush1.msra.mxu0 0.0
      %925 = vmatprep.subr.mxu0 0.0
      %926 = vmatpush1.msra.mxu0 0.0
      %927 = vmatprep.subr.mxu0 0.0
      %928 = vmatpush1.msra.mxu0 0.0
      %929 = vmatprep.subr.mxu0 0.0
      %930 = vmatpush1.msra.mxu0 0.0
      %931 = vmatprep.subr.mxu0 0.0
      %932 = vmatpush1.msra.mxu0 0.0
      %933 = vmatprep.subr.mxu0 0.0
      %934 = vmatpush1.msra.mxu0 0.0
      %935 = vmatprep.subr.mxu0 0.0
      %936 = vmatpush1.msra.mxu0 0.0
      %937 = vmatprep.subr.mxu0 0.0
      %938 = vmatpush1.msra.mxu0 0.0
      %939 = vmatprep.subr.mxu0 0.0
      %940 = vmatpush1.msra.mxu0 0.0
      %941 = vmatprep.subr.mxu0 0.0
      %942 = vmatpush1.msra.mxu0 0.0
      %943 = vmatprep.subr.mxu0 0.0
      %944 = vmatpush1.msra.mxu0 0.0
      %945 = vmatprep.subr.mxu0 0.0
      %946 = vmatpush1.msra.mxu0 0.0
      %947 = vmatprep.subr.mxu0 0.0
      %948 = vmatpush1.msra.mxu0 0.0
      %949 = vmatprep.subr.mxu0 0.0
      %950 = vmatpush1.msra.mxu0 0.0
      %951 = vmatprep.subr.mxu0 0.0
      %952 = vmatpush1.msra.mxu0 0.0
      %953 = vmatprep.subr.mxu0 0.0
      %954 = vmatpush1.msra.mxu0 0.0
      %955 = vmatprep.subr.mxu0 0.0
      %956 = vmatpush1.msra.mxu0 0.0
      %957 = vmatprep.subr.mxu0 0.0
      %958 = vmatpush1.msra.mxu0 0.0
      %959 = vmatprep.mubr.f32.mxu0 0.0
      %960 = vmatmul.mubr.f32.gmra.mrb[0].mxu0 %v889
      %v961 = vpop.f32.mrb[0].mxu0
      %v962 = vadd.f32 %v886, %v961
      %v963 = vpop.f32.mrb[0].mxu0
      %964 = vdwg.mxu0
      %v965 = vxor.u32 %v962, 2147483648
      %v966 = vmul.f32 %v965, 1.442695
      %v967 = vpow.pop %v966
      %v968 = vadd.f32 %v967, 1.0
      %v969 = vrcp.pop %v968
      %v970 = vmul.f32 1.0, %v969
      %v971 = vld [vmem:[%s9] sm:$0x7]
      %vm972 = vcmask 23552
      %v974 = vsel %vm972, %v970, 0
      %v977 = vsel %vm531, %v971, 0
      %979 = vmatprep.subr.mxu0 0.0
      %980 = vmatpush1.msra.mxu0 %v977
      %981 = vmatprep.subr.mxu0 0.0
      %982 = vmatpush1.msra.mxu0 0.0
      %983 = vmatprep.subr.mxu0 0.0
      %984 = vmatpush1.msra.mxu0 0.0
      %985 = vmatprep.subr.mxu0 0.0
      %986 = vmatpush1.msra.mxu0 0.0
      %987 = vmatprep.subr.mxu0 0.0
      %988 = vmatpush1.msra.mxu0 0.0
      %989 = vmatprep.subr.mxu0 0.0
      %990 = vmatpush1.msra.mxu0 0.0
      %991 = vmatprep.subr.mxu0 0.0
      %992 = vmatpush1.msra.mxu0 0.0
      %993 = vmatprep.subr.mxu0 0.0
      %994 = vmatpush1.msra.mxu0 0.0
      %995 = vmatprep.subr.mxu0 0.0
      %996 = vmatpush1.msra.mxu0 0.0
      %997 = vmatprep.subr.mxu0 0.0
      %998 = vmatpush1.msra.mxu0 0.0
      %999 = vmatprep.subr.mxu0 0.0
      %1000 = vmatpush1.msra.mxu0 0.0
      %1001 = vmatprep.subr.mxu0 0.0
      %1002 = vmatpush1.msra.mxu0 0.0
      %1003 = vmatprep.subr.mxu0 0.0
      %1004 = vmatpush1.msra.mxu0 0.0
      %1005 = vmatprep.subr.mxu0 0.0
      %1006 = vmatpush1.msra.mxu0 0.0
      %1007 = vmatprep.subr.mxu0 0.0
      %1008 = vmatpush1.msra.mxu0 0.0
      %1009 = vmatprep.subr.mxu0 0.0
      %1010 = vmatpush1.msra.mxu0 0.0
      %1011 = vmatprep.subr.mxu0 0.0
      %1012 = vmatpush1.msra.mxu0 0.0
      %1013 = vmatprep.subr.mxu0 0.0
      %1014 = vmatpush1.msra.mxu0 0.0
      %1015 = vmatprep.subr.mxu0 0.0
      %1016 = vmatpush1.msra.mxu0 0.0
      %1017 = vmatprep.subr.mxu0 0.0
      %1018 = vmatpush1.msra.mxu0 0.0
      %1019 = vmatprep.subr.mxu0 0.0
      %1020 = vmatpush1.msra.mxu0 0.0
      %1021 = vmatprep.subr.mxu0 0.0
      %1022 = vmatpush1.msra.mxu0 0.0
      %1023 = vmatprep.subr.mxu0 0.0
      %1024 = vmatpush1.msra.mxu0 0.0
      %1025 = vmatprep.subr.mxu0 0.0
      %1026 = vmatpush1.msra.mxu0 0.0
      %1027 = vmatprep.subr.mxu0 0.0
      %1028 = vmatpush1.msra.mxu0 0.0
      %1029 = vmatprep.subr.mxu0 0.0
      %1030 = vmatpush1.msra.mxu0 0.0
      %1031 = vmatprep.subr.mxu0 0.0
      %1032 = vmatpush1.msra.mxu0 0.0
      %1033 = vmatprep.subr.mxu0 0.0
      %1034 = vmatpush1.msra.mxu0 0.0
      %1035 = vmatprep.subr.mxu0 0.0
      %1036 = vmatpush1.msra.mxu0 0.0
      %1037 = vmatprep.subr.mxu0 0.0
      %1038 = vmatpush1.msra.mxu0 0.0
      %1039 = vmatprep.subr.mxu0 0.0
      %1040 = vmatpush1.msra.mxu0 0.0
      %1041 = vmatprep.subr.mxu0 0.0
      %1042 = vmatpush1.msra.mxu0 0.0
      %1043 = vmatprep.mubr.f32.mxu0 0.0
      %1044 = vmatmul.mubr.f32.gmra.mrb[0].mxu0 %v974
      %v1045 = vpop.f32.mrb[0].mxu0
      %v1046 = vadd.f32 1.0, %v1045
      %v1047 = vpop.f32.mrb[0].mxu0
      %1048 = vdwg.mxu0
      %v1049 = vld [vmem:[%s401] sm:$0xff]
      %v1050 = vld [vmem:[%s401 + $0x8] sm:$0xff]
      %v1051 = vld [vmem:[%s401 + $0x10] sm:$0xff]
      %v1052 = vld [vmem:[%s401 + $0x18] sm:$0xff]
      %v1053 = vld [vmem:[%s401 + $0x20] sm:$0xff]
      %v1054 = vld [vmem:[%s401 + $0x28] sm:$0xff]
      %v1055 = vld [vmem:[%s401 + $0x30] sm:$0xff]
      %v1056 = vld [vmem:[%s401 + $0x38] sm:$0xff]
      %v1057 = vld [vmem:[%s401 + $0x40] sm:$0xff]
      %v1058 = vld [vmem:[%s401 + $0x48] sm:$0xff]
      %v1059 = vld [vmem:[%s401 + $0x50] sm:$0xff]
      %v1060 = vld [vmem:[%s401 + $0x58] sm:$0xff]
      %v1061 = vld [vmem:[%s401 + $0x60] sm:$0xff]
      %v1062 = vld [vmem:[%s401 + $0x68] sm:$0xff]
      %v1063 = vld [vmem:[%s401 + $0x70] sm:$0xff]
      %v1064 = vld [vmem:[%s401 + $0x78] sm:$0xff]
      %v1065 = vlaneseq
      %v1066 = vshrl.u32 %v1065, 7
      %v1067 = vsub.s32 0, %v1066
      %v1068 = vrot.slane %v1046, %v1067
      %v1069 = vmul.f32 %v1049, %v1068
      %v1070 = vmul.f32 %v1050, %v1068
      %v1071 = vmul.f32 %v1051, %v1068
      %v1072 = vmul.f32 %v1052, %v1068
      %v1073 = vmul.f32 %v1053, %v1068
      %v1074 = vmul.f32 %v1054, %v1068
      %v1075 = vmul.f32 %v1055, %v1068
      %v1076 = vmul.f32 %v1056, %v1068
      %v1077 = vmul.f32 %v1057, %v1068
      %v1078 = vmul.f32 %v1058, %v1068
      %v1079 = vmul.f32 %v1059, %v1068
      %v1080 = vmul.f32 %v1060, %v1068
      %v1081 = vmul.f32 %v1061, %v1068
      %v1082 = vmul.f32 %v1062, %v1068
      %v1083 = vmul.f32 %v1063, %v1068
      %v1084 = vmul.f32 %v1064, %v1068
      %v1085 = vld [vmem:[%s10] sm:$0xff]
      %v1086 = vld [vmem:[%s10 + $0x8] sm:$0xf]
      %v1087 = vld [vmem:[%s2] sm:$0xff]
      %v1088 = vld [vmem:[%s2 + $0x8] sm:$0xff]
      %v1089 = vld [vmem:[%s2 + $0x10] sm:$0xff]
      %v1090 = vld [vmem:[%s2 + $0x18] sm:$0xff]
      %v1091 = vld [vmem:[%s2 + $0x20] sm:$0xff]
      %v1092 = vld [vmem:[%s2 + $0x28] sm:$0xff]
      %v1093 = vld [vmem:[%s2 + $0x30] sm:$0xff]
      %v1094 = vld [vmem:[%s2 + $0x38] sm:$0xff]
      %v1095 = vld [vmem:[%s2 + $0x40] sm:$0xff]
      %v1096 = vld [vmem:[%s2 + $0x48] sm:$0xff]
      %v1097 = vld [vmem:[%s2 + $0x50] sm:$0xff]
      %v1098 = vld [vmem:[%s2 + $0x58] sm:$0xff]
      %v1099 = vld [vmem:[%s2 + $0x60] sm:$0xff]
      %v1100 = vld [vmem:[%s2 + $0x68] sm:$0xff]
      %v1101 = vld [vmem:[%s2 + $0x70] sm:$0xff]
      %v1102 = vld [vmem:[%s2 + $0x78] sm:$0xff]
      %v1104 = vsel %vm740, %v1069, 0
      %v1107 = vsel %vm740, %v1070, 0
      %v1110 = vsel %vm740, %v1071, 0
      %v1113 = vsel %vm740, %v1072, 0
      %v1116 = vsel %vm740, %v1073, 0
      %v1119 = vsel %vm740, %v1074, 0
      %v1122 = vsel %vm740, %v1075, 0
      %v1125 = vsel %vm740, %v1076, 0
      %v1128 = vsel %vm740, %v1077, 0
      %v1131 = vsel %vm740, %v1078, 0
      %v1134 = vsel %vm740, %v1079, 0
      %v1137 = vsel %vm740, %v1080, 0
      %v1140 = vsel %vm740, %v1081, 0
      %v1143 = vsel %vm740, %v1082, 0
      %v1146 = vsel %vm740, %v1083, 0
      %v1149 = vsel %vm740, %v1084, 0
      %v1152 = vsel %vm810, %v1086, 0
      %1154 = vmatprep.subr.mxu0 0.0
      %1155 = vmatpush1.msra.mxu0 %v1085
      %1156 = vmatprep.subr.mxu0 0.0
      %1157 = vmatpush1.msra.mxu0 %v1152
      %1158 = vmatprep.subr.mxu0 0.0
      %1159 = vmatpush1.msra.mxu0 0.0
      %1160 = vmatprep.subr.mxu0 0.0
      %1161 = vmatpush1.msra.mxu0 0.0
      %1162 = vmatprep.subr.mxu0 0.0
      %1163 = vmatpush1.msra.mxu0 0.0
      %1164 = vmatprep.subr.mxu0 0.0
      %1165 = vmatpush1.msra.mxu0 0.0
      %1166 = vmatprep.subr.mxu0 0.0
      %1167 = vmatpush1.msra.mxu0 0.0
      %1168 = vmatprep.subr.mxu0 0.0
      %1169 = vmatpush1.msra.mxu0 0.0
      %1170 = vmatprep.subr.mxu0 0.0
      %1171 = vmatpush1.msra.mxu0 0.0
      %1172 = vmatprep.subr.mxu0 0.0
      %1173 = vmatpush1.msra.mxu0 0.0
      %1174 = vmatprep.subr.mxu0 0.0
      %1175 = vmatpush1.msra.mxu0 0.0
      %1176 = vmatprep.subr.mxu0 0.0
      %1177 = vmatpush1.msra.mxu0 0.0
      %1178 = vmatprep.subr.mxu0 0.0
      %1179 = vmatpush1.msra.mxu0 0.0
      %1180 = vmatprep.subr.mxu0 0.0
      %1181 = vmatpush1.msra.mxu0 0.0
      %1182 = vmatprep.subr.mxu0 0.0
      %1183 = vmatpush1.msra.mxu0 0.0
      %1184 = vmatprep.subr.mxu0 0.0
      %1185 = vmatpush1.msra.mxu0 0.0
      %1186 = vmatprep.subr.mxu0 0.0
      %1187 = vmatpush1.msra.mxu0 0.0
      %1188 = vmatprep.subr.mxu0 0.0
      %1189 = vmatpush1.msra.mxu0 0.0
      %1190 = vmatprep.subr.mxu0 0.0
      %1191 = vmatpush1.msra.mxu0 0.0
      %1192 = vmatprep.subr.mxu0 0.0
      %1193 = vmatpush1.msra.mxu0 0.0
      %1194 = vmatprep.subr.mxu0 0.0
      %1195 = vmatpush1.msra.mxu0 0.0
      %1196 = vmatprep.subr.mxu0 0.0
      %1197 = vmatpush1.msra.mxu0 0.0
      %1198 = vmatprep.subr.mxu0 0.0
      %1199 = vmatpush1.msra.mxu0 0.0
      %1200 = vmatprep.subr.mxu0 0.0
      %1201 = vmatpush1.msra.mxu0 0.0
      %1202 = vmatprep.subr.mxu0 0.0
      %1203 = vmatpush1.msra.mxu0 0.0
      %1204 = vmatprep.subr.mxu0 0.0
      %1205 = vmatpush1.msra.mxu0 0.0
      %1206 = vmatprep.subr.mxu0 0.0
      %1207 = vmatpush1.msra.mxu0 0.0
      %1208 = vmatprep.subr.mxu0 0.0
      %1209 = vmatpush1.msra.mxu0 0.0
      %1210 = vmatprep.subr.mxu0 0.0
      %1211 = vmatpush1.msra.mxu0 0.0
      %1212 = vmatprep.subr.mxu0 0.0
      %1213 = vmatpush1.msra.mxu0 0.0
      %1214 = vmatprep.subr.mxu0 0.0
      %1215 = vmatpush1.msra.mxu0 0.0
      %1216 = vmatprep.subr.mxu0 0.0
      %1217 = vmatpush1.msra.mxu0 0.0
      %1218 = vmatprep.mubr.f32.mxu0 0.0
      %1219 = vmatmul.mubr.f32.gmra.mrb[0].mxu0 %v1104
      %v1220 = vpop.f32.mrb[0].mxu0
      %v1221 = vadd.f32 %v1087, %v1220
      %v1222 = vpop.f32.mrb[0].mxu0
      %1223 = vmatprep.mubr.f32.mxu0 0.0
      %1224 = vmatmul.mubr.f32.gmra.mrb[0].mxu0 %v1107
      %v1225 = vpop.f32.mrb[0].mxu0
      %v1226 = vadd.f32 %v1088, %v1225
      %v1227 = vpop.f32.mrb[0].mxu0
      %1228 = vmatprep.mubr.f32.mxu0 0.0
      %1229 = vmatmul.mubr.f32.gmra.mrb[0].mxu0 %v1110
      %v1230 = vpop.f32.mrb[0].mxu0
      %v1231 = vadd.f32 %v1089, %v1230
      %v1232 = vpop.f32.mrb[0].mxu0
      %1233 = vmatprep.mubr.f32.mxu0 0.0
      %1234 = vmatmul.mubr.f32.gmra.mrb[0].mxu0 %v1113
      %v1235 = vpop.f32.mrb[0].mxu0
      %v1236 = vadd.f32 %v1090, %v1235
      %v1237 = vpop.f32.mrb[0].mxu0
      %1238 = vmatprep.mubr.f32.mxu0 0.0
      %1239 = vmatmul.mubr.f32.gmra.mrb[0].mxu0 %v1116
      %v1240 = vpop.f32.mrb[0].mxu0
      %v1241 = vadd.f32 %v1091, %v1240
      %v1242 = vpop.f32.mrb[0].mxu0
      %1243 = vmatprep.mubr.f32.mxu0 0.0
      %1244 = vmatmul.mubr.f32.gmra.mrb[0].mxu0 %v1119
      %v1245 = vpop.f32.mrb[0].mxu0
      %v1246 = vadd.f32 %v1092, %v1245
      %v1247 = vpop.f32.mrb[0].mxu0
      %1248 = vmatprep.mubr.f32.mxu0 0.0
      %1249 = vmatmul.mubr.f32.gmra.mrb[0].mxu0 %v1122
      %v1250 = vpop.f32.mrb[0].mxu0
      %v1251 = vadd.f32 %v1093, %v1250
      %v1252 = vpop.f32.mrb[0].mxu0
      %1253 = vmatprep.mubr.f32.mxu0 0.0
      %1254 = vmatmul.mubr.f32.gmra.mrb[0].mxu0 %v1125
      %v1255 = vpop.f32.mrb[0].mxu0
      %v1256 = vadd.f32 %v1094, %v1255
      %v1257 = vpop.f32.mrb[0].mxu0
      %1258 = vmatprep.mubr.f32.mxu0 0.0
      %1259 = vmatmul.mubr.f32.gmra.mrb[0].mxu0 %v1128
      %v1260 = vpop.f32.mrb[0].mxu0
      %v1261 = vadd.f32 %v1095, %v1260
      %v1262 = vpop.f32.mrb[0].mxu0
      %1263 = vmatprep.mubr.f32.mxu0 0.0
      %1264 = vmatmul.mubr.f32.gmra.mrb[0].mxu0 %v1131
      %v1265 = vpop.f32.mrb[0].mxu0
      %v1266 = vadd.f32 %v1096, %v1265
      %v1267 = vpop.f32.mrb[0].mxu0
      %1268 = vmatprep.mubr.f32.mxu0 0.0
      %1269 = vmatmul.mubr.f32.gmra.mrb[0].mxu0 %v1134
      %v1270 = vpop.f32.mrb[0].mxu0
      %v1271 = vadd.f32 %v1097, %v1270
      %v1272 = vpop.f32.mrb[0].mxu0
      %1273 = vmatprep.mubr.f32.mxu0 0.0
      %1274 = vmatmul.mubr.f32.gmra.mrb[0].mxu0 %v1137
      %v1275 = vpop.f32.mrb[0].mxu0
      %v1276 = vadd.f32 %v1098, %v1275
      %v1277 = vpop.f32.mrb[0].mxu0
      %1278 = vmatprep.mubr.f32.mxu0 0.0
      %1279 = vmatmul.mubr.f32.gmra.mrb[0].mxu0 %v1140
      %v1280 = vpop.f32.mrb[0].mxu0
      %v1281 = vadd.f32 %v1099, %v1280
      %v1282 = vpop.f32.mrb[0].mxu0
      %1283 = vmatprep.mubr.f32.mxu0 0.0
      %1284 = vmatmul.mubr.f32.gmra.mrb[0].mxu0 %v1143
      %v1285 = vpop.f32.mrb[0].mxu0
      %v1286 = vadd.f32 %v1100, %v1285
      %v1287 = vpop.f32.mrb[0].mxu0
      %1288 = vmatprep.mubr.f32.mxu0 0.0
      %1289 = vmatmul.mubr.f32.gmra.mrb[0].mxu0 %v1146
      %v1290 = vpop.f32.mrb[0].mxu0
      %v1291 = vadd.f32 %v1101, %v1290
      %v1292 = vpop.f32.mrb[0].mxu0
      %1293 = vmatprep.mubr.f32.mxu0 0.0
      %1294 = vmatmul.mubr.f32.gmra.mrb[0].mxu0 %v1149
      %v1295 = vpop.f32.mrb[0].mxu0
      %v1296 = vadd.f32 %v1102, %v1295
      %v1297 = vpop.f32.mrb[0].mxu0
      %1298 = vdwg.mxu0
      %1299 = vst [vmem:[%s406] sm:$0xff] %v1221
      %1300 = vst [vmem:[%s406 + $0x8] sm:$0xff] %v1226
      %1301 = vst [vmem:[%s406 + $0x10] sm:$0xff] %v1231
      %1302 = vst [vmem:[%s406 + $0x18] sm:$0xff] %v1236
      %1303 = vst [vmem:[%s406 + $0x20] sm:$0xff] %v1241
      %1304 = vst [vmem:[%s406 + $0x28] sm:$0xff] %v1246
      %1305 = vst [vmem:[%s406 + $0x30] sm:$0xff] %v1251
      %1306 = vst [vmem:[%s406 + $0x38] sm:$0xff] %v1256
      %1307 = vst [vmem:[%s406 + $0x40] sm:$0xff] %v1261
      %1308 = vst [vmem:[%s406 + $0x48] sm:$0xff] %v1266
      %1309 = vst [vmem:[%s406 + $0x50] sm:$0xff] %v1271
      %1310 = vst [vmem:[%s406 + $0x58] sm:$0xff] %v1276
      %1311 = vst [vmem:[%s406 + $0x60] sm:$0xff] %v1281
      %1312 = vst [vmem:[%s406 + $0x68] sm:$0xff] %v1286
      %1313 = vst [vmem:[%s406 + $0x70] sm:$0xff] %v1291
      %1314 = vst [vmem:[%s406 + $0x78] sm:$0xff] %v1296
      %p1315 = scmp.lt.s32.totalorder %s22, 1
      %s1316 = scalar_select %p1315, %s22, 1
      %s1317 = smul.addr %s1316, 16
      %s1318 = smul.addr %s1317, 8
      %s1319 = scalar_lea.vmem %s11, %s1318
      // Predicated region
      $region65: #{se_vit_forward.2} parent=63 // pred_check
        %p1320 = pneg %p281
      $region66: #{se_vit_forward.2} parent=63 // pred_check_branch
        %1322 = sbr.rel (%p1320) target = $region68
      $region67: #{se_vit_forward.2} parent=63 // pred_region
        _
      $region68: #{se_vit_forward.2} parent=63 // pred_fallthru
        _
    $region64: #{se_vit_forward.2} parent=5 // pred_fallthru
      _
    %p1323 = scmp.le.s32.totalorder 2, %s17
    // Predicated region
    $region69: #{se_vit_forward.2} parent=5 // pred_check
      %p1324 = pneg %p1323
    $region70: #{se_vit_forward.2} parent=5 // pred_check_branch
      %1326 = sbr.rel (%p1324) target = $region72
    $region71: #{se_vit_forward.2} parent=5 // pred_region
      %s1327 = ssub.s32 %s17, 2
      // Predicated region
      $region73: #{se_vit_forward.2} parent=71 // pred_check
        %p1328 = pneg %p287
      $region74: #{se_vit_forward.2} parent=71 // pred_check_branch
        %1330 = sbr.rel (%p1328) target = $region76
      $region75: #{se_vit_forward.2} parent=71 // pred_region
        %p1331 = scmp.lt.s32.totalorder %s23, 1
        %s1332 = scalar_select %p1331, %s23, 1
        %s1333 = smul.addr %s1332, 16
        %s1334 = smul.addr %s1333, 8
        %s1335 = scalar_lea.vmem %s11, %s1334
      $region76: #{se_vit_forward.2} parent=71 // pred_fallthru
        _
    $region72: #{se_vit_forward.2} parent=5 // pred_fallthru
      _
  $region6: #{se_vit_forward.2} parent=0 // loop_footer
    %s21 = sadd.s32 1, %s17
  $region7: #{se_vit_forward.2} parent=0 // loop_footer_branch
    %16 = sbr.rel target = $region3
  $region8: #{se_vit_forward.2} parent=0 // loop_exit
    _

// kernel: se_vit_forward.3
$region0: #{se_vit_forward.3}
  #allocation0 [shape = 'u32[]', space=smem, size = 0x4, offset = 0x4, fixed_abs, tag = 'smem constant byte address 0x4 - core index']
  #allocation1 [shape = 'u32[144,128]{1,0:T(1,128)}', space=vmem, size = 0x12000, scoped, tag = 'internal scratch']
  #allocation2 [shape = 'f32[128,128]{1,0:T(8,128)}', space=vmem, size = 0x10000, scoped, tag = 'scratch operand']
  %s0 = inlined_call_operand.vmem [shape: f32[2,128,128], index: 0, kind: input, shape index: {}]
  %s1 = inlined_call_operand.vmem [shape: f32[2,1,128], index: 1, kind: input, shape index: {}]
  %s2 = inlined_call_operand.vmem [shape: f32[2,1,128], index: 2, kind: input, shape index: {}]
  %s3 = inlined_call_operand.vmem [shape: f32[2,128,384], index: 3, kind: input, shape index: {}]
  %s4 = inlined_call_operand.vmem [shape: f32[2,1,384], index: 4, kind: input, shape index: {}]
  %s5 = inlined_call_operand.vmem [shape: f32[2,128,128], index: 5, kind: input, shape index: {}]
  %s6 = inlined_call_operand.vmem [shape: f32[2,1,128], index: 6, kind: input, shape index: {}]
  %s7 = inlined_call_operand.vmem [shape: f32[2,1,128], index: 7, kind: input, shape index: {}]
  %s8 = inlined_call_operand.vmem [shape: f32[2,1,128], index: 8, kind: input, shape index: {}]
  %s9 = inlined_call_operand.vmem [shape: f32[2,128,512], index: 9, kind: input, shape index: {}]
  %s10 = inlined_call_operand.vmem [shape: f32[2,1,512], index: 10, kind: input, shape index: {}]
  %s11 = inlined_call_operand.vmem [shape: f32[2,512,128], index: 11, kind: input, shape index: {}]
  %s12 = inlined_call_operand.vmem [shape: f32[2,1,128], index: 12, kind: input, shape index: {}]
  %s13 = inlined_call_operand.vmem [shape: f32[1,128], index: 13, kind: input, shape index: {}]
  %s14 = inlined_call_operand.vmem [shape: f32[1,128], index: 14, kind: input, shape index: {}]
  %s15 = inlined_call_operand.vmem [shape: f32[2,128,128], index: 15, kind: output, shape index: {}]
  %s16 = sld [smem:[#allocation0]]
  $region101: #{se_vit_forward.3} parent=0
    _
  %s18 = ssub.s32 1, %s16
  %s19 = scalar_select 0, %s18, %s16
  loop: start=0, step=1, limit=6
  $region2: #{se_vit_forward.3} parent=0 // loop_pre_header
    _
  $region3: #{se_vit_forward.3} parent=0 // loop_header
    %s21 = sphi 0, %s25
    %p22 = scmp.ge.s32.totalorder %s21, 6
    %s28 = sphi 0, %s40
    %s29 = sphi 0, %s36
    %s30 = sphi 0, %s28
    %s31 = sphi 0, %s29
    %s32 = sphi 0, %s30
    %s33 = sphi 0, %s31
    %s43 = sphi 0, %s45
    %s46 = sphi 0, %s43
    %s47 = sphi 0, %s46
    %s63 = sphi 0, %s47
    %s69 = sphi 0, %s71
    %s72 = sphi 0, %s69
    %s73 = sphi 0, %s72
    %s89 = sphi 0, %s73
    %s95 = sphi 0, %s97
    %s98 = sphi 0, %s95
    %s99 = sphi 0, %s98
    %s115 = sphi 0, %s99
    %s121 = sphi 0, %s123
    %s124 = sphi 0, %s121
    %s125 = sphi 0, %s124
    %s141 = sphi 0, %s125
    %s147 = sphi 0, %s149
    %s150 = sphi 0, %s147
    %s151 = sphi 0, %s150
    %s167 = sphi 0, %s151
    %s173 = sphi 0, %s175
    %s176 = sphi 0, %s173
    %s177 = sphi 0, %s176
    %s193 = sphi 0, %s177
    %s199 = sphi 0, %s201
    %s202 = sphi 0, %s199
    %s203 = sphi 0, %s202
    %s219 = sphi 0, %s203
    %s225 = sphi 0, %s227
    %s228 = sphi 0, %s225
    %s229 = sphi 0, %s228
    %s245 = sphi 0, %s229
    %s251 = sphi 0, %s253
    %s254 = sphi 0, %s251
    %s255 = sphi 0, %s254
    %s271 = sphi 0, %s255
    %s277 = sphi 0, %s279
    %s280 = sphi 0, %s277
    %s281 = sphi 0, %s280
    %s297 = sphi 0, %s281
    %s303 = sphi 0, %s305
    %s306 = sphi 0, %s303
    %s307 = sphi 0, %s306
    %s323 = sphi 0, %s307
    %s329 = sphi 0, %s331
    %s332 = sphi 0, %s329
    %s333 = sphi 0, %s332
    %s349 = sphi 0, %s333
    %s355 = sphi 0, %s357
    %s358 = sphi 0, %s355
    %s359 = sphi 0, %s358
    %s375 = sphi 0, %s359
    %s379 = sphi 0, %s379
    %s381 = sphi 0, %s379
    %s382 = sphi 0, %s381
    %s396 = sphi 0, %s382
    %s400 = sphi 0, %s400
    %s402 = sphi 0, %s400
    %s403 = sphi 0, %s402
    %s417 = sphi 0, %s403
    %s423 = sphi 0, %s425
    %s426 = sphi 0, %s423
    %s427 = sphi 0, %s426
    %s443 = sphi 0, %s427
  $region4: #{se_vit_forward.3} parent=0 // loop_header_branch
    %24 = sbr.rel (%p22) target = $region8
  $region5: #{se_vit_forward.3} parent=0 // loop_body
    %s26 = ssub.s32 %s21, 1
    %s27 = ssub.s32 %s21, 2
    %s34 = sadd.s32 1, %s29
    %p35 = scmp.ge.s32.totalorder %s34, 2
    %s36 = scalar_select %p35, 0, %s34
    %s37 = sadd.s32 1, %s28
    %s38 = scalar_select %p35, %s37, %s28
    %p39 = scmp.ge.s32.totalorder %s38, 2
    %s40 = scalar_select %p39, 0, %s38
    %s41 = ssub.s32 %s28, %s40
    %p42 = scmp.eq.s32.totalorder %s41, 0
    %s44 = sadd.s32 %s43, 1
    %s45 = scalar_select %p42, %s43, %s44
    %p48 = pneg %p42
    %p49 = scmp.eq.s32.totalorder %s21, 3
    %p50 = por %p48, %p49
    %p51 = scmp.ne.s32.totalorder %s43, %s46
    %p52 = scmp.eq.s32.totalorder %s21, 0
    %p53 = por %p51, %p52
    %p54 = scmp.ne.s32.totalorder %s43, %s46
    %p55 = scmp.eq.s32.totalorder %s26, 3
    %p56 = por %p54, %p55
    %p57 = scmp.ne.s32.totalorder %s46, %s47
    %p58 = scmp.eq.s32.totalorder %s26, 0
    %p59 = por %p57, %p58
    %p60 = scmp.ne.s32.totalorder %s46, %s47
    %p61 = scmp.eq.s32.totalorder %s27, 3
    %p62 = por %p60, %p61
    %p64 = scmp.ne.s32.totalorder %s47, %s63
    %p65 = scmp.eq.s32.totalorder %s27, 0
    %p66 = por %p64, %p65
    %s67 = ssub.s32 %s29, %s36
    %p68 = scmp.eq.s32.totalorder %s67, 0
    %s70 = sadd.s32 %s69, 1
    %s71 = scalar_select %p68, %s69, %s70
    %p74 = pneg %p68
    %p75 = scmp.eq.s32.totalorder %s21, 3
    %p76 = por %p74, %p75
    %p77 = scmp.ne.s32.totalorder %s69, %s72
    %p78 = scmp.eq.s32.totalorder %s21, 0
    %p79 = por %p77, %p78
    %p80 = scmp.ne.s32.totalorder %s69, %s72
    %p81 = scmp.eq.s32.totalorder %s26, 3
    %p82 = por %p80, %p81
    %p83 = scmp.ne.s32.totalorder %s72, %s73
    %p84 = scmp.eq.s32.totalorder %s26, 0
    %p85 = por %p83, %p84
    %p86 = scmp.ne.s32.totalorder %s72, %s73
    %p87 = scmp.eq.s32.totalorder %s27, 3
    %p88 = por %p86, %p87
    %p90 = scmp.ne.s32.totalorder %s73, %s89
    %p91 = scmp.eq.s32.totalorder %s27, 0
    %p92 = por %p90, %p91
    %s93 = ssub.s32 %s29, %s36
    %p94 = scmp.eq.s32.totalorder %s93, 0
    %s96 = sadd.s32 %s95, 1
    %s97 = scalar_select %p94, %s95, %s96
    %p100 = pneg %p94
    %p101 = scmp.eq.s32.totalorder %s21, 3
    %p102 = por %p100, %p101
    %p103 = scmp.ne.s32.totalorder %s95, %s98
    %p104 = scmp.eq.s32.totalorder %s21, 0
    %p105 = por %p103, %p104
    %p106 = scmp.ne.s32.totalorder %s95, %s98
    %p107 = scmp.eq.s32.totalorder %s26, 3
    %p108 = por %p106, %p107
    %p109 = scmp.ne.s32.totalorder %s98, %s99
    %p110 = scmp.eq.s32.totalorder %s26, 0
    %p111 = por %p109, %p110
    %p112 = scmp.ne.s32.totalorder %s98, %s99
    %p113 = scmp.eq.s32.totalorder %s27, 3
    %p114 = por %p112, %p113
    %p116 = scmp.ne.s32.totalorder %s99, %s115
    %p117 = scmp.eq.s32.totalorder %s27, 0
    %p118 = por %p116, %p117
    %s119 = ssub.s32 %s29, %s36
    %p120 = scmp.eq.s32.totalorder %s119, 0
    %s122 = sadd.s32 %s121, 1
    %s123 = scalar_select %p120, %s121, %s122
    %p126 = pneg %p120
    %p127 = scmp.eq.s32.totalorder %s21, 3
    %p128 = por %p126, %p127
    %p129 = scmp.ne.s32.totalorder %s121, %s124
    %p130 = scmp.eq.s32.totalorder %s21, 0
    %p131 = por %p129, %p130
    %p132 = scmp.ne.s32.totalorder %s121, %s124
    %p133 = scmp.eq.s32.totalorder %s26, 3
    %p134 = por %p132, %p133
    %p135 = scmp.ne.s32.totalorder %s124, %s125
    %p136 = scmp.eq.s32.totalorder %s26, 0
    %p137 = por %p135, %p136
    %p138 = scmp.ne.s32.totalorder %s124, %s125
    %p139 = scmp.eq.s32.totalorder %s27, 3
    %p140 = por %p138, %p139
    %p142 = scmp.ne.s32.totalorder %s125, %s141
    %p143 = scmp.eq.s32.totalorder %s27, 0
    %p144 = por %p142, %p143
    %s145 = ssub.s32 %s29, %s36
    %p146 = scmp.eq.s32.totalorder %s145, 0
    %s148 = sadd.s32 %s147, 1
    %s149 = scalar_select %p146, %s147, %s148
    %p152 = pneg %p146
    %p153 = scmp.eq.s32.totalorder %s21, 3
    %p154 = por %p152, %p153
    %p155 = scmp.ne.s32.totalorder %s147, %s150
    %p156 = scmp.eq.s32.totalorder %s21, 0
    %p157 = por %p155, %p156
    %p158 = scmp.ne.s32.totalorder %s147, %s150
    %p159 = scmp.eq.s32.totalorder %s26, 3
    %p160 = por %p158, %p159
    %p161 = scmp.ne.s32.totalorder %s150, %s151
    %p162 = scmp.eq.s32.totalorder %s26, 0
    %p163 = por %p161, %p162
    %p164 = scmp.ne.s32.totalorder %s150, %s151
    %p165 = scmp.eq.s32.totalorder %s27, 3
    %p166 = por %p164, %p165
    %p168 = scmp.ne.s32.totalorder %s151, %s167
    %p169 = scmp.eq.s32.totalorder %s27, 0
    %p170 = por %p168, %p169
    %s171 = ssub.s32 %s29, %s36
    %p172 = scmp.eq.s32.totalorder %s171, 0
    %s174 = sadd.s32 %s173, 1
    %s175 = scalar_select %p172, %s173, %s174
    %p178 = pneg %p172
    %p179 = scmp.eq.s32.totalorder %s21, 3
    %p180 = por %p178, %p179
    %p181 = scmp.ne.s32.totalorder %s173, %s176
    %p182 = scmp.eq.s32.totalorder %s21, 0
    %p183 = por %p181, %p182
    %p184 = scmp.ne.s32.totalorder %s173, %s176
    %p185 = scmp.eq.s32.totalorder %s26, 3
    %p186 = por %p184, %p185
    %p187 = scmp.ne.s32.totalorder %s176, %s177
    %p188 = scmp.eq.s32.totalorder %s26, 0
    %p189 = por %p187, %p188
    %p190 = scmp.ne.s32.totalorder %s176, %s177
    %p191 = scmp.eq.s32.totalorder %s27, 3
    %p192 = por %p190, %p191
    %p194 = scmp.ne.s32.totalorder %s177, %s193
    %p195 = scmp.eq.s32.totalorder %s27, 0
    %p196 = por %p194, %p195
    %s197 = ssub.s32 %s29, %s36
    %p198 = scmp.eq.s32.totalorder %s197, 0
    %s200 = sadd.s32 %s199, 1
    %s201 = scalar_select %p198, %s199, %s200
    %p204 = pneg %p198
    %p205 = scmp.eq.s32.totalorder %s21, 3
    %p206 = por %p204, %p205
    %p207 = scmp.ne.s32.totalorder %s199, %s202
    %p208 = scmp.eq.s32.totalorder %s21, 0
    %p209 = por %p207, %p208
    %p210 = scmp.ne.s32.totalorder %s199, %s202
    %p211 = scmp.eq.s32.totalorder %s26, 3
    %p212 = por %p210, %p211
    %p213 = scmp.ne.s32.totalorder %s202, %s203
    %p214 = scmp.eq.s32.totalorder %s26, 0
    %p215 = por %p213, %p214
    %p216 = scmp.ne.s32.totalorder %s202, %s203
    %p217 = scmp.eq.s32.totalorder %s27, 3
    %p218 = por %p216, %p217
    %p220 = scmp.ne.s32.totalorder %s203, %s219
    %p221 = scmp.eq.s32.totalorder %s27, 0
    %p222 = por %p220, %p221
    %s223 = ssub.s32 %s29, %s36
    %p224 = scmp.eq.s32.totalorder %s223, 0
    %s226 = sadd.s32 %s225, 1
    %s227 = scalar_select %p224, %s225, %s226
    %p230 = pneg %p224
    %p231 = scmp.eq.s32.totalorder %s21, 3
    %p232 = por %p230, %p231
    %p233 = scmp.ne.s32.totalorder %s225, %s228
    %p234 = scmp.eq.s32.totalorder %s21, 0
    %p235 = por %p233, %p234
    %p236 = scmp.ne.s32.totalorder %s225, %s228
    %p237 = scmp.eq.s32.totalorder %s26, 3
    %p238 = por %p236, %p237
    %p239 = scmp.ne.s32.totalorder %s228, %s229
    %p240 = scmp.eq.s32.totalorder %s26, 0
    %p241 = por %p239, %p240
    %p242 = scmp.ne.s32.totalorder %s228, %s229
    %p243 = scmp.eq.s32.totalorder %s27, 3
    %p244 = por %p242, %p243
    %p246 = scmp.ne.s32.totalorder %s229, %s245
    %p247 = scmp.eq.s32.totalorder %s27, 0
    %p248 = por %p246, %p247
    %s249 = ssub.s32 %s29, %s36
    %p250 = scmp.eq.s32.totalorder %s249, 0
    %s252 = sadd.s32 %s251, 1
    %s253 = scalar_select %p250, %s251, %s252
    %p256 = pneg %p250
    %p257 = scmp.eq.s32.totalorder %s21, 3
    %p258 = por %p256, %p257
    %p259 = scmp.ne.s32.totalorder %s251, %s254
    %p260 = scmp.eq.s32.totalorder %s21, 0
    %p261 = por %p259, %p260
    %p262 = scmp.ne.s32.totalorder %s251, %s254
    %p263 = scmp.eq.s32.totalorder %s26, 3
    %p264 = por %p262, %p263
    %p265 = scmp.ne.s32.totalorder %s254, %s255
    %p266 = scmp.eq.s32.totalorder %s26, 0
    %p267 = por %p265, %p266
    %p268 = scmp.ne.s32.totalorder %s254, %s255
    %p269 = scmp.eq.s32.totalorder %s27, 3
    %p270 = por %p268, %p269
    %p272 = scmp.ne.s32.totalorder %s255, %s271
    %p273 = scmp.eq.s32.totalorder %s27, 0
    %p274 = por %p272, %p273
    %s275 = ssub.s32 %s29, %s36
    %p276 = scmp.eq.s32.totalorder %s275, 0
    %s278 = sadd.s32 %s277, 1
    %s279 = scalar_select %p276, %s277, %s278
    %p282 = pneg %p276
    %p283 = scmp.eq.s32.totalorder %s21, 3
    %p284 = por %p282, %p283
    %p285 = scmp.ne.s32.totalorder %s277, %s280
    %p286 = scmp.eq.s32.totalorder %s21, 0
    %p287 = por %p285, %p286
    %p288 = scmp.ne.s32.totalorder %s277, %s280
    %p289 = scmp.eq.s32.totalorder %s26, 3
    %p290 = por %p288, %p289
    %p291 = scmp.ne.s32.totalorder %s280, %s281
    %p292 = scmp.eq.s32.totalorder %s26, 0
    %p293 = por %p291, %p292
    %p294 = scmp.ne.s32.totalorder %s280, %s281
    %p295 = scmp.eq.s32.totalorder %s27, 3
    %p296 = por %p294, %p295
    %p298 = scmp.ne.s32.totalorder %s281, %s297
    %p299 = scmp.eq.s32.totalorder %s27, 0
    %p300 = por %p298, %p299
    %s301 = ssub.s32 %s29, %s36
    %p302 = scmp.eq.s32.totalorder %s301, 0
    %s304 = sadd.s32 %s303, 1
    %s305 = scalar_select %p302, %s303, %s304
    %p308 = pneg %p302
    %p309 = scmp.eq.s32.totalorder %s21, 3
    %p310 = por %p308, %p309
    %p311 = scmp.ne.s32.totalorder %s303, %s306
    %p312 = scmp.eq.s32.totalorder %s21, 0
    %p313 = por %p311, %p312
    %p314 = scmp.ne.s32.totalorder %s303, %s306
    %p315 = scmp.eq.s32.totalorder %s26, 3
    %p316 = por %p314, %p315
    %p317 = scmp.ne.s32.totalorder %s306, %s307
    %p318 = scmp.eq.s32.totalorder %s26, 0
    %p319 = por %p317, %p318
    %p320 = scmp.ne.s32.totalorder %s306, %s307
    %p321 = scmp.eq.s32.totalorder %s27, 3
    %p322 = por %p320, %p321
    %p324 = scmp.ne.s32.totalorder %s307, %s323
    %p325 = scmp.eq.s32.totalorder %s27, 0
    %p326 = por %p324, %p325
    %s327 = ssub.s32 %s29, %s36
    %p328 = scmp.eq.s32.totalorder %s327, 0
    %s330 = sadd.s32 %s329, 1
    %s331 = scalar_select %p328, %s329, %s330
    %p334 = pneg %p328
    %p335 = scmp.eq.s32.totalorder %s21, 3
    %p336 = por %p334, %p335
    %p337 = scmp.ne.s32.totalorder %s329, %s332
    %p338 = scmp.eq.s32.totalorder %s21, 0
    %p339 = por %p337, %p338
    %p340 = scmp.ne.s32.totalorder %s329, %s332
    %p341 = scmp.eq.s32.totalorder %s26, 3
    %p342 = por %p340, %p341
    %p343 = scmp.ne.s32.totalorder %s332, %s333
    %p344 = scmp.eq.s32.totalorder %s26, 0
    %p345 = por %p343, %p344
    %p346 = scmp.ne.s32.totalorder %s332, %s333
    %p347 = scmp.eq.s32.totalorder %s27, 3
    %p348 = por %p346, %p347
    %p350 = scmp.ne.s32.totalorder %s333, %s349
    %p351 = scmp.eq.s32.totalorder %s27, 0
    %p352 = por %p350, %p351
    %s353 = ssub.s32 %s29, %s36
    %p354 = scmp.eq.s32.totalorder %s353, 0
    %s356 = sadd.s32 %s355, 1
    %s357 = scalar_select %p354, %s355, %s356
    %p360 = pneg %p354
    %p361 = scmp.eq.s32.totalorder %s21, 3
    %p362 = por %p360, %p361
    %p363 = scmp.ne.s32.totalorder %s355, %s358
    %p364 = scmp.eq.s32.totalorder %s21, 0
    %p365 = por %p363, %p364
    %p366 = scmp.ne.s32.totalorder %s355, %s358
    %p367 = scmp.eq.s32.totalorder %s26, 3
    %p368 = por %p366, %p367
    %p369 = scmp.ne.s32.totalorder %s358, %s359
    %p370 = scmp.eq.s32.totalorder %s26, 0
    %p371 = por %p369, %p370
    %p372 = scmp.ne.s32.totalorder %s358, %s359
    %p373 = scmp.eq.s32.totalorder %s27, 3
    %p374 = por %p372, %p373
    %p376 = scmp.ne.s32.totalorder %s359, %s375
    %p377 = scmp.eq.s32.totalorder %s27, 0
    %p378 = por %p376, %p377
    %s380 = sadd.s32 %s379, 1
    %p383 = scmp.eq.s32.totalorder %s21, 3
    %p384 = scmp.ne.s32.totalorder %s379, %s381
    %p385 = scmp.eq.s32.totalorder %s21, 0
    %p386 = por %p384, %p385
    %p387 = scmp.ne.s32.totalorder %s379, %s381
    %p388 = scmp.eq.s32.totalorder %s26, 3
    %p389 = por %p387, %p388
    %p390 = scmp.ne.s32.totalorder %s381, %s382
    %p391 = scmp.eq.s32.totalorder %s26, 0
    %p392 = por %p390, %p391
    %p393 = scmp.ne.s32.totalorder %s381, %s382
    %p394 = scmp.eq.s32.totalorder %s27, 3
    %p395 = por %p393, %p394
    %p397 = scmp.ne.s32.totalorder %s382, %s396
    %p398 = scmp.eq.s32.totalorder %s27, 0
    %p399 = por %p397, %p398
    %s401 = sadd.s32 %s400, 1
    %p404 = scmp.eq.s32.totalorder %s21, 3
    %p405 = scmp.ne.s32.totalorder %s400, %s402
    %p406 = scmp.eq.s32.totalorder %s21, 0
    %p407 = por %p405, %p406
    %p408 = scmp.ne.s32.totalorder %s400, %s402
    %p409 = scmp.eq.s32.totalorder %s26, 3
    %p410 = por %p408, %p409
    %p411 = scmp.ne.s32.totalorder %s402, %s403
    %p412 = scmp.eq.s32.totalorder %s26, 0
    %p413 = por %p411, %p412
    %p414 = scmp.ne.s32.totalorder %s402, %s403
    %p415 = scmp.eq.s32.totalorder %s27, 3
    %p416 = por %p414, %p415
    %p418 = scmp.ne.s32.totalorder %s403, %s417
    %p419 = scmp.eq.s32.totalorder %s27, 0
    %p420 = por %p418, %p419
    %s421 = ssub.s32 %s28, %s40
    %p422 = scmp.eq.s32.totalorder %s421, 0
    %s424 = sadd.s32 %s423, 1
    %s425 = scalar_select %p422, %s423, %s424
    %p428 = pneg %p422
    %p429 = scmp.eq.s32.totalorder %s21, 3
    %p430 = por %p428, %p429
    %p431 = scmp.ne.s32.totalorder %s423, %s426
    %p432 = scmp.eq.s32.totalorder %s21, 0
    %p433 = por %p431, %p432
    %p434 = scmp.ne.s32.totalorder %s423, %s426
    %p435 = scmp.eq.s32.totalorder %s26, 3
    %p436 = por %p434, %p435
    %p437 = scmp.ne.s32.totalorder %s426, %s427
    %p438 = scmp.eq.s32.totalorder %s26, 0
    %p439 = por %p437, %p438
    %p440 = scmp.ne.s32.totalorder %s426, %s427
    %p441 = scmp.eq.s32.totalorder %s27, 3
    %p442 = por %p440, %p441
    %p444 = scmp.ne.s32.totalorder %s427, %s443
    %p445 = scmp.eq.s32.totalorder %s27, 0
    %p446 = por %p444, %p445
    %p447 = scmp.le.s32.totalorder 1, %s21
    %p448 = scmp.lt.s32.totalorder %s21, 5
    %p449 = pnand %p447, %p448
    %p450 = pneg %p449
    // Predicated region
    $region9: #{se_vit_forward.3} parent=5 // pred_check
      _
    $region10: #{se_vit_forward.3} parent=5 // pred_check_branch
      %452 = sbr.rel (%p449) target = $region12
    $region11: #{se_vit_forward.3} parent=5 // pred_region
      %s453 = ssub.s32 %s21, 1
      // Predicated region
      $region13: #{se_vit_forward.3} parent=11 // pred_check
        %p454 = pneg %p392
      $region14: #{se_vit_forward.3} parent=11 // pred_check_branch
        %456 = sbr.rel (%p454) target = $region16
      $region15: #{se_vit_forward.3} parent=11 // pred_region
        _
      $region16: #{se_vit_forward.3} parent=11 // pred_fallthru
        _
      // Predicated region
      $region17: #{se_vit_forward.3} parent=11 // pred_check
        %p457 = pneg %p413
      $region18: #{se_vit_forward.3} parent=11 // pred_check_branch
        %459 = sbr.rel (%p457) target = $region20
      $region19: #{se_vit_forward.3} parent=11 // pred_region
        _
      $region20: #{se_vit_forward.3} parent=11 // pred_fallthru
        _
    $region12: #{se_vit_forward.3} parent=5 // pred_fallthru
      _
    %p460 = scmp.lt.s32.totalorder %s21, 4
    // Predicated region
    $region21: #{se_vit_forward.3} parent=5 // pred_check
      %p461 = pneg %p460
    $region22: #{se_vit_forward.3} parent=5 // pred_check_branch
      %463 = sbr.rel (%p461) target = $region24
    $region23: #{se_vit_forward.3} parent=5 // pred_region
      // Predicated region
      $region25: #{se_vit_forward.3} parent=23 // pred_check
        %p464 = pneg %p53
      $region26: #{se_vit_forward.3} parent=23 // pred_check_branch
        %466 = sbr.rel (%p464) target = $region28
      $region27: #{se_vit_forward.3} parent=23 // pred_region
        %p467 = scmp.lt.s32.totalorder %s28, 1
        %s468 = scalar_select %p467, %s28, 1
        %s469 = smul.addr %s468, 16
        %s470 = smul.addr %s469, 8
        %s471 = scalar_lea.vmem %s0, %s470
      $region28: #{se_vit_forward.3} parent=23 // pred_fallthru
        _
      // Predicated region
      $region29: #{se_vit_forward.3} parent=23 // pred_check
        %p472 = pneg %p79
      $region30: #{se_vit_forward.3} parent=23 // pred_check_branch
        %474 = sbr.rel (%p472) target = $region32
      $region31: #{se_vit_forward.3} parent=23 // pred_region
        %p475 = scmp.lt.s32.totalorder %s29, 1
        %s476 = scalar_select %p475, %s29, 1
        %s477 = scalar_lea.vmem %s1, %s476
      $region32: #{se_vit_forward.3} parent=23 // pred_fallthru
        _
      // Predicated region
      $region33: #{se_vit_forward.3} parent=23 // pred_check
        %p478 = pneg %p105
      $region34: #{se_vit_forward.3} parent=23 // pred_check_branch
        %480 = sbr.rel (%p478) target = $region36
      $region35: #{se_vit_forward.3} parent=23 // pred_region
        %p481 = scmp.lt.s32.totalorder %s29, 1
        %s482 = scalar_select %p481, %s29, 1
        %s483 = scalar_lea.vmem %s2, %s482
      $region36: #{se_vit_forward.3} parent=23 // pred_fallthru
        _
      // Predicated region
      $region37: #{se_vit_forward.3} parent=23 // pred_check
        %p484 = pneg %p131
      $region38: #{se_vit_forward.3} parent=23 // pred_check_branch
        %486 = sbr.rel (%p484) target = $region40
      $region39: #{se_vit_forward.3} parent=23 // pred_region
        %p487 = scmp.lt.s32.totalorder %s29, 1
        %s488 = scalar_select %p487, %s29, 1
        %s489 = smul.addr %s488, 48
        %s490 = smul.addr %s489, 8
        %s491 = scalar_lea.vmem %s3, %s490
      $region40: #{se_vit_forward.3} parent=23 // pred_fallthru
        _
      // Predicated region
      $region41: #{se_vit_forward.3} parent=23 // pred_check
        %p492 = pneg %p157
      $region42: #{se_vit_forward.3} parent=23 // pred_check_branch
        %494 = sbr.rel (%p492) target = $region44
      $region43: #{se_vit_forward.3} parent=23 // pred_region
        %p495 = scmp.lt.s32.totalorder %s29, 1
        %s496 = scalar_select %p495, %s29, 1
        %s497 = smul.addr %s496, 3
        %s498 = scalar_lea.vmem %s4, %s497
      $region44: #{se_vit_forward.3} parent=23 // pred_fallthru
        _
      // Predicated region
      $region45: #{se_vit_forward.3} parent=23 // pred_check
        %p499 = pneg %p183
      $region46: #{se_vit_forward.3} parent=23 // pred_check_branch
        %501 = sbr.rel (%p499) target = $region48
      $region47: #{se_vit_forward.3} parent=23 // pred_region
        %p502 = scmp.lt.s32.totalorder %s29, 1
        %s503 = scalar_select %p502, %s29, 1
        %s504 = smul.addr %s503, 16
        %s505 = smul.addr %s504, 8
        %s506 = scalar_lea.vmem %s5, %s505
      $region48: #{se_vit_forward.3} parent=23 // pred_fallthru
        _
      // Predicated region
      $region49: #{se_vit_forward.3} parent=23 // pred_check
        %p507 = pneg %p209
      $region50: #{se_vit_forward.3} parent=23 // pred_check_branch
        %509 = sbr.rel (%p507) target = $region52
      $region51: #{se_vit_forward.3} parent=23 // pred_region
        %p510 = scmp.lt.s32.totalorder %s29, 1
        %s511 = scalar_select %p510, %s29, 1
        %s512 = scalar_lea.vmem %s6, %s511
      $region52: #{se_vit_forward.3} parent=23 // pred_fallthru
        _
      // Predicated region
      $region53: #{se_vit_forward.3} parent=23 // pred_check
        %p513 = pneg %p235
      $region54: #{se_vit_forward.3} parent=23 // pred_check_branch
        %515 = sbr.rel (%p513) target = $region56
      $region55: #{se_vit_forward.3} parent=23 // pred_region
        %p516 = scmp.lt.s32.totalorder %s29, 1
        %s517 = scalar_select %p516, %s29, 1
        %s518 = scalar_lea.vmem %s7, %s517
      $region56: #{se_vit_forward.3} parent=23 // pred_fallthru
        _
      // Predicated region
      $region57: #{se_vit_forward.3} parent=23 // pred_check
        %p519 = pneg %p261
      $region58: #{se_vit_forward.3} parent=23 // pred_check_branch
        %521 = sbr.rel (%p519) target = $region60
      $region59: #{se_vit_forward.3} parent=23 // pred_region
        %p522 = scmp.lt.s32.totalorder %s29, 1
        %s523 = scalar_select %p522, %s29, 1
        %s524 = scalar_lea.vmem %s8, %s523
      $region60: #{se_vit_forward.3} parent=23 // pred_fallthru
        _
      // Predicated region
      $region61: #{se_vit_forward.3} parent=23 // pred_check
        %p525 = pneg %p287
      $region62: #{se_vit_forward.3} parent=23 // pred_check_branch
        %527 = sbr.rel (%p525) target = $region64
      $region63: #{se_vit_forward.3} parent=23 // pred_region
        %p528 = scmp.lt.s32.totalorder %s29, 1
        %s529 = scalar_select %p528, %s29, 1
        %s530 = smul.addr %s529, 64
        %s531 = smul.addr %s530, 8
        %s532 = scalar_lea.vmem %s9, %s531
      $region64: #{se_vit_forward.3} parent=23 // pred_fallthru
        _
      // Predicated region
      $region65: #{se_vit_forward.3} parent=23 // pred_check
        %p533 = pneg %p313
      $region66: #{se_vit_forward.3} parent=23 // pred_check_branch
        %535 = sbr.rel (%p533) target = $region68
      $region67: #{se_vit_forward.3} parent=23 // pred_region
        %p536 = scmp.lt.s32.totalorder %s29, 1
        %s537 = scalar_select %p536, %s29, 1
        %s538 = smul.addr %s537, 4
        %s539 = scalar_lea.vmem %s10, %s538
      $region68: #{se_vit_forward.3} parent=23 // pred_fallthru
        _
      // Predicated region
      $region69: #{se_vit_forward.3} parent=23 // pred_check
        %p540 = pneg %p339
      $region70: #{se_vit_forward.3} parent=23 // pred_check_branch
        %542 = sbr.rel (%p540) target = $region72
      $region71: #{se_vit_forward.3} parent=23 // pred_region
        %p543 = scmp.lt.s32.totalorder %s29, 1
        %s544 = scalar_select %p543, %s29, 1
        %s545 = smul.addr %s544, 64
        %s546 = smul.addr %s545, 8
        %s547 = scalar_lea.vmem %s11, %s546
      $region72: #{se_vit_forward.3} parent=23 // pred_fallthru
        _
      // Predicated region
      $region73: #{se_vit_forward.3} parent=23 // pred_check
        %p548 = pneg %p365
      $region74: #{se_vit_forward.3} parent=23 // pred_check_branch
        %550 = sbr.rel (%p548) target = $region76
      $region75: #{se_vit_forward.3} parent=23 // pred_region
        %p551 = scmp.lt.s32.totalorder %s29, 1
        %s552 = scalar_select %p551, %s29, 1
        %s553 = scalar_lea.vmem %s12, %s552
      $region76: #{se_vit_forward.3} parent=23 // pred_fallthru
        _
    $region24: #{se_vit_forward.3} parent=5 // pred_fallthru
      _
    %p554 = scmp.le.s32.totalorder 1, %s21
    %p555 = scmp.lt.s32.totalorder %s21, 5
    %p556 = pnand %p554, %p555
    %p557 = pneg %p556
    // Predicated region
    $region77: #{se_vit_forward.3} parent=5 // pred_check
      _
    $region78: #{se_vit_forward.3} parent=5 // pred_check_branch
      %559 = sbr.rel (%p556) target = $region80
    $region79: #{se_vit_forward.3} parent=5 // pred_region
      %s560 = ssub.s32 %s21, 1
      %p561 = scmp.lt.s32.totalorder %s30, 1
      %s562 = scalar_select %p561, %s30, 1
      %s563 = smul.addr %s562, 16
      %s564 = smul.addr %s563, 8
      %s565 = scalar_lea.vmem %s0, %s564
      %p566 = pneg %p59
      %p567 = pneg %p56
      %p568 = scmp.lt.s32.totalorder %s31, 1
      %s569 = scalar_select %p568, %s31, 1
      %s570 = scalar_lea.vmem %s1, %s569
      %p571 = pneg %p85
      %p572 = pneg %p82
      %p573 = scmp.lt.s32.totalorder %s31, 1
      %s574 = scalar_select %p573, %s31, 1
      %s575 = scalar_lea.vmem %s2, %s574
      %p576 = pneg %p111
      %p577 = pneg %p108
      %p578 = scmp.lt.s32.totalorder %s31, 1
      %s579 = scalar_select %p578, %s31, 1
      %s580 = smul.addr %s579, 48
      %s581 = smul.addr %s580, 8
      %s582 = scalar_lea.vmem %s3, %s581
      %p583 = pneg %p137
      %p584 = pneg %p134
      %p585 = scmp.lt.s32.totalorder %s31, 1
      %s586 = scalar_select %p585, %s31, 1
      %s587 = smul.addr %s586, 3
      %s588 = scalar_lea.vmem %s4, %s587
      %p589 = pneg %p163
      %p590 = pneg %p160
      %p591 = scmp.lt.s32.totalorder %s31, 1
      %s592 = scalar_select %p591, %s31, 1
      %s593 = smul.addr %s592, 16
      %s594 = smul.addr %s593, 8
      %s595 = scalar_lea.vmem %s5, %s594
      %p596 = pneg %p189
      %p597 = pneg %p186
      %p598 = scmp.lt.s32.totalorder %s31, 1
      %s599 = scalar_select %p598, %s31, 1
      %s600 = scalar_lea.vmem %s6, %s599
      %p601 = pneg %p215
      %p602 = pneg %p212
      %p603 = scmp.lt.s32.totalorder %s31, 1
      %s604 = scalar_select %p603, %s31, 1
      %s605 = scalar_lea.vmem %s7, %s604
      %p606 = pneg %p241
      %p607 = pneg %p238
      %p608 = scmp.lt.s32.totalorder %s31, 1
      %s609 = scalar_select %p608, %s31, 1
      %s610 = scalar_lea.vmem %s8, %s609
      %p611 = pneg %p267
      %p612 = pneg %p264
      %p613 = scmp.lt.s32.totalorder %s31, 1
      %s614 = scalar_select %p613, %s31, 1
      %s615 = smul.addr %s614, 64
      %s616 = smul.addr %s615, 8
      %s617 = scalar_lea.vmem %s9, %s616
      %p618 = pneg %p293
      %p619 = pneg %p290
      %p620 = scmp.lt.s32.totalorder %s31, 1
      %s621 = scalar_select %p620, %s31, 1
      %s622 = smul.addr %s621, 4
      %s623 = scalar_lea.vmem %s10, %s622
      %p624 = pneg %p319
      %p625 = pneg %p316
      %p626 = scmp.lt.s32.totalorder %s31, 1
      %s627 = scalar_select %p626, %s31, 1
      %s628 = smul.addr %s627, 64
      %s629 = smul.addr %s628, 8
      %s630 = scalar_lea.vmem %s11, %s629
      %p631 = pneg %p345
      %p632 = pneg %p342
      %p633 = scmp.lt.s32.totalorder %s31, 1
      %s634 = scalar_select %p633, %s31, 1
      %s635 = scalar_lea.vmem %s12, %s634
      %p636 = pneg %p371
      %p637 = pneg %p368
      %p638 = pneg %p392
      %p639 = pneg %p389
      %p640 = pneg %p413
      %p641 = pneg %p410
      %p642 = pneg %p439
      %p643 = pneg %p436
      %p644 = scmp.lt.s32.totalorder %s30, 1
      %s645 = scalar_select %p644, %s30, 1
      %s646 = smul.addr %s645, 16
      %s647 = smul.addr %s646, 8
      %s648 = scalar_lea.vmem %s15, %s647
      %p649 = scmp.lt.s32.totalorder %s30, 1
      %s650 = scalar_select %p649, %s30, 1
      %s651 = smul.addr %s650, 16
      %s652 = smul.addr %s651, 8
      %s653 = scalar_lea.vmem %s0, %s652
      %p654 = scmp.lt.s32.totalorder %s31, 1
      %s655 = scalar_select %p654, %s31, 1
      %s656 = scalar_lea.vmem %s1, %s655
      %p657 = scmp.lt.s32.totalorder %s31, 1
      %s658 = scalar_select %p657, %s31, 1
      %s659 = scalar_lea.vmem %s2, %s658
      %p660 = scmp.lt.s32.totalorder %s31, 1
      %s661 = scalar_select %p660, %s31, 1
      %s662 = smul.addr %s661, 48
      %s663 = smul.addr %s662, 8
      %s664 = scalar_lea.vmem %s3, %s663
      %p665 = scmp.lt.s32.totalorder %s31, 1
      %s666 = scalar_select %p665, %s31, 1
      %s667 = smul.addr %s666, 3
      %s668 = scalar_lea.vmem %s4, %s667
      %p669 = scmp.lt.s32.totalorder %s31, 1
      %s670 = scalar_select %p669, %s31, 1
      %s671 = smul.addr %s670, 16
      %s672 = smul.addr %s671, 8
      %s673 = scalar_lea.vmem %s5, %s672
      %p674 = scmp.lt.s32.totalorder %s31, 1
      %s675 = scalar_select %p674, %s31, 1
      %s676 = scalar_lea.vmem %s6, %s675
      %p677 = scmp.lt.s32.totalorder %s31, 1
      %s678 = scalar_select %p677, %s31, 1
      %s679 = scalar_lea.vmem %s7, %s678
      %p680 = scmp.lt.s32.totalorder %s31, 1
      %s681 = scalar_select %p680, %s31, 1
      %s682 = scalar_lea.vmem %s8, %s681
      %p683 = scmp.lt.s32.totalorder %s31, 1
      %s684 = scalar_select %p683, %s31, 1
      %s685 = smul.addr %s684, 64
      %s686 = smul.addr %s685, 8
      %s687 = scalar_lea.vmem %s9, %s686
      %p688 = scmp.lt.s32.totalorder %s31, 1
      %s689 = scalar_select %p688, %s31, 1
      %s690 = smul.addr %s689, 4
      %s691 = scalar_lea.vmem %s10, %s690
      %p692 = scmp.lt.s32.totalorder %s31, 1
      %s693 = scalar_select %p692, %s31, 1
      %s694 = smul.addr %s693, 64
      %s695 = smul.addr %s694, 8
      %s696 = scalar_lea.vmem %s11, %s695
      %p697 = scmp.lt.s32.totalorder %s31, 1
      %s698 = scalar_select %p697, %s31, 1
      %s699 = scalar_lea.vmem %s12, %s698
      %p700 = scmp.lt.s32.totalorder %s30, 1
      %s701 = scalar_select %p700, %s30, 1
      %s702 = smul.addr %s701, 16
      %s703 = smul.addr %s702, 8
      %s704 = scalar_lea.vmem %s15, %s703
      %p705 = scmp.eq.s32.totalorder %s31, 0
      // Predicated region
      $region81: #{se_vit_forward.3} parent=79 // pred_check
        %p706 = pneg %p705
      $region82: #{se_vit_forward.3} parent=79 // pred_check_branch
        %708 = sbr.rel (%p706) target = $region84
      $region83: #{se_vit_forward.3} parent=79 // pred_region
        %v709 = vld [vmem:[%s653] sm:$0xff]
        %v710 = vld [vmem:[%s653 + $0x8] sm:$0xff]
        %v711 = vld [vmem:[%s653 + $0x10] sm:$0xff]
        %v712 = vld [vmem:[%s653 + $0x18] sm:$0xff]
        %v713 = vld [vmem:[%s653 + $0x20] sm:$0xff]
        %v714 = vld [vmem:[%s653 + $0x28] sm:$0xff]
        %v715 = vld [vmem:[%s653 + $0x30] sm:$0xff]
        %v716 = vld [vmem:[%s653 + $0x38] sm:$0xff]
        %v717 = vld [vmem:[%s653 + $0x40] sm:$0xff]
        %v718 = vld [vmem:[%s653 + $0x48] sm:$0xff]
        %v719 = vld [vmem:[%s653 + $0x50] sm:$0xff]
        %v720 = vld [vmem:[%s653 + $0x58] sm:$0xff]
        %v721 = vld [vmem:[%s653 + $0x60] sm:$0xff]
        %v722 = vld [vmem:[%s653 + $0x68] sm:$0xff]
        %v723 = vld [vmem:[%s653 + $0x70] sm:$0xff]
        %v724 = vld [vmem:[%s653 + $0x78] sm:$0xff]
        %725 = vst [vmem:[#allocation2] sm:$0xff] %v709
        %726 = vst [vmem:[#allocation2 + $0x8] sm:$0xff] %v710
        %727 = vst [vmem:[#allocation2 + $0x10] sm:$0xff] %v711
        %728 = vst [vmem:[#allocation2 + $0x18] sm:$0xff] %v712
        %729 = vst [vmem:[#allocation2 + $0x20] sm:$0xff] %v713
        %730 = vst [vmem:[#allocation2 + $0x28] sm:$0xff] %v714
        %731 = vst [vmem:[#allocation2 + $0x30] sm:$0xff] %v715
        %732 = vst [vmem:[#allocation2 + $0x38] sm:$0xff] %v716
        %733 = vst [vmem:[#allocation2 + $0x40] sm:$0xff] %v717
        %734 = vst [vmem:[#allocation2 + $0x48] sm:$0xff] %v718
        %735 = vst [vmem:[#allocation2 + $0x50] sm:$0xff] %v719
        %736 = vst [vmem:[#allocation2 + $0x58] sm:$0xff] %v720
        %737 = vst [vmem:[#allocation2 + $0x60] sm:$0xff] %v721
        %738 = vst [vmem:[#allocation2 + $0x68] sm:$0xff] %v722
        %739 = vst [vmem:[#allocation2 + $0x70] sm:$0xff] %v723
        %740 = vst [vmem:[#allocation2 + $0x78] sm:$0xff] %v724
      $region84: #{se_vit_forward.3} parent=79 // pred_fallthru
        _
      %v741 = vld [vmem:[#allocation2] sm:$0xff]
      %v742 = vld [vmem:[#allocation2 + $0x8] sm:$0xff]
      %v743 = vld [vmem:[#allocation2 + $0x10] sm:$0xff]
      %v744 = vld [vmem:[#allocation2 + $0x18] sm:$0xff]
      %v745 = vld [vmem:[#allocation2 + $0x20] sm:$0xff]
      %v746 = vld [vmem:[#allocation2 + $0x28] sm:$0xff]
      %v747 = vld [vmem:[#allocation2 + $0x30] sm:$0xff]
      %v748 = vld [vmem:[#allocation2 + $0x38] sm:$0xff]
      %v749 = vld [vmem:[#allocation2 + $0x40] sm:$0xff]
      %v750 = vld [vmem:[#allocation2 + $0x48] sm:$0xff]
      %v751 = vld [vmem:[#allocation2 + $0x50] sm:$0xff]
      %v752 = vld [vmem:[#allocation2 + $0x58] sm:$0xff]
      %v753 = vld [vmem:[#allocation2 + $0x60] sm:$0xff]
      %v754 = vld [vmem:[#allocation2 + $0x68] sm:$0xff]
      %v755 = vld [vmem:[#allocation2 + $0x70] sm:$0xff]
      %v756 = vld [vmem:[#allocation2 + $0x78] sm:$0xff]
      %v757 = vld [vmem:[%s656] sm:$0x1]
      %v758 = vld [vmem:[%s659] sm:$0x1]
      %759 = vadd.xlane.f32.xlu0 %v741
      %v760 = vpop.xlane.xlu0 %759
      %761 = vadd.xlane.f32.xlu0 %v742
      %v762 = vpop.xlane.xlu0 %761
      %763 = vadd.xlane.f32.xlu0 %v743
      %v764 = vpop.xlane.xlu0 %763
      %765 = vadd.xlane.f32.xlu0 %v744
      %v766 = vpop.xlane.xlu0 %765
      %767 = vadd.xlane.f32.xlu0 %v745
      %v768 = vpop.xlane.xlu0 %767
      %769 = vadd.xlane.f32.xlu0 %v746
      %v770 = vpop.xlane.xlu0 %769
      %771 = vadd.xlane.f32.xlu0 %v747
      %v772 = vpop.xlane.xlu0 %771
      %773 = vadd.xlane.f32.xlu0 %v748
      %v774 = vpop.xlane.xlu0 %773
      %775 = vadd.xlane.f32.xlu0 %v749
      %v776 = vpop.xlane.xlu0 %775
      %777 = vadd.xlane.f32.xlu0 %v750
      %v778 = vpop.xlane.xlu0 %777
      %779 = vadd.xlane.f32.xlu0 %v751
      %v780 = vpop.xlane.xlu0 %779
      %781 = vadd.xlane.f32.xlu0 %v752
      %v782 = vpop.xlane.xlu0 %781
      %783 = vadd.xlane.f32.xlu0 %v753
      %v784 = vpop.xlane.xlu0 %783
      %785 = vadd.xlane.f32.xlu0 %v754
      %v786 = vpop.xlane.xlu0 %785
      %787 = vadd.xlane.f32.xlu0 %v755
      %v788 = vpop.xlane.xlu0 %787
      %789 = vadd.xlane.f32.xlu0 %v756
      %v790 = vpop.xlane.xlu0 %789
      %v791 = vrcp.pop 128.0
      %v792 = vmul.f32 %v760, %v791
      %v793 = vmul.f32 %v762, %v791
      %v794 = vmul.f32 %v764, %v791
      %v795 = vmul.f32 %v766, %v791
      %v796 = vmul.f32 %v768, %v791
      %v797 = vmul.f32 %v770, %v791
      %v798 = vmul.f32 %v772, %v791
      %v799 = vmul.f32 %v774, %v791
      %v800 = vmul.f32 %v776, %v791
      %v801 = vmul.f32 %v778, %v791
      %v802 = vmul.f32 %v780, %v791
      %v803 = vmul.f32 %v782, %v791
      %v804 = vmul.f32 %v784, %v791
      %v805 = vmul.f32 %v786, %v791
      %v806 = vmul.f32 %v788, %v791
      %v807 = vmul.f32 %v790, %v791
      %v808 = vsub.f32 %v741, %v792
      %v809 = vsub.f32 %v742, %v793
      %v810 = vsub.f32 %v743, %v794
      %v811 = vsub.f32 %v744, %v795
      %v812 = vsub.f32 %v745, %v796
      %v813 = vsub.f32 %v746, %v797
      %v814 = vsub.f32 %v747, %v798
      %v815 = vsub.f32 %v748, %v799
      %v816 = vsub.f32 %v749, %v800
      %v817 = vsub.f32 %v750, %v801
      %v818 = vsub.f32 %v751, %v802
      %v819 = vsub.f32 %v752, %v803
      %v820 = vsub.f32 %v753, %v804
      %v821 = vsub.f32 %v754, %v805
      %v822 = vsub.f32 %v755, %v806
      %v823 = vsub.f32 %v756, %v807
      %v824 = vmul.f32 %v808, %v808
      %v825 = vmul.f32 %v809, %v809
      %v826 = vmul.f32 %v810, %v810
      %v827 = vmul.f32 %v811, %v811
      %v828 = vmul.f32 %v812, %v812
      %v829 = vmul.f32 %v813, %v813
      %v830 = vmul.f32 %v814, %v814
      %v831 = vmul.f32 %v815, %v815
      %v832 = vmul.f32 %v816, %v816
      %v833 = vmul.f32 %v817, %v817
      %v834 = vmul.f32 %v818, %v818
      %v835 = vmul.f32 %v819, %v819
      %v836 = vmul.f32 %v820, %v820
      %v837 = vmul.f32 %v821, %v821
      %v838 = vmul.f32 %v822, %v822
      %v839 = vmul.f32 %v823, %v823
      %840 = vadd.xlane.f32.xlu0 %v824
      %v841 = vpop.xlane.xlu0 %840
      %842 = vadd.xlane.f32.xlu0 %v825
      %v843 = vpop.xlane.xlu0 %842
      %844 = vadd.xlane.f32.xlu0 %v826
      %v845 = vpop.xlane.xlu0 %844
      %846 = vadd.xlane.f32.xlu0 %v827
      %v847 = vpop.xlane.xlu0 %846
      %848 = vadd.xlane.f32.xlu0 %v828
      %v849 = vpop.xlane.xlu0 %848
      %850 = vadd.xlane.f32.xlu0 %v829
      %v851 = vpop.xlane.xlu0 %850
      %852 = vadd.xlane.f32.xlu0 %v830
      %v853 = vpop.xlane.xlu0 %852
      %854 = vadd.xlane.f32.xlu0 %v831
      %v855 = vpop.xlane.xlu0 %854
      %856 = vadd.xlane.f32.xlu0 %v832
      %v857 = vpop.xlane.xlu0 %856
      %858 = vadd.xlane.f32.xlu0 %v833
      %v859 = vpop.xlane.xlu0 %858
      %860 = vadd.xlane.f32.xlu0 %v834
      %v861 = vpop.xlane.xlu0 %860
      %862 = vadd.xlane.f32.xlu0 %v835
      %v863 = vpop.xlane.xlu0 %862
      %864 = vadd.xlane.f32.xlu0 %v836
      %v865 = vpop.xlane.xlu0 %864
      %866 = vadd.xlane.f32.xlu0 %v837
      %v867 = vpop.xlane.xlu0 %866
      %868 = vadd.xlane.f32.xlu0 %v838
      %v869 = vpop.xlane.xlu0 %868
      %870 = vadd.xlane.f32.xlu0 %v839
      %v871 = vpop.xlane.xlu0 %870
      %v872 = vmul.f32 %v841, %v791
      %v873 = vmul.f32 %v843, %v791
      %v874 = vmul.f32 %v845, %v791
      %v875 = vmul.f32 %v847, %v791
      %v876 = vmul.f32 %v849, %v791
      %v877 = vmul.f32 %v851, %v791
      %v878 = vmul.f32 %v853, %v791
      %v879 = vmul.f32 %v855, %v791
      %v880 = vmul.f32 %v857, %v791
      %v881 = vmul.f32 %v859, %v791
      %v882 = vmul.f32 %v861, %v791
      %v883 = vmul.f32 %v863, %v791
      %v884 = vmul.f32 %v865, %v791
      %v885 = vmul.f32 %v867, %v791
      %v886 = vmul.f32 %v869, %v791
      %v887 = vmul.f32 %v871, %v791
      %v888 = vadd.f32 %v872, 1e-06
      %v889 = vadd.f32 %v873, 1e-06
      %v890 = vadd.f32 %v874, 1e-06
      %v891 = vadd.f32 %v875, 1e-06
      %v892 = vadd.f32 %v876, 1e-06
      %v893 = vadd.f32 %v877, 1e-06
      %v894 = vadd.f32 %v878, 1e-06
      %v895 = vadd.f32 %v879, 1e-06
      %v896 = vadd.f32 %v880, 1e-06
      %v897 = vadd.f32 %v881, 1e-06
      %v898 = vadd.f32 %v882, 1e-06
      %v899 = vadd.f32 %v883, 1e-06
      %v900 = vadd.f32 %v884, 1e-06
      %v901 = vadd.f32 %v885, 1e-06
      %v902 = vadd.f32 %v886, 1e-06
      %v903 = vadd.f32 %v887, 1e-06
      %v904 = vrsqrt.pop %v888
      %v905 = vrsqrt.pop %v889
      %v906 = vrsqrt.pop %v890
      %v907 = vrsqrt.pop %v891
      %v908 = vrsqrt.pop %v892
      %v909 = vrsqrt.pop %v893
      %v910 = vrsqrt.pop %v894
      %v911 = vrsqrt.pop %v895
      %v912 = vrsqrt.pop %v896
      %v913 = vrsqrt.pop %v897
      %v914 = vrsqrt.pop %v898
      %v915 = vrsqrt.pop %v899
      %v916 = vrsqrt.pop %v900
      %v917 = vrsqrt.pop %v901
      %v918 = vrsqrt.pop %v902
      %v919 = vrsqrt.pop %v903
      %v920 = vmul.f32 %v808, %v904
      %v921 = vmul.f32 %v809, %v905
      %v922 = vmul.f32 %v810, %v906
      %v923 = vmul.f32 %v811, %v907
      %v924 = vmul.f32 %v812, %v908
      %v925 = vmul.f32 %v813, %v909
      %v926 = vmul.f32 %v814, %v910
      %v927 = vmul.f32 %v815, %v911
      %v928 = vmul.f32 %v816, %v912
      %v929 = vmul.f32 %v817, %v913
      %v930 = vmul.f32 %v818, %v914
      %v931 = vmul.f32 %v819, %v915
      %v932 = vmul.f32 %v820, %v916
      %v933 = vmul.f32 %v821, %v917
      %v934 = vmul.f32 %v822, %v918
      %v935 = vmul.f32 %v823, %v919
      %v937 = vlaneseq
      %v938 = vshrl.u32 %v937, 7
      %v939 = vsub.s32 0, %v938
      %v940 = vrot.slane %v757, %v939
      %v942 = vmul.f32 %v920, %v940
      %v943 = vmul.f32 %v921, %v940
      %v944 = vmul.f32 %v922, %v940
      %v945 = vmul.f32 %v923, %v940
      %v946 = vmul.f32 %v924, %v940
      %v947 = vmul.f32 %v925, %v940
      %v948 = vmul.f32 %v926, %v940
      %v949 = vmul.f32 %v927, %v940
      %v950 = vmul.f32 %v928, %v940
      %v951 = vmul.f32 %v929, %v940
      %v952 = vmul.f32 %v930, %v940
      %v953 = vmul.f32 %v931, %v940
      %v954 = vmul.f32 %v932, %v940
      %v955 = vmul.f32 %v933, %v940
      %v956 = vmul.f32 %v934, %v940
      %v957 = vmul.f32 %v935, %v940
      %v959 = vlaneseq
      %v960 = vshrl.u32 %v959, 7
      %v961 = vsub.s32 0, %v960
      %v962 = vrot.slane %v758, %v961
      %v964 = vadd.f32 %v942, %v962
      %v965 = vadd.f32 %v943, %v962
      %v966 = vadd.f32 %v944, %v962
      %v967 = vadd.f32 %v945, %v962
      %v968 = vadd.f32 %v946, %v962
      %v969 = vadd.f32 %v947, %v962
      %v970 = vadd.f32 %v948, %v962
      %v971 = vadd.f32 %v949, %v962
      %v972 = vadd.f32 %v950, %v962
      %v973 = vadd.f32 %v951, %v962
      %v974 = vadd.f32 %v952, %v962
      %v975 = vadd.f32 %v953, %v962
      %v976 = vadd.f32 %v954, %v962
      %v977 = vadd.f32 %v955, %v962
      %v978 = vadd.f32 %v956, %v962
      %v979 = vadd.f32 %v957, %v962
      %v980 = vld [vmem:[%s664] sm:$0xff]
      %v981 = vld [vmem:[%s664 + $0x8] sm:$0xff]
      %v982 = vld [vmem:[%s664 + $0x10] sm:$0xff]
      %v983 = vld [vmem:[%s664 + $0x18] sm:$0xff]
      %v984 = vld [vmem:[%s664 + $0x20] sm:$0xff]
      %v985 = vld [vmem:[%s664 + $0x28] sm:$0xff]
      %v986 = vld [vmem:[%s664 + $0x30] sm:$0xff]
      %v987 = vld [vmem:[%s664 + $0x38] sm:$0xff]
      %v988 = vld [vmem:[%s664 + $0x40] sm:$0xff]
      %v989 = vld [vmem:[%s664 + $0x48] sm:$0xff]
      %v990 = vld [vmem:[%s664 + $0x50] sm:$0xff]
      %v991 = vld [vmem:[%s664 + $0x58] sm:$0xff]
      %v992 = vld [vmem:[%s664 + $0x60] sm:$0xff]
      %v993 = vld [vmem:[%s664 + $0x68] sm:$0xff]
      %v994 = vld [vmem:[%s664 + $0x70] sm:$0xff]
      %v995 = vld [vmem:[%s664 + $0x78] sm:$0xff]
      %v996 = vld [vmem:[%s664 + $0x80] sm:$0xff]
      %v997 = vld [vmem:[%s664 + $0x88] sm:$0xff]
      %v998 = vld [vmem:[%s664 + $0x90] sm:$0xff]
      %v999 = vld [vmem:[%s664 + $0x98] sm:$0xff]
      %v1000 = vld [vmem:[%s664 + $0xa0] sm:$0xff]
      %v1001 = vld [vmem:[%s664 + $0xa8] sm:$0xff]
      %v1002 = vld [vmem:[%s664 + $0xb0] sm:$0xff]
      %v1003 = vld [vmem:[%s664 + $0xb8] sm:$0xff]
      %v1004 = vld [vmem:[%s664 + $0xc0] sm:$0xff]
      %v1005 = vld [vmem:[%s664 + $0xc8] sm:$0xff]
      %v1006 = vld [vmem:[%s664 + $0xd0] sm:$0xff]
      %v1007 = vld [vmem:[%s664 + $0xd8] sm:$0xff]
      %v1008 = vld [vmem:[%s664 + $0xe0] sm:$0xff]
      %v1009 = vld [vmem:[%s664 + $0xe8] sm:$0xff]
      %v1010 = vld [vmem:[%s664 + $0xf0] sm:$0xff]
      %v1011 = vld [vmem:[%s664 + $0xf8] sm:$0xff]
      %v1012 = vld [vmem:[%s664 + $0x100] sm:$0xff]
      %v1013 = vld [vmem:[%s664 + $0x108] sm:$0xff]
      %v1014 = vld [vmem:[%s664 + $0x110] sm:$0xff]
      %v1015 = vld [vmem:[%s664 + $0x118] sm:$0xff]
      %v1016 = vld [vmem:[%s664 + $0x120] sm:$0xff]
      %v1017 = vld [vmem:[%s664 + $0x128] sm:$0xff]
      %v1018 = vld [vmem:[%s664 + $0x130] sm:$0xff]
      %v1019 = vld [vmem:[%s664 + $0x138] sm:$0xff]
      %v1020 = vld [vmem:[%s664 + $0x140] sm:$0xff]
      %v1021 = vld [vmem:[%s664 + $0x148] sm:$0xff]
      %v1022 = vld [vmem:[%s664 + $0x150] sm:$0xff]
      %v1023 = vld [vmem:[%s664 + $0x158] sm:$0xff]
      %v1024 = vld [vmem:[%s664 + $0x160] sm:$0xff]
      %v1025 = vld [vmem:[%s664 + $0x168] sm:$0xff]
      %v1026 = vld [vmem:[%s664 + $0x170] sm:$0xff]
      %v1027 = vld [vmem:[%s664 + $0x178] sm:$0xff]
      %v1028 = vld [vmem:[%s668] sm:$0x7]
      %v1030 = vlaneseq
      %v1031 = vshrl.u32 %v1030, 7
      %v1032 = vsub.s32 0, %v1031
      %v1033 = vrot.slane %v1028, %v1032
      %v1034 = vlaneseq
      %v1035 = vshrl.u32 %v1034, 7
      %v1036 = vsub.s32 1, %v1035
      %v1037 = vrot.slane %v1028, %v1036
      %v1038 = vlaneseq
      %v1039 = vshrl.u32 %v1038, 7
      %v1040 = vsub.s32 2, %v1039
      %v1041 = vrot.slane %v1028, %v1040
      %1045 = vmatprep.subr.mxu0 %v981
      %1046 = vmatpush1.msra.mxu0 %v980
      %1047 = vmatprep.subr.mxu0 %v984
      %1048 = vmatpush1.msra.mxu0 %v983
      %1049 = vmatprep.subr.mxu0 %v987
      %1050 = vmatpush1.msra.mxu0 %v986
      %1051 = vmatprep.subr.mxu0 %v990
      %1052 = vmatpush1.msra.mxu0 %v989
      %1053 = vmatprep.subr.mxu0 %v993
      %1054 = vmatpush1.msra.mxu0 %v992
      %1055 = vmatprep.subr.mxu0 %v996
      %1056 = vmatpush1.msra.mxu0 %v995
      %1057 = vmatprep.subr.mxu0 %v999
      %1058 = vmatpush1.msra.mxu0 %v998
      %1059 = vmatprep.subr.mxu0 %v1002
      %1060 = vmatpush1.msra.mxu0 %v1001
      %1061 = vmatprep.subr.mxu0 %v1005
      %1062 = vmatpush1.msra.mxu0 %v1004
      %1063 = vmatprep.subr.mxu0 %v1008
      %1064 = vmatpush1.msra.mxu0 %v1007
      %1065 = vmatprep.subr.mxu0 %v1011
      %1066 = vmatpush1.msra.mxu0 %v1010
      %1067 = vmatprep.subr.mxu0 %v1014
      %1068 = vmatpush1.msra.mxu0 %v1013
      %1069 = vmatprep.subr.mxu0 %v1017
      %1070 = vmatpush1.msra.mxu0 %v1016
      %1071 = vmatprep.subr.mxu0 %v1020
      %1072 = vmatpush1.msra.mxu0 %v1019
      %1073 = vmatprep.subr.mxu0 %v1023
      %1074 = vmatpush1.msra.mxu0 %v1022
      %1075 = vmatprep.subr.mxu0 %v1026
      %1076 = vmatpush1.msra.mxu0 %v1025
      %1077 = vmatprep.subr.mxu0 0.0
      %1078 = vmatpush1.msra.mxu0 0.0
      %1079 = vmatprep.subr.mxu0 0.0
      %1080 = vmatpush1.msra.mxu0 0.0
      %1081 = vmatprep.subr.mxu0 0.0
      %1082 = vmatpush1.msra.mxu0 0.0
      %1083 = vmatprep.subr.mxu0 0.0
      %1084 = vmatpush1.msra.mxu0 0.0
      %1085 = vmatprep.subr.mxu0 0.0
      %1086 = vmatpush1.msra.mxu0 0.0
      %1087 = vmatprep.subr.mxu0 0.0
      %1088 = vmatpush1.msra.mxu0 0.0
      %1089 = vmatprep.subr.mxu0 0.0
      %1090 = vmatpush1.msra.mxu0 0.0
      %1091 = vmatprep.subr.mxu0 0.0
      %1092 = vmatpush1.msra.mxu0 0.0
      %1093 = vmatprep.subr.mxu0 0.0
      %1094 = vmatpush1.msra.mxu0 0.0
      %1095 = vmatprep.subr.mxu0 0.0
      %1096 = vmatpush1.msra.mxu0 0.0
      %1097 = vmatprep.subr.mxu0 0.0
      %1098 = vmatpush1.msra.mxu0 0.0
      %1099 = vmatprep.subr.mxu0 0.0
      %1100 = vmatpush1.msra.mxu0 0.0
      %1101 = vmatprep.subr.mxu0 0.0
      %1102 = vmatpush1.msra.mxu0 0.0
      %1103 = vmatprep.subr.mxu0 0.0
      %1104 = vmatpush1.msra.mxu0 0.0
      %1105 = vmatprep.subr.mxu0 0.0
      %1106 = vmatpush1.msra.mxu0 0.0
      %1107 = vmatprep.subr.mxu0 0.0
      %1108 = vmatpush1.msra.mxu0 0.0
      %1109 = vmatprep.mubr.f32.mxu0 0.0
      %1110 = vmatmul.mubr.f32.gmra.mrb[0].mxu0 %v964
      %v1111 = vpop.f32.mrb[0].mxu0
      %v1112 = vadd.f32 %v1033, %v1111
      %v1113 = vpop.f32.mrb[0].mxu0
      %v1114 = vadd.f32 %v1037, %v1113
      %1115 = vmatprep.mubr.f32.mxu0 0.0
      %1116 = vmatmul.mubr.f32.gmra.mrb[0].mxu0 %v965
      %v1117 = vpop.f32.mrb[0].mxu0
      %v1118 = vadd.f32 %v1033, %v1117
      %v1119 = vpop.f32.mrb[0].mxu0
      %v1120 = vadd.f32 %v1037, %v1119
      %1121 = vmatprep.mubr.f32.mxu0 0.0
      %1122 = vmatmul.mubr.f32.gmra.mrb[0].mxu0 %v966
      %v1123 = vpop.f32.mrb[0].mxu0
      %v1124 = vadd.f32 %v1033, %v1123
      %v1125 = vpop.f32.mrb[0].mxu0
      %v1126 = vadd.f32 %v1037, %v1125
      %1127 = vmatprep.mubr.f32.mxu0 0.0
      %1128 = vmatmul.mubr.f32.gmra.mrb[0].mxu0 %v967
      %v1129 = vpop.f32.mrb[0].mxu0
      %v1130 = vadd.f32 %v1033, %v1129
      %v1131 = vpop.f32.mrb[0].mxu0
      %v1132 = vadd.f32 %v1037, %v1131
      %1133 = vmatprep.mubr.f32.mxu0 0.0
      %1134 = vmatmul.mubr.f32.gmra.mrb[0].mxu0 %v968
      %v1135 = vpop.f32.mrb[0].mxu0
      %v1136 = vadd.f32 %v1033, %v1135
      %v1137 = vpop.f32.mrb[0].mxu0
      %v1138 = vadd.f32 %v1037, %v1137
      %1139 = vmatprep.mubr.f32.mxu0 0.0
      %1140 = vmatmul.mubr.f32.gmra.mrb[0].mxu0 %v969
      %v1141 = vpop.f32.mrb[0].mxu0
      %v1142 = vadd.f32 %v1033, %v1141
      %v1143 = vpop.f32.mrb[0].mxu0
      %v1144 = vadd.f32 %v1037, %v1143
      %1145 = vmatprep.mubr.f32.mxu0 0.0
      %1146 = vmatmul.mubr.f32.gmra.mrb[0].mxu0 %v970
      %v1147 = vpop.f32.mrb[0].mxu0
      %v1148 = vadd.f32 %v1033, %v1147
      %v1149 = vpop.f32.mrb[0].mxu0
      %v1150 = vadd.f32 %v1037, %v1149
      %1151 = vmatprep.mubr.f32.mxu0 0.0
      %1152 = vmatmul.mubr.f32.gmra.mrb[0].mxu0 %v971
      %v1153 = vpop.f32.mrb[0].mxu0
      %v1154 = vadd.f32 %v1033, %v1153
      %v1155 = vpop.f32.mrb[0].mxu0
      %v1156 = vadd.f32 %v1037, %v1155
      %1157 = vmatprep.mubr.f32.mxu0 0.0
      %1158 = vmatmul.mubr.f32.gmra.mrb[0].mxu0 %v972
      %v1159 = vpop.f32.mrb[0].mxu0
      %v1160 = vadd.f32 %v1033, %v1159
      %v1161 = vpop.f32.mrb[0].mxu0
      %v1162 = vadd.f32 %v1037, %v1161
      %1163 = vmatprep.mubr.f32.mxu0 0.0
      %1164 = vmatmul.mubr.f32.gmra.mrb[0].mxu0 %v973
      %v1165 = vpop.f32.mrb[0].mxu0
      %v1166 = vadd.f32 %v1033, %v1165
      %v1167 = vpop.f32.mrb[0].mxu0
      %v1168 = vadd.f32 %v1037, %v1167
      %1169 = vmatprep.mubr.f32.mxu0 0.0
      %1170 = vmatmul.mubr.f32.gmra.mrb[0].mxu0 %v974
      %v1171 = vpop.f32.mrb[0].mxu0
      %v1172 = vadd.f32 %v1033, %v1171
      %v1173 = vpop.f32.mrb[0].mxu0
      %v1174 = vadd.f32 %v1037, %v1173
      %1175 = vmatprep.mubr.f32.mxu0 0.0
      %1176 = vmatmul.mubr.f32.gmra.mrb[0].mxu0 %v975
      %v1177 = vpop.f32.mrb[0].mxu0
      %v1178 = vadd.f32 %v1033, %v1177
      %v1179 = vpop.f32.mrb[0].mxu0
      %v1180 = vadd.f32 %v1037, %v1179
      %1181 = vmatprep.mubr.f32.mxu0 0.0
      %1182 = vmatmul.mubr.f32.gmra.mrb[0].mxu0 %v976
      %v1183 = vpop.f32.mrb[0].mxu0
      %v1184 = vadd.f32 %v1033, %v1183
      %v1185 = vpop.f32.mrb[0].mxu0
      %v1186 = vadd.f32 %v1037, %v1185
      %1187 = vmatprep.mubr.f32.mxu0 0.0
      %1188 = vmatmul.mubr.f32.gmra.mrb[0].mxu0 %v977
      %v1189 = vpop.f32.mrb[0].mxu0
      %v1190 = vadd.f32 %v1033, %v1189
      %v1191 = vpop.f32.mrb[0].mxu0
      %v1192 = vadd.f32 %v1037, %v1191
      %1193 = vmatprep.mubr.f32.mxu0 0.0
      %1194 = vmatmul.mubr.f32.gmra.mrb[0].mxu0 %v978
      %v1195 = vpop.f32.mrb[0].mxu0
      %v1196 = vadd.f32 %v1033, %v1195
      %v1197 = vpop.f32.mrb[0].mxu0
      %v1198 = vadd.f32 %v1037, %v1197
      %1199 = vmatprep.mubr.f32.mxu0 0.0
      %1200 = vmatmul.mubr.f32.gmra.mrb[0].mxu0 %v979
      %v1201 = vpop.f32.mrb[0].mxu0
      %v1202 = vadd.f32 %v1033, %v1201
      %v1203 = vpop.f32.mrb[0].mxu0
      %v1204 = vadd.f32 %v1037, %v1203
      %1205 = vdwg.mxu0
      %1206 = vmatprep.subr.mxu0 0.0
      %1207 = vmatpush1.msra.mxu0 %v982
      %1208 = vmatprep.subr.mxu0 0.0
      %1209 = vmatpush1.msra.mxu0 %v985
      %1210 = vmatprep.subr.mxu0 0.0
      %1211 = vmatpush1.msra.mxu0 %v988
      %1212 = vmatprep.subr.mxu0 0.0
      %1213 = vmatpush1.msra.mxu0 %v991
      %1214 = vmatprep.subr.mxu0 0.0
      %1215 = vmatpush1.msra.mxu0 %v994
      %1216 = vmatprep.subr.mxu0 0.0
      %1217 = vmatpush1.msra.mxu0 %v997
      %1218 = vmatprep.subr.mxu0 0.0
      %1219 = vmatpush1.msra.mxu0 %v1000
      %1220 = vmatprep.subr.mxu0 0.0
      %1221 = vmatpush1.msra.mxu0 %v1003
      %1222 = vmatprep.subr.mxu0 0.0
      %1223 = vmatpush1.msra.mxu0 %v1006
      %1224 = vmatprep.subr.mxu0 0.0
      %1225 = vmatpush1.msra.mxu0 %v1009
      %1226 = vmatprep.subr.mxu0 0.0
      %1227 = vmatpush1.msra.mxu0 %v1012
      %1228 = vmatprep.subr.mxu0 0.0
      %1229 = vmatpush1.msra.mxu0 %v1015
      %1230 = vmatprep.subr.mxu0 0.0
      %1231 = vmatpush1.msra.mxu0 %v1018
      %1232 = vmatprep.subr.mxu0 0.0
      %1233 = vmatpush1.msra.mxu0 %v1021
      %1234 = vmatprep.subr.mxu0 0.0
      %1235 = vmatpush1.msra.mxu0 %v1024
      %1236 = vmatprep.subr.mxu0 0.0
      %1237 = vmatpush1.msra.mxu0 %v1027
      %1238 = vmatprep.subr.mxu0 0.0
      %1239 = vmatpush1.msra.mxu0 0.0
      %1240 = vmatprep.subr.mxu0 0.0
      %1241 = vmatpush1.msra.mxu0 0.0
      %1242 = vmatprep.subr.mxu0 0.0
      %1243 = vmatpush1.msra.mxu0 0.0
      %1244 = vmatprep.subr.mxu0 0.0
      %1245 = vmatpush1.msra.mxu0 0.0
      %1246 = vmatprep.subr.mxu0 0.0
      %1247 = vmatpush1.msra.mxu0 0.0
      %1248 = vmatprep.subr.mxu0 0.0
      %1249 = vmatpush1.msra.mxu0 0.0
      %1250 = vmatprep.subr.mxu0 0.0
      %1251 = vmatpush1.msra.mxu0 0.0
      %1252 = vmatprep.subr.mxu0 0.0
      %1253 = vmatpush1.msra.mxu0 0.0
      %1254 = vmatprep.subr.mxu0 0.0
      %1255 = vmatpush1.msra.mxu0 0.0
      %1256 = vmatprep.subr.mxu0 0.0
      %1257 = vmatpush1.msra.mxu0 0.0
      %1258 = vmatprep.subr.mxu0 0.0
      %1259 = vmatpush1.msra.mxu0 0.0
      %1260 = vmatprep.subr.mxu0 0.0
      %1261 = vmatpush1.msra.mxu0 0.0
      %1262 = vmatprep.subr.mxu0 0.0
      %1263 = vmatpush1.msra.mxu0 0.0
      %1264 = vmatprep.subr.mxu0 0.0
      %1265 = vmatpush1.msra.mxu0 0.0
      %1266 = vmatprep.subr.mxu0 0.0
      %1267 = vmatpush1.msra.mxu0 0.0
      %1268 = vmatprep.subr.mxu0 0.0
      %1269 = vmatpush1.msra.mxu0 0.0
      %1270 = vmatprep.mubr.f32.mxu0 0.0
      %1271 = vmatmul.mubr.f32.gmra.mrb[0].mxu0 %v964
      %v1272 = vpop.f32.mrb[0].mxu0
      %v1273 = vadd.f32 %v1041, %v1272
      %v1274 = vpop.f32.mrb[0].mxu0
      %1275 = vmatprep.mubr.f32.mxu0 0.0
      %1276 = vmatmul.mubr.f32.gmra.mrb[0].mxu0 %v965
      %v1277 = vpop.f32.mrb[0].mxu0
      %v1278 = vadd.f32 %v1041, %v1277
      %v1279 = vpop.f32.mrb[0].mxu0
      %1280 = vmatprep.mubr.f32.mxu0 0.0
      %1281 = vmatmul.mubr.f32.gmra.mrb[0].mxu0 %v966
      %v1282 = vpop.f32.mrb[0].mxu0
      %v1283 = vadd.f32 %v1041, %v1282
      %v1284 = vpop.f32.mrb[0].mxu0
      %1285 = vmatprep.mubr.f32.mxu0 0.0
      %1286 = vmatmul.mubr.f32.gmra.mrb[0].mxu0 %v967
      %v1287 = vpop.f32.mrb[0].mxu0
      %v1288 = vadd.f32 %v1041, %v1287
      %v1289 = vpop.f32.mrb[0].mxu0
      %1290 = vmatprep.mubr.f32.mxu0 0.0
      %1291 = vmatmul.mubr.f32.gmra.mrb[0].mxu0 %v968
      %v1292 = vpop.f32.mrb[0].mxu0
      %v1293 = vadd.f32 %v1041, %v1292
      %v1294 = vpop.f32.mrb[0].mxu0
      %1295 = vmatprep.mubr.f32.mxu0 0.0
      %1296 = vmatmul.mubr.f32.gmra.mrb[0].mxu0 %v969
      %v1297 = vpop.f32.mrb[0].mxu0
      %v1298 = vadd.f32 %v1041, %v1297
      %v1299 = vpop.f32.mrb[0].mxu0
      %1300 = vmatprep.mubr.f32.mxu0 0.0
      %1301 = vmatmul.mubr.f32.gmra.mrb[0].mxu0 %v970
      %v1302 = vpop.f32.mrb[0].mxu0
      %v1303 = vadd.f32 %v1041, %v1302
      %v1304 = vpop.f32.mrb[0].mxu0
      %1305 = vmatprep.mubr.f32.mxu0 0.0
      %1306 = vmatmul.mubr.f32.gmra.mrb[0].mxu0 %v971
      %v1307 = vpop.f32.mrb[0].mxu0
      %v1308 = vadd.f32 %v1041, %v1307
      %v1309 = vpop.f32.mrb[0].mxu0
      %1310 = vmatprep.mubr.f32.mxu0 0.0
      %1311 = vmatmul.mubr.f32.gmra.mrb[0].mxu0 %v972
      %v1312 = vpop.f32.mrb[0].mxu0
      %v1313 = vadd.f32 %v1041, %v1312
      %v1314 = vpop.f32.mrb[0].mxu0
      %1315 = vmatprep.mubr.f32.mxu0 0.0
      %1316 = vmatmul.mubr.f32.gmra.mrb[0].mxu0 %v973
      %v1317 = vpop.f32.mrb[0].mxu0
      %v1318 = vadd.f32 %v1041, %v1317
      %v1319 = vpop.f32.mrb[0].mxu0
      %1320 = vmatprep.mubr.f32.mxu0 0.0
      %1321 = vmatmul.mubr.f32.gmra.mrb[0].mxu0 %v974
      %v1322 = vpop.f32.mrb[0].mxu0
      %v1323 = vadd.f32 %v1041, %v1322
      %v1324 = vpop.f32.mrb[0].mxu0
      %1325 = vmatprep.mubr.f32.mxu0 0.0
      %1326 = vmatmul.mubr.f32.gmra.mrb[0].mxu0 %v975
      %v1327 = vpop.f32.mrb[0].mxu0
      %v1328 = vadd.f32 %v1041, %v1327
      %v1329 = vpop.f32.mrb[0].mxu0
      %1330 = vmatprep.mubr.f32.mxu0 0.0
      %1331 = vmatmul.mubr.f32.gmra.mrb[0].mxu0 %v976
      %v1332 = vpop.f32.mrb[0].mxu0
      %v1333 = vadd.f32 %v1041, %v1332
      %v1334 = vpop.f32.mrb[0].mxu0
      %1335 = vmatprep.mubr.f32.mxu0 0.0
      %1336 = vmatmul.mubr.f32.gmra.mrb[0].mxu0 %v977
      %v1337 = vpop.f32.mrb[0].mxu0
      %v1338 = vadd.f32 %v1041, %v1337
      %v1339 = vpop.f32.mrb[0].mxu0
      %1340 = vmatprep.mubr.f32.mxu0 0.0
      %1341 = vmatmul.mubr.f32.gmra.mrb[0].mxu0 %v978
      %v1342 = vpop.f32.mrb[0].mxu0
      %v1343 = vadd.f32 %v1041, %v1342
      %v1344 = vpop.f32.mrb[0].mxu0
      %1345 = vmatprep.mubr.f32.mxu0 0.0
      %1346 = vmatmul.mubr.f32.gmra.mrb[0].mxu0 %v979
      %v1347 = vpop.f32.mrb[0].mxu0
      %v1348 = vadd.f32 %v1041, %v1347
      %v1349 = vpop.f32.mrb[0].mxu0
      %1350 = vdwg.mxu0
      %1351 = vxpose.xlu0.b32.start [1/16] %v1112, 128
      %1352 = vxpose.xlu0.b32.cont [2/16] %v1118, 128
      %1353 = vxpose.xlu0.b32.cont [3/16] %v1124, 128
      %1354 = vxpose.xlu0.b32.cont [4/16] %v1130, 128
      %1355 = vxpose.xlu0.b32.cont [5/16] %v1136, 128
      %1356 = vxpose.xlu0.b32.cont [6/16] %v1142, 128
      %1357 = vxpose.xlu0.b32.cont [7/16] %v1148, 128
      %1358 = vxpose.xlu0.b32.cont [8/16] %v1154, 128
      %1359 = vxpose.xlu0.b32.cont [9/16] %v1160, 128
      %1360 = vxpose.xlu0.b32.cont [10/16] %v1166, 128
      %1361 = vxpose.xlu0.b32.cont [11/16] %v1172, 128
      %1362 = vxpose.xlu0.b32.cont [12/16] %v1178, 128
      %1363 = vxpose.xlu0.b32.cont [13/16] %v1184, 128
      %1364 = vxpose.xlu0.b32.cont [14/16] %v1190, 128
      %1365 = vxpose.xlu0.b32.cont [15/16] %v1196, 128
      %1366 = vxpose.xlu0.b32.end [16/16] %v1202, 128
      %v1367 = vpop.trf.xlu0
      %v1368 = vpop.trf.xlu0
      %v1369 = vpop.trf.xlu0
      %v1370 = vpop.trf.xlu0
      %v1371 = vpop.trf.xlu0
      %v1372 = vpop.trf.xlu0
      %v1373 = vpop.trf.xlu0
      %v1374 = vpop.trf.xlu0
      %v1375 = vpop.trf.xlu0
      %v1376 = vpop.trf.xlu0
      %v1377 = vpop.trf.xlu0
      %v1378 = vpop.trf.xlu0
      %v1379 = vpop.trf.xlu0
      %v1380 = vpop.trf.xlu0
      %v1381 = vpop.trf.xlu0
      %v1382 = vpop.trf.xlu0
      %1383 = vxpose.xlu0.b32.start [1/16] %v1114, 128
      %1384 = vxpose.xlu0.b32.cont [2/16] %v1120, 128
      %1385 = vxpose.xlu0.b32.cont [3/16] %v1126, 128
      %1386 = vxpose.xlu0.b32.cont [4/16] %v1132, 128
      %1387 = vxpose.xlu0.b32.cont [5/16] %v1138, 128
      %1388 = vxpose.xlu0.b32.cont [6/16] %v1144, 128
      %1389 = vxpose.xlu0.b32.cont [7/16] %v1150, 128
      %1390 = vxpose.xlu0.b32.cont [8/16] %v1156, 128
      %1391 = vxpose.xlu0.b32.cont [9/16] %v1162, 128
      %1392 = vxpose.xlu0.b32.cont [10/16] %v1168, 128
      %1393 = vxpose.xlu0.b32.cont [11/16] %v1174, 128
      %1394 = vxpose.xlu0.b32.cont [12/16] %v1180, 128
      %1395 = vxpose.xlu0.b32.cont [13/16] %v1186, 128
      %1396 = vxpose.xlu0.b32.cont [14/16] %v1192, 128
      %1397 = vxpose.xlu0.b32.cont [15/16] %v1198, 128
      %1398 = vxpose.xlu0.b32.end [16/16] %v1204, 128
      %v1399 = vpop.trf.xlu0
      %v1400 = vpop.trf.xlu0
      %v1401 = vpop.trf.xlu0
      %v1402 = vpop.trf.xlu0
      %v1403 = vpop.trf.xlu0
      %v1404 = vpop.trf.xlu0
      %v1405 = vpop.trf.xlu0
      %v1406 = vpop.trf.xlu0
      %v1407 = vpop.trf.xlu0
      %v1408 = vpop.trf.xlu0
      %v1409 = vpop.trf.xlu0
      %v1410 = vpop.trf.xlu0
      %v1411 = vpop.trf.xlu0
      %v1412 = vpop.trf.xlu0
      %v1413 = vpop.trf.xlu0
      %v1414 = vpop.trf.xlu0
      %1415 = vxpose.xlu0.b32.start [1/16] %v1273, 128
      %1416 = vxpose.xlu0.b32.cont [2/16] %v1278, 128
      %1417 = vxpose.xlu0.b32.cont [3/16] %v1283, 128
      %1418 = vxpose.xlu0.b32.cont [4/16] %v1288, 128
      %1419 = vxpose.xlu0.b32.cont [5/16] %v1293, 128
      %1420 = vxpose.xlu0.b32.cont [6/16] %v1298, 128
      %1421 = vxpose.xlu0.b32.cont [7/16] %v1303, 128
      %1422 = vxpose.xlu0.b32.cont [8/16] %v1308, 128
      %1423 = vxpose.xlu0.b32.cont [9/16] %v1313, 128
      %1424 = vxpose.xlu0.b32.cont [10/16] %v1318, 128
      %1425 = vxpose.xlu0.b32.cont [11/16] %v1323, 128
      %1426 = vxpose.xlu0.b32.cont [12/16] %v1328, 128
      %1427 = vxpose.xlu0.b32.cont [13/16] %v1333, 128
      %1428 = vxpose.xlu0.b32.cont [14/16] %v1338, 128
      %1429 = vxpose.xlu0.b32.cont [15/16] %v1343, 128
      %1430 = vxpose.xlu0.b32.end [16/16] %v1348, 128
      %v1431 = vpop.trf.xlu0
      %v1432 = vpop.trf.xlu0
      %v1433 = vpop.trf.xlu0
      %v1434 = vpop.trf.xlu0
      %v1435 = vpop.trf.xlu0
      %v1436 = vpop.trf.xlu0
      %v1437 = vpop.trf.xlu0
      %v1438 = vpop.trf.xlu0
      %v1439 = vpop.trf.xlu0
      %v1440 = vpop.trf.xlu0
      %v1441 = vpop.trf.xlu0
      %v1442 = vpop.trf.xlu0
      %v1443 = vpop.trf.xlu0
      %v1444 = vpop.trf.xlu0
      %v1445 = vpop.trf.xlu0
      %v1446 = vpop.trf.xlu0
      %1447 = vxpose.xlu0.b32.start [1/16] %v1367, 128
      %1448 = vxpose.xlu0.b32.cont [2/16] %v1368, 128
      %1449 = vxpose.xlu0.b32.cont [3/16] %v1369, 128
      %1450 = vxpose.xlu0.b32.cont [4/16] %v1370, 128
      %1451 = vxpose.xlu0.b32.cont [5/16] 0.0, 128
      %1452 = vxpose.xlu0.b32.cont [6/16] 0.0, 128
      %1453 = vxpose.xlu0.b32.cont [7/16] 0.0, 128
      %1454 = vxpose.xlu0.b32.cont [8/16] 0.0, 128
      %1455 = vxpose.xlu0.b32.cont [9/16] 0.0, 128
      %1456 = vxpose.xlu0.b32.cont [10/16] 0.0, 128
      %1457 = vxpose.xlu0.b32.cont [11/16] 0.0, 128
      %1458 = vxpose.xlu0.b32.cont [12/16] 0.0, 128
      %1459 = vxpose.xlu0.b32.cont [13/16] 0.0, 128
      %1460 = vxpose.xlu0.b32.cont [14/16] 0.0, 128
      %1461 = vxpose.xlu0.b32.cont [15/16] 0.0, 128
      %1462 = vxpose.xlu0.b32.end [16/16] 0.0, 128
      %v1463 = vpop.trf.xlu0
      %v1464 = vpop.trf.xlu0
      %v1465 = vpop.trf.xlu0
      %v1466 = vpop.trf.xlu0
      %v1467 = vpop.trf.xlu0
      %v1468 = vpop.trf.xlu0
      %v1469 = vpop.trf.xlu0
      %v1470 = vpop.trf.xlu0
      %v1471 = vpop.trf.xlu0
      %v1472 = vpop.trf.xlu0
      %v1473 = vpop.trf.xlu0
      %v1474 = vpop.trf.xlu0
      %v1475 = vpop.trf.xlu0
      %v1476 = vpop.trf.xlu0
      %v1477 = vpop.trf.xlu0
      %v1478 = vpop.trf.xlu0
      %vm1479 = vcmask 261120
      %v1481 = vsel %vm1479, %v1463, 0
      %v1484 = vsel %vm1479, %v1464, 0
      %v1487 = vsel %vm1479, %v1465, 0
      %v1490 = vsel %vm1479, %v1466, 0
      %v1493 = vsel %vm1479, %v1467, 0
      %v1496 = vsel %vm1479, %v1468, 0
      %v1499 = vsel %vm1479, %v1469, 0
      %v1502 = vsel %vm1479, %v1470, 0
      %v1505 = vsel %vm1479, %v1471, 0
      %v1508 = vsel %vm1479, %v1472, 0
      %v1511 = vsel %vm1479, %v1473, 0
      %v1514 = vsel %vm1479, %v1474, 0
      %v1517 = vsel %vm1479, %v1475, 0
      %v1520 = vsel %vm1479, %v1476, 0
      %v1523 = vsel %vm1479, %v1477, 0
      %v1526 = vsel %vm1479, %v1478, 0
      %1528 = vmatprep.subr.mxu0 0.0
      %1529 = vmatpush1.msra.mxu0 %v1399
      %1530 = vmatprep.subr.mxu0 0.0
      %1531 = vmatpush1.msra.mxu0 %v1400
      %1532 = vmatprep.subr.mxu0 0.0
      %1533 = vmatpush1.msra.mxu0 %v1401
      %1534 = vmatprep.subr.mxu0 0.0
      %1535 = vmatpush1.msra.mxu0 %v1402
      %1536 = vmatprep.subr.mxu0 0.0
      %1537 = vmatpush1.msra.mxu0 0.0
      %1538 = vmatprep.subr.mxu0 0.0
      %1539 = vmatpush1.msra.mxu0 0.0
      %1540 = vmatprep.subr.mxu0 0.0
      %1541 = vmatpush1.msra.mxu0 0.0
      %1542 = vmatprep.subr.mxu0 0.0
      %1543 = vmatpush1.msra.mxu0 0.0
      %1544 = vmatprep.subr.mxu0 0.0
      %1545 = vmatpush1.msra.mxu0 0.0
      %1546 = vmatprep.subr.mxu0 0.0
      %1547 = vmatpush1.msra.mxu0 0.0
      %1548 = vmatprep.subr.mxu0 0.0
      %1549 = vmatpush1.msra.mxu0 0.0
      %1550 = vmatprep.subr.mxu0 0.0
      %1551 = vmatpush1.msra.mxu0 0.0
      %1552 = vmatprep.subr.mxu0 0.0
      %1553 = vmatpush1.msra.mxu0 0.0
      %1554 = vmatprep.subr.mxu0 0.0
      %1555 = vmatpush1.msra.mxu0 0.0
      %1556 = vmatprep.subr.mxu0 0.0
      %1557 = vmatpush1.msra.mxu0 0.0
      %1558 = vmatprep.subr.mxu0 0.0
      %1559 = vmatpush1.msra.mxu0 0.0
      %1560 = vmatprep.subr.mxu0 0.0
      %1561 = vmatpush1.msra.mxu0 0.0
      %1562 = vmatprep.subr.mxu0 0.0
      %1563 = vmatpush1.msra.mxu0 0.0
      %1564 = vmatprep.subr.mxu0 0.0
      %1565 = vmatpush1.msra.mxu0 0.0
      %1566 = vmatprep.subr.mxu0 0.0
      %1567 = vmatpush1.msra.mxu0 0.0
      %1568 = vmatprep.subr.mxu0 0.0
      %1569 = vmatpush1.msra.mxu0 0.0
      %1570 = vmatprep.subr.mxu0 0.0
      %1571 = vmatpush1.msra.mxu0 0.0
      %1572 = vmatprep.subr.mxu0 0.0
      %1573 = vmatpush1.msra.mxu0 0.0
      %1574 = vmatprep.subr.mxu0 0.0
      %1575 = vmatpush1.msra.mxu0 0.0
      %1576 = vmatprep.subr.mxu0 0.0
      %1577 = vmatpush1.msra.mxu0 0.0
      %1578 = vmatprep.subr.mxu0 0.0
      %1579 = vmatpush1.msra.mxu0 0.0
      %1580 = vmatprep.subr.mxu0 0.0
      %1581 = vmatpush1.msra.mxu0 0.0
      %1582 = vmatprep.subr.mxu0 0.0
      %1583 = vmatpush1.msra.mxu0 0.0
      %1584 = vmatprep.subr.mxu0 0.0
      %1585 = vmatpush1.msra.mxu0 0.0
      %1586 = vmatprep.subr.mxu0 0.0
      %1587 = vmatpush1.msra.mxu0 0.0
      %1588 = vmatprep.subr.mxu0 0.0
      %1589 = vmatpush1.msra.mxu0 0.0
      %1590 = vmatprep.subr.mxu0 0.0
      %1591 = vmatpush1.msra.mxu0 0.0
      %1592 = vmatprep.mubr.f32.mxu0 0.0
      %1593 = vmatmul.mubr.f32.gmra.mrb[0].mxu0 %v1481
      %v1594 = vpop.f32.mrb[0].mxu0
      %v1595 = vadd.f32 0.0, %v1594
      %v1596 = vpop.f32.mrb[0].mxu0
      %1597 = vmatprep.mubr.f32.mxu0 0.0
      %1598 = vmatmul.mubr.f32.gmra.mrb[0].mxu0 %v1484
      %v1599 = vpop.f32.mrb[0].mxu0
      %v1600 = vadd.f32 0.0, %v1599
      %v1601 = vpop.f32.mrb[0].mxu0
      %1602 = vmatprep.mubr.f32.mxu0 0.0
      %1603 = vmatmul.mubr.f32.gmra.mrb[0].mxu0 %v1487
      %v1604 = vpop.f32.mrb[0].mxu0
      %v1605 = vadd.f32 0.0, %v1604
      %v1606 = vpop.f32.mrb[0].mxu0
      %1607 = vmatprep.mubr.f32.mxu0 0.0
      %1608 = vmatmul.mubr.f32.gmra.mrb[0].mxu0 %v1490
      %v1609 = vpop.f32.mrb[0].mxu0
      %v1610 = vadd.f32 0.0, %v1609
      %v1611 = vpop.f32.mrb[0].mxu0
      %1612 = vmatprep.mubr.f32.mxu0 0.0
      %1613 = vmatmul.mubr.f32.gmra.mrb[0].mxu0 %v1493
      %v1614 = vpop.f32.mrb[0].mxu0
      %v1615 = vadd.f32 0.0, %v1614
      %v1616 = vpop.f32.mrb[0].mxu0
      %1617 = vmatprep.mubr.f32.mxu0 0.0
      %1618 = vmatmul.mubr.f32.gmra.mrb[0].mxu0 %v1496
      %v1619 = vpop.f32.mrb[0].mxu0
      %v1620 = vadd.f32 0.0, %v1619
      %v1621 = vpop.f32.mrb[0].mxu0
      %1622 = vmatprep.mubr.f32.mxu0 0.0
      %1623 = vmatmul.mubr.f32.gmra.mrb[0].mxu0 %v1499
      %v1624 = vpop.f32.mrb[0].mxu0
      %v1625 = vadd.f32 0.0, %v1624
      %v1626 = vpop.f32.mrb[0].mxu0
      %1627 = vmatprep.mubr.f32.mxu0 0.0
      %1628 = vmatmul.mubr.f32.gmra.mrb[0].mxu0 %v1502
      %v1629 = vpop.f32.mrb[0].mxu0
      %v1630 = vadd.f32 0.0, %v1629
      %v1631 = vpop.f32.mrb[0].mxu0
      %1632 = vmatprep.mubr.f32.mxu0 0.0
      %1633 = vmatmul.mubr.f32.gmra.mrb[0].mxu0 %v1505
      %v1634 = vpop.f32.mrb[0].mxu0
      %v1635 = vadd.f32 0.0, %v1634
      %v1636 = vpop.f32.mrb[0].mxu0
      %1637 = vmatprep.mubr.f32.mxu0 0.0
      %1638 = vmatmul.mubr.f32.gmra.mrb[0].mxu0 %v1508
      %v1639 = vpop.f32.mrb[0].mxu0
      %v1640 = vadd.f32 0.0, %v1639
      %v1641 = vpop.f32.mrb[0].mxu0
      %1642 = vmatprep.mubr.f32.mxu0 0.0
      %1643 = vmatmul.mubr.f32.gmra.mrb[0].mxu0 %v1511
      %v1644 = vpop.f32.mrb[0].mxu0
      %v1645 = vadd.f32 0.0, %v1644
      %v1646 = vpop.f32.mrb[0].mxu0
      %1647 = vmatprep.mubr.f32.mxu0 0.0
      %1648 = vmatmul.mubr.f32.gmra.mrb[0].mxu0 %v1514
      %v1649 = vpop.f32.mrb[0].mxu0
      %v1650 = vadd.f32 0.0, %v1649
      %v1651 = vpop.f32.mrb[0].mxu0
      %1652 = vmatprep.mubr.f32.mxu0 0.0
      %1653 = vmatmul.mubr.f32.gmra.mrb[0].mxu0 %v1517
      %v1654 = vpop.f32.mrb[0].mxu0
      %v1655 = vadd.f32 0.0, %v1654
      %v1656 = vpop.f32.mrb[0].mxu0
      %1657 = vmatprep.mubr.f32.mxu0 0.0
      %1658 = vmatmul.mubr.f32.gmra.mrb[0].mxu0 %v1520
      %v1659 = vpop.f32.mrb[0].mxu0
      %v1660 = vadd.f32 0.0, %v1659
      %v1661 = vpop.f32.mrb[0].mxu0
      %1662 = vmatprep.mubr.f32.mxu0 0.0
      %1663 = vmatmul.mubr.f32.gmra.mrb[0].mxu0 %v1523
      %v1664 = vpop.f32.mrb[0].mxu0
      %v1665 = vadd.f32 0.0, %v1664
      %v1666 = vpop.f32.mrb[0].mxu0
      %1667 = vmatprep.mubr.f32.mxu0 0.0
      %1668 = vmatmul.mubr.f32.gmra.mrb[0].mxu0 %v1526
      %v1669 = vpop.f32.mrb[0].mxu0
      %v1670 = vadd.f32 0.0, %v1669
      %v1671 = vpop.f32.mrb[0].mxu0
      %1672 = vdwg.mxu0
      %1673 = vxpose.xlu0.b32.start [1/16] %v1371, 128
      %1674 = vxpose.xlu0.b32.cont [2/16] %v1372, 128
      %1675 = vxpose.xlu0.b32.cont [3/16] %v1373, 128
      %1676 = vxpose.xlu0.b32.cont [4/16] %v1374, 128
      %1677 = vxpose.xlu0.b32.cont [5/16] 0.0, 128
      %1678 = vxpose.xlu0.b32.cont [6/16] 0.0, 128
      %1679 = vxpose.xlu0.b32.cont [7/16] 0.0, 128
      %1680 = vxpose.xlu0.b32.cont [8/16] 0.0, 128
      %1681 = vxpose.xlu0.b32.cont [9/16] 0.0, 128
      %1682 = vxpose.xlu0.b32.cont [10/16] 0.0, 128
      %1683 = vxpose.xlu0.b32.cont [11/16] 0.0, 128
      %1684 = vxpose.xlu0.b32.cont [12/16] 0.0, 128
      %1685 = vxpose.xlu0.b32.cont [13/16] 0.0, 128
      %1686 = vxpose.xlu0.b32.cont [14/16] 0.0, 128
      %1687 = vxpose.xlu0.b32.cont [15/16] 0.0, 128
      %1688 = vxpose.xlu0.b32.end [16/16] 0.0, 128
      %v1689 = vpop.trf.xlu0
      %v1690 = vpop.trf.xlu0
      %v1691 = vpop.trf.xlu0
      %v1692 = vpop.trf.xlu0
      %v1693 = vpop.trf.xlu0
      %v1694 = vpop.trf.xlu0
      %v1695 = vpop.trf.xlu0
      %v1696 = vpop.trf.xlu0
      %v1697 = vpop.trf.xlu0
      %v1698 = vpop.trf.xlu0
      %v1699 = vpop.trf.xlu0
      %v1700 = vpop.trf.xlu0
      %v1701 = vpop.trf.xlu0
      %v1702 = vpop.trf.xlu0
      %v1703 = vpop.trf.xlu0
      %v1704 = vpop.trf.xlu0
      %v1706 = vsel %vm1479, %v1689, 0
      %v1709 = vsel %vm1479, %v1690, 0
      %v1712 = vsel %vm1479, %v1691, 0
      %v1715 = vsel %vm1479, %v1692, 0
      %v1718 = vsel %vm1479, %v1693, 0
      %v1721 = vsel %vm1479, %v1694, 0
      %v1724 = vsel %vm1479, %v1695, 0
      %v1727 = vsel %vm1479, %v1696, 0
      %v1730 = vsel %vm1479, %v1697, 0
      %v1733 = vsel %vm1479, %v1698, 0
      %v1736 = vsel %vm1479, %v1699, 0
      %v1739 = vsel %vm1479, %v1700, 0
      %v1742 = vsel %vm1479, %v1701, 0
      %v1745 = vsel %vm1479, %v1702, 0
      %v1748 = vsel %vm1479, %v1703, 0
      %v1751 = vsel %vm1479, %v1704, 0
      %1753 = vmatprep.subr.mxu0 0.0
      %1754 = vmatpush1.msra.mxu0 %v1403
      %1755 = vmatprep.subr.mxu0 0.0
      %1756 = vmatpush1.msra.mxu0 %v1404
      %1757 = vmatprep.subr.mxu0 0.0
      %1758 = vmatpush1.msra.mxu0 %v1405
      %1759 = vmatprep.subr.mxu0 0.0
      %1760 = vmatpush1.msra.mxu0 %v1406
      %1761 = vmatprep.subr.mxu0 0.0
      %1762 = vmatpush1.msra.mxu0 0.0
      %1763 = vmatprep.subr.mxu0 0.0
      %1764 = vmatpush1.msra.mxu0 0.0
      %1765 = vmatprep.subr.mxu0 0.0
      %1766 = vmatpush1.msra.mxu0 0.0
      %1767 = vmatprep.subr.mxu0 0.0
      %1768 = vmatpush1.msra.mxu0 0.0
      %1769 = vmatprep.subr.mxu0 0.0
      %1770 = vmatpush1.msra.mxu0 0.0
      %1771 = vmatprep.subr.mxu0 0.0
      %1772 = vmatpush1.msra.mxu0 0.0
      %1773 = vmatprep.subr.mxu0 0.0
      %1774 = vmatpush1.msra.mxu0 0.0
      %1775 = vmatprep.subr.mxu0 0.0
      %1776 = vmatpush1.msra.mxu0 0.0
      %1777 = vmatprep.subr.mxu0 0.0
      %1778 = vmatpush1.msra.mxu0 0.0
      %1779 = vmatprep.subr.mxu0 0.0
      %1780 = vmatpush1.msra.mxu0 0.0
      %1781 = vmatprep.subr.mxu0 0.0
      %1782 = vmatpush1.msra.mxu0 0.0
      %1783 = vmatprep.subr.mxu0 0.0
      %1784 = vmatpush1.msra.mxu0 0.0
      %1785 = vmatprep.subr.mxu0 0.0
      %1786 = vmatpush1.msra.mxu0 0.0
      %1787 = vmatprep.subr.mxu0 0.0
      %1788 = vmatpush1.msra.mxu0 0.0
      %1789 = vmatprep.subr.mxu0 0.0
      %1790 = vmatpush1.msra.mxu0 0.0
      %1791 = vmatprep.subr.mxu0 0.0
      %1792 = vmatpush1.msra.mxu0 0.0
      %1793 = vmatprep.subr.mxu0 0.0
      %1794 = vmatpush1.msra.mxu0 0.0
      %1795 = vmatprep.subr.mxu0 0.0
      %1796 = vmatpush1.msra.mxu0 0.0
      %1797 = vmatprep.subr.mxu0 0.0
      %1798 = vmatpush1.msra.mxu0 0.0
      %1799 = vmatprep.subr.mxu0 0.0
      %1800 = vmatpush1.msra.mxu0 0.0
      %1801 = vmatprep.subr.mxu0 0.0
      %1802 = vmatpush1.msra.mxu0 0.0
      %1803 = vmatprep.subr.mxu0 0.0
      %1804 = vmatpush1.msra.mxu0 0.0
      %1805 = vmatprep.subr.mxu0 0.0
      %1806 = vmatpush1.msra.mxu0 0.0
      %1807 = vmatprep.subr.mxu0 0.0
      %1808 = vmatpush1.msra.mxu0 0.0
      %1809 = vmatprep.subr.mxu0 0.0
      %1810 = vmatpush1.msra.mxu0 0.0
      %1811 = vmatprep.subr.mxu0 0.0
      %1812 = vmatpush1.msra.mxu0 0.0
      %1813 = vmatprep.subr.mxu0 0.0
      %1814 = vmatpush1.msra.mxu0 0.0
      %1815 = vmatprep.subr.mxu0 0.0
      %1816 = vmatpush1.msra.mxu0 0.0
      %1817 = vmatprep.mubr.f32.mxu0 0.0
      %1818 = vmatmul.mubr.f32.gmra.mrb[0].mxu0 %v1706
      %v1819 = vpop.f32.mrb[0].mxu0
      %v1820 = vadd.f32 0.0, %v1819
      %v1821 = vpop.f32.mrb[0].mxu0
      %1822 = vmatprep.mubr.f32.mxu0 0.0
      %1823 = vmatmul.mubr.f32.gmra.mrb[0].mxu0 %v1709
      %v1824 = vpop.f32.mrb[0].mxu0
      %v1825 = vadd.f32 0.0, %v1824
      %v1826 = vpop.f32.mrb[0].mxu0
      %1827 = vmatprep.mubr.f32.mxu0 0.0
      %1828 = vmatmul.mubr.f32.gmra.mrb[0].mxu0 %v1712
      %v1829 = vpop.f32.mrb[0].mxu0
      %v1830 = vadd.f32 0.0, %v1829
      %v1831 = vpop.f32.mrb[0].mxu0
      %1832 = vmatprep.mubr.f32.mxu0 0.0
      %1833 = vmatmul.mubr.f32.gmra.mrb[0].mxu0 %v1715
      %v1834 = vpop.f32.mrb[0].mxu0
      %v1835 = vadd.f32 0.0, %v1834
      %v1836 = vpop.f32.mrb[0].mxu0
      %1837 = vmatprep.mubr.f32.mxu0 0.0
      %1838 = vmatmul.mubr.f32.gmra.mrb[0].mxu0 %v1718
      %v1839 = vpop.f32.mrb[0].mxu0
      %v1840 = vadd.f32 0.0, %v1839
      %v1841 = vpop.f32.mrb[0].mxu0
      %1842 = vmatprep.mubr.f32.mxu0 0.0
      %1843 = vmatmul.mubr.f32.gmra.mrb[0].mxu0 %v1721
      %v1844 = vpop.f32.mrb[0].mxu0
      %v1845 = vadd.f32 0.0, %v1844
      %v1846 = vpop.f32.mrb[0].mxu0
      %1847 = vmatprep.mubr.f32.mxu0 0.0
      %1848 = vmatmul.mubr.f32.gmra.mrb[0].mxu0 %v1724
      %v1849 = vpop.f32.mrb[0].mxu0
      %v1850 = vadd.f32 0.0, %v1849
      %v1851 = vpop.f32.mrb[0].mxu0
      %1852 = vmatprep.mubr.f32.mxu0 0.0
      %1853 = vmatmul.mubr.f32.gmra.mrb[0].mxu0 %v1727
      %v1854 = vpop.f32.mrb[0].mxu0
      %v1855 = vadd.f32 0.0, %v1854
      %v1856 = vpop.f32.mrb[0].mxu0
      %1857 = vmatprep.mubr.f32.mxu0 0.0
      %1858 = vmatmul.mubr.f32.gmra.mrb[0].mxu0 %v1730
      %v1859 = vpop.f32.mrb[0].mxu0
      %v1860 = vadd.f32 0.0, %v1859
      %v1861 = vpop.f32.mrb[0].mxu0
      %1862 = vmatprep.mubr.f32.mxu0 0.0
      %1863 = vmatmul.mubr.f32.gmra.mrb[0].mxu0 %v1733
      %v1864 = vpop.f32.mrb[0].mxu0
      %v1865 = vadd.f32 0.0, %v1864
      %v1866 = vpop.f32.mrb[0].mxu0
      %1867 = vmatprep.mubr.f32.mxu0 0.0
      %1868 = vmatmul.mubr.f32.gmra.mrb[0].mxu0 %v1736
      %v1869 = vpop.f32.mrb[0].mxu0
      %v1870 = vadd.f32 0.0, %v1869
      %v1871 = vpop.f32.mrb[0].mxu0
      %1872 = vmatprep.mubr.f32.mxu0 0.0
      %1873 = vmatmul.mubr.f32.gmra.mrb[0].mxu0 %v1739
      %v1874 = vpop.f32.mrb[0].mxu0
      %v1875 = vadd.f32 0.0, %v1874
      %v1876 = vpop.f32.mrb[0].mxu0
      %1877 = vmatprep.mubr.f32.mxu0 0.0
      %1878 = vmatmul.mubr.f32.gmra.mrb[0].mxu0 %v1742
      %v1879 = vpop.f32.mrb[0].mxu0
      %v1880 = vadd.f32 0.0, %v1879
      %v1881 = vpop.f32.mrb[0].mxu0
      %1882 = vmatprep.mubr.f32.mxu0 0.0
      %1883 = vmatmul.mubr.f32.gmra.mrb[0].mxu0 %v1745
      %v1884 = vpop.f32.mrb[0].mxu0
      %v1885 = vadd.f32 0.0, %v1884
      %v1886 = vpop.f32.mrb[0].mxu0
      %1887 = vmatprep.mubr.f32.mxu0 0.0
      %1888 = vmatmul.mubr.f32.gmra.mrb[0].mxu0 %v1748
      %v1889 = vpop.f32.mrb[0].mxu0
      %v1890 = vadd.f32 0.0, %v1889
      %v1891 = vpop.f32.mrb[0].mxu0
      %1892 = vmatprep.mubr.f32.mxu0 0.0
      %1893 = vmatmul.mubr.f32.gmra.mrb[0].mxu0 %v1751
      %v1894 = vpop.f32.mrb[0].mxu0
      %v1895 = vadd.f32 0.0, %v1894
      %v1896 = vpop.f32.mrb[0].mxu0
      %1897 = vdwg.mxu0
      %1898 = vxpose.xlu0.b32.start [1/16] %v1375, 128
      %1899 = vxpose.xlu0.b32.cont [2/16] %v1376, 128
      %1900 = vxpose.xlu0.b32.cont [3/16] %v1377, 128
      %1901 = vxpose.xlu0.b32.cont [4/16] %v1378, 128
      %1902 = vxpose.xlu0.b32.cont [5/16] 0.0, 128
      %1903 = vxpose.xlu0.b32.cont [6/16] 0.0, 128
      %1904 = vxpose.xlu0.b32.cont [7/16] 0.0, 128
      %1905 = vxpose.xlu0.b32.cont [8/16] 0.0, 128
      %1906 = vxpose.xlu0.b32.cont [9/16] 0.0, 128
      %1907 = vxpose.xlu0.b32.cont [10/16] 0.0, 128
      %1908 = vxpose.xlu0.b32.cont [11/16] 0.0, 128
      %1909 = vxpose.xlu0.b32.cont [12/16] 0.0, 128
      %1910 = vxpose.xlu0.b32.cont [13/16] 0.0, 128
      %1911 = vxpose.xlu0.b32.cont [14/16] 0.0, 128
      %1912 = vxpose.xlu0.b32.cont [15/16] 0.0, 128
      %1913 = vxpose.xlu0.b32.end [16/16] 0.0, 128
      %v1914 = vpop.trf.xlu0
      %v1915 = vpop.trf.xlu0
      %v1916 = vpop.trf.xlu0
      %v1917 = vpop.trf.xlu0
      %v1918 = vpop.trf.xlu0
      %v1919 = vpop.trf.xlu0
      %v1920 = vpop.trf.xlu0
      %v1921 = vpop.trf.xlu0
      %v1922 = vpop.trf.xlu0
      %v1923 = vpop.trf.xlu0
      %v1924 = vpop.trf.xlu0
      %v1925 = vpop.trf.xlu0
      %v1926 = vpop.trf.xlu0
      %v1927 = vpop.trf.xlu0
      %v1928 = vpop.trf.xlu0
      %v1929 = vpop.trf.xlu0
      %v1931 = vsel %vm1479, %v1914, 0
      %v1934 = vsel %vm1479, %v1915, 0
      %v1937 = vsel %vm1479, %v1916, 0
      %v1940 = vsel %vm1479, %v1917, 0
      %v1943 = vsel %vm1479, %v1918, 0
      %v1946 = vsel %vm1479, %v1919, 0
      %v1949 = vsel %vm1479, %v1920, 0
      %v1952 = vsel %vm1479, %v1921, 0
      %v1955 = vsel %vm1479, %v1922, 0
      %v1958 = vsel %vm1479, %v1923, 0
      %v1961 = vsel %vm1479, %v1924, 0
      %v1964 = vsel %vm1479, %v1925, 0
      %v1967 = vsel %vm1479, %v1926, 0
      %v1970 = vsel %vm1479, %v1927, 0
      %v1973 = vsel %vm1479, %v1928, 0
      %v1976 = vsel %vm1479, %v1929, 0
      %1978 = vmatprep.subr.mxu0 0.0
      %1979 = vmatpush1.msra.mxu0 %v1407
      %1980 = vmatprep.subr.mxu0 0.0
      %1981 = vmatpush1.msra.mxu0 %v1408
      %1982 = vmatprep.subr.mxu0 0.0
      %1983 = vmatpush1.msra.mxu0 %v1409
      %1984 = vmatprep.subr.mxu0 0.0
      %1985 = vmatpush1.msra.mxu0 %v1410
      %1986 = vmatprep.subr.mxu0 0.0
      %1987 = vmatpush1.msra.mxu0 0.0
      %1988 = vmatprep.subr.mxu0 0.0
      %1989 = vmatpush1.msra.mxu0 0.0
      %1990 = vmatprep.subr.mxu0 0.0
      %1991 = vmatpush1.msra.mxu0 0.0
      %1992 = vmatprep.subr.mxu0 0.0
      %1993 = vmatpush1.msra.mxu0 0.0
      %1994 = vmatprep.subr.mxu0 0.0
      %1995 = vmatpush1.msra.mxu0 0.0
      %1996 = vmatprep.subr.mxu0 0.0
      %1997 = vmatpush1.msra.mxu0 0.0
      %1998 = vmatprep.subr.mxu0 0.0
      %1999 = vmatpush1.msra.mxu0 0.0
      %2000 = vmatprep.subr.mxu0 0.0
      %2001 = vmatpush1.msra.mxu0 0.0
      %2002 = vmatprep.subr.mxu0 0.0
      %2003 = vmatpush1.msra.mxu0 0.0
      %2004 = vmatprep.subr.mxu0 0.0
      %2005 = vmatpush1.msra.mxu0 0.0
      %2006 = vmatprep.subr.mxu0 0.0
      %2007 = vmatpush1.msra.mxu0 0.0
      %2008 = vmatprep.subr.mxu0 0.0
      %2009 = vmatpush1.msra.mxu0 0.0
      %2010 = vmatprep.subr.mxu0 0.0
      %2011 = vmatpush1.msra.mxu0 0.0
      %2012 = vmatprep.subr.mxu0 0.0
      %2013 = vmatpush1.msra.mxu0 0.0
      %2014 = vmatprep.subr.mxu0 0.0
      %2015 = vmatpush1.msra.mxu0 0.0
      %2016 = vmatprep.subr.mxu0 0.0
      %2017 = vmatpush1.msra.mxu0 0.0
      %2018 = vmatprep.subr.mxu0 0.0
      %2019 = vmatpush1.msra.mxu0 0.0
      %2020 = vmatprep.subr.mxu0 0.0
      %2021 = vmatpush1.msra.mxu0 0.0
      %2022 = vmatprep.subr.mxu0 0.0
      %2023 = vmatpush1.msra.mxu0 0.0
      %2024 = vmatprep.subr.mxu0 0.0
      %2025 = vmatpush1.msra.mxu0 0.0
      %2026 = vmatprep.subr.mxu0 0.0
      %2027 = vmatpush1.msra.mxu0 0.0
      %2028 = vmatprep.subr.mxu0 0.0
      %2029 = vmatpush1.msra.mxu0 0.0
      %2030 = vmatprep.subr.mxu0 0.0
      %2031 = vmatpush1.msra.mxu0 0.0
      %2032 = vmatprep.subr.mxu0 0.0
      %2033 = vmatpush1.msra.mxu0 0.0
      %2034 = vmatprep.subr.mxu0 0.0
      %2035 = vmatpush1.msra.mxu0 0.0
      %2036 = vmatprep.subr.mxu0 0.0
      %2037 = vmatpush1.msra.mxu0 0.0
      %2038 = vmatprep.subr.mxu0 0.0
      %2039 = vmatpush1.msra.mxu0 0.0
      %2040 = vmatprep.subr.mxu0 0.0
      %2041 = vmatpush1.msra.mxu0 0.0
      %2042 = vmatprep.mubr.f32.mxu0 0.0
      %2043 = vmatmul.mubr.f32.gmra.mrb[0].mxu0 %v1931
      %v2044 = vpop.f32.mrb[0].mxu0
      %v2045 = vadd.f32 0.0, %v2044
      %v2046 = vpop.f32.mrb[0].mxu0
      %2047 = vmatprep.mubr.f32.mxu0 0.0
      %2048 = vmatmul.mubr.f32.gmra.mrb[0].mxu0 %v1934
      %v2049 = vpop.f32.mrb[0].mxu0
      %v2050 = vadd.f32 0.0, %v2049
      %v2051 = vpop.f32.mrb[0].mxu0
      %2052 = vmatprep.mubr.f32.mxu0 0.0
      %2053 = vmatmul.mubr.f32.gmra.mrb[0].mxu0 %v1937
      %v2054 = vpop.f32.mrb[0].mxu0
      %v2055 = vadd.f32 0.0, %v2054
      %v2056 = vpop.f32.mrb[0].mxu0
      %2057 = vmatprep.mubr.f32.mxu0 0.0
      %2058 = vmatmul.mubr.f32.gmra.mrb[0].mxu0 %v1940
      %v2059 = vpop.f32.mrb[0].mxu0
      %v2060 = vadd.f32 0.0, %v2059
      %v2061 = vpop.f32.mrb[0].mxu0
      %2062 = vmatprep.mubr.f32.mxu0 0.0
      %2063 = vmatmul.mubr.f32.gmra.mrb[0].mxu0 %v1943
      %v2064 = vpop.f32.mrb[0].mxu0
      %v2065 = vadd.f32 0.0, %v2064
      %v2066 = vpop.f32.mrb[0].mxu0
      %2067 = vmatprep.mubr.f32.mxu0 0.0
      %2068 = vmatmul.mubr.f32.gmra.mrb[0].mxu0 %v1946
      %v2069 = vpop.f32.mrb[0].mxu0
      %v2070 = vadd.f32 0.0, %v2069
      %v2071 = vpop.f32.mrb[0].mxu0
      %2072 = vmatprep.mubr.f32.mxu0 0.0
      %2073 = vmatmul.mubr.f32.gmra.mrb[0].mxu0 %v1949
      %v2074 = vpop.f32.mrb[0].mxu0
      %v2075 = vadd.f32 0.0, %v2074
      %v2076 = vpop.f32.mrb[0].mxu0
      %2077 = vmatprep.mubr.f32.mxu0 0.0
      %2078 = vmatmul.mubr.f32.gmra.mrb[0].mxu0 %v1952
      %v2079 = vpop.f32.mrb[0].mxu0
      %v2080 = vadd.f32 0.0, %v2079
      %v2081 = vpop.f32.mrb[0].mxu0
      %2082 = vmatprep.mubr.f32.mxu0 0.0
      %2083 = vmatmul.mubr.f32.gmra.mrb[0].mxu0 %v1955
      %v2084 = vpop.f32.mrb[0].mxu0
      %v2085 = vadd.f32 0.0, %v2084
      %v2086 = vpop.f32.mrb[0].mxu0
      %2087 = vmatprep.mubr.f32.mxu0 0.0
      %2088 = vmatmul.mubr.f32.gmra.mrb[0].mxu0 %v1958
      %v2089 = vpop.f32.mrb[0].mxu0
      %v2090 = vadd.f32 0.0, %v2089
      %v2091 = vpop.f32.mrb[0].mxu0
      %2092 = vmatprep.mubr.f32.mxu0 0.0
      %2093 = vmatmul.mubr.f32.gmra.mrb[0].mxu0 %v1961
      %v2094 = vpop.f32.mrb[0].mxu0
      %v2095 = vadd.f32 0.0, %v2094
      %v2096 = vpop.f32.mrb[0].mxu0
      %2097 = vmatprep.mubr.f32.mxu0 0.0
      %2098 = vmatmul.mubr.f32.gmra.mrb[0].mxu0 %v1964
      %v2099 = vpop.f32.mrb[0].mxu0
      %v2100 = vadd.f32 0.0, %v2099
      %v2101 = vpop.f32.mrb[0].mxu0
      %2102 = vmatprep.mubr.f32.mxu0 0.0
      %2103 = vmatmul.mubr.f32.gmra.mrb[0].mxu0 %v1967
      %v2104 = vpop.f32.mrb[0].mxu0
      %v2105 = vadd.f32 0.0, %v2104
      %v2106 = vpop.f32.mrb[0].mxu0
      %2107 = vmatprep.mubr.f32.mxu0 0.0
      %2108 = vmatmul.mubr.f32.gmra.mrb[0].mxu0 %v1970
      %v2109 = vpop.f32.mrb[0].mxu0
      %v2110 = vadd.f32 0.0, %v2109
      %v2111 = vpop.f32.mrb[0].mxu0
      %2112 = vmatprep.mubr.f32.mxu0 0.0
      %2113 = vmatmul.mubr.f32.gmra.mrb[0].mxu0 %v1973
      %v2114 = vpop.f32.mrb[0].mxu0
      %v2115 = vadd.f32 0.0, %v2114
      %v2116 = vpop.f32.mrb[0].mxu0
      %2117 = vmatprep.mubr.f32.mxu0 0.0
      %2118 = vmatmul.mubr.f32.gmra.mrb[0].mxu0 %v1976
      %v2119 = vpop.f32.mrb[0].mxu0
      %v2120 = vadd.f32 0.0, %v2119
      %v2121 = vpop.f32.mrb[0].mxu0
      %2122 = vdwg.mxu0
      %2123 = vxpose.xlu0.b32.start [1/16] %v1379, 128
      %2124 = vxpose.xlu0.b32.cont [2/16] %v1380, 128
      %2125 = vxpose.xlu0.b32.cont [3/16] %v1381, 128
      %2126 = vxpose.xlu0.b32.cont [4/16] %v1382, 128
      %2127 = vxpose.xlu0.b32.cont [5/16] 0.0, 128
      %2128 = vxpose.xlu0.b32.cont [6/16] 0.0, 128
      %2129 = vxpose.xlu0.b32.cont [7/16] 0.0, 128
      %2130 = vxpose.xlu0.b32.cont [8/16] 0.0, 128
      %2131 = vxpose.xlu0.b32.cont [9/16] 0.0, 128
      %2132 = vxpose.xlu0.b32.cont [10/16] 0.0, 128
      %2133 = vxpose.xlu0.b32.cont [11/16] 0.0, 128
      %2134 = vxpose.xlu0.b32.cont [12/16] 0.0, 128
      %2135 = vxpose.xlu0.b32.cont [13/16] 0.0, 128
      %2136 = vxpose.xlu0.b32.cont [14/16] 0.0, 128
      %2137 = vxpose.xlu0.b32.cont [15/16] 0.0, 128
      %2138 = vxpose.xlu0.b32.end [16/16] 0.0, 128
      %v2139 = vpop.trf.xlu0
      %v2140 = vpop.trf.xlu0
      %v2141 = vpop.trf.xlu0
      %v2142 = vpop.trf.xlu0
      %v2143 = vpop.trf.xlu0
      %v2144 = vpop.trf.xlu0
      %v2145 = vpop.trf.xlu0
      %v2146 = vpop.trf.xlu0
      %v2147 = vpop.trf.xlu0
      %v2148 = vpop.trf.xlu0
      %v2149 = vpop.trf.xlu0
      %v2150 = vpop.trf.xlu0
      %v2151 = vpop.trf.xlu0
      %v2152 = vpop.trf.xlu0
      %v2153 = vpop.trf.xlu0
      %v2154 = vpop.trf.xlu0
      %v2156 = vsel %vm1479, %v2139, 0
      %v2159 = vsel %vm1479, %v2140, 0
      %v2162 = vsel %vm1479, %v2141, 0
      %v2165 = vsel %vm1479, %v2142, 0
      %v2168 = vsel %vm1479, %v2143, 0
      %v2171 = vsel %vm1479, %v2144, 0
      %v2174 = vsel %vm1479, %v2145, 0
      %v2177 = vsel %vm1479, %v2146, 0
      %v2180 = vsel %vm1479, %v2147, 0
      %v2183 = vsel %vm1479, %v2148, 0
      %v2186 = vsel %vm1479, %v2149, 0
      %v2189 = vsel %vm1479, %v2150, 0
      %v2192 = vsel %vm1479, %v2151, 0
      %v2195 = vsel %vm1479, %v2152, 0
      %v2198 = vsel %vm1479, %v2153, 0
      %v2201 = vsel %vm1479, %v2154, 0
      %2203 = vmatprep.subr.mxu0 0.0
      %2204 = vmatpush1.msra.mxu0 %v1411
      %2205 = vmatprep.subr.mxu0 0.0
      %2206 = vmatpush1.msra.mxu0 %v1412
      %2207 = vmatprep.subr.mxu0 0.0
      %2208 = vmatpush1.msra.mxu0 %v1413
      %2209 = vmatprep.subr.mxu0 0.0
      %2210 = vmatpush1.msra.mxu0 %v1414
      %2211 = vmatprep.subr.mxu0 0.0
      %2212 = vmatpush1.msra.mxu0 0.0
      %2213 = vmatprep.subr.mxu0 0.0
      %2214 = vmatpush1.msra.mxu0 0.0
      %2215 = vmatprep.subr.mxu0 0.0
      %2216 = vmatpush1.msra.mxu0 0.0
      %2217 = vmatprep.subr.mxu0 0.0
      %2218 = vmatpush1.msra.mxu0 0.0
      %2219 = vmatprep.subr.mxu0 0.0
      %2220 = vmatpush1.msra.mxu0 0.0
      %2221 = vmatprep.subr.mxu0 0.0
      %2222 = vmatpush1.msra.mxu0 0.0
      %2223 = vmatprep.subr.mxu0 0.0
      %2224 = vmatpush1.msra.mxu0 0.0
      %2225 = vmatprep.subr.mxu0 0.0
      %2226 = vmatpush1.msra.mxu0 0.0
      %2227 = vmatprep.subr.mxu0 0.0
      %2228 = vmatpush1.msra.mxu0 0.0
      %2229 = vmatprep.subr.mxu0 0.0
      %2230 = vmatpush1.msra.mxu0 0.0
      %2231 = vmatprep.subr.mxu0 0.0
      %2232 = vmatpush1.msra.mxu0 0.0
      %2233 = vmatprep.subr.mxu0 0.0
      %2234 = vmatpush1.msra.mxu0 0.0
      %2235 = vmatprep.subr.mxu0 0.0
      %2236 = vmatpush1.msra.mxu0 0.0
      %2237 = vmatprep.subr.mxu0 0.0
      %2238 = vmatpush1.msra.mxu0 0.0
      %2239 = vmatprep.subr.mxu0 0.0
      %2240 = vmatpush1.msra.mxu0 0.0
      %2241 = vmatprep.subr.mxu0 0.0
      %2242 = vmatpush1.msra.mxu0 0.0
      %2243 = vmatprep.subr.mxu0 0.0
      %2244 = vmatpush1.msra.mxu0 0.0
      %2245 = vmatprep.subr.mxu0 0.0
      %2246 = vmatpush1.msra.mxu0 0.0
      %2247 = vmatprep.subr.mxu0 0.0
      %2248 = vmatpush1.msra.mxu0 0.0
      %2249 = vmatprep.subr.mxu0 0.0
      %2250 = vmatpush1.msra.mxu0 0.0
      %2251 = vmatprep.subr.mxu0 0.0
      %2252 = vmatpush1.msra.mxu0 0.0
      %2253 = vmatprep.subr.mxu0 0.0
      %2254 = vmatpush1.msra.mxu0 0.0
      %2255 = vmatprep.subr.mxu0 0.0
      %2256 = vmatpush1.msra.mxu0 0.0
      %2257 = vmatprep.subr.mxu0 0.0
      %2258 = vmatpush1.msra.mxu0 0.0
      %2259 = vmatprep.subr.mxu0 0.0
      %2260 = vmatpush1.msra.mxu0 0.0
      %2261 = vmatprep.subr.mxu0 0.0
      %2262 = vmatpush1.msra.mxu0 0.0
      %2263 = vmatprep.subr.mxu0 0.0
      %2264 = vmatpush1.msra.mxu0 0.0
      %2265 = vmatprep.subr.mxu0 0.0
      %2266 = vmatpush1.msra.mxu0 0.0
      %2267 = vmatprep.mubr.f32.mxu0 0.0
      %2268 = vmatmul.mubr.f32.gmra.mrb[0].mxu0 %v2156
      %v2269 = vpop.f32.mrb[0].mxu0
      %v2270 = vadd.f32 0.0, %v2269
      %v2271 = vpop.f32.mrb[0].mxu0
      %2272 = vmatprep.mubr.f32.mxu0 0.0
      %2273 = vmatmul.mubr.f32.gmra.mrb[0].mxu0 %v2159
      %v2274 = vpop.f32.mrb[0].mxu0
      %v2275 = vadd.f32 0.0, %v2274
      %v2276 = vpop.f32.mrb[0].mxu0
      %2277 = vmatprep.mubr.f32.mxu0 0.0
      %2278 = vmatmul.mubr.f32.gmra.mrb[0].mxu0 %v2162
      %v2279 = vpop.f32.mrb[0].mxu0
      %v2280 = vadd.f32 0.0, %v2279
      %v2281 = vpop.f32.mrb[0].mxu0
      %2282 = vmatprep.mubr.f32.mxu0 0.0
      %2283 = vmatmul.mubr.f32.gmra.mrb[0].mxu0 %v2165
      %v2284 = vpop.f32.mrb[0].mxu0
      %v2285 = vadd.f32 0.0, %v2284
      %v2286 = vpop.f32.mrb[0].mxu0
      %2287 = vmatprep.mubr.f32.mxu0 0.0
      %2288 = vmatmul.mubr.f32.gmra.mrb[0].mxu0 %v2168
      %v2289 = vpop.f32.mrb[0].mxu0
      %v2290 = vadd.f32 0.0, %v2289
      %v2291 = vpop.f32.mrb[0].mxu0
      %2292 = vmatprep.mubr.f32.mxu0 0.0
      %2293 = vmatmul.mubr.f32.gmra.mrb[0].mxu0 %v2171
      %v2294 = vpop.f32.mrb[0].mxu0
      %v2295 = vadd.f32 0.0, %v2294
      %v2296 = vpop.f32.mrb[0].mxu0
      %2297 = vmatprep.mubr.f32.mxu0 0.0
      %2298 = vmatmul.mubr.f32.gmra.mrb[0].mxu0 %v2174
      %v2299 = vpop.f32.mrb[0].mxu0
      %v2300 = vadd.f32 0.0, %v2299
      %v2301 = vpop.f32.mrb[0].mxu0
      %2302 = vmatprep.mubr.f32.mxu0 0.0
      %2303 = vmatmul.mubr.f32.gmra.mrb[0].mxu0 %v2177
      %v2304 = vpop.f32.mrb[0].mxu0
      %v2305 = vadd.f32 0.0, %v2304
      %v2306 = vpop.f32.mrb[0].mxu0
      %2307 = vmatprep.mubr.f32.mxu0 0.0
      %2308 = vmatmul.mubr.f32.gmra.mrb[0].mxu0 %v2180
      %v2309 = vpop.f32.mrb[0].mxu0
      %v2310 = vadd.f32 0.0, %v2309
      %v2311 = vpop.f32.mrb[0].mxu0
      %2312 = vmatprep.mubr.f32.mxu0 0.0
      %2313 = vmatmul.mubr.f32.gmra.mrb[0].mxu0 %v2183
      %v2314 = vpop.f32.mrb[0].mxu0
      %v2315 = vadd.f32 0.0, %v2314
      %v2316 = vpop.f32.mrb[0].mxu0
      %2317 = vmatprep.mubr.f32.mxu0 0.0
      %2318 = vmatmul.mubr.f32.gmra.mrb[0].mxu0 %v2186
      %v2319 = vpop.f32.mrb[0].mxu0
      %v2320 = vadd.f32 0.0, %v2319
      %v2321 = vpop.f32.mrb[0].mxu0
      %2322 = vmatprep.mubr.f32.mxu0 0.0
      %2323 = vmatmul.mubr.f32.gmra.mrb[0].mxu0 %v2189
      %v2324 = vpop.f32.mrb[0].mxu0
      %v2325 = vadd.f32 0.0, %v2324
      %v2326 = vpop.f32.mrb[0].mxu0
      %2327 = vmatprep.mubr.f32.mxu0 0.0
      %2328 = vmatmul.mubr.f32.gmra.mrb[0].mxu0 %v2192
      %v2329 = vpop.f32.mrb[0].mxu0
      %v2330 = vadd.f32 0.0, %v2329
      %v2331 = vpop.f32.mrb[0].mxu0
      %2332 = vmatprep.mubr.f32.mxu0 0.0
      %2333 = vmatmul.mubr.f32.gmra.mrb[0].mxu0 %v2195
      %v2334 = vpop.f32.mrb[0].mxu0
      %v2335 = vadd.f32 0.0, %v2334
      %v2336 = vpop.f32.mrb[0].mxu0
      %2337 = vmatprep.mubr.f32.mxu0 0.0
      %2338 = vmatmul.mubr.f32.gmra.mrb[0].mxu0 %v2198
      %v2339 = vpop.f32.mrb[0].mxu0
      %v2340 = vadd.f32 0.0, %v2339
      %v2341 = vpop.f32.mrb[0].mxu0
      %2342 = vmatprep.mubr.f32.mxu0 0.0
      %2343 = vmatmul.mubr.f32.gmra.mrb[0].mxu0 %v2201
      %v2344 = vpop.f32.mrb[0].mxu0
      %v2345 = vadd.f32 0.0, %v2344
      %v2346 = vpop.f32.mrb[0].mxu0
      %2347 = vdwg.mxu0
      %v2348 = vmul.f32 %v1595, 0.17677669
      %v2349 = vmul.f32 %v1600, 0.17677669
      %v2350 = vmul.f32 %v1605, 0.17677669
      %v2351 = vmul.f32 %v1610, 0.17677669
      %v2352 = vmul.f32 %v1615, 0.17677669
      %v2353 = vmul.f32 %v1620, 0.17677669
      %v2354 = vmul.f32 %v1625, 0.17677669
      %v2355 = vmul.f32 %v1630, 0.17677669
      %v2356 = vmul.f32 %v1635, 0.17677669
      %v2357 = vmul.f32 %v1640, 0.17677669
      %v2358 = vmul.f32 %v1645, 0.17677669
      %v2359 = vmul.f32 %v1650, 0.17677669
      %v2360 = vmul.f32 %v1655, 0.17677669
      %v2361 = vmul.f32 %v1660, 0.17677669
      %v2362 = vmul.f32 %v1665, 0.17677669
      %v2363 = vmul.f32 %v1670, 0.17677669
      %v2364 = vmul.f32 %v1820, 0.17677669
      %v2365 = vmul.f32 %v1825, 0.17677669
      %v2366 = vmul.f32 %v1830, 0.17677669
      %v2367 = vmul.f32 %v1835, 0.17677669
      %v2368 = vmul.f32 %v1840, 0.17677669
      %v2369 = vmul.f32 %v1845, 0.17677669
      %v2370 = vmul.f32 %v1850, 0.17677669
      %v2371 = vmul.f32 %v1855, 0.17677669
      %v2372 = vmul.f32 %v1860, 0.17677669
      %v2373 = vmul.f32 %v1865, 0.17677669
      %v2374 = vmul.f32 %v1870, 0.17677669
      %v2375 = vmul.f32 %v1875, 0.17677669
      %v2376 = vmul.f32 %v1880, 0.17677669
      %v2377 = vmul.f32 %v1885, 0.17677669
      %v2378 = vmul.f32 %v1890, 0.17677669
      %v2379 = vmul.f32 %v1895, 0.17677669
      %v2380 = vmul.f32 %v2045, 0.17677669
      %v2381 = vmul.f32 %v2050, 0.17677669
      %v2382 = vmul.f32 %v2055, 0.17677669
      %v2383 = vmul.f32 %v2060, 0.17677669
      %v2384 = vmul.f32 %v2065, 0.17677669
      %v2385 = vmul.f32 %v2070, 0.17677669
      %v2386 = vmul.f32 %v2075, 0.17677669
      %v2387 = vmul.f32 %v2080, 0.17677669
      %v2388 = vmul.f32 %v2085, 0.17677669
      %v2389 = vmul.f32 %v2090, 0.17677669
      %v2390 = vmul.f32 %v2095, 0.17677669
      %v2391 = vmul.f32 %v2100, 0.17677669
      %v2392 = vmul.f32 %v2105, 0.17677669
      %v2393 = vmul.f32 %v2110, 0.17677669
      %v2394 = vmul.f32 %v2115, 0.17677669
      %v2395 = vmul.f32 %v2120, 0.17677669
      %v2396 = vmul.f32 %v2270, 0.17677669
      %v2397 = vmul.f32 %v2275, 0.17677669
      %v2398 = vmul.f32 %v2280, 0.17677669
      %v2399 = vmul.f32 %v2285, 0.17677669
      %v2400 = vmul.f32 %v2290, 0.17677669
      %v2401 = vmul.f32 %v2295, 0.17677669
      %v2402 = vmul.f32 %v2300, 0.17677669
      %v2403 = vmul.f32 %v2305, 0.17677669
      %v2404 = vmul.f32 %v2310, 0.17677669
      %v2405 = vmul.f32 %v2315, 0.17677669
      %v2406 = vmul.f32 %v2320, 0.17677669
      %v2407 = vmul.f32 %v2325, 0.17677669
      %v2408 = vmul.f32 %v2330, 0.17677669
      %v2409 = vmul.f32 %v2335, 0.17677669
      %v2410 = vmul.f32 %v2340, 0.17677669
      %v2411 = vmul.f32 %v2345, 0.17677669
      %v2412 = vlaneseq
      %v2413 = vand.u32 %v2412, 127
      %vm2414 = vcmp.lt.s32.totalorder %v2413, 65
      %v2415 = vsel %vm2414, %v2348, -1e+30
      %v2416 = vsel %vm2414, %v2349, -1e+30
      %v2417 = vsel %vm2414, %v2350, -1e+30
      %v2418 = vsel %vm2414, %v2351, -1e+30
      %v2419 = vsel %vm2414, %v2352, -1e+30
      %v2420 = vsel %vm2414, %v2353, -1e+30
      %v2421 = vsel %vm2414, %v2354, -1e+30
      %v2422 = vsel %vm2414, %v2355, -1e+30
      %v2423 = vsel %vm2414, %v2356, -1e+30
      %v2424 = vsel %vm2414, %v2357, -1e+30
      %v2425 = vsel %vm2414, %v2358, -1e+30
      %v2426 = vsel %vm2414, %v2359, -1e+30
      %v2427 = vsel %vm2414, %v2360, -1e+30
      %v2428 = vsel %vm2414, %v2361, -1e+30
      %v2429 = vsel %vm2414, %v2362, -1e+30
      %v2430 = vsel %vm2414, %v2363, -1e+30
      %v2431 = vsel %vm2414, %v2364, -1e+30
      %v2432 = vsel %vm2414, %v2365, -1e+30
      %v2433 = vsel %vm2414, %v2366, -1e+30
      %v2434 = vsel %vm2414, %v2367, -1e+30
      %v2435 = vsel %vm2414, %v2368, -1e+30
      %v2436 = vsel %vm2414, %v2369, -1e+30
      %v2437 = vsel %vm2414, %v2370, -1e+30
      %v2438 = vsel %vm2414, %v2371, -1e+30
      %v2439 = vsel %vm2414, %v2372, -1e+30
      %v2440 = vsel %vm2414, %v2373, -1e+30
      %v2441 = vsel %vm2414, %v2374, -1e+30
      %v2442 = vsel %vm2414, %v2375, -1e+30
      %v2443 = vsel %vm2414, %v2376, -1e+30
      %v2444 = vsel %vm2414, %v2377, -1e+30
      %v2445 = vsel %vm2414, %v2378, -1e+30
      %v2446 = vsel %vm2414, %v2379, -1e+30
      %v2447 = vsel %vm2414, %v2380, -1e+30
      %v2448 = vsel %vm2414, %v2381, -1e+30
      %v2449 = vsel %vm2414, %v2382, -1e+30
      %v2450 = vsel %vm2414, %v2383, -1e+30
      %v2451 = vsel %vm2414, %v2384, -1e+30
      %v2452 = vsel %vm2414, %v2385, -1e+30
      %v2453 = vsel %vm2414, %v2386, -1e+30
      %v2454 = vsel %vm2414, %v2387, -1e+30
      %v2455 = vsel %vm2414, %v2388, -1e+30
      %v2456 = vsel %vm2414, %v2389, -1e+30
      %v2457 = vsel %vm2414, %v2390, -1e+30
      %v2458 = vsel %vm2414, %v2391, -1e+30
      %v2459 = vsel %vm2414, %v2392, -1e+30
      %v2460 = vsel %vm2414, %v2393, -1e+30
      %v2461 = vsel %vm2414, %v2394, -1e+30
      %v2462 = vsel %vm2414, %v2395, -1e+30
      %v2463 = vsel %vm2414, %v2396, -1e+30
      %v2464 = vsel %vm2414, %v2397, -1e+30
      %v2465 = vsel %vm2414, %v2398, -1e+30
      %v2466 = vsel %vm2414, %v2399, -1e+30
      %v2467 = vsel %vm2414, %v2400, -1e+30
      %v2468 = vsel %vm2414, %v2401, -1e+30
      %v2469 = vsel %vm2414, %v2402, -1e+30
      %v2470 = vsel %vm2414, %v2403, -1e+30
      %v2471 = vsel %vm2414, %v2404, -1e+30
      %v2472 = vsel %vm2414, %v2405, -1e+30
      %v2473 = vsel %vm2414, %v2406, -1e+30
      %v2474 = vsel %vm2414, %v2407, -1e+30
      %v2475 = vsel %vm2414, %v2408, -1e+30
      %v2476 = vsel %vm2414, %v2409, -1e+30
      %v2477 = vsel %vm2414, %v2410, -1e+30
      %v2478 = vsel %vm2414, %v2411, -1e+30
      %2479 = vmax.xlane.f32.xlu0 %v2415
      %v2480 = vpop.xlane.xlu0 %2479
      %2481 = vmax.xlane.f32.xlu0 %v2416
      %v2482 = vpop.xlane.xlu0 %2481
      %2483 = vmax.xlane.f32.xlu0 %v2417
      %v2484 = vpop.xlane.xlu0 %2483
      %2485 = vmax.xlane.f32.xlu0 %v2418
      %v2486 = vpop.xlane.xlu0 %2485
      %2487 = vmax.xlane.f32.xlu0 %v2419
      %v2488 = vpop.xlane.xlu0 %2487
      %2489 = vmax.xlane.f32.xlu0 %v2420
      %v2490 = vpop.xlane.xlu0 %2489
      %2491 = vmax.xlane.f32.xlu0 %v2421
      %v2492 = vpop.xlane.xlu0 %2491
      %2493 = vmax.xlane.f32.xlu0 %v2422
      %v2494 = vpop.xlane.xlu0 %2493
      %2495 = vmax.xlane.f32.xlu0 %v2423
      %v2496 = vpop.xlane.xlu0 %2495
      %2497 = vmax.xlane.f32.xlu0 %v2424
      %v2498 = vpop.xlane.xlu0 %2497
      %2499 = vmax.xlane.f32.xlu0 %v2425
      %v2500 = vpop.xlane.xlu0 %2499
      %2501 = vmax.xlane.f32.xlu0 %v2426
      %v2502 = vpop.xlane.xlu0 %2501
      %2503 = vmax.xlane.f32.xlu0 %v2427
      %v2504 = vpop.xlane.xlu0 %2503
      %2505 = vmax.xlane.f32.xlu0 %v2428
      %v2506 = vpop.xlane.xlu0 %2505
      %2507 = vmax.xlane.f32.xlu0 %v2429
      %v2508 = vpop.xlane.xlu0 %2507
      %2509 = vmax.xlane.f32.xlu0 %v2430
      %v2510 = vpop.xlane.xlu0 %2509
      %2511 = vmax.xlane.f32.xlu0 %v2431
      %v2512 = vpop.xlane.xlu0 %2511
      %2513 = vmax.xlane.f32.xlu0 %v2432
      %v2514 = vpop.xlane.xlu0 %2513
      %2515 = vmax.xlane.f32.xlu0 %v2433
      %v2516 = vpop.xlane.xlu0 %2515
      %2517 = vmax.xlane.f32.xlu0 %v2434
      %v2518 = vpop.xlane.xlu0 %2517
      %2519 = vmax.xlane.f32.xlu0 %v2435
      %v2520 = vpop.xlane.xlu0 %2519
      %2521 = vmax.xlane.f32.xlu0 %v2436
      %v2522 = vpop.xlane.xlu0 %2521
      %2523 = vmax.xlane.f32.xlu0 %v2437
      %v2524 = vpop.xlane.xlu0 %2523
      %2525 = vmax.xlane.f32.xlu0 %v2438
      %v2526 = vpop.xlane.xlu0 %2525
      %2527 = vmax.xlane.f32.xlu0 %v2439
      %v2528 = vpop.xlane.xlu0 %2527
      %2529 = vmax.xlane.f32.xlu0 %v2440
      %v2530 = vpop.xlane.xlu0 %2529
      %2531 = vmax.xlane.f32.xlu0 %v2441
      %v2532 = vpop.xlane.xlu0 %2531
      %2533 = vmax.xlane.f32.xlu0 %v2442
      %v2534 = vpop.xlane.xlu0 %2533
      %2535 = vmax.xlane.f32.xlu0 %v2443
      %v2536 = vpop.xlane.xlu0 %2535
      %2537 = vmax.xlane.f32.xlu0 %v2444
      %v2538 = vpop.xlane.xlu0 %2537
      %2539 = vmax.xlane.f32.xlu0 %v2445
      %v2540 = vpop.xlane.xlu0 %2539
      %2541 = vmax.xlane.f32.xlu0 %v2446
      %v2542 = vpop.xlane.xlu0 %2541
      %2543 = vmax.xlane.f32.xlu0 %v2447
      %v2544 = vpop.xlane.xlu0 %2543
      %2545 = vmax.xlane.f32.xlu0 %v2448
      %v2546 = vpop.xlane.xlu0 %2545
      %2547 = vmax.xlane.f32.xlu0 %v2449
      %v2548 = vpop.xlane.xlu0 %2547
      %2549 = vmax.xlane.f32.xlu0 %v2450
      %v2550 = vpop.xlane.xlu0 %2549
      %2551 = vmax.xlane.f32.xlu0 %v2451
      %v2552 = vpop.xlane.xlu0 %2551
      %2553 = vmax.xlane.f32.xlu0 %v2452
      %v2554 = vpop.xlane.xlu0 %2553
      %2555 = vmax.xlane.f32.xlu0 %v2453
      %v2556 = vpop.xlane.xlu0 %2555
      %2557 = vmax.xlane.f32.xlu0 %v2454
      %v2558 = vpop.xlane.xlu0 %2557
      %2559 = vmax.xlane.f32.xlu0 %v2455
      %v2560 = vpop.xlane.xlu0 %2559
      %2561 = vmax.xlane.f32.xlu0 %v2456
      %v2562 = vpop.xlane.xlu0 %2561
      %2563 = vmax.xlane.f32.xlu0 %v2457
      %v2564 = vpop.xlane.xlu0 %2563
      %2565 = vmax.xlane.f32.xlu0 %v2458
      %v2566 = vpop.xlane.xlu0 %2565
      %2567 = vmax.xlane.f32.xlu0 %v2459
      %v2568 = vpop.xlane.xlu0 %2567
      %2569 = vmax.xlane.f32.xlu0 %v2460
      %v2570 = vpop.xlane.xlu0 %2569
      %2571 = vmax.xlane.f32.xlu0 %v2461
      %v2572 = vpop.xlane.xlu0 %2571
      %2573 = vmax.xlane.f32.xlu0 %v2462
      %v2574 = vpop.xlane.xlu0 %2573
      %2575 = vmax.xlane.f32.xlu0 %v2463
      %v2576 = vpop.xlane.xlu0 %2575
      %2577 = vmax.xlane.f32.xlu0 %v2464
      %v2578 = vpop.xlane.xlu0 %2577
      %2579 = vmax.xlane.f32.xlu0 %v2465
      %v2580 = vpop.xlane.xlu0 %2579
      %2581 = vmax.xlane.f32.xlu0 %v2466
      %v2582 = vpop.xlane.xlu0 %2581
      %2583 = vmax.xlane.f32.xlu0 %v2467
      %v2584 = vpop.xlane.xlu0 %2583
      %2585 = vmax.xlane.f32.xlu0 %v2468
      %v2586 = vpop.xlane.xlu0 %2585
      %2587 = vmax.xlane.f32.xlu0 %v2469
      %v2588 = vpop.xlane.xlu0 %2587
      %2589 = vmax.xlane.f32.xlu0 %v2470
      %v2590 = vpop.xlane.xlu0 %2589
      %2591 = vmax.xlane.f32.xlu0 %v2471
      %v2592 = vpop.xlane.xlu0 %2591
      %2593 = vmax.xlane.f32.xlu0 %v2472
      %v2594 = vpop.xlane.xlu0 %2593
      %2595 = vmax.xlane.f32.xlu0 %v2473
      %v2596 = vpop.xlane.xlu0 %2595
      %2597 = vmax.xlane.f32.xlu0 %v2474
      %v2598 = vpop.xlane.xlu0 %2597
      %2599 = vmax.xlane.f32.xlu0 %v2475
      %v2600 = vpop.xlane.xlu0 %2599
      %2601 = vmax.xlane.f32.xlu0 %v2476
      %v2602 = vpop.xlane.xlu0 %2601
      %2603 = vmax.xlane.f32.xlu0 %v2477
      %v2604 = vpop.xlane.xlu0 %2603
      %2605 = vmax.xlane.f32.xlu0 %v2478
      %v2606 = vpop.xlane.xlu0 %2605
      %v2607 = vsub.f32 %v2415, %v2480
      %v2608 = vsub.f32 %v2416, %v2482
      %v2609 = vsub.f32 %v2417, %v2484
      %v2610 = vsub.f32 %v2418, %v2486
      %v2611 = vsub.f32 %v2419, %v2488
      %v2612 = vsub.f32 %v2420, %v2490
      %v2613 = vsub.f32 %v2421, %v2492
      %v2614 = vsub.f32 %v2422, %v2494
      %v2615 = vsub.f32 %v2423, %v2496
      %v2616 = vsub.f32 %v2424, %v2498
      %v2617 = vsub.f32 %v2425, %v2500
      %v2618 = vsub.f32 %v2426, %v2502
      %v2619 = vsub.f32 %v2427, %v2504
      %v2620 = vsub.f32 %v2428, %v2506
      %v2621 = vsub.f32 %v2429, %v2508
      %v2622 = vsub.f32 %v2430, %v2510
      %v2623 = vsub.f32 %v2431, %v2512
      %v2624 = vsub.f32 %v2432, %v2514
      %v2625 = vsub.f32 %v2433, %v2516
      %v2626 = vsub.f32 %v2434, %v2518
      %v2627 = vsub.f32 %v2435, %v2520
      %v2628 = vsub.f32 %v2436, %v2522
      %v2629 = vsub.f32 %v2437, %v2524
      %v2630 = vsub.f32 %v2438, %v2526
      %v2631 = vsub.f32 %v2439, %v2528
      %v2632 = vsub.f32 %v2440, %v2530
      %v2633 = vsub.f32 %v2441, %v2532
      %v2634 = vsub.f32 %v2442, %v2534
      %v2635 = vsub.f32 %v2443, %v2536
      %v2636 = vsub.f32 %v2444, %v2538
      %v2637 = vsub.f32 %v2445, %v2540
      %v2638 = vsub.f32 %v2446, %v2542
      %v2639 = vsub.f32 %v2447, %v2544
      %v2640 = vsub.f32 %v2448, %v2546
      %v2641 = vsub.f32 %v2449, %v2548
      %v2642 = vsub.f32 %v2450, %v2550
      %v2643 = vsub.f32 %v2451, %v2552
      %v2644 = vsub.f32 %v2452, %v2554
      %v2645 = vsub.f32 %v2453, %v2556
      %v2646 = vsub.f32 %v2454, %v2558
      %v2647 = vsub.f32 %v2455, %v2560
      %v2648 = vsub.f32 %v2456, %v2562
      %v2649 = vsub.f32 %v2457, %v2564
      %v2650 = vsub.f32 %v2458, %v2566
      %v2651 = vsub.f32 %v2459, %v2568
      %v2652 = vsub.f32 %v2460, %v2570
      %v2653 = vsub.f32 %v2461, %v2572
      %v2654 = vsub.f32 %v2462, %v2574
      %v2655 = vsub.f32 %v2463, %v2576
      %v2656 = vsub.f32 %v2464, %v2578
      %v2657 = vsub.f32 %v2465, %v2580
      %v2658 = vsub.f32 %v2466, %v2582
      %v2659 = vsub.f32 %v2467, %v2584
      %v2660 = vsub.f32 %v2468, %v2586
      %v2661 = vsub.f32 %v2469, %v2588
      %v2662 = vsub.f32 %v2470, %v2590
      %v2663 = vsub.f32 %v2471, %v2592
      %v2664 = vsub.f32 %v2472, %v2594
      %v2665 = vsub.f32 %v2473, %v2596
      %v2666 = vsub.f32 %v2474, %v2598
      %v2667 = vsub.f32 %v2475, %v2600
      %v2668 = vsub.f32 %v2476, %v2602
      %v2669 = vsub.f32 %v2477, %v2604
      %v2670 = vsub.f32 %v2478, %v2606
      %v2671 = vmul.f32 %v2607, 1.442695
      %v2672 = vpow.pop %v2671
      %v2673 = vmul.f32 %v2608, 1.442695
      %v2674 = vpow.pop %v2673
      %v2675 = vmul.f32 %v2609, 1.442695
      %v2676 = vpow.pop %v2675
      %v2677 = vmul.f32 %v2610, 1.442695
      %v2678 = vpow.pop %v2677
      %v2679 = vmul.f32 %v2611, 1.442695
      %v2680 = vpow.pop %v2679
      %v2681 = vmul.f32 %v2612, 1.442695
      %v2682 = vpow.pop %v2681
      %v2683 = vmul.f32 %v2613, 1.442695
      %v2684 = vpow.pop %v2683
      %v2685 = vmul.f32 %v2614, 1.442695
      %v2686 = vpow.pop %v2685
      %v2687 = vmul.f32 %v2615, 1.442695
      %v2688 = vpow.pop %v2687
      %v2689 = vmul.f32 %v2616, 1.442695
      %v2690 = vpow.pop %v2689
      %v2691 = vmul.f32 %v2617, 1.442695
      %v2692 = vpow.pop %v2691
      %v2693 = vmul.f32 %v2618, 1.442695
      %v2694 = vpow.pop %v2693
      %v2695 = vmul.f32 %v2619, 1.442695
      %v2696 = vpow.pop %v2695
      %v2697 = vmul.f32 %v2620, 1.442695
      %v2698 = vpow.pop %v2697
      %v2699 = vmul.f32 %v2621, 1.442695
      %v2700 = vpow.pop %v2699
      %v2701 = vmul.f32 %v2622, 1.442695
      %v2702 = vpow.pop %v2701
      %v2703 = vmul.f32 %v2623, 1.442695
      %v2704 = vpow.pop %v2703
      %v2705 = vmul.f32 %v2624, 1.442695
      %v2706 = vpow.pop %v2705
      %v2707 = vmul.f32 %v2625, 1.442695
      %v2708 = vpow.pop %v2707
      %v2709 = vmul.f32 %v2626, 1.442695
      %v2710 = vpow.pop %v2709
      %v2711 = vmul.f32 %v2627, 1.442695
      %v2712 = vpow.pop %v2711
      %v2713 = vmul.f32 %v2628, 1.442695
      %v2714 = vpow.pop %v2713
      %v2715 = vmul.f32 %v2629, 1.442695
      %v2716 = vpow.pop %v2715
      %v2717 = vmul.f32 %v2630, 1.442695
      %v2718 = vpow.pop %v2717
      %v2719 = vmul.f32 %v2631, 1.442695
      %v2720 = vpow.pop %v2719
      %v2721 = vmul.f32 %v2632, 1.442695
      %v2722 = vpow.pop %v2721
      %v2723 = vmul.f32 %v2633, 1.442695
      %v2724 = vpow.pop %v2723
      %v2725 = vmul.f32 %v2634, 1.442695
      %v2726 = vpow.pop %v2725
      %v2727 = vmul.f32 %v2635, 1.442695
      %v2728 = vpow.pop %v2727
      %v2729 = vmul.f32 %v2636, 1.442695
      %v2730 = vpow.pop %v2729
      %v2731 = vmul.f32 %v2637, 1.442695
      %v2732 = vpow.pop %v2731
      %v2733 = vmul.f32 %v2638, 1.442695
      %v2734 = vpow.pop %v2733
      %v2735 = vmul.f32 %v2639, 1.442695
      %v2736 = vpow.pop %v2735
      %v2737 = vmul.f32 %v2640, 1.442695
      %v2738 = vpow.pop %v2737
      %v2739 = vmul.f32 %v2641, 1.442695
      %v2740 = vpow.pop %v2739
      %v2741 = vmul.f32 %v2642, 1.442695
      %v2742 = vpow.pop %v2741
      %v2743 = vmul.f32 %v2643, 1.442695
      %v2744 = vpow.pop %v2743
      %v2745 = vmul.f32 %v2644, 1.442695
      %v2746 = vpow.pop %v2745
      %v2747 = vmul.f32 %v2645, 1.442695
      %v2748 = vpow.pop %v2747
      %v2749 = vmul.f32 %v2646, 1.442695
      %v2750 = vpow.pop %v2749
      %v2751 = vmul.f32 %v2647, 1.442695
      %v2752 = vpow.pop %v2751
      %v2753 = vmul.f32 %v2648, 1.442695
      %v2754 = vpow.pop %v2753
      %v2755 = vmul.f32 %v2649, 1.442695
      %v2756 = vpow.pop %v2755
      %v2757 = vmul.f32 %v2650, 1.442695
      %v2758 = vpow.pop %v2757
      %v2759 = vmul.f32 %v2651, 1.442695
      %v2760 = vpow.pop %v2759
      %v2761 = vmul.f32 %v2652, 1.442695
      %v2762 = vpow.pop %v2761
      %v2763 = vmul.f32 %v2653, 1.442695
      %v2764 = vpow.pop %v2763
      %v2765 = vmul.f32 %v2654, 1.442695
      %v2766 = vpow.pop %v2765
      %v2767 = vmul.f32 %v2655, 1.442695
      %v2768 = vpow.pop %v2767
      %v2769 = vmul.f32 %v2656, 1.442695
      %v2770 = vpow.pop %v2769
      %v2771 = vmul.f32 %v2657, 1.442695
      %v2772 = vpow.pop %v2771
      %v2773 = vmul.f32 %v2658, 1.442695
      %v2774 = vpow.pop %v2773
      %v2775 = vmul.f32 %v2659, 1.442695
      %v2776 = vpow.pop %v2775
      %v2777 = vmul.f32 %v2660, 1.442695
      %v2778 = vpow.pop %v2777
      %v2779 = vmul.f32 %v2661, 1.442695
      %v2780 = vpow.pop %v2779
      %v2781 = vmul.f32 %v2662, 1.442695
      %v2782 = vpow.pop %v2781
      %v2783 = vmul.f32 %v2663, 1.442695
      %v2784 = vpow.pop %v2783
      %v2785 = vmul.f32 %v2664, 1.442695
      %v2786 = vpow.pop %v2785
      %v2787 = vmul.f32 %v2665, 1.442695
      %v2788 = vpow.pop %v2787
      %v2789 = vmul.f32 %v2666, 1.442695
      %v2790 = vpow.pop %v2789
      %v2791 = vmul.f32 %v2667, 1.442695
      %v2792 = vpow.pop %v2791
      %v2793 = vmul.f32 %v2668, 1.442695
      %v2794 = vpow.pop %v2793
      %v2795 = vmul.f32 %v2669, 1.442695
      %v2796 = vpow.pop %v2795
      %v2797 = vmul.f32 %v2670, 1.442695
      %v2798 = vpow.pop %v2797
      %2799 = vadd.xlane.f32.xlu0 %v2672
      %v2800 = vpop.xlane.xlu0 %2799
      %2801 = vadd.xlane.f32.xlu0 %v2674
      %v2802 = vpop.xlane.xlu0 %2801
      %2803 = vadd.xlane.f32.xlu0 %v2676
      %v2804 = vpop.xlane.xlu0 %2803
      %2805 = vadd.xlane.f32.xlu0 %v2678
      %v2806 = vpop.xlane.xlu0 %2805
      %2807 = vadd.xlane.f32.xlu0 %v2680
      %v2808 = vpop.xlane.xlu0 %2807
      %2809 = vadd.xlane.f32.xlu0 %v2682
      %v2810 = vpop.xlane.xlu0 %2809
      %2811 = vadd.xlane.f32.xlu0 %v2684
      %v2812 = vpop.xlane.xlu0 %2811
      %2813 = vadd.xlane.f32.xlu0 %v2686
      %v2814 = vpop.xlane.xlu0 %2813
      %2815 = vadd.xlane.f32.xlu0 %v2688
      %v2816 = vpop.xlane.xlu0 %2815
      %2817 = vadd.xlane.f32.xlu0 %v2690
      %v2818 = vpop.xlane.xlu0 %2817
      %2819 = vadd.xlane.f32.xlu0 %v2692
      %v2820 = vpop.xlane.xlu0 %2819
      %2821 = vadd.xlane.f32.xlu0 %v2694
      %v2822 = vpop.xlane.xlu0 %2821
      %2823 = vadd.xlane.f32.xlu0 %v2696
      %v2824 = vpop.xlane.xlu0 %2823
      %2825 = vadd.xlane.f32.xlu0 %v2698
      %v2826 = vpop.xlane.xlu0 %2825
      %2827 = vadd.xlane.f32.xlu0 %v2700
      %v2828 = vpop.xlane.xlu0 %2827
      %2829 = vadd.xlane.f32.xlu0 %v2702
      %v2830 = vpop.xlane.xlu0 %2829
      %2831 = vadd.xlane.f32.xlu0 %v2704
      %v2832 = vpop.xlane.xlu0 %2831
      %2833 = vadd.xlane.f32.xlu0 %v2706
      %v2834 = vpop.xlane.xlu0 %2833
      %2835 = vadd.xlane.f32.xlu0 %v2708
      %v2836 = vpop.xlane.xlu0 %2835
      %2837 = vadd.xlane.f32.xlu0 %v2710
      %v2838 = vpop.xlane.xlu0 %2837
      %2839 = vadd.xlane.f32.xlu0 %v2712
      %v2840 = vpop.xlane.xlu0 %2839
      %2841 = vadd.xlane.f32.xlu0 %v2714
      %v2842 = vpop.xlane.xlu0 %2841
      %2843 = vadd.xlane.f32.xlu0 %v2716
      %v2844 = vpop.xlane.xlu0 %2843
      %2845 = vadd.xlane.f32.xlu0 %v2718
      %v2846 = vpop.xlane.xlu0 %2845
      %2847 = vadd.xlane.f32.xlu0 %v2720
      %v2848 = vpop.xlane.xlu0 %2847
      %2849 = vadd.xlane.f32.xlu0 %v2722
      %v2850 = vpop.xlane.xlu0 %2849
      %2851 = vadd.xlane.f32.xlu0 %v2724
      %v2852 = vpop.xlane.xlu0 %2851
      %2853 = vadd.xlane.f32.xlu0 %v2726
      %v2854 = vpop.xlane.xlu0 %2853
      %2855 = vadd.xlane.f32.xlu0 %v2728
      %v2856 = vpop.xlane.xlu0 %2855
      %2857 = vadd.xlane.f32.xlu0 %v2730
      %v2858 = vpop.xlane.xlu0 %2857
      %2859 = vadd.xlane.f32.xlu0 %v2732
      %v2860 = vpop.xlane.xlu0 %2859
      %2861 = vadd.xlane.f32.xlu0 %v2734
      %v2862 = vpop.xlane.xlu0 %2861
      %2863 = vadd.xlane.f32.xlu0 %v2736
      %v2864 = vpop.xlane.xlu0 %2863
      %2865 = vadd.xlane.f32.xlu0 %v2738
      %v2866 = vpop.xlane.xlu0 %2865
      %2867 = vadd.xlane.f32.xlu0 %v2740
      %v2868 = vpop.xlane.xlu0 %2867
      %2869 = vadd.xlane.f32.xlu0 %v2742
      %v2870 = vpop.xlane.xlu0 %2869
      %2871 = vadd.xlane.f32.xlu0 %v2744
      %v2872 = vpop.xlane.xlu0 %2871
      %2873 = vadd.xlane.f32.xlu0 %v2746
      %v2874 = vpop.xlane.xlu0 %2873
      %2875 = vadd.xlane.f32.xlu0 %v2748
      %v2876 = vpop.xlane.xlu0 %2875
      %2877 = vadd.xlane.f32.xlu0 %v2750
      %v2878 = vpop.xlane.xlu0 %2877
      %2879 = vadd.xlane.f32.xlu0 %v2752
      %v2880 = vpop.xlane.xlu0 %2879
      %2881 = vadd.xlane.f32.xlu0 %v2754
      %v2882 = vpop.xlane.xlu0 %2881
      %2883 = vadd.xlane.f32.xlu0 %v2756
      %v2884 = vpop.xlane.xlu0 %2883
      %2885 = vadd.xlane.f32.xlu0 %v2758
      %v2886 = vpop.xlane.xlu0 %2885
      %2887 = vadd.xlane.f32.xlu0 %v2760
      %v2888 = vpop.xlane.xlu0 %2887
      %2889 = vadd.xlane.f32.xlu0 %v2762
      %v2890 = vpop.xlane.xlu0 %2889
      %2891 = vadd.xlane.f32.xlu0 %v2764
      %v2892 = vpop.xlane.xlu0 %2891
      %2893 = vadd.xlane.f32.xlu0 %v2766
      %v2894 = vpop.xlane.xlu0 %2893
      %2895 = vadd.xlane.f32.xlu0 %v2768
      %v2896 = vpop.xlane.xlu0 %2895
      %2897 = vadd.xlane.f32.xlu0 %v2770
      %v2898 = vpop.xlane.xlu0 %2897
      %2899 = vadd.xlane.f32.xlu0 %v2772
      %v2900 = vpop.xlane.xlu0 %2899
      %2901 = vadd.xlane.f32.xlu0 %v2774
      %v2902 = vpop.xlane.xlu0 %2901
      %2903 = vadd.xlane.f32.xlu0 %v2776
      %v2904 = vpop.xlane.xlu0 %2903
      %2905 = vadd.xlane.f32.xlu0 %v2778
      %v2906 = vpop.xlane.xlu0 %2905
      %2907 = vadd.xlane.f32.xlu0 %v2780
      %v2908 = vpop.xlane.xlu0 %2907
      %2909 = vadd.xlane.f32.xlu0 %v2782
      %v2910 = vpop.xlane.xlu0 %2909
      %2911 = vadd.xlane.f32.xlu0 %v2784
      %v2912 = vpop.xlane.xlu0 %2911
      %2913 = vadd.xlane.f32.xlu0 %v2786
      %v2914 = vpop.xlane.xlu0 %2913
      %2915 = vadd.xlane.f32.xlu0 %v2788
      %v2916 = vpop.xlane.xlu0 %2915
      %2917 = vadd.xlane.f32.xlu0 %v2790
      %v2918 = vpop.xlane.xlu0 %2917
      %2919 = vadd.xlane.f32.xlu0 %v2792
      %v2920 = vpop.xlane.xlu0 %2919
      %2921 = vadd.xlane.f32.xlu0 %v2794
      %v2922 = vpop.xlane.xlu0 %2921
      %2923 = vadd.xlane.f32.xlu0 %v2796
      %v2924 = vpop.xlane.xlu0 %2923
      %2925 = vadd.xlane.f32.xlu0 %v2798
      %v2926 = vpop.xlane.xlu0 %2925
      %v2927 = vrcp.pop %v2800
      %v2928 = vrcp.pop %v2802
      %v2929 = vrcp.pop %v2804
      %v2930 = vrcp.pop %v2806
      %v2931 = vrcp.pop %v2808
      %v2932 = vrcp.pop %v2810
      %v2933 = vrcp.pop %v2812
      %v2934 = vrcp.pop %v2814
      %v2935 = vrcp.pop %v2816
      %v2936 = vrcp.pop %v2818
      %v2937 = vrcp.pop %v2820
      %v2938 = vrcp.pop %v2822
      %v2939 = vrcp.pop %v2824
      %v2940 = vrcp.pop %v2826
      %v2941 = vrcp.pop %v2828
      %v2942 = vrcp.pop %v2830
      %v2943 = vrcp.pop %v2832
      %v2944 = vrcp.pop %v2834
      %v2945 = vrcp.pop %v2836
      %v2946 = vrcp.pop %v2838
      %v2947 = vrcp.pop %v2840
      %v2948 = vrcp.pop %v2842
      %v2949 = vrcp.pop %v2844
      %v2950 = vrcp.pop %v2846
      %v2951 = vrcp.pop %v2848
      %v2952 = vrcp.pop %v2850
      %v2953 = vrcp.pop %v2852
      %v2954 = vrcp.pop %v2854
      %v2955 = vrcp.pop %v2856
      %v2956 = vrcp.pop %v2858
      %v2957 = vrcp.pop %v2860
      %v2958 = vrcp.pop %v2862
      %v2959 = vrcp.pop %v2864
      %v2960 = vrcp.pop %v2866
      %v2961 = vrcp.pop %v2868
      %v2962 = vrcp.pop %v2870
      %v2963 = vrcp.pop %v2872
      %v2964 = vrcp.pop %v2874
      %v2965 = vrcp.pop %v2876
      %v2966 = vrcp.pop %v2878
      %v2967 = vrcp.pop %v2880
      %v2968 = vrcp.pop %v2882
      %v2969 = vrcp.pop %v2884
      %v2970 = vrcp.pop %v2886
      %v2971 = vrcp.pop %v2888
      %v2972 = vrcp.pop %v2890
      %v2973 = vrcp.pop %v2892
      %v2974 = vrcp.pop %v2894
      %v2975 = vrcp.pop %v2896
      %v2976 = vrcp.pop %v2898
      %v2977 = vrcp.pop %v2900
      %v2978 = vrcp.pop %v2902
      %v2979 = vrcp.pop %v2904
      %v2980 = vrcp.pop %v2906
      %v2981 = vrcp.pop %v2908
      %v2982 = vrcp.pop %v2910
      %v2983 = vrcp.pop %v2912
      %v2984 = vrcp.pop %v2914
      %v2985 = vrcp.pop %v2916
      %v2986 = vrcp.pop %v2918
      %v2987 = vrcp.pop %v2920
      %v2988 = vrcp.pop %v2922
      %v2989 = vrcp.pop %v2924
      %v2990 = vrcp.pop %v2926
      %v2991 = vmul.f32 %v2672, %v2927
      %v2992 = vmul.f32 %v2674, %v2928
      %v2993 = vmul.f32 %v2676, %v2929
      %v2994 = vmul.f32 %v2678, %v2930
      %v2995 = vmul.f32 %v2680, %v2931
      %v2996 = vmul.f32 %v2682, %v2932
      %v2997 = vmul.f32 %v2684, %v2933
      %v2998 = vmul.f32 %v2686, %v2934
      %v2999 = vmul.f32 %v2688, %v2935
      %v3000 = vmul.f32 %v2690, %v2936
      %v3001 = vmul.f32 %v2692, %v2937
      %v3002 = vmul.f32 %v2694, %v2938
      %v3003 = vmul.f32 %v2696, %v2939
      %v3004 = vmul.f32 %v2698, %v2940
      %v3005 = vmul.f32 %v2700, %v2941
      %v3006 = vmul.f32 %v2702, %v2942
      %v3007 = vmul.f32 %v2704, %v2943
      %v3008 = vmul.f32 %v2706, %v2944
      %v3009 = vmul.f32 %v2708, %v2945
      %v3010 = vmul.f32 %v2710, %v2946
      %v3011 = vmul.f32 %v2712, %v2947
      %v3012 = vmul.f32 %v2714, %v2948
      %v3013 = vmul.f32 %v2716, %v2949
      %v3014 = vmul.f32 %v2718, %v2950
      %v3015 = vmul.f32 %v2720, %v2951
      %v3016 = vmul.f32 %v2722, %v2952
      %v3017 = vmul.f32 %v2724, %v2953
      %v3018 = vmul.f32 %v2726, %v2954
      %v3019 = vmul.f32 %v2728, %v2955
      %v3020 = vmul.f32 %v2730, %v2956
      %v3021 = vmul.f32 %v2732, %v2957
      %v3022 = vmul.f32 %v2734, %v2958
      %v3023 = vmul.f32 %v2736, %v2959
      %v3024 = vmul.f32 %v2738, %v2960
      %v3025 = vmul.f32 %v2740, %v2961
      %v3026 = vmul.f32 %v2742, %v2962
      %v3027 = vmul.f32 %v2744, %v2963
      %v3028 = vmul.f32 %v2746, %v2964
      %v3029 = vmul.f32 %v2748, %v2965
      %v3030 = vmul.f32 %v2750, %v2966
      %v3031 = vmul.f32 %v2752, %v2967
      %v3032 = vmul.f32 %v2754, %v2968
      %v3033 = vmul.f32 %v2756, %v2969
      %v3034 = vmul.f32 %v2758, %v2970
      %v3035 = vmul.f32 %v2760, %v2971
      %v3036 = vmul.f32 %v2762, %v2972
      %v3037 = vmul.f32 %v2764, %v2973
      %v3038 = vmul.f32 %v2766, %v2974
      %v3039 = vmul.f32 %v2768, %v2975
      %v3040 = vmul.f32 %v2770, %v2976
      %v3041 = vmul.f32 %v2772, %v2977
      %v3042 = vmul.f32 %v2774, %v2978
      %v3043 = vmul.f32 %v2776, %v2979
      %v3044 = vmul.f32 %v2778, %v2980
      %v3045 = vmul.f32 %v2780, %v2981
      %v3046 = vmul.f32 %v2782, %v2982
      %v3047 = vmul.f32 %v2784, %v2983
      %v3048 = vmul.f32 %v2786, %v2984
      %v3049 = vmul.f32 %v2788, %v2985
      %v3050 = vmul.f32 %v2790, %v2986
      %v3051 = vmul.f32 %v2792, %v2987
      %v3052 = vmul.f32 %v2794, %v2988
      %v3053 = vmul.f32 %v2796, %v2989
      %v3054 = vmul.f32 %v2798, %v2990
      %3055 = vmatprep.subr.mxu0 0.0
      %3056 = vmatpush1.xpose.msra.mxu0 %v2991
      %3057 = vmatprep.subr.mxu0 0.0
      %3058 = vmatpush1.xpose.msra.mxu0 %v2992
      %3059 = vmatprep.subr.mxu0 0.0
      %3060 = vmatpush1.xpose.msra.mxu0 %v2993
      %3061 = vmatprep.subr.mxu0 0.0
      %3062 = vmatpush1.xpose.msra.mxu0 %v2994
      %3063 = vmatprep.subr.mxu0 0.0
      %3064 = vmatpush1.xpose.msra.mxu0 %v2995
      %3065 = vmatprep.subr.mxu0 0.0
      %3066 = vmatpush1.xpose.msra.mxu0 %v2996
      %3067 = vmatprep.subr.mxu0 0.0
      %3068 = vmatpush1.xpose.msra.mxu0 %v2997
      %3069 = vmatprep.subr.mxu0 0.0
      %3070 = vmatpush1.xpose.msra.mxu0 %v2998
      %3071 = vmatprep.subr.mxu0 0.0
      %3072 = vmatpush1.xpose.msra.mxu0 %v2999
      %3073 = vmatprep.subr.mxu0 0.0
      %3074 = vmatpush1.xpose.msra.mxu0 %v3000
      %3075 = vmatprep.subr.mxu0 0.0
      %3076 = vmatpush1.xpose.msra.mxu0 %v3001
      %3077 = vmatprep.subr.mxu0 0.0
      %3078 = vmatpush1.xpose.msra.mxu0 %v3002
      %3079 = vmatprep.subr.mxu0 0.0
      %3080 = vmatpush1.xpose.msra.mxu0 %v3003
      %3081 = vmatprep.subr.mxu0 0.0
      %3082 = vmatpush1.xpose.msra.mxu0 %v3004
      %3083 = vmatprep.subr.mxu0 0.0
      %3084 = vmatpush1.xpose.msra.mxu0 %v3005
      %3085 = vmatprep.subr.mxu0 0.0
      %3086 = vmatpush1.xpose.msra.mxu0 %v3006
      %3087 = vmatprep.subr.mxu0 0.0
      %3088 = vmatpush1.xpose.msra.mxu0 0.0
      %3089 = vmatprep.subr.mxu0 0.0
      %3090 = vmatpush1.xpose.msra.mxu0 0.0
      %3091 = vmatprep.subr.mxu0 0.0
      %3092 = vmatpush1.xpose.msra.mxu0 0.0
      %3093 = vmatprep.subr.mxu0 0.0
      %3094 = vmatpush1.xpose.msra.mxu0 0.0
      %3095 = vmatprep.subr.mxu0 0.0
      %3096 = vmatpush1.xpose.msra.mxu0 0.0
      %3097 = vmatprep.subr.mxu0 0.0
      %3098 = vmatpush1.xpose.msra.mxu0 0.0
      %3099 = vmatprep.subr.mxu0 0.0
      %3100 = vmatpush1.xpose.msra.mxu0 0.0
      %3101 = vmatprep.subr.mxu0 0.0
      %3102 = vmatpush1.xpose.msra.mxu0 0.0
      %3103 = vmatprep.subr.mxu0 0.0
      %3104 = vmatpush1.xpose.msra.mxu0 0.0
      %3105 = vmatprep.subr.mxu0 0.0
      %3106 = vmatpush1.xpose.msra.mxu0 0.0
      %3107 = vmatprep.subr.mxu0 0.0
      %3108 = vmatpush1.xpose.msra.mxu0 0.0
      %3109 = vmatprep.subr.mxu0 0.0
      %3110 = vmatpush1.xpose.msra.mxu0 0.0
      %3111 = vmatprep.subr.mxu0 0.0
      %3112 = vmatpush1.xpose.msra.mxu0 0.0
      %3113 = vmatprep.subr.mxu0 0.0
      %3114 = vmatpush1.xpose.msra.mxu0 0.0
      %3115 = vmatprep.subr.mxu0 0.0
      %3116 = vmatpush1.xpose.msra.mxu0 0.0
      %3117 = vmatprep.subr.mxu0 0.0
      %3118 = vmatpush1.xpose.msra.mxu0 0.0
      %3119 = vmatprep.mubr.f32.mxu0 0.0
      %3120 = vmatmul.mubr.f32.gmra.mrb[0].mxu0 %v1431
      %v3121 = vpop.f32.mrb[0].mxu0
      %v3122 = vadd.f32 0.0, %v3121
      %v3123 = vpop.f32.mrb[0].mxu0
      %3124 = vmatprep.mubr.f32.mxu0 0.0
      %3125 = vmatmul.mubr.f32.gmra.mrb[0].mxu0 %v1432
      %v3126 = vpop.f32.mrb[0].mxu0
      %v3127 = vadd.f32 0.0, %v3126
      %v3128 = vpop.f32.mrb[0].mxu0
      %3129 = vmatprep.mubr.f32.mxu0 0.0
      %3130 = vmatmul.mubr.f32.gmra.mrb[0].mxu0 %v1433
      %v3131 = vpop.f32.mrb[0].mxu0
      %v3132 = vadd.f32 0.0, %v3131
      %v3133 = vpop.f32.mrb[0].mxu0
      %3134 = vmatprep.mubr.f32.mxu0 0.0
      %3135 = vmatmul.mubr.f32.gmra.mrb[0].mxu0 %v1434
      %v3136 = vpop.f32.mrb[0].mxu0
      %v3137 = vadd.f32 0.0, %v3136
      %v3138 = vpop.f32.mrb[0].mxu0
      %3139 = vdwg.mxu0
      %3140 = vmatprep.subr.mxu0 0.0
      %3141 = vmatpush1.xpose.msra.mxu0 %v3007
      %3142 = vmatprep.subr.mxu0 0.0
      %3143 = vmatpush1.xpose.msra.mxu0 %v3008
      %3144 = vmatprep.subr.mxu0 0.0
      %3145 = vmatpush1.xpose.msra.mxu0 %v3009
      %3146 = vmatprep.subr.mxu0 0.0
      %3147 = vmatpush1.xpose.msra.mxu0 %v3010
      %3148 = vmatprep.subr.mxu0 0.0
      %3149 = vmatpush1.xpose.msra.mxu0 %v3011
      %3150 = vmatprep.subr.mxu0 0.0
      %3151 = vmatpush1.xpose.msra.mxu0 %v3012
      %3152 = vmatprep.subr.mxu0 0.0
      %3153 = vmatpush1.xpose.msra.mxu0 %v3013
      %3154 = vmatprep.subr.mxu0 0.0
      %3155 = vmatpush1.xpose.msra.mxu0 %v3014
      %3156 = vmatprep.subr.mxu0 0.0
      %3157 = vmatpush1.xpose.msra.mxu0 %v3015
      %3158 = vmatprep.subr.mxu0 0.0
      %3159 = vmatpush1.xpose.msra.mxu0 %v3016
      %3160 = vmatprep.subr.mxu0 0.0
      %3161 = vmatpush1.xpose.msra.mxu0 %v3017
      %3162 = vmatprep.subr.mxu0 0.0
      %3163 = vmatpush1.xpose.msra.mxu0 %v3018
      %3164 = vmatprep.subr.mxu0 0.0
      %3165 = vmatpush1.xpose.msra.mxu0 %v3019
      %3166 = vmatprep.subr.mxu0 0.0
      %3167 = vmatpush1.xpose.msra.mxu0 %v3020
      %3168 = vmatprep.subr.mxu0 0.0
      %3169 = vmatpush1.xpose.msra.mxu0 %v3021
      %3170 = vmatprep.subr.mxu0 0.0
      %3171 = vmatpush1.xpose.msra.mxu0 %v3022
      %3172 = vmatprep.subr.mxu0 0.0
      %3173 = vmatpush1.xpose.msra.mxu0 0.0
      %3174 = vmatprep.subr.mxu0 0.0
      %3175 = vmatpush1.xpose.msra.mxu0 0.0
      %3176 = vmatprep.subr.mxu0 0.0
      %3177 = vmatpush1.xpose.msra.mxu0 0.0
      %3178 = vmatprep.subr.mxu0 0.0
      %3179 = vmatpush1.xpose.msra.mxu0 0.0
      %3180 = vmatprep.subr.mxu0 0.0
      %3181 = vmatpush1.xpose.msra.mxu0 0.0
      %3182 = vmatprep.subr.mxu0 0.0
      %3183 = vmatpush1.xpose.msra.mxu0 0.0
      %3184 = vmatprep.subr.mxu0 0.0
      %3185 = vmatpush1.xpose.msra.mxu0 0.0
      %3186 = vmatprep.subr.mxu0 0.0
      %3187 = vmatpush1.xpose.msra.mxu0 0.0
      %3188 = vmatprep.subr.mxu0 0.0
      %3189 = vmatpush1.xpose.msra.mxu0 0.0
      %3190 = vmatprep.subr.mxu0 0.0
      %3191 = vmatpush1.xpose.msra.mxu0 0.0
      %3192 = vmatprep.subr.mxu0 0.0
      %3193 = vmatpush1.xpose.msra.mxu0 0.0
      %3194 = vmatprep.subr.mxu0 0.0
      %3195 = vmatpush1.xpose.msra.mxu0 0.0
      %3196 = vmatprep.subr.mxu0 0.0
      %3197 = vmatpush1.xpose.msra.mxu0 0.0
      %3198 = vmatprep.subr.mxu0 0.0
      %3199 = vmatpush1.xpose.msra.mxu0 0.0
      %3200 = vmatprep.subr.mxu0 0.0
      %3201 = vmatpush1.xpose.msra.mxu0 0.0
      %3202 = vmatprep.subr.mxu0 0.0
      %3203 = vmatpush1.xpose.msra.mxu0 0.0
      %3204 = vmatprep.mubr.f32.mxu0 0.0
      %3205 = vmatmul.mubr.f32.gmra.mrb[0].mxu0 %v1435
      %v3206 = vpop.f32.mrb[0].mxu0
      %v3207 = vadd.f32 0.0, %v3206
      %v3208 = vpop.f32.mrb[0].mxu0
      %3209 = vmatprep.mubr.f32.mxu0 0.0
      %3210 = vmatmul.mubr.f32.gmra.mrb[0].mxu0 %v1436
      %v3211 = vpop.f32.mrb[0].mxu0
      %v3212 = vadd.f32 0.0, %v3211
      %v3213 = vpop.f32.mrb[0].mxu0
      %3214 = vmatprep.mubr.f32.mxu0 0.0
      %3215 = vmatmul.mubr.f32.gmra.mrb[0].mxu0 %v1437
      %v3216 = vpop.f32.mrb[0].mxu0
      %v3217 = vadd.f32 0.0, %v3216
      %v3218 = vpop.f32.mrb[0].mxu0
      %3219 = vmatprep.mubr.f32.mxu0 0.0
      %3220 = vmatmul.mubr.f32.gmra.mrb[0].mxu0 %v1438
      %v3221 = vpop.f32.mrb[0].mxu0
      %v3222 = vadd.f32 0.0, %v3221
      %v3223 = vpop.f32.mrb[0].mxu0
      %3224 = vdwg.mxu0
      %3225 = vmatprep.subr.mxu0 0.0
      %3226 = vmatpush1.xpose.msra.mxu0 %v3023
      %3227 = vmatprep.subr.mxu0 0.0
      %3228 = vmatpush1.xpose.msra.mxu0 %v3024
      %3229 = vmatprep.subr.mxu0 0.0
      %3230 = vmatpush1.xpose.msra.mxu0 %v3025
      %3231 = vmatprep.subr.mxu0 0.0
      %3232 = vmatpush1.xpose.msra.mxu0 %v3026
      %3233 = vmatprep.subr.mxu0 0.0
      %3234 = vmatpush1.xpose.msra.mxu0 %v3027
      %3235 = vmatprep.subr.mxu0 0.0
      %3236 = vmatpush1.xpose.msra.mxu0 %v3028
      %3237 = vmatprep.subr.mxu0 0.0
      %3238 = vmatpush1.xpose.msra.mxu0 %v3029
      %3239 = vmatprep.subr.mxu0 0.0
      %3240 = vmatpush1.xpose.msra.mxu0 %v3030
      %3241 = vmatprep.subr.mxu0 0.0
      %3242 = vmatpush1.xpose.msra.mxu0 %v3031
      %3243 = vmatprep.subr.mxu0 0.0
      %3244 = vmatpush1.xpose.msra.mxu0 %v3032
      %3245 = vmatprep.subr.mxu0 0.0
      %3246 = vmatpush1.xpose.msra.mxu0 %v3033
      %3247 = vmatprep.subr.mxu0 0.0
      %3248 = vmatpush1.xpose.msra.mxu0 %v3034
      %3249 = vmatprep.subr.mxu0 0.0
      %3250 = vmatpush1.xpose.msra.mxu0 %v3035
      %3251 = vmatprep.subr.mxu0 0.0
      %3252 = vmatpush1.xpose.msra.mxu0 %v3036
      %3253 = vmatprep.subr.mxu0 0.0
      %3254 = vmatpush1.xpose.msra.mxu0 %v3037
      %3255 = vmatprep.subr.mxu0 0.0
      %3256 = vmatpush1.xpose.msra.mxu0 %v3038
      %3257 = vmatprep.subr.mxu0 0.0
      %3258 = vmatpush1.xpose.msra.mxu0 0.0
      %3259 = vmatprep.subr.mxu0 0.0
      %3260 = vmatpush1.xpose.msra.mxu0 0.0
      %3261 = vmatprep.subr.mxu0 0.0
      %3262 = vmatpush1.xpose.msra.mxu0 0.0
      %3263 = vmatprep.subr.mxu0 0.0
      %3264 = vmatpush1.xpose.msra.mxu0 0.0
      %3265 = vmatprep.subr.mxu0 0.0
      %3266 = vmatpush1.xpose.msra.mxu0 0.0
      %3267 = vmatprep.subr.mxu0 0.0
      %3268 = vmatpush1.xpose.msra.mxu0 0.0
      %3269 = vmatprep.subr.mxu0 0.0
      %3270 = vmatpush1.xpose.msra.mxu0 0.0
      %3271 = vmatprep.subr.mxu0 0.0
      %3272 = vmatpush1.xpose.msra.mxu0 0.0
      %3273 = vmatprep.subr.mxu0 0.0
      %3274 = vmatpush1.xpose.msra.mxu0 0.0
      %3275 = vmatprep.subr.mxu0 0.0
      %3276 = vmatpush1.xpose.msra.mxu0 0.0
      %3277 = vmatprep.subr.mxu0 0.0
      %3278 = vmatpush1.xpose.msra.mxu0 0.0
      %3279 = vmatprep.subr.mxu0 0.0
      %3280 = vmatpush1.xpose.msra.mxu0 0.0
      %3281 = vmatprep.subr.mxu0 0.0
      %3282 = vmatpush1.xpose.msra.mxu0 0.0
      %3283 = vmatprep.subr.mxu0 0.0
      %3284 = vmatpush1.xpose.msra.mxu0 0.0
      %3285 = vmatprep.subr.mxu0 0.0
      %3286 = vmatpush1.xpose.msra.mxu0 0.0
      %3287 = vmatprep.subr.mxu0 0.0
      %3288 = vmatpush1.xpose.msra.mxu0 0.0
      %3289 = vmatprep.mubr.f32.mxu0 0.0
      %3290 = vmatmul.mubr.f32.gmra.mrb[0].mxu0 %v1439
      %v3291 = vpop.f32.mrb[0].mxu0
      %v3292 = vadd.f32 0.0, %v3291
      %v3293 = vpop.f32.mrb[0].mxu0
      %3294 = vmatprep.mubr.f32.mxu0 0.0
      %3295 = vmatmul.mubr.f32.gmra.mrb[0].mxu0 %v1440
      %v3296 = vpop.f32.mrb[0].mxu0
      %v3297 = vadd.f32 0.0, %v3296
      %v3298 = vpop.f32.mrb[0].mxu0
      %3299 = vmatprep.mubr.f32.mxu0 0.0
      %3300 = vmatmul.mubr.f32.gmra.mrb[0].mxu0 %v1441
      %v3301 = vpop.f32.mrb[0].mxu0
      %v3302 = vadd.f32 0.0, %v3301
      %v3303 = vpop.f32.mrb[0].mxu0
      %3304 = vmatprep.mubr.f32.mxu0 0.0
      %3305 = vmatmul.mubr.f32.gmra.mrb[0].mxu0 %v1442
      %v3306 = vpop.f32.mrb[0].mxu0
      %v3307 = vadd.f32 0.0, %v3306
      %v3308 = vpop.f32.mrb[0].mxu0
      %3309 = vdwg.mxu0
      %3310 = vmatprep.subr.mxu0 0.0
      %3311 = vmatpush1.xpose.msra.mxu0 %v3039
      %3312 = vmatprep.subr.mxu0 0.0
      %3313 = vmatpush1.xpose.msra.mxu0 %v3040
      %3314 = vmatprep.subr.mxu0 0.0
      %3315 = vmatpush1.xpose.msra.mxu0 %v3041
      %3316 = vmatprep.subr.mxu0 0.0
      %3317 = vmatpush1.xpose.msra.mxu0 %v3042
      %3318 = vmatprep.subr.mxu0 0.0
      %3319 = vmatpush1.xpose.msra.mxu0 %v3043
      %3320 = vmatprep.subr.mxu0 0.0
      %3321 = vmatpush1.xpose.msra.mxu0 %v3044
      %3322 = vmatprep.subr.mxu0 0.0
      %3323 = vmatpush1.xpose.msra.mxu0 %v3045
      %3324 = vmatprep.subr.mxu0 0.0
      %3325 = vmatpush1.xpose.msra.mxu0 %v3046
      %3326 = vmatprep.subr.mxu0 0.0
      %3327 = vmatpush1.xpose.msra.mxu0 %v3047
      %3328 = vmatprep.subr.mxu0 0.0
      %3329 = vmatpush1.xpose.msra.mxu0 %v3048
      %3330 = vmatprep.subr.mxu0 0.0
      %3331 = vmatpush1.xpose.msra.mxu0 %v3049
      %3332 = vmatprep.subr.mxu0 0.0
      %3333 = vmatpush1.xpose.msra.mxu0 %v3050
      %3334 = vmatprep.subr.mxu0 0.0
      %3335 = vmatpush1.xpose.msra.mxu0 %v3051
      %3336 = vmatprep.subr.mxu0 0.0
      %3337 = vmatpush1.xpose.msra.mxu0 %v3052
      %3338 = vmatprep.subr.mxu0 0.0
      %3339 = vmatpush1.xpose.msra.mxu0 %v3053
      %3340 = vmatprep.subr.mxu0 0.0
      %3341 = vmatpush1.xpose.msra.mxu0 %v3054
      %3342 = vmatprep.subr.mxu0 0.0
      %3343 = vmatpush1.xpose.msra.mxu0 0.0
      %3344 = vmatprep.subr.mxu0 0.0
      %3345 = vmatpush1.xpose.msra.mxu0 0.0
      %3346 = vmatprep.subr.mxu0 0.0
      %3347 = vmatpush1.xpose.msra.mxu0 0.0
      %3348 = vmatprep.subr.mxu0 0.0
      %3349 = vmatpush1.xpose.msra.mxu0 0.0
      %3350 = vmatprep.subr.mxu0 0.0
      %3351 = vmatpush1.xpose.msra.mxu0 0.0
      %3352 = vmatprep.subr.mxu0 0.0
      %3353 = vmatpush1.xpose.msra.mxu0 0.0
      %3354 = vmatprep.subr.mxu0 0.0
      %3355 = vmatpush1.xpose.msra.mxu0 0.0
      %3356 = vmatprep.subr.mxu0 0.0
      %3357 = vmatpush1.xpose.msra.mxu0 0.0
      %3358 = vmatprep.subr.mxu0 0.0
      %3359 = vmatpush1.xpose.msra.mxu0 0.0
      %3360 = vmatprep.subr.mxu0 0.0
      %3361 = vmatpush1.xpose.msra.mxu0 0.0
      %3362 = vmatprep.subr.mxu0 0.0
      %3363 = vmatpush1.xpose.msra.mxu0 0.0
      %3364 = vmatprep.subr.mxu0 0.0
      %3365 = vmatpush1.xpose.msra.mxu0 0.0
      %3366 = vmatprep.subr.mxu0 0.0
      %3367 = vmatpush1.xpose.msra.mxu0 0.0
      %3368 = vmatprep.subr.mxu0 0.0
      %3369 = vmatpush1.xpose.msra.mxu0 0.0
      %3370 = vmatprep.subr.mxu0 0.0
      %3371 = vmatpush1.xpose.msra.mxu0 0.0
      %3372 = vmatprep.subr.mxu0 0.0
      %3373 = vmatpush1.xpose.msra.mxu0 0.0
      %3374 = vmatprep.mubr.f32.mxu0 0.0
      %3375 = vmatmul.mubr.f32.gmra.mrb[0].mxu0 %v1443
      %v3376 = vpop.f32.mrb[0].mxu0
      %v3377 = vadd.f32 0.0, %v3376
      %v3378 = vpop.f32.mrb[0].mxu0
      %3379 = vmatprep.mubr.f32.mxu0 0.0
      %3380 = vmatmul.mubr.f32.gmra.mrb[0].mxu0 %v1444
      %v3381 = vpop.f32.mrb[0].mxu0
      %v3382 = vadd.f32 0.0, %v3381
      %v3383 = vpop.f32.mrb[0].mxu0
      %3384 = vmatprep.mubr.f32.mxu0 0.0
      %3385 = vmatmul.mubr.f32.gmra.mrb[0].mxu0 %v1445
      %v3386 = vpop.f32.mrb[0].mxu0
      %v3387 = vadd.f32 0.0, %v3386
      %v3388 = vpop.f32.mrb[0].mxu0
      %3389 = vmatprep.mubr.f32.mxu0 0.0
      %3390 = vmatmul.mubr.f32.gmra.mrb[0].mxu0 %v1446
      %v3391 = vpop.f32.mrb[0].mxu0
      %v3392 = vadd.f32 0.0, %v3391
      %v3393 = vpop.f32.mrb[0].mxu0
      %3394 = vdwg.mxu0
      %v3395 = vld [vmem:[%s673] sm:$0xff]
      %v3396 = vld [vmem:[%s673 + $0x8] sm:$0xff]
      %v3397 = vld [vmem:[%s673 + $0x10] sm:$0xff]
      %v3398 = vld [vmem:[%s673 + $0x18] sm:$0xff]
      %v3399 = vld [vmem:[%s673 + $0x20] sm:$0xff]
      %v3400 = vld [vmem:[%s673 + $0x28] sm:$0xff]
      %v3401 = vld [vmem:[%s673 + $0x30] sm:$0xff]
      %v3402 = vld [vmem:[%s673 + $0x38] sm:$0xff]
      %v3403 = vld [vmem:[%s673 + $0x40] sm:$0xff]
      %v3404 = vld [vmem:[%s673 + $0x48] sm:$0xff]
      %v3405 = vld [vmem:[%s673 + $0x50] sm:$0xff]
      %v3406 = vld [vmem:[%s673 + $0x58] sm:$0xff]
      %v3407 = vld [vmem:[%s673 + $0x60] sm:$0xff]
      %v3408 = vld [vmem:[%s673 + $0x68] sm:$0xff]
      %v3409 = vld [vmem:[%s673 + $0x70] sm:$0xff]
      %v3410 = vld [vmem:[%s673 + $0x78] sm:$0xff]
      %v3411 = vld [vmem:[%s676] sm:$0x1]
      %v3413 = vlaneseq
      %v3414 = vshrl.u32 %v3413, 7
      %v3415 = vsub.s32 0, %v3414
      %v3416 = vrot.slane %v3411, %v3415
      %3418 = vxpose.xlu0.b32.start [1/16] %v3122, 128
      %3419 = vxpose.xlu0.b32.cont [2/16] %v3127, 128
      %3420 = vxpose.xlu0.b32.cont [3/16] %v3132, 128
      %3421 = vxpose.xlu0.b32.cont [4/16] %v3137, 128
      %3422 = vxpose.xlu0.b32.cont [5/16] %v3207, 128
      %3423 = vxpose.xlu0.b32.cont [6/16] %v3212, 128
      %3424 = vxpose.xlu0.b32.cont [7/16] %v3217, 128
      %3425 = vxpose.xlu0.b32.cont [8/16] %v3222, 128
      %3426 = vxpose.xlu0.b32.cont [9/16] %v3292, 128
      %3427 = vxpose.xlu0.b32.cont [10/16] %v3297, 128
      %3428 = vxpose.xlu0.b32.cont [11/16] %v3302, 128
      %3429 = vxpose.xlu0.b32.cont [12/16] %v3307, 128
      %3430 = vxpose.xlu0.b32.cont [13/16] %v3377, 128
      %3431 = vxpose.xlu0.b32.cont [14/16] %v3382, 128
      %3432 = vxpose.xlu0.b32.cont [15/16] %v3387, 128
      %3433 = vxpose.xlu0.b32.end [16/16] %v3392, 128
      %v3434 = vpop.trf.xlu0
      %v3435 = vpop.trf.xlu0
      %v3436 = vpop.trf.xlu0
      %v3437 = vpop.trf.xlu0
      %v3438 = vpop.trf.xlu0
      %v3439 = vpop.trf.xlu0
      %v3440 = vpop.trf.xlu0
      %v3441 = vpop.trf.xlu0
      %v3442 = vpop.trf.xlu0
      %v3443 = vpop.trf.xlu0
      %v3444 = vpop.trf.xlu0
      %v3445 = vpop.trf.xlu0
      %v3446 = vpop.trf.xlu0
      %v3447 = vpop.trf.xlu0
      %v3448 = vpop.trf.xlu0
      %v3449 = vpop.trf.xlu0
      %3450 = vmatprep.subr.mxu0 0.0
      %3451 = vmatpush1.msra.mxu0 %v3395
      %3452 = vmatprep.subr.mxu0 0.0
      %3453 = vmatpush1.msra.mxu0 %v3396
      %3454 = vmatprep.subr.mxu0 0.0
      %3455 = vmatpush1.msra.mxu0 %v3397
      %3456 = vmatprep.subr.mxu0 0.0
      %3457 = vmatpush1.msra.mxu0 %v3398
      %3458 = vmatprep.subr.mxu0 0.0
      %3459 = vmatpush1.msra.mxu0 %v3399
      %3460 = vmatprep.subr.mxu0 0.0
      %3461 = vmatpush1.msra.mxu0 %v3400
      %3462 = vmatprep.subr.mxu0 0.0
      %3463 = vmatpush1.msra.mxu0 %v3401
      %3464 = vmatprep.subr.mxu0 0.0
      %3465 = vmatpush1.msra.mxu0 %v3402
      %3466 = vmatprep.subr.mxu0 0.0
      %3467 = vmatpush1.msra.mxu0 %v3403
      %3468 = vmatprep.subr.mxu0 0.0
      %3469 = vmatpush1.msra.mxu0 %v3404
      %3470 = vmatprep.subr.mxu0 0.0
      %3471 = vmatpush1.msra.mxu0 %v3405
      %3472 = vmatprep.subr.mxu0 0.0
      %3473 = vmatpush1.msra.mxu0 %v3406
      %3474 = vmatprep.subr.mxu0 0.0
      %3475 = vmatpush1.msra.mxu0 %v3407
      %3476 = vmatprep.subr.mxu0 0.0
      %3477 = vmatpush1.msra.mxu0 %v3408
      %3478 = vmatprep.subr.mxu0 0.0
      %3479 = vmatpush1.msra.mxu0 %v3409
      %3480 = vmatprep.subr.mxu0 0.0
      %3481 = vmatpush1.msra.mxu0 %v3410
      %3482 = vmatprep.subr.mxu0 0.0
      %3483 = vmatpush1.msra.mxu0 0.0
      %3484 = vmatprep.subr.mxu0 0.0
      %3485 = vmatpush1.msra.mxu0 0.0
      %3486 = vmatprep.subr.mxu0 0.0
      %3487 = vmatpush1.msra.mxu0 0.0
      %3488 = vmatprep.subr.mxu0 0.0
      %3489 = vmatpush1.msra.mxu0 0.0
      %3490 = vmatprep.subr.mxu0 0.0
      %3491 = vmatpush1.msra.mxu0 0.0
      %3492 = vmatprep.subr.mxu0 0.0
      %3493 = vmatpush1.msra.mxu0 0.0
      %3494 = vmatprep.subr.mxu0 0.0
      %3495 = vmatpush1.msra.mxu0 0.0
      %3496 = vmatprep.subr.mxu0 0.0
      %3497 = vmatpush1.msra.mxu0 0.0
      %3498 = vmatprep.subr.mxu0 0.0
      %3499 = vmatpush1.msra.mxu0 0.0
      %3500 = vmatprep.subr.mxu0 0.0
      %3501 = vmatpush1.msra.mxu0 0.0
      %3502 = vmatprep.subr.mxu0 0.0
      %3503 = vmatpush1.msra.mxu0 0.0
      %3504 = vmatprep.subr.mxu0 0.0
      %3505 = vmatpush1.msra.mxu0 0.0
      %3506 = vmatprep.subr.mxu0 0.0
      %3507 = vmatpush1.msra.mxu0 0.0
      %3508 = vmatprep.subr.mxu0 0.0
      %3509 = vmatpush1.msra.mxu0 0.0
      %3510 = vmatprep.subr.mxu0 0.0
      %3511 = vmatpush1.msra.mxu0 0.0
      %3512 = vmatprep.subr.mxu0 0.0
      %3513 = vmatpush1.msra.mxu0 0.0
      %3514 = vmatprep.mubr.f32.mxu0 0.0
      %3515 = vmatmul.mubr.f32.gmra.mrb[0].mxu0 %v3434
      %v3516 = vpop.f32.mrb[0].mxu0
      %v3517 = vadd.f32 %v3416, %v3516
      %v3518 = vpop.f32.mrb[0].mxu0
      %3519 = vmatprep.mubr.f32.mxu0 0.0
      %3520 = vmatmul.mubr.f32.gmra.mrb[0].mxu0 %v3435
      %v3521 = vpop.f32.mrb[0].mxu0
      %v3522 = vadd.f32 %v3416, %v3521
      %v3523 = vpop.f32.mrb[0].mxu0
      %3524 = vmatprep.mubr.f32.mxu0 0.0
      %3525 = vmatmul.mubr.f32.gmra.mrb[0].mxu0 %v3436
      %v3526 = vpop.f32.mrb[0].mxu0
      %v3527 = vadd.f32 %v3416, %v3526
      %v3528 = vpop.f32.mrb[0].mxu0
      %3529 = vmatprep.mubr.f32.mxu0 0.0
      %3530 = vmatmul.mubr.f32.gmra.mrb[0].mxu0 %v3437
      %v3531 = vpop.f32.mrb[0].mxu0
      %v3532 = vadd.f32 %v3416, %v3531
      %v3533 = vpop.f32.mrb[0].mxu0
      %3534 = vmatprep.mubr.f32.mxu0 0.0
      %3535 = vmatmul.mubr.f32.gmra.mrb[0].mxu0 %v3438
      %v3536 = vpop.f32.mrb[0].mxu0
      %v3537 = vadd.f32 %v3416, %v3536
      %v3538 = vpop.f32.mrb[0].mxu0
      %3539 = vmatprep.mubr.f32.mxu0 0.0
      %3540 = vmatmul.mubr.f32.gmra.mrb[0].mxu0 %v3439
      %v3541 = vpop.f32.mrb[0].mxu0
      %v3542 = vadd.f32 %v3416, %v3541
      %v3543 = vpop.f32.mrb[0].mxu0
      %3544 = vmatprep.mubr.f32.mxu0 0.0
      %3545 = vmatmul.mubr.f32.gmra.mrb[0].mxu0 %v3440
      %v3546 = vpop.f32.mrb[0].mxu0
      %v3547 = vadd.f32 %v3416, %v3546
      %v3548 = vpop.f32.mrb[0].mxu0
      %3549 = vmatprep.mubr.f32.mxu0 0.0
      %3550 = vmatmul.mubr.f32.gmra.mrb[0].mxu0 %v3441
      %v3551 = vpop.f32.mrb[0].mxu0
      %v3552 = vadd.f32 %v3416, %v3551
      %v3553 = vpop.f32.mrb[0].mxu0
      %3554 = vmatprep.mubr.f32.mxu0 0.0
      %3555 = vmatmul.mubr.f32.gmra.mrb[0].mxu0 %v3442
      %v3556 = vpop.f32.mrb[0].mxu0
      %v3557 = vadd.f32 %v3416, %v3556
      %v3558 = vpop.f32.mrb[0].mxu0
      %3559 = vmatprep.mubr.f32.mxu0 0.0
      %3560 = vmatmul.mubr.f32.gmra.mrb[0].mxu0 %v3443
      %v3561 = vpop.f32.mrb[0].mxu0
      %v3562 = vadd.f32 %v3416, %v3561
      %v3563 = vpop.f32.mrb[0].mxu0
      %3564 = vmatprep.mubr.f32.mxu0 0.0
      %3565 = vmatmul.mubr.f32.gmra.mrb[0].mxu0 %v3444
      %v3566 = vpop.f32.mrb[0].mxu0
      %v3567 = vadd.f32 %v3416, %v3566
      %v3568 = vpop.f32.mrb[0].mxu0
      %3569 = vmatprep.mubr.f32.mxu0 0.0
      %3570 = vmatmul.mubr.f32.gmra.mrb[0].mxu0 %v3445
      %v3571 = vpop.f32.mrb[0].mxu0
      %v3572 = vadd.f32 %v3416, %v3571
      %v3573 = vpop.f32.mrb[0].mxu0
      %3574 = vmatprep.mubr.f32.mxu0 0.0
      %3575 = vmatmul.mubr.f32.gmra.mrb[0].mxu0 %v3446
      %v3576 = vpop.f32.mrb[0].mxu0
      %v3577 = vadd.f32 %v3416, %v3576
      %v3578 = vpop.f32.mrb[0].mxu0
      %3579 = vmatprep.mubr.f32.mxu0 0.0
      %3580 = vmatmul.mubr.f32.gmra.mrb[0].mxu0 %v3447
      %v3581 = vpop.f32.mrb[0].mxu0
      %v3582 = vadd.f32 %v3416, %v3581
      %v3583 = vpop.f32.mrb[0].mxu0
      %3584 = vmatprep.mubr.f32.mxu0 0.0
      %3585 = vmatmul.mubr.f32.gmra.mrb[0].mxu0 %v3448
      %v3586 = vpop.f32.mrb[0].mxu0
      %v3587 = vadd.f32 %v3416, %v3586
      %v3588 = vpop.f32.mrb[0].mxu0
      %3589 = vmatprep.mubr.f32.mxu0 0.0
      %3590 = vmatmul.mubr.f32.gmra.mrb[0].mxu0 %v3449
      %v3591 = vpop.f32.mrb[0].mxu0
      %v3592 = vadd.f32 %v3416, %v3591
      %v3593 = vpop.f32.mrb[0].mxu0
      %3594 = vdwg.mxu0
      %v3595 = vadd.f32 %v741, %v3517
      %v3596 = vadd.f32 %v742, %v3522
      %v3597 = vadd.f32 %v743, %v3527
      %v3598 = vadd.f32 %v744, %v3532
      %v3599 = vadd.f32 %v745, %v3537
      %v3600 = vadd.f32 %v746, %v3542
      %v3601 = vadd.f32 %v747, %v3547
      %v3602 = vadd.f32 %v748, %v3552
      %v3603 = vadd.f32 %v749, %v3557
      %v3604 = vadd.f32 %v750, %v3562
      %v3605 = vadd.f32 %v751, %v3567
      %v3606 = vadd.f32 %v752, %v3572
      %v3607 = vadd.f32 %v753, %v3577
      %v3608 = vadd.f32 %v754, %v3582
      %v3609 = vadd.f32 %v755, %v3587
      %v3610 = vadd.f32 %v756, %v3592
      %v3611 = vld [vmem:[%s679] sm:$0x1]
      %v3612 = vld [vmem:[%s682] sm:$0x1]
      %3613 = vadd.xlane.f32.xlu0 %v3595
      %v3614 = vpop.xlane.xlu0 %3613
      %3615 = vadd.xlane.f32.xlu0 %v3596
      %v3616 = vpop.xlane.xlu0 %3615
      %3617 = vadd.xlane.f32.xlu0 %v3597
      %v3618 = vpop.xlane.xlu0 %3617
      %3619 = vadd.xlane.f32.xlu0 %v3598
      %v3620 = vpop.xlane.xlu0 %3619
      %3621 = vadd.xlane.f32.xlu0 %v3599
      %v3622 = vpop.xlane.xlu0 %3621
      %3623 = vadd.xlane.f32.xlu0 %v3600
      %v3624 = vpop.xlane.xlu0 %3623
      %3625 = vadd.xlane.f32.xlu0 %v3601
      %v3626 = vpop.xlane.xlu0 %3625
      %3627 = vadd.xlane.f32.xlu0 %v3602
      %v3628 = vpop.xlane.xlu0 %3627
      %3629 = vadd.xlane.f32.xlu0 %v3603
      %v3630 = vpop.xlane.xlu0 %3629
      %3631 = vadd.xlane.f32.xlu0 %v3604
      %v3632 = vpop.xlane.xlu0 %3631
      %3633 = vadd.xlane.f32.xlu0 %v3605
      %v3634 = vpop.xlane.xlu0 %3633
      %3635 = vadd.xlane.f32.xlu0 %v3606
      %v3636 = vpop.xlane.xlu0 %3635
      %3637 = vadd.xlane.f32.xlu0 %v3607
      %v3638 = vpop.xlane.xlu0 %3637
      %3639 = vadd.xlane.f32.xlu0 %v3608
      %v3640 = vpop.xlane.xlu0 %3639
      %3641 = vadd.xlane.f32.xlu0 %v3609
      %v3642 = vpop.xlane.xlu0 %3641
      %3643 = vadd.xlane.f32.xlu0 %v3610
      %v3644 = vpop.xlane.xlu0 %3643
      %v3645 = vmul.f32 %v3614, %v791
      %v3646 = vmul.f32 %v3616, %v791
      %v3647 = vmul.f32 %v3618, %v791
      %v3648 = vmul.f32 %v3620, %v791
      %v3649 = vmul.f32 %v3622, %v791
      %v3650 = vmul.f32 %v3624, %v791
      %v3651 = vmul.f32 %v3626, %v791
      %v3652 = vmul.f32 %v3628, %v791
      %v3653 = vmul.f32 %v3630, %v791
      %v3654 = vmul.f32 %v3632, %v791
      %v3655 = vmul.f32 %v3634, %v791
      %v3656 = vmul.f32 %v3636, %v791
      %v3657 = vmul.f32 %v3638, %v791
      %v3658 = vmul.f32 %v3640, %v791
      %v3659 = vmul.f32 %v3642, %v791
      %v3660 = vmul.f32 %v3644, %v791
      %v3661 = vsub.f32 %v3595, %v3645
      %v3662 = vsub.f32 %v3596, %v3646
      %v3663 = vsub.f32 %v3597, %v3647
      %v3664 = vsub.f32 %v3598, %v3648
      %v3665 = vsub.f32 %v3599, %v3649
      %v3666 = vsub.f32 %v3600, %v3650
      %v3667 = vsub.f32 %v3601, %v3651
      %v3668 = vsub.f32 %v3602, %v3652
      %v3669 = vsub.f32 %v3603, %v3653
      %v3670 = vsub.f32 %v3604, %v3654
      %v3671 = vsub.f32 %v3605, %v3655
      %v3672 = vsub.f32 %v3606, %v3656
      %v3673 = vsub.f32 %v3607, %v3657
      %v3674 = vsub.f32 %v3608, %v3658
      %v3675 = vsub.f32 %v3609, %v3659
      %v3676 = vsub.f32 %v3610, %v3660
      %v3677 = vmul.f32 %v3661, %v3661
      %v3678 = vmul.f32 %v3662, %v3662
      %v3679 = vmul.f32 %v3663, %v3663
      %v3680 = vmul.f32 %v3664, %v3664
      %v3681 = vmul.f32 %v3665, %v3665
      %v3682 = vmul.f32 %v3666, %v3666
      %v3683 = vmul.f32 %v3667, %v3667
      %v3684 = vmul.f32 %v3668, %v3668
      %v3685 = vmul.f32 %v3669, %v3669
      %v3686 = vmul.f32 %v3670, %v3670
      %v3687 = vmul.f32 %v3671, %v3671
      %v3688 = vmul.f32 %v3672, %v3672
      %v3689 = vmul.f32 %v3673, %v3673
      %v3690 = vmul.f32 %v3674, %v3674
      %v3691 = vmul.f32 %v3675, %v3675
      %v3692 = vmul.f32 %v3676, %v3676
      %3693 = vadd.xlane.f32.xlu0 %v3677
      %v3694 = vpop.xlane.xlu0 %3693
      %3695 = vadd.xlane.f32.xlu0 %v3678
      %v3696 = vpop.xlane.xlu0 %3695
      %3697 = vadd.xlane.f32.xlu0 %v3679
      %v3698 = vpop.xlane.xlu0 %3697
      %3699 = vadd.xlane.f32.xlu0 %v3680
      %v3700 = vpop.xlane.xlu0 %3699
      %3701 = vadd.xlane.f32.xlu0 %v3681
      %v3702 = vpop.xlane.xlu0 %3701
      %3703 = vadd.xlane.f32.xlu0 %v3682
      %v3704 = vpop.xlane.xlu0 %3703
      %3705 = vadd.xlane.f32.xlu0 %v3683
      %v3706 = vpop.xlane.xlu0 %3705
      %3707 = vadd.xlane.f32.xlu0 %v3684
      %v3708 = vpop.xlane.xlu0 %3707
      %3709 = vadd.xlane.f32.xlu0 %v3685
      %v3710 = vpop.xlane.xlu0 %3709
      %3711 = vadd.xlane.f32.xlu0 %v3686
      %v3712 = vpop.xlane.xlu0 %3711
      %3713 = vadd.xlane.f32.xlu0 %v3687
      %v3714 = vpop.xlane.xlu0 %3713
      %3715 = vadd.xlane.f32.xlu0 %v3688
      %v3716 = vpop.xlane.xlu0 %3715
      %3717 = vadd.xlane.f32.xlu0 %v3689
      %v3718 = vpop.xlane.xlu0 %3717
      %3719 = vadd.xlane.f32.xlu0 %v3690
      %v3720 = vpop.xlane.xlu0 %3719
      %3721 = vadd.xlane.f32.xlu0 %v3691
      %v3722 = vpop.xlane.xlu0 %3721
      %3723 = vadd.xlane.f32.xlu0 %v3692
      %v3724 = vpop.xlane.xlu0 %3723
      %v3725 = vmul.f32 %v3694, %v791
      %v3726 = vmul.f32 %v3696, %v791
      %v3727 = vmul.f32 %v3698, %v791
      %v3728 = vmul.f32 %v3700, %v791
      %v3729 = vmul.f32 %v3702, %v791
      %v3730 = vmul.f32 %v3704, %v791
      %v3731 = vmul.f32 %v3706, %v791
      %v3732 = vmul.f32 %v3708, %v791
      %v3733 = vmul.f32 %v3710, %v791
      %v3734 = vmul.f32 %v3712, %v791
      %v3735 = vmul.f32 %v3714, %v791
      %v3736 = vmul.f32 %v3716, %v791
      %v3737 = vmul.f32 %v3718, %v791
      %v3738 = vmul.f32 %v3720, %v791
      %v3739 = vmul.f32 %v3722, %v791
      %v3740 = vmul.f32 %v3724, %v791
      %v3741 = vadd.f32 %v3725, 1e-06
      %v3742 = vadd.f32 %v3726, 1e-06
      %v3743 = vadd.f32 %v3727, 1e-06
      %v3744 = vadd.f32 %v3728, 1e-06
      %v3745 = vadd.f32 %v3729, 1e-06
      %v3746 = vadd.f32 %v3730, 1e-06
      %v3747 = vadd.f32 %v3731, 1e-06
      %v3748 = vadd.f32 %v3732, 1e-06
      %v3749 = vadd.f32 %v3733, 1e-06
      %v3750 = vadd.f32 %v3734, 1e-06
      %v3751 = vadd.f32 %v3735, 1e-06
      %v3752 = vadd.f32 %v3736, 1e-06
      %v3753 = vadd.f32 %v3737, 1e-06
      %v3754 = vadd.f32 %v3738, 1e-06
      %v3755 = vadd.f32 %v3739, 1e-06
      %v3756 = vadd.f32 %v3740, 1e-06
      %v3757 = vrsqrt.pop %v3741
      %v3758 = vrsqrt.pop %v3742
      %v3759 = vrsqrt.pop %v3743
      %v3760 = vrsqrt.pop %v3744
      %v3761 = vrsqrt.pop %v3745
      %v3762 = vrsqrt.pop %v3746
      %v3763 = vrsqrt.pop %v3747
      %v3764 = vrsqrt.pop %v3748
      %v3765 = vrsqrt.pop %v3749
      %v3766 = vrsqrt.pop %v3750
      %v3767 = vrsqrt.pop %v3751
      %v3768 = vrsqrt.pop %v3752
      %v3769 = vrsqrt.pop %v3753
      %v3770 = vrsqrt.pop %v3754
      %v3771 = vrsqrt.pop %v3755
      %v3772 = vrsqrt.pop %v3756
      %v3773 = vmul.f32 %v3661, %v3757
      %v3774 = vmul.f32 %v3662, %v3758
      %v3775 = vmul.f32 %v3663, %v3759
      %v3776 = vmul.f32 %v3664, %v3760
      %v3777 = vmul.f32 %v3665, %v3761
      %v3778 = vmul.f32 %v3666, %v3762
      %v3779 = vmul.f32 %v3667, %v3763
      %v3780 = vmul.f32 %v3668, %v3764
      %v3781 = vmul.f32 %v3669, %v3765
      %v3782 = vmul.f32 %v3670, %v3766
      %v3783 = vmul.f32 %v3671, %v3767
      %v3784 = vmul.f32 %v3672, %v3768
      %v3785 = vmul.f32 %v3673, %v3769
      %v3786 = vmul.f32 %v3674, %v3770
      %v3787 = vmul.f32 %v3675, %v3771
      %v3788 = vmul.f32 %v3676, %v3772
      %v3790 = vlaneseq
      %v3791 = vshrl.u32 %v3790, 7
      %v3792 = vsub.s32 0, %v3791
      %v3793 = vrot.slane %v3611, %v3792
      %v3795 = vmul.f32 %v3773, %v3793
      %v3796 = vmul.f32 %v3774, %v3793
      %v3797 = vmul.f32 %v3775, %v3793
      %v3798 = vmul.f32 %v3776, %v3793
      %v3799 = vmul.f32 %v3777, %v3793
      %v3800 = vmul.f32 %v3778, %v3793
      %v3801 = vmul.f32 %v3779, %v3793
      %v3802 = vmul.f32 %v3780, %v3793
      %v3803 = vmul.f32 %v3781, %v3793
      %v3804 = vmul.f32 %v3782, %v3793
      %v3805 = vmul.f32 %v3783, %v3793
      %v3806 = vmul.f32 %v3784, %v3793
      %v3807 = vmul.f32 %v3785, %v3793
      %v3808 = vmul.f32 %v3786, %v3793
      %v3809 = vmul.f32 %v3787, %v3793
      %v3810 = vmul.f32 %v3788, %v3793
      %v3812 = vlaneseq
      %v3813 = vshrl.u32 %v3812, 7
      %v3814 = vsub.s32 0, %v3813
      %v3815 = vrot.slane %v3612, %v3814
      %v3817 = vadd.f32 %v3795, %v3815
      %v3818 = vadd.f32 %v3796, %v3815
      %v3819 = vadd.f32 %v3797, %v3815
      %v3820 = vadd.f32 %v3798, %v3815
      %v3821 = vadd.f32 %v3799, %v3815
      %v3822 = vadd.f32 %v3800, %v3815
      %v3823 = vadd.f32 %v3801, %v3815
      %v3824 = vadd.f32 %v3802, %v3815
      %v3825 = vadd.f32 %v3803, %v3815
      %v3826 = vadd.f32 %v3804, %v3815
      %v3827 = vadd.f32 %v3805, %v3815
      %v3828 = vadd.f32 %v3806, %v3815
      %v3829 = vadd.f32 %v3807, %v3815
      %v3830 = vadd.f32 %v3808, %v3815
      %v3831 = vadd.f32 %v3809, %v3815
      %v3832 = vadd.f32 %v3810, %v3815
      %v3833 = vld [vmem:[%s687] sm:$0xff]
      %v3834 = vld [vmem:[%s687 + $0x8] sm:$0xff]
      %v3835 = vld [vmem:[%s687 + $0x10] sm:$0xff]
      %v3836 = vld [vmem:[%s687 + $0x18] sm:$0xff]
      %v3837 = vld [vmem:[%s687 + $0x20] sm:$0xff]
      %v3838 = vld [vmem:[%s687 + $0x28] sm:$0xff]
      %v3839 = vld [vmem:[%s687 + $0x30] sm:$0xff]
      %v3840 = vld [vmem:[%s687 + $0x38] sm:$0xff]
      %v3841 = vld [vmem:[%s687 + $0x40] sm:$0xff]
      %v3842 = vld [vmem:[%s687 + $0x48] sm:$0xff]
      %v3843 = vld [vmem:[%s687 + $0x50] sm:$0xff]
      %v3844 = vld [vmem:[%s687 + $0x58] sm:$0xff]
      %v3845 = vld [vmem:[%s687 + $0x60] sm:$0xff]
      %v3846 = vld [vmem:[%s687 + $0x68] sm:$0xff]
      %v3847 = vld [vmem:[%s687 + $0x70] sm:$0xff]
      %v3848 = vld [vmem:[%s687 + $0x78] sm:$0xff]
      %v3849 = vld [vmem:[%s687 + $0x80] sm:$0xff]
      %v3850 = vld [vmem:[%s687 + $0x88] sm:$0xff]
      %v3851 = vld [vmem:[%s687 + $0x90] sm:$0xff]
      %v3852 = vld [vmem:[%s687 + $0x98] sm:$0xff]
      %v3853 = vld [vmem:[%s687 + $0xa0] sm:$0xff]
      %v3854 = vld [vmem:[%s687 + $0xa8] sm:$0xff]
      %v3855 = vld [vmem:[%s687 + $0xb0] sm:$0xff]
      %v3856 = vld [vmem:[%s687 + $0xb8] sm:$0xff]
      %v3857 = vld [vmem:[%s687 + $0xc0] sm:$0xff]
      %v3858 = vld [vmem:[%s687 + $0xc8] sm:$0xff]
      %v3859 = vld [vmem:[%s687 + $0xd0] sm:$0xff]
      %v3860 = vld [vmem:[%s687 + $0xd8] sm:$0xff]
      %v3861 = vld [vmem:[%s687 + $0xe0] sm:$0xff]
      %v3862 = vld [vmem:[%s687 + $0xe8] sm:$0xff]
      %v3863 = vld [vmem:[%s687 + $0xf0] sm:$0xff]
      %v3864 = vld [vmem:[%s687 + $0xf8] sm:$0xff]
      %v3865 = vld [vmem:[%s687 + $0x100] sm:$0xff]
      %v3866 = vld [vmem:[%s687 + $0x108] sm:$0xff]
      %v3867 = vld [vmem:[%s687 + $0x110] sm:$0xff]
      %v3868 = vld [vmem:[%s687 + $0x118] sm:$0xff]
      %v3869 = vld [vmem:[%s687 + $0x120] sm:$0xff]
      %v3870 = vld [vmem:[%s687 + $0x128] sm:$0xff]
      %v3871 = vld [vmem:[%s687 + $0x130] sm:$0xff]
      %v3872 = vld [vmem:[%s687 + $0x138] sm:$0xff]
      %v3873 = vld [vmem:[%s687 + $0x140] sm:$0xff]
      %v3874 = vld [vmem:[%s687 + $0x148] sm:$0xff]
      %v3875 = vld [vmem:[%s687 + $0x150] sm:$0xff]
      %v3876 = vld [vmem:[%s687 + $0x158] sm:$0xff]
      %v3877 = vld [vmem:[%s687 + $0x160] sm:$0xff]
      %v3878 = vld [vmem:[%s687 + $0x168] sm:$0xff]
      %v3879 = vld [vmem:[%s687 + $0x170] sm:$0xff]
      %v3880 = vld [vmem:[%s687 + $0x178] sm:$0xff]
      %v3881 = vld [vmem:[%s687 + $0x180] sm:$0xff]
      %v3882 = vld [vmem:[%s687 + $0x188] sm:$0xff]
      %v3883 = vld [vmem:[%s687 + $0x190] sm:$0xff]
      %v3884 = vld [vmem:[%s687 + $0x198] sm:$0xff]
      %v3885 = vld [vmem:[%s687 + $0x1a0] sm:$0xff]
      %v3886 = vld [vmem:[%s687 + $0x1a8] sm:$0xff]
      %v3887 = vld [vmem:[%s687 + $0x1b0] sm:$0xff]
      %v3888 = vld [vmem:[%s687 + $0x1b8] sm:$0xff]
      %v3889 = vld [vmem:[%s687 + $0x1c0] sm:$0xff]
      %v3890 = vld [vmem:[%s687 + $0x1c8] sm:$0xff]
      %v3891 = vld [vmem:[%s687 + $0x1d0] sm:$0xff]
      %v3892 = vld [vmem:[%s687 + $0x1d8] sm:$0xff]
      %v3893 = vld [vmem:[%s687 + $0x1e0] sm:$0xff]
      %v3894 = vld [vmem:[%s687 + $0x1e8] sm:$0xff]
      %v3895 = vld [vmem:[%s687 + $0x1f0] sm:$0xff]
      %v3896 = vld [vmem:[%s687 + $0x1f8] sm:$0xff]
      %v3897 = vld [vmem:[%s691] sm:$0xf]
      %v3899 = vlaneseq
      %v3900 = vshrl.u32 %v3899, 7
      %v3901 = vsub.s32 0, %v3900
      %v3902 = vrot.slane %v3897, %v3901
      %v3903 = vlaneseq
      %v3904 = vshrl.u32 %v3903, 7
      %v3905 = vsub.s32 1, %v3904
      %v3906 = vrot.slane %v3897, %v3905
      %v3907 = vlaneseq
      %v3908 = vshrl.u32 %v3907, 7
      %v3909 = vsub.s32 2, %v3908
      %v3910 = vrot.slane %v3897, %v3909
      %v3911 = vlaneseq
      %v3912 = vshrl.u32 %v3911, 7
      %v3913 = vsub.s32 3, %v3912
      %v3914 = vrot.slane %v3897, %v3913
      %3919 = vmatprep.subr.mxu0 %v3834
      %3920 = vmatpush1.msra.mxu0 %v3833
      %3921 = vmatprep.subr.mxu0 %v3838
      %3922 = vmatpush1.msra.mxu0 %v3837
      %3923 = vmatprep.subr.mxu0 %v3842
      %3924 = vmatpush1.msra.mxu0 %v3841
      %3925 = vmatprep.subr.mxu0 %v3846
      %3926 = vmatpush1.msra.mxu0 %v3845
      %3927 = vmatprep.subr.mxu0 %v3850
      %3928 = vmatpush1.msra.mxu0 %v3849
      %3929 = vmatprep.subr.mxu0 %v3854
      %3930 = vmatpush1.msra.mxu0 %v3853
      %3931 = vmatprep.subr.mxu0 %v3858
      %3932 = vmatpush1.msra.mxu0 %v3857
      %3933 = vmatprep.subr.mxu0 %v3862
      %3934 = vmatpush1.msra.mxu0 %v3861
      %3935 = vmatprep.subr.mxu0 %v3866
      %3936 = vmatpush1.msra.mxu0 %v3865
      %3937 = vmatprep.subr.mxu0 %v3870
      %3938 = vmatpush1.msra.mxu0 %v3869
      %3939 = vmatprep.subr.mxu0 %v3874
      %3940 = vmatpush1.msra.mxu0 %v3873
      %3941 = vmatprep.subr.mxu0 %v3878
      %3942 = vmatpush1.msra.mxu0 %v3877
      %3943 = vmatprep.subr.mxu0 %v3882
      %3944 = vmatpush1.msra.mxu0 %v3881
      %3945 = vmatprep.subr.mxu0 %v3886
      %3946 = vmatpush1.msra.mxu0 %v3885
      %3947 = vmatprep.subr.mxu0 %v3890
      %3948 = vmatpush1.msra.mxu0 %v3889
      %3949 = vmatprep.subr.mxu0 %v3894
      %3950 = vmatpush1.msra.mxu0 %v3893
      %3951 = vmatprep.subr.mxu0 0.0
      %3952 = vmatpush1.msra.mxu0 0.0
      %3953 = vmatprep.subr.mxu0 0.0
      %3954 = vmatpush1.msra.mxu0 0.0
      %3955 = vmatprep.subr.mxu0 0.0
      %3956 = vmatpush1.msra.mxu0 0.0
      %3957 = vmatprep.subr.mxu0 0.0
      %3958 = vmatpush1.msra.mxu0 0.0
      %3959 = vmatprep.subr.mxu0 0.0
      %3960 = vmatpush1.msra.mxu0 0.0
      %3961 = vmatprep.subr.mxu0 0.0
      %3962 = vmatpush1.msra.mxu0 0.0
      %3963 = vmatprep.subr.mxu0 0.0
      %3964 = vmatpush1.msra.mxu0 0.0
      %3965 = vmatprep.subr.mxu0 0.0
      %3966 = vmatpush1.msra.mxu0 0.0
      %3967 = vmatprep.subr.mxu0 0.0
      %3968 = vmatpush1.msra.mxu0 0.0
      %3969 = vmatprep.subr.mxu0 0.0
      %3970 = vmatpush1.msra.mxu0 0.0
      %3971 = vmatprep.subr.mxu0 0.0
      %3972 = vmatpush1.msra.mxu0 0.0
      %3973 = vmatprep.subr.mxu0 0.0
      %3974 = vmatpush1.msra.mxu0 0.0
      %3975 = vmatprep.subr.mxu0 0.0
      %3976 = vmatpush1.msra.mxu0 0.0
      %3977 = vmatprep.subr.mxu0 0.0
      %3978 = vmatpush1.msra.mxu0 0.0
      %3979 = vmatprep.subr.mxu0 0.0
      %3980 = vmatpush1.msra.mxu0 0.0
      %3981 = vmatprep.subr.mxu0 0.0
      %3982 = vmatpush1.msra.mxu0 0.0
      %3983 = vmatprep.mubr.f32.mxu0 0.0
      %3984 = vmatmul.mubr.f32.gmra.mrb[0].mxu0 %v3817
      %v3985 = vpop.f32.mrb[0].mxu0
      %v3986 = vadd.f32 %v3902, %v3985
      %v3987 = vpop.f32.mrb[0].mxu0
      %v3988 = vadd.f32 %v3906, %v3987
      %3989 = vmatprep.mubr.f32.mxu0 0.0
      %3990 = vmatmul.mubr.f32.gmra.mrb[0].mxu0 %v3818
      %v3991 = vpop.f32.mrb[0].mxu0
      %v3992 = vadd.f32 %v3902, %v3991
      %v3993 = vpop.f32.mrb[0].mxu0
      %v3994 = vadd.f32 %v3906, %v3993
      %3995 = vmatprep.mubr.f32.mxu0 0.0
      %3996 = vmatmul.mubr.f32.gmra.mrb[0].mxu0 %v3819
      %v3997 = vpop.f32.mrb[0].mxu0
      %v3998 = vadd.f32 %v3902, %v3997
      %v3999 = vpop.f32.mrb[0].mxu0
      %v4000 = vadd.f32 %v3906, %v3999
      %4001 = vmatprep.mubr.f32.mxu0 0.0
      %4002 = vmatmul.mubr.f32.gmra.mrb[0].mxu0 %v3820
      %v4003 = vpop.f32.mrb[0].mxu0
      %v4004 = vadd.f32 %v3902, %v4003
      %v4005 = vpop.f32.mrb[0].mxu0
      %v4006 = vadd.f32 %v3906, %v4005
      %4007 = vmatprep.mubr.f32.mxu0 0.0
      %4008 = vmatmul.mubr.f32.gmra.mrb[0].mxu0 %v3821
      %v4009 = vpop.f32.mrb[0].mxu0
      %v4010 = vadd.f32 %v3902, %v4009
      %v4011 = vpop.f32.mrb[0].mxu0
      %v4012 = vadd.f32 %v3906, %v4011
      %4013 = vmatprep.mubr.f32.mxu0 0.0
      %4014 = vmatmul.mubr.f32.gmra.mrb[0].mxu0 %v3822
      %v4015 = vpop.f32.mrb[0].mxu0
      %v4016 = vadd.f32 %v3902, %v4015
      %v4017 = vpop.f32.mrb[0].mxu0
      %v4018 = vadd.f32 %v3906, %v4017
      %4019 = vmatprep.mubr.f32.mxu0 0.0
      %4020 = vmatmul.mubr.f32.gmra.mrb[0].mxu0 %v3823
      %v4021 = vpop.f32.mrb[0].mxu0
      %v4022 = vadd.f32 %v3902, %v4021
      %v4023 = vpop.f32.mrb[0].mxu0
      %v4024 = vadd.f32 %v3906, %v4023
      %4025 = vmatprep.mubr.f32.mxu0 0.0
      %4026 = vmatmul.mubr.f32.gmra.mrb[0].mxu0 %v3824
      %v4027 = vpop.f32.mrb[0].mxu0
      %v4028 = vadd.f32 %v3902, %v4027
      %v4029 = vpop.f32.mrb[0].mxu0
      %v4030 = vadd.f32 %v3906, %v4029
      %4031 = vmatprep.mubr.f32.mxu0 0.0
      %4032 = vmatmul.mubr.f32.gmra.mrb[0].mxu0 %v3825
      %v4033 = vpop.f32.mrb[0].mxu0
      %v4034 = vadd.f32 %v3902, %v4033
      %v4035 = vpop.f32.mrb[0].mxu0
      %v4036 = vadd.f32 %v3906, %v4035
      %4037 = vmatprep.mubr.f32.mxu0 0.0
      %4038 = vmatmul.mubr.f32.gmra.mrb[0].mxu0 %v3826
      %v4039 = vpop.f32.mrb[0].mxu0
      %v4040 = vadd.f32 %v3902, %v4039
      %v4041 = vpop.f32.mrb[0].mxu0
      %v4042 = vadd.f32 %v3906, %v4041
      %4043 = vmatprep.mubr.f32.mxu0 0.0
      %4044 = vmatmul.mubr.f32.gmra.mrb[0].mxu0 %v3827
      %v4045 = vpop.f32.mrb[0].mxu0
      %v4046 = vadd.f32 %v3902, %v4045
      %v4047 = vpop.f32.mrb[0].mxu0
      %v4048 = vadd.f32 %v3906, %v4047
      %4049 = vmatprep.mubr.f32.mxu0 0.0
      %4050 = vmatmul.mubr.f32.gmra.mrb[0].mxu0 %v3828
      %v4051 = vpop.f32.mrb[0].mxu0
      %v4052 = vadd.f32 %v3902, %v4051
      %v4053 = vpop.f32.mrb[0].mxu0
      %v4054 = vadd.f32 %v3906, %v4053
      %4055 = vmatprep.mubr.f32.mxu0 0.0
      %4056 = vmatmul.mubr.f32.gmra.mrb[0].mxu0 %v3829
      %v4057 = vpop.f32.mrb[0].mxu0
      %v4058 = vadd.f32 %v3902, %v4057
      %v4059 = vpop.f32.mrb[0].mxu0
      %v4060 = vadd.f32 %v3906, %v4059
      %4061 = vmatprep.mubr.f32.mxu0 0.0
      %4062 = vmatmul.mubr.f32.gmra.mrb[0].mxu0 %v3830
      %v4063 = vpop.f32.mrb[0].mxu0
      %v4064 = vadd.f32 %v3902, %v4063
      %v4065 = vpop.f32.mrb[0].mxu0
      %v4066 = vadd.f32 %v3906, %v4065
      %4067 = vmatprep.mubr.f32.mxu0 0.0
      %4068 = vmatmul.mubr.f32.gmra.mrb[0].mxu0 %v3831
      %v4069 = vpop.f32.mrb[0].mxu0
      %v4070 = vadd.f32 %v3902, %v4069
      %v4071 = vpop.f32.mrb[0].mxu0
      %v4072 = vadd.f32 %v3906, %v4071
      %4073 = vmatprep.mubr.f32.mxu0 0.0
      %4074 = vmatmul.mubr.f32.gmra.mrb[0].mxu0 %v3832
      %v4075 = vpop.f32.mrb[0].mxu0
      %v4076 = vadd.f32 %v3902, %v4075
      %v4077 = vpop.f32.mrb[0].mxu0
      %v4078 = vadd.f32 %v3906, %v4077
      %4079 = vdwg.mxu0
      %4080 = vmatprep.subr.mxu0 %v3836
      %4081 = vmatpush1.msra.mxu0 %v3835
      %4082 = vmatprep.subr.mxu0 %v3840
      %4083 = vmatpush1.msra.mxu0 %v3839
      %4084 = vmatprep.subr.mxu0 %v3844
      %4085 = vmatpush1.msra.mxu0 %v3843
      %4086 = vmatprep.subr.mxu0 %v3848
      %4087 = vmatpush1.msra.mxu0 %v3847
      %4088 = vmatprep.subr.mxu0 %v3852
      %4089 = vmatpush1.msra.mxu0 %v3851
      %4090 = vmatprep.subr.mxu0 %v3856
      %4091 = vmatpush1.msra.mxu0 %v3855
      %4092 = vmatprep.subr.mxu0 %v3860
      %4093 = vmatpush1.msra.mxu0 %v3859
      %4094 = vmatprep.subr.mxu0 %v3864
      %4095 = vmatpush1.msra.mxu0 %v3863
      %4096 = vmatprep.subr.mxu0 %v3868
      %4097 = vmatpush1.msra.mxu0 %v3867
      %4098 = vmatprep.subr.mxu0 %v3872
      %4099 = vmatpush1.msra.mxu0 %v3871
      %4100 = vmatprep.subr.mxu0 %v3876
      %4101 = vmatpush1.msra.mxu0 %v3875
      %4102 = vmatprep.subr.mxu0 %v3880
      %4103 = vmatpush1.msra.mxu0 %v3879
      %4104 = vmatprep.subr.mxu0 %v3884
      %4105 = vmatpush1.msra.mxu0 %v3883
      %4106 = vmatprep.subr.mxu0 %v3888
      %4107 = vmatpush1.msra.mxu0 %v3887
      %4108 = vmatprep.subr.mxu0 %v3892
      %4109 = vmatpush1.msra.mxu0 %v3891
      %4110 = vmatprep.subr.mxu0 %v3896
      %4111 = vmatpush1.msra.mxu0 %v3895
      %4112 = vmatprep.subr.mxu0 0.0
      %4113 = vmatpush1.msra.mxu0 0.0
      %4114 = vmatprep.subr.mxu0 0.0
      %4115 = vmatpush1.msra.mxu0 0.0
      %4116 = vmatprep.subr.mxu0 0.0
      %4117 = vmatpush1.msra.mxu0 0.0
      %4118 = vmatprep.subr.mxu0 0.0
      %4119 = vmatpush1.msra.mxu0 0.0
      %4120 = vmatprep.subr.mxu0 0.0
      %4121 = vmatpush1.msra.mxu0 0.0
      %4122 = vmatprep.subr.mxu0 0.0
      %4123 = vmatpush1.msra.mxu0 0.0
      %4124 = vmatprep.subr.mxu0 0.0
      %4125 = vmatpush1.msra.mxu0 0.0
      %4126 = vmatprep.subr.mxu0 0.0
      %4127 = vmatpush1.msra.mxu0 0.0
      %4128 = vmatprep.subr.mxu0 0.0
      %4129 = vmatpush1.msra.mxu0 0.0
      %4130 = vmatprep.subr.mxu0 0.0
      %4131 = vmatpush1.msra.mxu0 0.0
      %4132 = vmatprep.subr.mxu0 0.0
      %4133 = vmatpush1.msra.mxu0 0.0
      %4134 = vmatprep.subr.mxu0 0.0
      %4135 = vmatpush1.msra.mxu0 0.0
      %4136 = vmatprep.subr.mxu0 0.0
      %4137 = vmatpush1.msra.mxu0 0.0
      %4138 = vmatprep.subr.mxu0 0.0
      %4139 = vmatpush1.msra.mxu0 0.0
      %4140 = vmatprep.subr.mxu0 0.0
      %4141 = vmatpush1.msra.mxu0 0.0
      %4142 = vmatprep.subr.mxu0 0.0
      %4143 = vmatpush1.msra.mxu0 0.0
      %4144 = vmatprep.mubr.f32.mxu0 0.0
      %4145 = vmatmul.mubr.f32.gmra.mrb[0].mxu0 %v3817
      %v4146 = vpop.f32.mrb[0].mxu0
      %v4147 = vadd.f32 %v3910, %v4146
      %v4148 = vpop.f32.mrb[0].mxu0
      %v4149 = vadd.f32 %v3914, %v4148
      %4150 = vmatprep.mubr.f32.mxu0 0.0
      %4151 = vmatmul.mubr.f32.gmra.mrb[0].mxu0 %v3818
      %v4152 = vpop.f32.mrb[0].mxu0
      %v4153 = vadd.f32 %v3910, %v4152
      %v4154 = vpop.f32.mrb[0].mxu0
      %v4155 = vadd.f32 %v3914, %v4154
      %4156 = vmatprep.mubr.f32.mxu0 0.0
      %4157 = vmatmul.mubr.f32.gmra.mrb[0].mxu0 %v3819
      %v4158 = vpop.f32.mrb[0].mxu0
      %v4159 = vadd.f32 %v3910, %v4158
      %v4160 = vpop.f32.mrb[0].mxu0
      %v4161 = vadd.f32 %v3914, %v4160
      %4162 = vmatprep.mubr.f32.mxu0 0.0
      %4163 = vmatmul.mubr.f32.gmra.mrb[0].mxu0 %v3820
      %v4164 = vpop.f32.mrb[0].mxu0
      %v4165 = vadd.f32 %v3910, %v4164
      %v4166 = vpop.f32.mrb[0].mxu0
      %v4167 = vadd.f32 %v3914, %v4166
      %4168 = vmatprep.mubr.f32.mxu0 0.0
      %4169 = vmatmul.mubr.f32.gmra.mrb[0].mxu0 %v3821
      %v4170 = vpop.f32.mrb[0].mxu0
      %v4171 = vadd.f32 %v3910, %v4170
      %v4172 = vpop.f32.mrb[0].mxu0
      %v4173 = vadd.f32 %v3914, %v4172
      %4174 = vmatprep.mubr.f32.mxu0 0.0
      %4175 = vmatmul.mubr.f32.gmra.mrb[0].mxu0 %v3822
      %v4176 = vpop.f32.mrb[0].mxu0
      %v4177 = vadd.f32 %v3910, %v4176
      %v4178 = vpop.f32.mrb[0].mxu0
      %v4179 = vadd.f32 %v3914, %v4178
      %4180 = vmatprep.mubr.f32.mxu0 0.0
      %4181 = vmatmul.mubr.f32.gmra.mrb[0].mxu0 %v3823
      %v4182 = vpop.f32.mrb[0].mxu0
      %v4183 = vadd.f32 %v3910, %v4182
      %v4184 = vpop.f32.mrb[0].mxu0
      %v4185 = vadd.f32 %v3914, %v4184
      %4186 = vmatprep.mubr.f32.mxu0 0.0
      %4187 = vmatmul.mubr.f32.gmra.mrb[0].mxu0 %v3824
      %v4188 = vpop.f32.mrb[0].mxu0
      %v4189 = vadd.f32 %v3910, %v4188
      %v4190 = vpop.f32.mrb[0].mxu0
      %v4191 = vadd.f32 %v3914, %v4190
      %4192 = vmatprep.mubr.f32.mxu0 0.0
      %4193 = vmatmul.mubr.f32.gmra.mrb[0].mxu0 %v3825
      %v4194 = vpop.f32.mrb[0].mxu0
      %v4195 = vadd.f32 %v3910, %v4194
      %v4196 = vpop.f32.mrb[0].mxu0
      %v4197 = vadd.f32 %v3914, %v4196
      %4198 = vmatprep.mubr.f32.mxu0 0.0
      %4199 = vmatmul.mubr.f32.gmra.mrb[0].mxu0 %v3826
      %v4200 = vpop.f32.mrb[0].mxu0
      %v4201 = vadd.f32 %v3910, %v4200
      %v4202 = vpop.f32.mrb[0].mxu0
      %v4203 = vadd.f32 %v3914, %v4202
      %4204 = vmatprep.mubr.f32.mxu0 0.0
      %4205 = vmatmul.mubr.f32.gmra.mrb[0].mxu0 %v3827
      %v4206 = vpop.f32.mrb[0].mxu0
      %v4207 = vadd.f32 %v3910, %v4206
      %v4208 = vpop.f32.mrb[0].mxu0
      %v4209 = vadd.f32 %v3914, %v4208
      %4210 = vmatprep.mubr.f32.mxu0 0.0
      %4211 = vmatmul.mubr.f32.gmra.mrb[0].mxu0 %v3828
      %v4212 = vpop.f32.mrb[0].mxu0
      %v4213 = vadd.f32 %v3910, %v4212
      %v4214 = vpop.f32.mrb[0].mxu0
      %v4215 = vadd.f32 %v3914, %v4214
      %4216 = vmatprep.mubr.f32.mxu0 0.0
      %4217 = vmatmul.mubr.f32.gmra.mrb[0].mxu0 %v3829
      %v4218 = vpop.f32.mrb[0].mxu0
      %v4219 = vadd.f32 %v3910, %v4218
      %v4220 = vpop.f32.mrb[0].mxu0
      %v4221 = vadd.f32 %v3914, %v4220
      %4222 = vmatprep.mubr.f32.mxu0 0.0
      %4223 = vmatmul.mubr.f32.gmra.mrb[0].mxu0 %v3830
      %v4224 = vpop.f32.mrb[0].mxu0
      %v4225 = vadd.f32 %v3910, %v4224
      %v4226 = vpop.f32.mrb[0].mxu0
      %v4227 = vadd.f32 %v3914, %v4226
      %4228 = vmatprep.mubr.f32.mxu0 0.0
      %4229 = vmatmul.mubr.f32.gmra.mrb[0].mxu0 %v3831
      %v4230 = vpop.f32.mrb[0].mxu0
      %v4231 = vadd.f32 %v3910, %v4230
      %v4232 = vpop.f32.mrb[0].mxu0
      %v4233 = vadd.f32 %v3914, %v4232
      %4234 = vmatprep.mubr.f32.mxu0 0.0
      %4235 = vmatmul.mubr.f32.gmra.mrb[0].mxu0 %v3832
      %v4236 = vpop.f32.mrb[0].mxu0
      %v4237 = vadd.f32 %v3910, %v4236
      %v4238 = vpop.f32.mrb[0].mxu0
      %v4239 = vadd.f32 %v3914, %v4238
      %4240 = vdwg.mxu0
      %v4241 = vmul.f32 %v3986, %v3986
      %v4242 = vmul.f32 %v3988, %v3988
      %v4243 = vmul.f32 %v4147, %v4147
      %v4244 = vmul.f32 %v4149, %v4149
      %v4245 = vmul.f32 %v3992, %v3992
      %v4246 = vmul.f32 %v3994, %v3994
      %v4247 = vmul.f32 %v4153, %v4153
      %v4248 = vmul.f32 %v4155, %v4155
      %v4249 = vmul.f32 %v3998, %v3998
      %v4250 = vmul.f32 %v4000, %v4000
      %v4251 = vmul.f32 %v4159, %v4159
      %v4252 = vmul.f32 %v4161, %v4161
      %v4253 = vmul.f32 %v4004, %v4004
      %v4254 = vmul.f32 %v4006, %v4006
      %v4255 = vmul.f32 %v4165, %v4165
      %v4256 = vmul.f32 %v4167, %v4167
      %v4257 = vmul.f32 %v4010, %v4010
      %v4258 = vmul.f32 %v4012, %v4012
      %v4259 = vmul.f32 %v4171, %v4171
      %v4260 = vmul.f32 %v4173, %v4173
      %v4261 = vmul.f32 %v4016, %v4016
      %v4262 = vmul.f32 %v4018, %v4018
      %v4263 = vmul.f32 %v4177, %v4177
      %v4264 = vmul.f32 %v4179, %v4179
      %v4265 = vmul.f32 %v4022, %v4022
      %v4266 = vmul.f32 %v4024, %v4024
      %v4267 = vmul.f32 %v4183, %v4183
      %v4268 = vmul.f32 %v4185, %v4185
      %v4269 = vmul.f32 %v4028, %v4028
      %v4270 = vmul.f32 %v4030, %v4030
      %v4271 = vmul.f32 %v4189, %v4189
      %v4272 = vmul.f32 %v4191, %v4191
      %v4273 = vmul.f32 %v4034, %v4034
      %v4274 = vmul.f32 %v4036, %v4036
      %v4275 = vmul.f32 %v4195, %v4195
      %v4276 = vmul.f32 %v4197, %v4197
      %v4277 = vmul.f32 %v4040, %v4040
      %v4278 = vmul.f32 %v4042, %v4042
      %v4279 = vmul.f32 %v4201, %v4201
      %v4280 = vmul.f32 %v4203, %v4203
      %v4281 = vmul.f32 %v4046, %v4046
      %v4282 = vmul.f32 %v4048, %v4048
      %v4283 = vmul.f32 %v4207, %v4207
      %v4284 = vmul.f32 %v4209, %v4209
      %v4285 = vmul.f32 %v4052, %v4052
      %v4286 = vmul.f32 %v4054, %v4054
      %v4287 = vmul.f32 %v4213, %v4213
      %v4288 = vmul.f32 %v4215, %v4215
      %v4289 = vmul.f32 %v4058, %v4058
      %v4290 = vmul.f32 %v4060, %v4060
      %v4291 = vmul.f32 %v4219, %v4219
      %v4292 = vmul.f32 %v4221, %v4221
      %v4293 = vmul.f32 %v4064, %v4064
      %v4294 = vmul.f32 %v4066, %v4066
      %v4295 = vmul.f32 %v4225, %v4225
      %v4296 = vmul.f32 %v4227, %v4227
      %v4297 = vmul.f32 %v4070, %v4070
      %v4298 = vmul.f32 %v4072, %v4072
      %v4299 = vmul.f32 %v4231, %v4231
      %v4300 = vmul.f32 %v4233, %v4233
      %v4301 = vmul.f32 %v4076, %v4076
      %v4302 = vmul.f32 %v4078, %v4078
      %v4303 = vmul.f32 %v4237, %v4237
      %v4304 = vmul.f32 %v4239, %v4239
      %v4305 = vmul.f32 %v3986, %v4241
      %v4306 = vmul.f32 %v3988, %v4242
      %v4307 = vmul.f32 %v4147, %v4243
      %v4308 = vmul.f32 %v4149, %v4244
      %v4309 = vmul.f32 %v3992, %v4245
      %v4310 = vmul.f32 %v3994, %v4246
      %v4311 = vmul.f32 %v4153, %v4247
      %v4312 = vmul.f32 %v4155, %v4248
      %v4313 = vmul.f32 %v3998, %v4249
      %v4314 = vmul.f32 %v4000, %v4250
      %v4315 = vmul.f32 %v4159, %v4251
      %v4316 = vmul.f32 %v4161, %v4252
      %v4317 = vmul.f32 %v4004, %v4253
      %v4318 = vmul.f32 %v4006, %v4254
      %v4319 = vmul.f32 %v4165, %v4255
      %v4320 = vmul.f32 %v4167, %v4256
      %v4321 = vmul.f32 %v4010, %v4257
      %v4322 = vmul.f32 %v4012, %v4258
      %v4323 = vmul.f32 %v4171, %v4259
      %v4324 = vmul.f32 %v4173, %v4260
      %v4325 = vmul.f32 %v4016, %v4261
      %v4326 = vmul.f32 %v4018, %v4262
      %v4327 = vmul.f32 %v4177, %v4263
      %v4328 = vmul.f32 %v4179, %v4264
      %v4329 = vmul.f32 %v4022, %v4265
      %v4330 = vmul.f32 %v4024, %v4266
      %v4331 = vmul.f32 %v4183, %v4267
      %v4332 = vmul.f32 %v4185, %v4268
      %v4333 = vmul.f32 %v4028, %v4269
      %v4334 = vmul.f32 %v4030, %v4270
      %v4335 = vmul.f32 %v4189, %v4271
      %v4336 = vmul.f32 %v4191, %v4272
      %v4337 = vmul.f32 %v4034, %v4273
      %v4338 = vmul.f32 %v4036, %v4274
      %v4339 = vmul.f32 %v4195, %v4275
      %v4340 = vmul.f32 %v4197, %v4276
      %v4341 = vmul.f32 %v4040, %v4277
      %v4342 = vmul.f32 %v4042, %v4278
      %v4343 = vmul.f32 %v4201, %v4279
      %v4344 = vmul.f32 %v4203, %v4280
      %v4345 = vmul.f32 %v4046, %v4281
      %v4346 = vmul.f32 %v4048, %v4282
      %v4347 = vmul.f32 %v4207, %v4283
      %v4348 = vmul.f32 %v4209, %v4284
      %v4349 = vmul.f32 %v4052, %v4285
      %v4350 = vmul.f32 %v4054, %v4286
      %v4351 = vmul.f32 %v4213, %v4287
      %v4352 = vmul.f32 %v4215, %v4288
      %v4353 = vmul.f32 %v4058, %v4289
      %v4354 = vmul.f32 %v4060, %v4290
      %v4355 = vmul.f32 %v4219, %v4291
      %v4356 = vmul.f32 %v4221, %v4292
      %v4357 = vmul.f32 %v4064, %v4293
      %v4358 = vmul.f32 %v4066, %v4294
      %v4359 = vmul.f32 %v4225, %v4295
      %v4360 = vmul.f32 %v4227, %v4296
      %v4361 = vmul.f32 %v4070, %v4297
      %v4362 = vmul.f32 %v4072, %v4298
      %v4363 = vmul.f32 %v4231, %v4299
      %v4364 = vmul.f32 %v4233, %v4300
      %v4365 = vmul.f32 %v4076, %v4301
      %v4366 = vmul.f32 %v4078, %v4302
      %v4367 = vmul.f32 %v4237, %v4303
      %v4368 = vmul.f32 %v4239, %v4304
      %v4369 = vmul.f32 %v4305, 0.044715
      %v4370 = vmul.f32 %v4306, 0.044715
      %v4371 = vmul.f32 %v4307, 0.044715
      %v4372 = vmul.f32 %v4308, 0.044715
      %v4373 = vmul.f32 %v4309, 0.044715
      %v4374 = vmul.f32 %v4310, 0.044715
      %v4375 = vmul.f32 %v4311, 0.044715
      %v4376 = vmul.f32 %v4312, 0.044715
      %v4377 = vmul.f32 %v4313, 0.044715
      %v4378 = vmul.f32 %v4314, 0.044715
      %v4379 = vmul.f32 %v4315, 0.044715
      %v4380 = vmul.f32 %v4316, 0.044715
      %v4381 = vmul.f32 %v4317, 0.044715
      %v4382 = vmul.f32 %v4318, 0.044715
      %v4383 = vmul.f32 %v4319, 0.044715
      %v4384 = vmul.f32 %v4320, 0.044715
      %v4385 = vmul.f32 %v4321, 0.044715
      %v4386 = vmul.f32 %v4322, 0.044715
      %v4387 = vmul.f32 %v4323, 0.044715
      %v4388 = vmul.f32 %v4324, 0.044715
      %v4389 = vmul.f32 %v4325, 0.044715
      %v4390 = vmul.f32 %v4326, 0.044715
      %v4391 = vmul.f32 %v4327, 0.044715
      %v4392 = vmul.f32 %v4328, 0.044715
      %v4393 = vmul.f32 %v4329, 0.044715
      %v4394 = vmul.f32 %v4330, 0.044715
      %v4395 = vmul.f32 %v4331, 0.044715
      %v4396 = vmul.f32 %v4332, 0.044715
      %v4397 = vmul.f32 %v4333, 0.044715
      %v4398 = vmul.f32 %v4334, 0.044715
      %v4399 = vmul.f32 %v4335, 0.044715
      %v4400 = vmul.f32 %v4336, 0.044715
      %v4401 = vmul.f32 %v4337, 0.044715
      %v4402 = vmul.f32 %v4338, 0.044715
      %v4403 = vmul.f32 %v4339, 0.044715
      %v4404 = vmul.f32 %v4340, 0.044715
      %v4405 = vmul.f32 %v4341, 0.044715
      %v4406 = vmul.f32 %v4342, 0.044715
      %v4407 = vmul.f32 %v4343, 0.044715
      %v4408 = vmul.f32 %v4344, 0.044715
      %v4409 = vmul.f32 %v4345, 0.044715
      %v4410 = vmul.f32 %v4346, 0.044715
      %v4411 = vmul.f32 %v4347, 0.044715
      %v4412 = vmul.f32 %v4348, 0.044715
      %v4413 = vmul.f32 %v4349, 0.044715
      %v4414 = vmul.f32 %v4350, 0.044715
      %v4415 = vmul.f32 %v4351, 0.044715
      %v4416 = vmul.f32 %v4352, 0.044715
      %v4417 = vmul.f32 %v4353, 0.044715
      %v4418 = vmul.f32 %v4354, 0.044715
      %v4419 = vmul.f32 %v4355, 0.044715
      %v4420 = vmul.f32 %v4356, 0.044715
      %v4421 = vmul.f32 %v4357, 0.044715
      %v4422 = vmul.f32 %v4358, 0.044715
      %v4423 = vmul.f32 %v4359, 0.044715
      %v4424 = vmul.f32 %v4360, 0.044715
      %v4425 = vmul.f32 %v4361, 0.044715
      %v4426 = vmul.f32 %v4362, 0.044715
      %v4427 = vmul.f32 %v4363, 0.044715
      %v4428 = vmul.f32 %v4364, 0.044715
      %v4429 = vmul.f32 %v4365, 0.044715
      %v4430 = vmul.f32 %v4366, 0.044715
      %v4431 = vmul.f32 %v4367, 0.044715
      %v4432 = vmul.f32 %v4368, 0.044715
      %v4433 = vadd.f32 %v3986, %v4369
      %v4434 = vadd.f32 %v3988, %v4370
      %v4435 = vadd.f32 %v4147, %v4371
      %v4436 = vadd.f32 %v4149, %v4372
      %v4437 = vadd.f32 %v3992, %v4373
      %v4438 = vadd.f32 %v3994, %v4374
      %v4439 = vadd.f32 %v4153, %v4375
      %v4440 = vadd.f32 %v4155, %v4376
      %v4441 = vadd.f32 %v3998, %v4377
      %v4442 = vadd.f32 %v4000, %v4378
      %v4443 = vadd.f32 %v4159, %v4379
      %v4444 = vadd.f32 %v4161, %v4380
      %v4445 = vadd.f32 %v4004, %v4381
      %v4446 = vadd.f32 %v4006, %v4382
      %v4447 = vadd.f32 %v4165, %v4383
      %v4448 = vadd.f32 %v4167, %v4384
      %v4449 = vadd.f32 %v4010, %v4385
      %v4450 = vadd.f32 %v4012, %v4386
      %v4451 = vadd.f32 %v4171, %v4387
      %v4452 = vadd.f32 %v4173, %v4388
      %v4453 = vadd.f32 %v4016, %v4389
      %v4454 = vadd.f32 %v4018, %v4390
      %v4455 = vadd.f32 %v4177, %v4391
      %v4456 = vadd.f32 %v4179, %v4392
      %v4457 = vadd.f32 %v4022, %v4393
      %v4458 = vadd.f32 %v4024, %v4394
      %v4459 = vadd.f32 %v4183, %v4395
      %v4460 = vadd.f32 %v4185, %v4396
      %v4461 = vadd.f32 %v4028, %v4397
      %v4462 = vadd.f32 %v4030, %v4398
      %v4463 = vadd.f32 %v4189, %v4399
      %v4464 = vadd.f32 %v4191, %v4400
      %v4465 = vadd.f32 %v4034, %v4401
      %v4466 = vadd.f32 %v4036, %v4402
      %v4467 = vadd.f32 %v4195, %v4403
      %v4468 = vadd.f32 %v4197, %v4404
      %v4469 = vadd.f32 %v4040, %v4405
      %v4470 = vadd.f32 %v4042, %v4406
      %v4471 = vadd.f32 %v4201, %v4407
      %v4472 = vadd.f32 %v4203, %v4408
      %v4473 = vadd.f32 %v4046, %v4409
      %v4474 = vadd.f32 %v4048, %v4410
      %v4475 = vadd.f32 %v4207, %v4411
      %v4476 = vadd.f32 %v4209, %v4412
      %v4477 = vadd.f32 %v4052, %v4413
      %v4478 = vadd.f32 %v4054, %v4414
      %v4479 = vadd.f32 %v4213, %v4415
      %v4480 = vadd.f32 %v4215, %v4416
      %v4481 = vadd.f32 %v4058, %v4417
      %v4482 = vadd.f32 %v4060, %v4418
      %v4483 = vadd.f32 %v4219, %v4419
      %v4484 = vadd.f32 %v4221, %v4420
      %v4485 = vadd.f32 %v4064, %v4421
      %v4486 = vadd.f32 %v4066, %v4422
      %v4487 = vadd.f32 %v4225, %v4423
      %v4488 = vadd.f32 %v4227, %v4424
      %v4489 = vadd.f32 %v4070, %v4425
      %v4490 = vadd.f32 %v4072, %v4426
      %v4491 = vadd.f32 %v4231, %v4427
      %v4492 = vadd.f32 %v4233, %v4428
      %v4493 = vadd.f32 %v4076, %v4429
      %v4494 = vadd.f32 %v4078, %v4430
      %v4495 = vadd.f32 %v4237, %v4431
      %v4496 = vadd.f32 %v4239, %v4432
      %v4497 = vmul.f32 %v4433, 0.7978846
      %v4498 = vmul.f32 %v4434, 0.7978846
      %v4499 = vmul.f32 %v4435, 0.7978846
      %v4500 = vmul.f32 %v4436, 0.7978846
      %v4501 = vmul.f32 %v4437, 0.7978846
      %v4502 = vmul.f32 %v4438, 0.7978846
      %v4503 = vmul.f32 %v4439, 0.7978846
      %v4504 = vmul.f32 %v4440, 0.7978846
      %v4505 = vmul.f32 %v4441, 0.7978846
      %v4506 = vmul.f32 %v4442, 0.7978846
      %v4507 = vmul.f32 %v4443, 0.7978846
      %v4508 = vmul.f32 %v4444, 0.7978846
      %v4509 = vmul.f32 %v4445, 0.7978846
      %v4510 = vmul.f32 %v4446, 0.7978846
      %v4511 = vmul.f32 %v4447, 0.7978846
      %v4512 = vmul.f32 %v4448, 0.7978846
      %v4513 = vmul.f32 %v4449, 0.7978846
      %v4514 = vmul.f32 %v4450, 0.7978846
      %v4515 = vmul.f32 %v4451, 0.7978846
      %v4516 = vmul.f32 %v4452, 0.7978846
      %v4517 = vmul.f32 %v4453, 0.7978846
      %v4518 = vmul.f32 %v4454, 0.7978846
      %v4519 = vmul.f32 %v4455, 0.7978846
      %v4520 = vmul.f32 %v4456, 0.7978846
      %v4521 = vmul.f32 %v4457, 0.7978846
      %v4522 = vmul.f32 %v4458, 0.7978846
      %v4523 = vmul.f32 %v4459, 0.7978846
      %v4524 = vmul.f32 %v4460, 0.7978846
      %v4525 = vmul.f32 %v4461, 0.7978846
      %v4526 = vmul.f32 %v4462, 0.7978846
      %v4527 = vmul.f32 %v4463, 0.7978846
      %v4528 = vmul.f32 %v4464, 0.7978846
      %v4529 = vmul.f32 %v4465, 0.7978846
      %v4530 = vmul.f32 %v4466, 0.7978846
      %v4531 = vmul.f32 %v4467, 0.7978846
      %v4532 = vmul.f32 %v4468, 0.7978846
      %v4533 = vmul.f32 %v4469, 0.7978846
      %v4534 = vmul.f32 %v4470, 0.7978846
      %v4535 = vmul.f32 %v4471, 0.7978846
      %v4536 = vmul.f32 %v4472, 0.7978846
      %v4537 = vmul.f32 %v4473, 0.7978846
      %v4538 = vmul.f32 %v4474, 0.7978846
      %v4539 = vmul.f32 %v4475, 0.7978846
      %v4540 = vmul.f32 %v4476, 0.7978846
      %v4541 = vmul.f32 %v4477, 0.7978846
      %v4542 = vmul.f32 %v4478, 0.7978846
      %v4543 = vmul.f32 %v4479, 0.7978846
      %v4544 = vmul.f32 %v4480, 0.7978846
      %v4545 = vmul.f32 %v4481, 0.7978846
      %v4546 = vmul.f32 %v4482, 0.7978846
      %v4547 = vmul.f32 %v4483, 0.7978846
      %v4548 = vmul.f32 %v4484, 0.7978846
      %v4549 = vmul.f32 %v4485, 0.7978846
      %v4550 = vmul.f32 %v4486, 0.7978846
      %v4551 = vmul.f32 %v4487, 0.7978846
      %v4552 = vmul.f32 %v4488, 0.7978846
      %v4553 = vmul.f32 %v4489, 0.7978846
      %v4554 = vmul.f32 %v4490, 0.7978846
      %v4555 = vmul.f32 %v4491, 0.7978846
      %v4556 = vmul.f32 %v4492, 0.7978846
      %v4557 = vmul.f32 %v4493, 0.7978846
      %v4558 = vmul.f32 %v4494, 0.7978846
      %v4559 = vmul.f32 %v4495, 0.7978846
      %v4560 = vmul.f32 %v4496, 0.7978846
      %v4561 = vtanh.pop %v4497
      %v4562 = vtanh.pop %v4498
      %v4563 = vtanh.pop %v4499
      %v4564 = vtanh.pop %v4500
      %v4565 = vtanh.pop %v4501
      %v4566 = vtanh.pop %v4502
      %v4567 = vtanh.pop %v4503
      %v4568 = vtanh.pop %v4504
      %v4569 = vtanh.pop %v4505
      %v4570 = vtanh.pop %v4506
      %v4571 = vtanh.pop %v4507
      %v4572 = vtanh.pop %v4508
      %v4573 = vtanh.pop %v4509
      %v4574 = vtanh.pop %v4510
      %v4575 = vtanh.pop %v4511
      %v4576 = vtanh.pop %v4512
      %v4577 = vtanh.pop %v4513
      %v4578 = vtanh.pop %v4514
      %v4579 = vtanh.pop %v4515
      %v4580 = vtanh.pop %v4516
      %v4581 = vtanh.pop %v4517
      %v4582 = vtanh.pop %v4518
      %v4583 = vtanh.pop %v4519
      %v4584 = vtanh.pop %v4520
      %v4585 = vtanh.pop %v4521
      %v4586 = vtanh.pop %v4522
      %v4587 = vtanh.pop %v4523
      %v4588 = vtanh.pop %v4524
      %v4589 = vtanh.pop %v4525
      %v4590 = vtanh.pop %v4526
      %v4591 = vtanh.pop %v4527
      %v4592 = vtanh.pop %v4528
      %v4593 = vtanh.pop %v4529
      %v4594 = vtanh.pop %v4530
      %v4595 = vtanh.pop %v4531
      %v4596 = vtanh.pop %v4532
      %v4597 = vtanh.pop %v4533
      %v4598 = vtanh.pop %v4534
      %v4599 = vtanh.pop %v4535
      %v4600 = vtanh.pop %v4536
      %v4601 = vtanh.pop %v4537
      %v4602 = vtanh.pop %v4538
      %v4603 = vtanh.pop %v4539
      %v4604 = vtanh.pop %v4540
      %v4605 = vtanh.pop %v4541
      %v4606 = vtanh.pop %v4542
      %v4607 = vtanh.pop %v4543
      %v4608 = vtanh.pop %v4544
      %v4609 = vtanh.pop %v4545
      %v4610 = vtanh.pop %v4546
      %v4611 = vtanh.pop %v4547
      %v4612 = vtanh.pop %v4548
      %v4613 = vtanh.pop %v4549
      %v4614 = vtanh.pop %v4550
      %v4615 = vtanh.pop %v4551
      %v4616 = vtanh.pop %v4552
      %v4617 = vtanh.pop %v4553
      %v4618 = vtanh.pop %v4554
      %v4619 = vtanh.pop %v4555
      %v4620 = vtanh.pop %v4556
      %v4621 = vtanh.pop %v4557
      %v4622 = vtanh.pop %v4558
      %v4623 = vtanh.pop %v4559
      %v4624 = vtanh.pop %v4560
      %v4625 = vadd.f32 %v4561, 1.0
      %v4626 = vadd.f32 %v4562, 1.0
      %v4627 = vadd.f32 %v4563, 1.0
      %v4628 = vadd.f32 %v4564, 1.0
      %v4629 = vadd.f32 %v4565, 1.0
      %v4630 = vadd.f32 %v4566, 1.0
      %v4631 = vadd.f32 %v4567, 1.0
      %v4632 = vadd.f32 %v4568, 1.0
      %v4633 = vadd.f32 %v4569, 1.0
      %v4634 = vadd.f32 %v4570, 1.0
      %v4635 = vadd.f32 %v4571, 1.0
      %v4636 = vadd.f32 %v4572, 1.0
      %v4637 = vadd.f32 %v4573, 1.0
      %v4638 = vadd.f32 %v4574, 1.0
      %v4639 = vadd.f32 %v4575, 1.0
      %v4640 = vadd.f32 %v4576, 1.0
      %v4641 = vadd.f32 %v4577, 1.0
      %v4642 = vadd.f32 %v4578, 1.0
      %v4643 = vadd.f32 %v4579, 1.0
      %v4644 = vadd.f32 %v4580, 1.0
      %v4645 = vadd.f32 %v4581, 1.0
      %v4646 = vadd.f32 %v4582, 1.0
      %v4647 = vadd.f32 %v4583, 1.0
      %v4648 = vadd.f32 %v4584, 1.0
      %v4649 = vadd.f32 %v4585, 1.0
      %v4650 = vadd.f32 %v4586, 1.0
      %v4651 = vadd.f32 %v4587, 1.0
      %v4652 = vadd.f32 %v4588, 1.0
      %v4653 = vadd.f32 %v4589, 1.0
      %v4654 = vadd.f32 %v4590, 1.0
      %v4655 = vadd.f32 %v4591, 1.0
      %v4656 = vadd.f32 %v4592, 1.0
      %v4657 = vadd.f32 %v4593, 1.0
      %v4658 = vadd.f32 %v4594, 1.0
      %v4659 = vadd.f32 %v4595, 1.0
      %v4660 = vadd.f32 %v4596, 1.0
      %v4661 = vadd.f32 %v4597, 1.0
      %v4662 = vadd.f32 %v4598, 1.0
      %v4663 = vadd.f32 %v4599, 1.0
      %v4664 = vadd.f32 %v4600, 1.0
      %v4665 = vadd.f32 %v4601, 1.0
      %v4666 = vadd.f32 %v4602, 1.0
      %v4667 = vadd.f32 %v4603, 1.0
      %v4668 = vadd.f32 %v4604, 1.0
      %v4669 = vadd.f32 %v4605, 1.0
      %v4670 = vadd.f32 %v4606, 1.0
      %v4671 = vadd.f32 %v4607, 1.0
      %v4672 = vadd.f32 %v4608, 1.0
      %v4673 = vadd.f32 %v4609, 1.0
      %v4674 = vadd.f32 %v4610, 1.0
      %v4675 = vadd.f32 %v4611, 1.0
      %v4676 = vadd.f32 %v4612, 1.0
      %v4677 = vadd.f32 %v4613, 1.0
      %v4678 = vadd.f32 %v4614, 1.0
      %v4679 = vadd.f32 %v4615, 1.0
      %v4680 = vadd.f32 %v4616, 1.0
      %v4681 = vadd.f32 %v4617, 1.0
      %v4682 = vadd.f32 %v4618, 1.0
      %v4683 = vadd.f32 %v4619, 1.0
      %v4684 = vadd.f32 %v4620, 1.0
      %v4685 = vadd.f32 %v4621, 1.0
      %v4686 = vadd.f32 %v4622, 1.0
      %v4687 = vadd.f32 %v4623, 1.0
      %v4688 = vadd.f32 %v4624, 1.0
      %v4689 = vmul.f32 %v4625, 0.5
      %v4690 = vmul.f32 %v4626, 0.5
      %v4691 = vmul.f32 %v4627, 0.5
      %v4692 = vmul.f32 %v4628, 0.5
      %v4693 = vmul.f32 %v4629, 0.5
      %v4694 = vmul.f32 %v4630, 0.5
      %v4695 = vmul.f32 %v4631, 0.5
      %v4696 = vmul.f32 %v4632, 0.5
      %v4697 = vmul.f32 %v4633, 0.5
      %v4698 = vmul.f32 %v4634, 0.5
      %v4699 = vmul.f32 %v4635, 0.5
      %v4700 = vmul.f32 %v4636, 0.5
      %v4701 = vmul.f32 %v4637, 0.5
      %v4702 = vmul.f32 %v4638, 0.5
      %v4703 = vmul.f32 %v4639, 0.5
      %v4704 = vmul.f32 %v4640, 0.5
      %v4705 = vmul.f32 %v4641, 0.5
      %v4706 = vmul.f32 %v4642, 0.5
      %v4707 = vmul.f32 %v4643, 0.5
      %v4708 = vmul.f32 %v4644, 0.5
      %v4709 = vmul.f32 %v4645, 0.5
      %v4710 = vmul.f32 %v4646, 0.5
      %v4711 = vmul.f32 %v4647, 0.5
      %v4712 = vmul.f32 %v4648, 0.5
      %v4713 = vmul.f32 %v4649, 0.5
      %v4714 = vmul.f32 %v4650, 0.5
      %v4715 = vmul.f32 %v4651, 0.5
      %v4716 = vmul.f32 %v4652, 0.5
      %v4717 = vmul.f32 %v4653, 0.5
      %v4718 = vmul.f32 %v4654, 0.5
      %v4719 = vmul.f32 %v4655, 0.5
      %v4720 = vmul.f32 %v4656, 0.5
      %v4721 = vmul.f32 %v4657, 0.5
      %v4722 = vmul.f32 %v4658, 0.5
      %v4723 = vmul.f32 %v4659, 0.5
      %v4724 = vmul.f32 %v4660, 0.5
      %v4725 = vmul.f32 %v4661, 0.5
      %v4726 = vmul.f32 %v4662, 0.5
      %v4727 = vmul.f32 %v4663, 0.5
      %v4728 = vmul.f32 %v4664, 0.5
      %v4729 = vmul.f32 %v4665, 0.5
      %v4730 = vmul.f32 %v4666, 0.5
      %v4731 = vmul.f32 %v4667, 0.5
      %v4732 = vmul.f32 %v4668, 0.5
      %v4733 = vmul.f32 %v4669, 0.5
      %v4734 = vmul.f32 %v4670, 0.5
      %v4735 = vmul.f32 %v4671, 0.5
      %v4736 = vmul.f32 %v4672, 0.5
      %v4737 = vmul.f32 %v4673, 0.5
      %v4738 = vmul.f32 %v4674, 0.5
      %v4739 = vmul.f32 %v4675, 0.5
      %v4740 = vmul.f32 %v4676, 0.5
      %v4741 = vmul.f32 %v4677, 0.5
      %v4742 = vmul.f32 %v4678, 0.5
      %v4743 = vmul.f32 %v4679, 0.5
      %v4744 = vmul.f32 %v4680, 0.5
      %v4745 = vmul.f32 %v4681, 0.5
      %v4746 = vmul.f32 %v4682, 0.5
      %v4747 = vmul.f32 %v4683, 0.5
      %v4748 = vmul.f32 %v4684, 0.5
      %v4749 = vmul.f32 %v4685, 0.5
      %v4750 = vmul.f32 %v4686, 0.5
      %v4751 = vmul.f32 %v4687, 0.5
      %v4752 = vmul.f32 %v4688, 0.5
      %v4753 = vmul.f32 %v3986, %v4689
      %v4754 = vmul.f32 %v3988, %v4690
      %v4755 = vmul.f32 %v4147, %v4691
      %v4756 = vmul.f32 %v4149, %v4692
      %v4757 = vmul.f32 %v3992, %v4693
      %v4758 = vmul.f32 %v3994, %v4694
      %v4759 = vmul.f32 %v4153, %v4695
      %v4760 = vmul.f32 %v4155, %v4696
      %v4761 = vmul.f32 %v3998, %v4697
      %v4762 = vmul.f32 %v4000, %v4698
      %v4763 = vmul.f32 %v4159, %v4699
      %v4764 = vmul.f32 %v4161, %v4700
      %v4765 = vmul.f32 %v4004, %v4701
      %v4766 = vmul.f32 %v4006, %v4702
      %v4767 = vmul.f32 %v4165, %v4703
      %v4768 = vmul.f32 %v4167, %v4704
      %v4769 = vmul.f32 %v4010, %v4705
      %v4770 = vmul.f32 %v4012, %v4706
      %v4771 = vmul.f32 %v4171, %v4707
      %v4772 = vmul.f32 %v4173, %v4708
      %v4773 = vmul.f32 %v4016, %v4709
      %v4774 = vmul.f32 %v4018, %v4710
      %v4775 = vmul.f32 %v4177, %v4711
      %v4776 = vmul.f32 %v4179, %v4712
      %v4777 = vmul.f32 %v4022, %v4713
      %v4778 = vmul.f32 %v4024, %v4714
      %v4779 = vmul.f32 %v4183, %v4715
      %v4780 = vmul.f32 %v4185, %v4716
      %v4781 = vmul.f32 %v4028, %v4717
      %v4782 = vmul.f32 %v4030, %v4718
      %v4783 = vmul.f32 %v4189, %v4719
      %v4784 = vmul.f32 %v4191, %v4720
      %v4785 = vmul.f32 %v4034, %v4721
      %v4786 = vmul.f32 %v4036, %v4722
      %v4787 = vmul.f32 %v4195, %v4723
      %v4788 = vmul.f32 %v4197, %v4724
      %v4789 = vmul.f32 %v4040, %v4725
      %v4790 = vmul.f32 %v4042, %v4726
      %v4791 = vmul.f32 %v4201, %v4727
      %v4792 = vmul.f32 %v4203, %v4728
      %v4793 = vmul.f32 %v4046, %v4729
      %v4794 = vmul.f32 %v4048, %v4730
      %v4795 = vmul.f32 %v4207, %v4731
      %v4796 = vmul.f32 %v4209, %v4732
      %v4797 = vmul.f32 %v4052, %v4733
      %v4798 = vmul.f32 %v4054, %v4734
      %v4799 = vmul.f32 %v4213, %v4735
      %v4800 = vmul.f32 %v4215, %v4736
      %v4801 = vmul.f32 %v4058, %v4737
      %v4802 = vmul.f32 %v4060, %v4738
      %v4803 = vmul.f32 %v4219, %v4739
      %v4804 = vmul.f32 %v4221, %v4740
      %v4805 = vmul.f32 %v4064, %v4741
      %v4806 = vmul.f32 %v4066, %v4742
      %v4807 = vmul.f32 %v4225, %v4743
      %v4808 = vmul.f32 %v4227, %v4744
      %v4809 = vmul.f32 %v4070, %v4745
      %v4810 = vmul.f32 %v4072, %v4746
      %v4811 = vmul.f32 %v4231, %v4747
      %v4812 = vmul.f32 %v4233, %v4748
      %v4813 = vmul.f32 %v4076, %v4749
      %v4814 = vmul.f32 %v4078, %v4750
      %v4815 = vmul.f32 %v4237, %v4751
      %v4816 = vmul.f32 %v4239, %v4752
      %v4817 = vld [vmem:[%s696] sm:$0xff]
      %v4818 = vld [vmem:[%s696 + $0x8] sm:$0xff]
      %v4819 = vld [vmem:[%s696 + $0x10] sm:$0xff]
      %v4820 = vld [vmem:[%s696 + $0x18] sm:$0xff]
      %v4821 = vld [vmem:[%s696 + $0x20] sm:$0xff]
      %v4822 = vld [vmem:[%s696 + $0x28] sm:$0xff]
      %v4823 = vld [vmem:[%s696 + $0x30] sm:$0xff]
      %v4824 = vld [vmem:[%s696 + $0x38] sm:$0xff]
      %v4825 = vld [vmem:[%s696 + $0x40] sm:$0xff]
      %v4826 = vld [vmem:[%s696 + $0x48] sm:$0xff]
      %v4827 = vld [vmem:[%s696 + $0x50] sm:$0xff]
      %v4828 = vld [vmem:[%s696 + $0x58] sm:$0xff]
      %v4829 = vld [vmem:[%s696 + $0x60] sm:$0xff]
      %v4830 = vld [vmem:[%s696 + $0x68] sm:$0xff]
      %v4831 = vld [vmem:[%s696 + $0x70] sm:$0xff]
      %v4832 = vld [vmem:[%s696 + $0x78] sm:$0xff]
      %v4833 = vld [vmem:[%s696 + $0x80] sm:$0xff]
      %v4834 = vld [vmem:[%s696 + $0x88] sm:$0xff]
      %v4835 = vld [vmem:[%s696 + $0x90] sm:$0xff]
      %v4836 = vld [vmem:[%s696 + $0x98] sm:$0xff]
      %v4837 = vld [vmem:[%s696 + $0xa0] sm:$0xff]
      %v4838 = vld [vmem:[%s696 + $0xa8] sm:$0xff]
      %v4839 = vld [vmem:[%s696 + $0xb0] sm:$0xff]
      %v4840 = vld [vmem:[%s696 + $0xb8] sm:$0xff]
      %v4841 = vld [vmem:[%s696 + $0xc0] sm:$0xff]
      %v4842 = vld [vmem:[%s696 + $0xc8] sm:$0xff]
      %v4843 = vld [vmem:[%s696 + $0xd0] sm:$0xff]
      %v4844 = vld [vmem:[%s696 + $0xd8] sm:$0xff]
      %v4845 = vld [vmem:[%s696 + $0xe0] sm:$0xff]
      %v4846 = vld [vmem:[%s696 + $0xe8] sm:$0xff]
      %v4847 = vld [vmem:[%s696 + $0xf0] sm:$0xff]
      %v4848 = vld [vmem:[%s696 + $0xf8] sm:$0xff]
      %v4849 = vld [vmem:[%s696 + $0x100] sm:$0xff]
      %v4850 = vld [vmem:[%s696 + $0x108] sm:$0xff]
      %v4851 = vld [vmem:[%s696 + $0x110] sm:$0xff]
      %v4852 = vld [vmem:[%s696 + $0x118] sm:$0xff]
      %v4853 = vld [vmem:[%s696 + $0x120] sm:$0xff]
      %v4854 = vld [vmem:[%s696 + $0x128] sm:$0xff]
      %v4855 = vld [vmem:[%s696 + $0x130] sm:$0xff]
      %v4856 = vld [vmem:[%s696 + $0x138] sm:$0xff]
      %v4857 = vld [vmem:[%s696 + $0x140] sm:$0xff]
      %v4858 = vld [vmem:[%s696 + $0x148] sm:$0xff]
      %v4859 = vld [vmem:[%s696 + $0x150] sm:$0xff]
      %v4860 = vld [vmem:[%s696 + $0x158] sm:$0xff]
      %v4861 = vld [vmem:[%s696 + $0x160] sm:$0xff]
      %v4862 = vld [vmem:[%s696 + $0x168] sm:$0xff]
      %v4863 = vld [vmem:[%s696 + $0x170] sm:$0xff]
      %v4864 = vld [vmem:[%s696 + $0x178] sm:$0xff]
      %v4865 = vld [vmem:[%s696 + $0x180] sm:$0xff]
      %v4866 = vld [vmem:[%s696 + $0x188] sm:$0xff]
      %v4867 = vld [vmem:[%s696 + $0x190] sm:$0xff]
      %v4868 = vld [vmem:[%s696 + $0x198] sm:$0xff]
      %v4869 = vld [vmem:[%s696 + $0x1a0] sm:$0xff]
      %v4870 = vld [vmem:[%s696 + $0x1a8] sm:$0xff]
      %v4871 = vld [vmem:[%s696 + $0x1b0] sm:$0xff]
      %v4872 = vld [vmem:[%s696 + $0x1b8] sm:$0xff]
      %v4873 = vld [vmem:[%s696 + $0x1c0] sm:$0xff]
      %v4874 = vld [vmem:[%s696 + $0x1c8] sm:$0xff]
      %v4875 = vld [vmem:[%s696 + $0x1d0] sm:$0xff]
      %v4876 = vld [vmem:[%s696 + $0x1d8] sm:$0xff]
      %v4877 = vld [vmem:[%s696 + $0x1e0] sm:$0xff]
      %v4878 = vld [vmem:[%s696 + $0x1e8] sm:$0xff]
      %v4879 = vld [vmem:[%s696 + $0x1f0] sm:$0xff]
      %v4880 = vld [vmem:[%s696 + $0x1f8] sm:$0xff]
      %v4881 = vld [vmem:[%s699] sm:$0x1]
      %v4883 = vlaneseq
      %v4884 = vshrl.u32 %v4883, 7
      %v4885 = vsub.s32 0, %v4884
      %v4886 = vrot.slane %v4881, %v4885
      %4888 = vmatprep.subr.mxu0 0.0
      %4889 = vmatpush1.msra.mxu0 %v4817
      %4890 = vmatprep.subr.mxu0 0.0
      %4891 = vmatpush1.msra.mxu0 %v4818
      %4892 = vmatprep.subr.mxu0 0.0
      %4893 = vmatpush1.msra.mxu0 %v4819
      %4894 = vmatprep.subr.mxu0 0.0
      %4895 = vmatpush1.msra.mxu0 %v4820
      %4896 = vmatprep.subr.mxu0 0.0
      %4897 = vmatpush1.msra.mxu0 %v4821
      %4898 = vmatprep.subr.mxu0 0.0
      %4899 = vmatpush1.msra.mxu0 %v4822
      %4900 = vmatprep.subr.mxu0 0.0
      %4901 = vmatpush1.msra.mxu0 %v4823
      %4902 = vmatprep.subr.mxu0 0.0
      %4903 = vmatpush1.msra.mxu0 %v4824
      %4904 = vmatprep.subr.mxu0 0.0
      %4905 = vmatpush1.msra.mxu0 %v4825
      %4906 = vmatprep.subr.mxu0 0.0
      %4907 = vmatpush1.msra.mxu0 %v4826
      %4908 = vmatprep.subr.mxu0 0.0
      %4909 = vmatpush1.msra.mxu0 %v4827
      %4910 = vmatprep.subr.mxu0 0.0
      %4911 = vmatpush1.msra.mxu0 %v4828
      %4912 = vmatprep.subr.mxu0 0.0
      %4913 = vmatpush1.msra.mxu0 %v4829
      %4914 = vmatprep.subr.mxu0 0.0
      %4915 = vmatpush1.msra.mxu0 %v4830
      %4916 = vmatprep.subr.mxu0 0.0
      %4917 = vmatpush1.msra.mxu0 %v4831
      %4918 = vmatprep.subr.mxu0 0.0
      %4919 = vmatpush1.msra.mxu0 %v4832
      %4920 = vmatprep.subr.mxu0 0.0
      %4921 = vmatpush1.msra.mxu0 %v4833
      %4922 = vmatprep.subr.mxu0 0.0
      %4923 = vmatpush1.msra.mxu0 %v4834
      %4924 = vmatprep.subr.mxu0 0.0
      %4925 = vmatpush1.msra.mxu0 %v4835
      %4926 = vmatprep.subr.mxu0 0.0
      %4927 = vmatpush1.msra.mxu0 %v4836
      %4928 = vmatprep.subr.mxu0 0.0
      %4929 = vmatpush1.msra.mxu0 %v4837
      %4930 = vmatprep.subr.mxu0 0.0
      %4931 = vmatpush1.msra.mxu0 %v4838
      %4932 = vmatprep.subr.mxu0 0.0
      %4933 = vmatpush1.msra.mxu0 %v4839
      %4934 = vmatprep.subr.mxu0 0.0
      %4935 = vmatpush1.msra.mxu0 %v4840
      %4936 = vmatprep.subr.mxu0 0.0
      %4937 = vmatpush1.msra.mxu0 %v4841
      %4938 = vmatprep.subr.mxu0 0.0
      %4939 = vmatpush1.msra.mxu0 %v4842
      %4940 = vmatprep.subr.mxu0 0.0
      %4941 = vmatpush1.msra.mxu0 %v4843
      %4942 = vmatprep.subr.mxu0 0.0
      %4943 = vmatpush1.msra.mxu0 %v4844
      %4944 = vmatprep.subr.mxu0 0.0
      %4945 = vmatpush1.msra.mxu0 %v4845
      %4946 = vmatprep.subr.mxu0 0.0
      %4947 = vmatpush1.msra.mxu0 %v4846
      %4948 = vmatprep.subr.mxu0 0.0
      %4949 = vmatpush1.msra.mxu0 %v4847
      %4950 = vmatprep.subr.mxu0 0.0
      %4951 = vmatpush1.msra.mxu0 %v4848
      %4952 = vmatprep.mubr.f32.mxu0 %v4754
      %4953 = vmatmul.mubr.f32.gmra.mrb[0].mxu0 %v4753
      %v4954 = vpop.f32.mrb[0].mxu0
      %v4955 = vadd.f32 %v4886, %v4954
      %v4956 = vpop.f32.mrb[0].mxu0
      %4957 = vmatprep.mubr.f32.mxu0 %v4758
      %4958 = vmatmul.mubr.f32.gmra.mrb[0].mxu0 %v4757
      %v4959 = vpop.f32.mrb[0].mxu0
      %v4960 = vadd.f32 %v4886, %v4959
      %v4961 = vpop.f32.mrb[0].mxu0
      %4962 = vmatprep.mubr.f32.mxu0 %v4762
      %4963 = vmatmul.mubr.f32.gmra.mrb[0].mxu0 %v4761
      %v4964 = vpop.f32.mrb[0].mxu0
      %v4965 = vadd.f32 %v4886, %v4964
      %v4966 = vpop.f32.mrb[0].mxu0
      %4967 = vmatprep.mubr.f32.mxu0 %v4766
      %4968 = vmatmul.mubr.f32.gmra.mrb[0].mxu0 %v4765
      %v4969 = vpop.f32.mrb[0].mxu0
      %v4970 = vadd.f32 %v4886, %v4969
      %v4971 = vpop.f32.mrb[0].mxu0
      %4972 = vmatprep.mubr.f32.mxu0 %v4770
      %4973 = vmatmul.mubr.f32.gmra.mrb[0].mxu0 %v4769
      %v4974 = vpop.f32.mrb[0].mxu0
      %v4975 = vadd.f32 %v4886, %v4974
      %v4976 = vpop.f32.mrb[0].mxu0
      %4977 = vmatprep.mubr.f32.mxu0 %v4774
      %4978 = vmatmul.mubr.f32.gmra.mrb[0].mxu0 %v4773
      %v4979 = vpop.f32.mrb[0].mxu0
      %v4980 = vadd.f32 %v4886, %v4979
      %v4981 = vpop.f32.mrb[0].mxu0
      %4982 = vmatprep.mubr.f32.mxu0 %v4778
      %4983 = vmatmul.mubr.f32.gmra.mrb[0].mxu0 %v4777
      %v4984 = vpop.f32.mrb[0].mxu0
      %v4985 = vadd.f32 %v4886, %v4984
      %v4986 = vpop.f32.mrb[0].mxu0
      %4987 = vmatprep.mubr.f32.mxu0 %v4782
      %4988 = vmatmul.mubr.f32.gmra.mrb[0].mxu0 %v4781
      %v4989 = vpop.f32.mrb[0].mxu0
      %v4990 = vadd.f32 %v4886, %v4989
      %v4991 = vpop.f32.mrb[0].mxu0
      %4992 = vmatprep.mubr.f32.mxu0 %v4786
      %4993 = vmatmul.mubr.f32.gmra.mrb[0].mxu0 %v4785
      %v4994 = vpop.f32.mrb[0].mxu0
      %v4995 = vadd.f32 %v4886, %v4994
      %v4996 = vpop.f32.mrb[0].mxu0
      %4997 = vmatprep.mubr.f32.mxu0 %v4790
      %4998 = vmatmul.mubr.f32.gmra.mrb[0].mxu0 %v4789
      %v4999 = vpop.f32.mrb[0].mxu0
      %v5000 = vadd.f32 %v4886, %v4999
      %v5001 = vpop.f32.mrb[0].mxu0
      %5002 = vmatprep.mubr.f32.mxu0 %v4794
      %5003 = vmatmul.mubr.f32.gmra.mrb[0].mxu0 %v4793
      %v5004 = vpop.f32.mrb[0].mxu0
      %v5005 = vadd.f32 %v4886, %v5004
      %v5006 = vpop.f32.mrb[0].mxu0
      %5007 = vmatprep.mubr.f32.mxu0 %v4798
      %5008 = vmatmul.mubr.f32.gmra.mrb[0].mxu0 %v4797
      %v5009 = vpop.f32.mrb[0].mxu0
      %v5010 = vadd.f32 %v4886, %v5009
      %v5011 = vpop.f32.mrb[0].mxu0
      %5012 = vmatprep.mubr.f32.mxu0 %v4802
      %5013 = vmatmul.mubr.f32.gmra.mrb[0].mxu0 %v4801
      %v5014 = vpop.f32.mrb[0].mxu0
      %v5015 = vadd.f32 %v4886, %v5014
      %v5016 = vpop.f32.mrb[0].mxu0
      %5017 = vmatprep.mubr.f32.mxu0 %v4806
      %5018 = vmatmul.mubr.f32.gmra.mrb[0].mxu0 %v4805
      %v5019 = vpop.f32.mrb[0].mxu0
      %v5020 = vadd.f32 %v4886, %v5019
      %v5021 = vpop.f32.mrb[0].mxu0
      %5022 = vmatprep.mubr.f32.mxu0 %v4810
      %5023 = vmatmul.mubr.f32.gmra.mrb[0].mxu0 %v4809
      %v5024 = vpop.f32.mrb[0].mxu0
      %v5025 = vadd.f32 %v4886, %v5024
      %v5026 = vpop.f32.mrb[0].mxu0
      %5027 = vmatprep.mubr.f32.mxu0 %v4814
      %5028 = vmatmul.mubr.f32.gmra.mrb[0].mxu0 %v4813
      %v5029 = vpop.f32.mrb[0].mxu0
      %v5030 = vadd.f32 %v4886, %v5029
      %v5031 = vpop.f32.mrb[0].mxu0
      %5032 = vdwg.mxu0
      %5033 = vmatprep.subr.mxu0 0.0
      %5034 = vmatpush1.msra.mxu0 %v4849
      %5035 = vmatprep.subr.mxu0 0.0
      %5036 = vmatpush1.msra.mxu0 %v4850
      %5037 = vmatprep.subr.mxu0 0.0
      %5038 = vmatpush1.msra.mxu0 %v4851
      %5039 = vmatprep.subr.mxu0 0.0
      %5040 = vmatpush1.msra.mxu0 %v4852
      %5041 = vmatprep.subr.mxu0 0.0
      %5042 = vmatpush1.msra.mxu0 %v4853
      %5043 = vmatprep.subr.mxu0 0.0
      %5044 = vmatpush1.msra.mxu0 %v4854
      %5045 = vmatprep.subr.mxu0 0.0
      %5046 = vmatpush1.msra.mxu0 %v4855
      %5047 = vmatprep.subr.mxu0 0.0
      %5048 = vmatpush1.msra.mxu0 %v4856
      %5049 = vmatprep.subr.mxu0 0.0
      %5050 = vmatpush1.msra.mxu0 %v4857
      %5051 = vmatprep.subr.mxu0 0.0
      %5052 = vmatpush1.msra.mxu0 %v4858
      %5053 = vmatprep.subr.mxu0 0.0
      %5054 = vmatpush1.msra.mxu0 %v4859
      %5055 = vmatprep.subr.mxu0 0.0
      %5056 = vmatpush1.msra.mxu0 %v4860
      %5057 = vmatprep.subr.mxu0 0.0
      %5058 = vmatpush1.msra.mxu0 %v4861
      %5059 = vmatprep.subr.mxu0 0.0
      %5060 = vmatpush1.msra.mxu0 %v4862
      %5061 = vmatprep.subr.mxu0 0.0
      %5062 = vmatpush1.msra.mxu0 %v4863
      %5063 = vmatprep.subr.mxu0 0.0
      %5064 = vmatpush1.msra.mxu0 %v4864
      %5065 = vmatprep.subr.mxu0 0.0
      %5066 = vmatpush1.msra.mxu0 %v4865
      %5067 = vmatprep.subr.mxu0 0.0
      %5068 = vmatpush1.msra.mxu0 %v4866
      %5069 = vmatprep.subr.mxu0 0.0
      %5070 = vmatpush1.msra.mxu0 %v4867
      %5071 = vmatprep.subr.mxu0 0.0
      %5072 = vmatpush1.msra.mxu0 %v4868
      %5073 = vmatprep.subr.mxu0 0.0
      %5074 = vmatpush1.msra.mxu0 %v4869
      %5075 = vmatprep.subr.mxu0 0.0
      %5076 = vmatpush1.msra.mxu0 %v4870
      %5077 = vmatprep.subr.mxu0 0.0
      %5078 = vmatpush1.msra.mxu0 %v4871
      %5079 = vmatprep.subr.mxu0 0.0
      %5080 = vmatpush1.msra.mxu0 %v4872
      %5081 = vmatprep.subr.mxu0 0.0
      %5082 = vmatpush1.msra.mxu0 %v4873
      %5083 = vmatprep.subr.mxu0 0.0
      %5084 = vmatpush1.msra.mxu0 %v4874
      %5085 = vmatprep.subr.mxu0 0.0
      %5086 = vmatpush1.msra.mxu0 %v4875
      %5087 = vmatprep.subr.mxu0 0.0
      %5088 = vmatpush1.msra.mxu0 %v4876
      %5089 = vmatprep.subr.mxu0 0.0
      %5090 = vmatpush1.msra.mxu0 %v4877
      %5091 = vmatprep.subr.mxu0 0.0
      %5092 = vmatpush1.msra.mxu0 %v4878
      %5093 = vmatprep.subr.mxu0 0.0
      %5094 = vmatpush1.msra.mxu0 %v4879
      %5095 = vmatprep.subr.mxu0 0.0
      %5096 = vmatpush1.msra.mxu0 %v4880
      %5097 = vmatprep.mubr.f32.mxu0 %v4756
      %5098 = vmatmul.mubr.f32.gmra.mrb[0].mxu0 %v4755
      %v5099 = vpop.f32.mrb[0].mxu0
      %v5100 = vadd.f32 %v4955, %v5099
      %v5101 = vpop.f32.mrb[0].mxu0
      %5102 = vmatprep.mubr.f32.mxu0 %v4760
      %5103 = vmatmul.mubr.f32.gmra.mrb[0].mxu0 %v4759
      %v5104 = vpop.f32.mrb[0].mxu0
      %v5105 = vadd.f32 %v4960, %v5104
      %v5106 = vpop.f32.mrb[0].mxu0
      %5107 = vmatprep.mubr.f32.mxu0 %v4764
      %5108 = vmatmul.mubr.f32.gmra.mrb[0].mxu0 %v4763
      %v5109 = vpop.f32.mrb[0].mxu0
      %v5110 = vadd.f32 %v4965, %v5109
      %v5111 = vpop.f32.mrb[0].mxu0
      %5112 = vmatprep.mubr.f32.mxu0 %v4768
      %5113 = vmatmul.mubr.f32.gmra.mrb[0].mxu0 %v4767
      %v5114 = vpop.f32.mrb[0].mxu0
      %v5115 = vadd.f32 %v4970, %v5114
      %v5116 = vpop.f32.mrb[0].mxu0
      %5117 = vmatprep.mubr.f32.mxu0 %v4772
      %5118 = vmatmul.mubr.f32.gmra.mrb[0].mxu0 %v4771
      %v5119 = vpop.f32.mrb[0].mxu0
      %v5120 = vadd.f32 %v4975, %v5119
      %v5121 = vpop.f32.mrb[0].mxu0
      %5122 = vmatprep.mubr.f32.mxu0 %v4776
      %5123 = vmatmul.mubr.f32.gmra.mrb[0].mxu0 %v4775
      %v5124 = vpop.f32.mrb[0].mxu0
      %v5125 = vadd.f32 %v4980, %v5124
      %v5126 = vpop.f32.mrb[0].mxu0
      %5127 = vmatprep.mubr.f32.mxu0 %v4780
      %5128 = vmatmul.mubr.f32.gmra.mrb[0].mxu0 %v4779
      %v5129 = vpop.f32.mrb[0].mxu0
      %v5130 = vadd.f32 %v4985, %v5129
      %v5131 = vpop.f32.mrb[0].mxu0
      %5132 = vmatprep.mubr.f32.mxu0 %v4784
      %5133 = vmatmul.mubr.f32.gmra.mrb[0].mxu0 %v4783
      %v5134 = vpop.f32.mrb[0].mxu0
      %v5135 = vadd.f32 %v4990, %v5134
      %v5136 = vpop.f32.mrb[0].mxu0
      %5137 = vmatprep.mubr.f32.mxu0 %v4788
      %5138 = vmatmul.mubr.f32.gmra.mrb[0].mxu0 %v4787
      %v5139 = vpop.f32.mrb[0].mxu0
      %v5140 = vadd.f32 %v4995, %v5139
      %v5141 = vpop.f32.mrb[0].mxu0
      %5142 = vmatprep.mubr.f32.mxu0 %v4792
      %5143 = vmatmul.mubr.f32.gmra.mrb[0].mxu0 %v4791
      %v5144 = vpop.f32.mrb[0].mxu0
      %v5145 = vadd.f32 %v5000, %v5144
      %v5146 = vpop.f32.mrb[0].mxu0
      %5147 = vmatprep.mubr.f32.mxu0 %v4796
      %5148 = vmatmul.mubr.f32.gmra.mrb[0].mxu0 %v4795
      %v5149 = vpop.f32.mrb[0].mxu0
      %v5150 = vadd.f32 %v5005, %v5149
      %v5151 = vpop.f32.mrb[0].mxu0
      %5152 = vmatprep.mubr.f32.mxu0 %v4800
      %5153 = vmatmul.mubr.f32.gmra.mrb[0].mxu0 %v4799
      %v5154 = vpop.f32.mrb[0].mxu0
      %v5155 = vadd.f32 %v5010, %v5154
      %v5156 = vpop.f32.mrb[0].mxu0
      %5157 = vmatprep.mubr.f32.mxu0 %v4804
      %5158 = vmatmul.mubr.f32.gmra.mrb[0].mxu0 %v4803
      %v5159 = vpop.f32.mrb[0].mxu0
      %v5160 = vadd.f32 %v5015, %v5159
      %v5161 = vpop.f32.mrb[0].mxu0
      %5162 = vmatprep.mubr.f32.mxu0 %v4808
      %5163 = vmatmul.mubr.f32.gmra.mrb[0].mxu0 %v4807
      %v5164 = vpop.f32.mrb[0].mxu0
      %v5165 = vadd.f32 %v5020, %v5164
      %v5166 = vpop.f32.mrb[0].mxu0
      %5167 = vmatprep.mubr.f32.mxu0 %v4812
      %5168 = vmatmul.mubr.f32.gmra.mrb[0].mxu0 %v4811
      %v5169 = vpop.f32.mrb[0].mxu0
      %v5170 = vadd.f32 %v5025, %v5169
      %v5171 = vpop.f32.mrb[0].mxu0
      %5172 = vmatprep.mubr.f32.mxu0 %v4816
      %5173 = vmatmul.mubr.f32.gmra.mrb[0].mxu0 %v4815
      %v5174 = vpop.f32.mrb[0].mxu0
      %v5175 = vadd.f32 %v5030, %v5174
      %v5176 = vpop.f32.mrb[0].mxu0
      %5177 = vdwg.mxu0
      %v5178 = vadd.f32 %v3595, %v5100
      %v5179 = vadd.f32 %v3596, %v5105
      %v5180 = vadd.f32 %v3597, %v5110
      %v5181 = vadd.f32 %v3598, %v5115
      %v5182 = vadd.f32 %v3599, %v5120
      %v5183 = vadd.f32 %v3600, %v5125
      %v5184 = vadd.f32 %v3601, %v5130
      %v5185 = vadd.f32 %v3602, %v5135
      %v5186 = vadd.f32 %v3603, %v5140
      %v5187 = vadd.f32 %v3604, %v5145
      %v5188 = vadd.f32 %v3605, %v5150
      %v5189 = vadd.f32 %v3606, %v5155
      %v5190 = vadd.f32 %v3607, %v5160
      %v5191 = vadd.f32 %v3608, %v5165
      %v5192 = vadd.f32 %v3609, %v5170
      %v5193 = vadd.f32 %v3610, %v5175
      %5194 = vst [vmem:[#allocation2] sm:$0xff] %v5178
      %5195 = vst [vmem:[#allocation2 + $0x8] sm:$0xff] %v5179
      %5196 = vst [vmem:[#allocation2 + $0x10] sm:$0xff] %v5180
      %5197 = vst [vmem:[#allocation2 + $0x18] sm:$0xff] %v5181
      %5198 = vst [vmem:[#allocation2 + $0x20] sm:$0xff] %v5182
      %5199 = vst [vmem:[#allocation2 + $0x28] sm:$0xff] %v5183
      %5200 = vst [vmem:[#allocation2 + $0x30] sm:$0xff] %v5184
      %5201 = vst [vmem:[#allocation2 + $0x38] sm:$0xff] %v5185
      %5202 = vst [vmem:[#allocation2 + $0x40] sm:$0xff] %v5186
      %5203 = vst [vmem:[#allocation2 + $0x48] sm:$0xff] %v5187
      %5204 = vst [vmem:[#allocation2 + $0x50] sm:$0xff] %v5188
      %5205 = vst [vmem:[#allocation2 + $0x58] sm:$0xff] %v5189
      %5206 = vst [vmem:[#allocation2 + $0x60] sm:$0xff] %v5190
      %5207 = vst [vmem:[#allocation2 + $0x68] sm:$0xff] %v5191
      %5208 = vst [vmem:[#allocation2 + $0x70] sm:$0xff] %v5192
      %5209 = vst [vmem:[#allocation2 + $0x78] sm:$0xff] %v5193
      %p5210 = scmp.eq.s32.totalorder %s31, 1
      // Predicated region
      $region85: #{se_vit_forward.3} parent=79 // pred_check
        %p5211 = pneg %p5210
      $region86: #{se_vit_forward.3} parent=79 // pred_check_branch
        %5213 = sbr.rel (%p5211) target = $region88
      $region87: #{se_vit_forward.3} parent=79 // pred_region
        %v5214 = vld [vmem:[%s13] sm:$0x1]
        %v5215 = vld [vmem:[%s14] sm:$0x1]
        %5216 = vadd.xlane.f32.xlu0 %v5178
        %v5217 = vpop.xlane.xlu0 %5216
        %5218 = vadd.xlane.f32.xlu0 %v5179
        %v5219 = vpop.xlane.xlu0 %5218
        %5220 = vadd.xlane.f32.xlu0 %v5180
        %v5221 = vpop.xlane.xlu0 %5220
        %5222 = vadd.xlane.f32.xlu0 %v5181
        %v5223 = vpop.xlane.xlu0 %5222
        %5224 = vadd.xlane.f32.xlu0 %v5182
        %v5225 = vpop.xlane.xlu0 %5224
        %5226 = vadd.xlane.f32.xlu0 %v5183
        %v5227 = vpop.xlane.xlu0 %5226
        %5228 = vadd.xlane.f32.xlu0 %v5184
        %v5229 = vpop.xlane.xlu0 %5228
        %5230 = vadd.xlane.f32.xlu0 %v5185
        %v5231 = vpop.xlane.xlu0 %5230
        %5232 = vadd.xlane.f32.xlu0 %v5186
        %v5233 = vpop.xlane.xlu0 %5232
        %5234 = vadd.xlane.f32.xlu0 %v5187
        %v5235 = vpop.xlane.xlu0 %5234
        %5236 = vadd.xlane.f32.xlu0 %v5188
        %v5237 = vpop.xlane.xlu0 %5236
        %5238 = vadd.xlane.f32.xlu0 %v5189
        %v5239 = vpop.xlane.xlu0 %5238
        %5240 = vadd.xlane.f32.xlu0 %v5190
        %v5241 = vpop.xlane.xlu0 %5240
        %5242 = vadd.xlane.f32.xlu0 %v5191
        %v5243 = vpop.xlane.xlu0 %5242
        %5244 = vadd.xlane.f32.xlu0 %v5192
        %v5245 = vpop.xlane.xlu0 %5244
        %5246 = vadd.xlane.f32.xlu0 %v5193
        %v5247 = vpop.xlane.xlu0 %5246
        %v5248 = vmul.f32 %v5217, %v791
        %v5249 = vmul.f32 %v5219, %v791
        %v5250 = vmul.f32 %v5221, %v791
        %v5251 = vmul.f32 %v5223, %v791
        %v5252 = vmul.f32 %v5225, %v791
        %v5253 = vmul.f32 %v5227, %v791
        %v5254 = vmul.f32 %v5229, %v791
        %v5255 = vmul.f32 %v5231, %v791
        %v5256 = vmul.f32 %v5233, %v791
        %v5257 = vmul.f32 %v5235, %v791
        %v5258 = vmul.f32 %v5237, %v791
        %v5259 = vmul.f32 %v5239, %v791
        %v5260 = vmul.f32 %v5241, %v791
        %v5261 = vmul.f32 %v5243, %v791
        %v5262 = vmul.f32 %v5245, %v791
        %v5263 = vmul.f32 %v5247, %v791
        %v5264 = vsub.f32 %v5178, %v5248
        %v5265 = vsub.f32 %v5179, %v5249
        %v5266 = vsub.f32 %v5180, %v5250
        %v5267 = vsub.f32 %v5181, %v5251
        %v5268 = vsub.f32 %v5182, %v5252
        %v5269 = vsub.f32 %v5183, %v5253
        %v5270 = vsub.f32 %v5184, %v5254
        %v5271 = vsub.f32 %v5185, %v5255
        %v5272 = vsub.f32 %v5186, %v5256
        %v5273 = vsub.f32 %v5187, %v5257
        %v5274 = vsub.f32 %v5188, %v5258
        %v5275 = vsub.f32 %v5189, %v5259
        %v5276 = vsub.f32 %v5190, %v5260
        %v5277 = vsub.f32 %v5191, %v5261
        %v5278 = vsub.f32 %v5192, %v5262
        %v5279 = vsub.f32 %v5193, %v5263
        %v5280 = vmul.f32 %v5264, %v5264
        %v5281 = vmul.f32 %v5265, %v5265
        %v5282 = vmul.f32 %v5266, %v5266
        %v5283 = vmul.f32 %v5267, %v5267
        %v5284 = vmul.f32 %v5268, %v5268
        %v5285 = vmul.f32 %v5269, %v5269
        %v5286 = vmul.f32 %v5270, %v5270
        %v5287 = vmul.f32 %v5271, %v5271
        %v5288 = vmul.f32 %v5272, %v5272
        %v5289 = vmul.f32 %v5273, %v5273
        %v5290 = vmul.f32 %v5274, %v5274
        %v5291 = vmul.f32 %v5275, %v5275
        %v5292 = vmul.f32 %v5276, %v5276
        %v5293 = vmul.f32 %v5277, %v5277
        %v5294 = vmul.f32 %v5278, %v5278
        %v5295 = vmul.f32 %v5279, %v5279
        %5296 = vadd.xlane.f32.xlu0 %v5280
        %v5297 = vpop.xlane.xlu0 %5296
        %5298 = vadd.xlane.f32.xlu0 %v5281
        %v5299 = vpop.xlane.xlu0 %5298
        %5300 = vadd.xlane.f32.xlu0 %v5282
        %v5301 = vpop.xlane.xlu0 %5300
        %5302 = vadd.xlane.f32.xlu0 %v5283
        %v5303 = vpop.xlane.xlu0 %5302
        %5304 = vadd.xlane.f32.xlu0 %v5284
        %v5305 = vpop.xlane.xlu0 %5304
        %5306 = vadd.xlane.f32.xlu0 %v5285
        %v5307 = vpop.xlane.xlu0 %5306
        %5308 = vadd.xlane.f32.xlu0 %v5286
        %v5309 = vpop.xlane.xlu0 %5308
        %5310 = vadd.xlane.f32.xlu0 %v5287
        %v5311 = vpop.xlane.xlu0 %5310
        %5312 = vadd.xlane.f32.xlu0 %v5288
        %v5313 = vpop.xlane.xlu0 %5312
        %5314 = vadd.xlane.f32.xlu0 %v5289
        %v5315 = vpop.xlane.xlu0 %5314
        %5316 = vadd.xlane.f32.xlu0 %v5290
        %v5317 = vpop.xlane.xlu0 %5316
        %5318 = vadd.xlane.f32.xlu0 %v5291
        %v5319 = vpop.xlane.xlu0 %5318
        %5320 = vadd.xlane.f32.xlu0 %v5292
        %v5321 = vpop.xlane.xlu0 %5320
        %5322 = vadd.xlane.f32.xlu0 %v5293
        %v5323 = vpop.xlane.xlu0 %5322
        %5324 = vadd.xlane.f32.xlu0 %v5294
        %v5325 = vpop.xlane.xlu0 %5324
        %5326 = vadd.xlane.f32.xlu0 %v5295
        %v5327 = vpop.xlane.xlu0 %5326
        %v5328 = vmul.f32 %v5297, %v791
        %v5329 = vmul.f32 %v5299, %v791
        %v5330 = vmul.f32 %v5301, %v791
        %v5331 = vmul.f32 %v5303, %v791
        %v5332 = vmul.f32 %v5305, %v791
        %v5333 = vmul.f32 %v5307, %v791
        %v5334 = vmul.f32 %v5309, %v791
        %v5335 = vmul.f32 %v5311, %v791
        %v5336 = vmul.f32 %v5313, %v791
        %v5337 = vmul.f32 %v5315, %v791
        %v5338 = vmul.f32 %v5317, %v791
        %v5339 = vmul.f32 %v5319, %v791
        %v5340 = vmul.f32 %v5321, %v791
        %v5341 = vmul.f32 %v5323, %v791
        %v5342 = vmul.f32 %v5325, %v791
        %v5343 = vmul.f32 %v5327, %v791
        %v5344 = vadd.f32 %v5328, 1e-06
        %v5345 = vadd.f32 %v5329, 1e-06
        %v5346 = vadd.f32 %v5330, 1e-06
        %v5347 = vadd.f32 %v5331, 1e-06
        %v5348 = vadd.f32 %v5332, 1e-06
        %v5349 = vadd.f32 %v5333, 1e-06
        %v5350 = vadd.f32 %v5334, 1e-06
        %v5351 = vadd.f32 %v5335, 1e-06
        %v5352 = vadd.f32 %v5336, 1e-06
        %v5353 = vadd.f32 %v5337, 1e-06
        %v5354 = vadd.f32 %v5338, 1e-06
        %v5355 = vadd.f32 %v5339, 1e-06
        %v5356 = vadd.f32 %v5340, 1e-06
        %v5357 = vadd.f32 %v5341, 1e-06
        %v5358 = vadd.f32 %v5342, 1e-06
        %v5359 = vadd.f32 %v5343, 1e-06
        %v5360 = vrsqrt.pop %v5344
        %v5361 = vrsqrt.pop %v5345
        %v5362 = vrsqrt.pop %v5346
        %v5363 = vrsqrt.pop %v5347
        %v5364 = vrsqrt.pop %v5348
        %v5365 = vrsqrt.pop %v5349
        %v5366 = vrsqrt.pop %v5350
        %v5367 = vrsqrt.pop %v5351
        %v5368 = vrsqrt.pop %v5352
        %v5369 = vrsqrt.pop %v5353
        %v5370 = vrsqrt.pop %v5354
        %v5371 = vrsqrt.pop %v5355
        %v5372 = vrsqrt.pop %v5356
        %v5373 = vrsqrt.pop %v5357
        %v5374 = vrsqrt.pop %v5358
        %v5375 = vrsqrt.pop %v5359
        %v5376 = vmul.f32 %v5264, %v5360
        %v5377 = vmul.f32 %v5265, %v5361
        %v5378 = vmul.f32 %v5266, %v5362
        %v5379 = vmul.f32 %v5267, %v5363
        %v5380 = vmul.f32 %v5268, %v5364
        %v5381 = vmul.f32 %v5269, %v5365
        %v5382 = vmul.f32 %v5270, %v5366
        %v5383 = vmul.f32 %v5271, %v5367
        %v5384 = vmul.f32 %v5272, %v5368
        %v5385 = vmul.f32 %v5273, %v5369
        %v5386 = vmul.f32 %v5274, %v5370
        %v5387 = vmul.f32 %v5275, %v5371
        %v5388 = vmul.f32 %v5276, %v5372
        %v5389 = vmul.f32 %v5277, %v5373
        %v5390 = vmul.f32 %v5278, %v5374
        %v5391 = vmul.f32 %v5279, %v5375
        %v5393 = vlaneseq
        %v5394 = vshrl.u32 %v5393, 7
        %v5395 = vsub.s32 0, %v5394
        %v5396 = vrot.slane %v5214, %v5395
        %v5398 = vmul.f32 %v5376, %v5396
        %v5399 = vmul.f32 %v5377, %v5396
        %v5400 = vmul.f32 %v5378, %v5396
        %v5401 = vmul.f32 %v5379, %v5396
        %v5402 = vmul.f32 %v5380, %v5396
        %v5403 = vmul.f32 %v5381, %v5396
        %v5404 = vmul.f32 %v5382, %v5396
        %v5405 = vmul.f32 %v5383, %v5396
        %v5406 = vmul.f32 %v5384, %v5396
        %v5407 = vmul.f32 %v5385, %v5396
        %v5408 = vmul.f32 %v5386, %v5396
        %v5409 = vmul.f32 %v5387, %v5396
        %v5410 = vmul.f32 %v5388, %v5396
        %v5411 = vmul.f32 %v5389, %v5396
        %v5412 = vmul.f32 %v5390, %v5396
        %v5413 = vmul.f32 %v5391, %v5396
        %v5415 = vlaneseq
        %v5416 = vshrl.u32 %v5415, 7
        %v5417 = vsub.s32 0, %v5416
        %v5418 = vrot.slane %v5215, %v5417
        %v5420 = vadd.f32 %v5398, %v5418
        %v5421 = vadd.f32 %v5399, %v5418
        %v5422 = vadd.f32 %v5400, %v5418
        %v5423 = vadd.f32 %v5401, %v5418
        %v5424 = vadd.f32 %v5402, %v5418
        %v5425 = vadd.f32 %v5403, %v5418
        %v5426 = vadd.f32 %v5404, %v5418
        %v5427 = vadd.f32 %v5405, %v5418
        %v5428 = vadd.f32 %v5406, %v5418
        %v5429 = vadd.f32 %v5407, %v5418
        %v5430 = vadd.f32 %v5408, %v5418
        %v5431 = vadd.f32 %v5409, %v5418
        %v5432 = vadd.f32 %v5410, %v5418
        %v5433 = vadd.f32 %v5411, %v5418
        %v5434 = vadd.f32 %v5412, %v5418
        %v5435 = vadd.f32 %v5413, %v5418
        %5436 = vst [vmem:[%s704] sm:$0xff] %v5420
        %5437 = vst [vmem:[%s704 + $0x8] sm:$0xff] %v5421
        %5438 = vst [vmem:[%s704 + $0x10] sm:$0xff] %v5422
        %5439 = vst [vmem:[%s704 + $0x18] sm:$0xff] %v5423
        %5440 = vst [vmem:[%s704 + $0x20] sm:$0xff] %v5424
        %5441 = vst [vmem:[%s704 + $0x28] sm:$0xff] %v5425
        %5442 = vst [vmem:[%s704 + $0x30] sm:$0xff] %v5426
        %5443 = vst [vmem:[%s704 + $0x38] sm:$0xff] %v5427
        %5444 = vst [vmem:[%s704 + $0x40] sm:$0xff] %v5428
        %5445 = vst [vmem:[%s704 + $0x48] sm:$0xff] %v5429
        %5446 = vst [vmem:[%s704 + $0x50] sm:$0xff] %v5430
        %5447 = vst [vmem:[%s704 + $0x58] sm:$0xff] %v5431
        %5448 = vst [vmem:[%s704 + $0x60] sm:$0xff] %v5432
        %5449 = vst [vmem:[%s704 + $0x68] sm:$0xff] %v5433
        %5450 = vst [vmem:[%s704 + $0x70] sm:$0xff] %v5434
        %5451 = vst [vmem:[%s704 + $0x78] sm:$0xff] %v5435
      $region88: #{se_vit_forward.3} parent=79 // pred_fallthru
        _
      %p5452 = scmp.lt.s32.totalorder %s30, 1
      %s5453 = scalar_select %p5452, %s30, 1
      %s5454 = smul.addr %s5453, 16
      %s5455 = smul.addr %s5454, 8
      %s5456 = scalar_lea.vmem %s15, %s5455
      // Predicated region
      $region89: #{se_vit_forward.3} parent=79 // pred_check
        %p5457 = pneg %p436
      $region90: #{se_vit_forward.3} parent=79 // pred_check_branch
        %5459 = sbr.rel (%p5457) target = $region92
      $region91: #{se_vit_forward.3} parent=79 // pred_region
        _
      $region92: #{se_vit_forward.3} parent=79 // pred_fallthru
        _
    $region80: #{se_vit_forward.3} parent=5 // pred_fallthru
      _
    %p5460 = scmp.le.s32.totalorder 2, %s21
    // Predicated region
    $region93: #{se_vit_forward.3} parent=5 // pred_check
      %p5461 = pneg %p5460
    $region94: #{se_vit_forward.3} parent=5 // pred_check_branch
      %5463 = sbr.rel (%p5461) target = $region96
    $region95: #{se_vit_forward.3} parent=5 // pred_region
      %s5464 = ssub.s32 %s21, 2
      // Predicated region
      $region97: #{se_vit_forward.3} parent=95 // pred_check
        %p5465 = pneg %p442
      $region98: #{se_vit_forward.3} parent=95 // pred_check_branch
        %5467 = sbr.rel (%p5465) target = $region100
      $region99: #{se_vit_forward.3} parent=95 // pred_region
        %p5468 = scmp.lt.s32.totalorder %s32, 1
        %s5469 = scalar_select %p5468, %s32, 1
        %s5470 = smul.addr %s5469, 16
        %s5471 = smul.addr %s5470, 8
        %s5472 = scalar_lea.vmem %s15, %s5471
      $region100: #{se_vit_forward.3} parent=95 // pred_fallthru
        _
    $region96: #{se_vit_forward.3} parent=5 // pred_fallthru
      _
  $region6: #{se_vit_forward.3} parent=0 // loop_footer
    %s25 = sadd.s32 1, %s21
  $region7: #{se_vit_forward.3} parent=0 // loop_footer_branch
    %20 = sbr.rel target = $region3
  $region8: #{se_vit_forward.3} parent=0 // loop_exit
    _

</llo_original>
